<compile_context>
chip_gen: v7x
topology: tpu7x:2x2x1
jax: 0.10.0
libtpu: 0.0.40
codegen_flags: <defaults>
</compile_context>

<pallas_src>
import numpy as np
import jax
import jax.numpy as jnp
from jax import lax
from jax.experimental import pallas as pl
from jax.experimental.pallas import tpu as pltpu


def _round_up(x, m):
    return (x + m - 1) // m * m


def _upsample_conv_kernel(x_ref, halo_ref, w_ref, b_ref, o_ref, xpad_ref):
    """One (batch n, row-tile h) grid step; computes both row/column parities.

    x_ref    : (1, TH, W, Cin)        row tile of the NHWC input image
    halo_ref : (1, 1, 2, W, Cin)      row above / row below the tile (zeros at image edges)
    w_ref    : (2, 2, 4, Cin, Cout)   effective 2x2 weights, [row parity, col parity, tap]
    b_ref    : (1, 2*Cout)            bias tiled for both column parities (f32)
    o_ref    : (1, TH, 2, W, 2*Cout)  pixel-shuffled output block
    xpad_ref : (TH+2, Wp, Cin)        VMEM scratch: padded row tile (Wp >= W + 2)
    """
    _, TH, W, C = x_ref.shape
    cout2 = b_ref.shape[1]
    cout = cout2 // 2

    # Assemble the padded tile.  Zero ONLY the two 1-pixel column strips (they also cover
    # the four corners); top/bottom halo rows come from the prefetched halo block, which is
    # already zero at the image border — no full-buffer zero fill, no pl.when.
    zcol = jnp.zeros((TH + 2, 1, C), dtype=xpad_ref.dtype)
    xpad_ref[:, 0:1, :] = zcol
    xpad_ref[:, W + 1:W + 2, :] = zcol
    xpad_ref[0, 1:W + 1, :] = halo_ref[0, 0, 0]
    xpad_ref[TH + 1, 1:W + 1, :] = halo_ref[0, 0, 1]
    xpad_ref[1:TH + 1, 1:W + 1, :] = x_ref[0]

    bias = b_ref[...].astype(jnp.float32)                              # (1, 2*Cout)

    for a in range(2):                                                  # output row parity
        ys = []
        for b in range(2):                                              # output column parity
            acc = jnp.zeros((TH * W, cout), jnp.float32)
            for t, (u, v) in enumerate(((0, 0), (0, 1), (1, 0), (1, 1))):
                win = xpad_ref[a + u:a + u + TH, b + v:b + v + W, :]    # (TH, W, C)
                acc = acc + jnp.dot(win.reshape(TH * W, C), w_ref[a, b, t],
                                    preferred_element_type=jnp.float32)
            ys.append(acc)
        # One wide f32 slab: bias added once, cast once, single lane-dense store.
        y = jnp.concatenate(ys, axis=-1) + bias                         # (TH*W, 2*Cout)
        o_ref[0, :, a, :, :] = y.reshape(TH, W, cout2).astype(o_ref.dtype)


def _effective_weights(w_oihw):
    """Fold the 3x3 kernel into per-parity 2x2 kernels.

    For output row parity a the 3x3 row taps collapse onto 2 original-image rows:
      a=0: row offset 0 <- tap 0,    row offset 1 <- taps 1+2
      a=1: row offset 0 <- taps 0+1, row offset 1 <- tap 2
    (same along columns with parity b).  Returns (2, 2, 4, Cin, Cout) indexed
    [a, b, tap(u, v), cin, cout], matching the kernel's tap order.
    """
    w = jnp.transpose(w_oihw, (2, 3, 1, 0)).astype(jnp.float32)         # (3, 3, Cin, Cout)
    cin, cout = w.shape[2], w.shape[3]
    groups = (((0,), (1, 2)), ((0, 1), (2,)))                           # groups[parity][u]
    rows = []
    for a in range(2):
        cols = []
        for b in range(2):
            taps = []
            for u in range(2):
                for v in range(2):
                    s = jnp.zeros((cin, cout), dtype=jnp.float32)
                    for dy in groups[a][u]:
                        for dx in groups[b][v]:
                            s = s + w[dy, dx]
                    taps.append(s)
            cols.append(jnp.stack(taps, axis=0))                        # (4, Cin, Cout)
        rows.append(jnp.stack(cols, axis=0))                            # (2, 4, Cin, Cout)
    return jnp.stack(rows, axis=0)                                      # (2, 2, 4, Cin, Cout)


def _vmem_limit_bytes():
    """Generation-aware VMEM limit: half the physical VMEM, capped at 64 MiB."""
    phys = 128 * 1024 * 1024
    try:
        info = pltpu.get_tpu_info()
        phys = int(getattr(info, "vmem_capacity_bytes", phys) or phys)
    except Exception:
        pass
    return int(min(phys // 2, 64 * 1024 * 1024))


def _choose_row_tile(H, W, C, Cout, itemsize, vmem_limit):
    """Largest divisor of H whose per-step working set fits comfortably in the VMEM limit."""
    budget = int(vmem_limit * 0.6)
    wp = _round_up(W + 2, 8)
    for th in range(H, 0, -1):
        if H % th:
            continue
        x_blk = th * W * C * itemsize
        halo_blk = 2 * W * C * itemsize
        out_blk = th * W * 2 * Cout * itemsize
        w_blk = 16 * C * Cout * itemsize
        pad_scr = (th + 2) * wp * C * itemsize
        acc_tmp = 2 * th * W * 2 * Cout * 4                 # f32 accumulators / concat temp
        total = 2 * (x_blk + halo_blk + out_blk) + 2 * w_blk + pad_scr + acc_tmp
        if total <= budget:
            return th
    return 1


def upsample_forward(x_nchw, w_oihw, bias, *, compute_dtype=None, row_tile=None):
    """Upsample.forward for unet_dim=2, use_conv=True.  NCHW -> NCHW, caller dtype preserved.

    compute_dtype: matmul operand dtype (default: x dtype).  On v5e pass jnp.bfloat16 for
    float32 inputs (its MXU has no f32 path); accumulation stays f32 either way.
    row_tile: optional override for the H tile size (must divide H).
    """
    N, C, H, W = x_nchw.shape
    Cout = w_oihw.shape[0]
    out_dtype = x_nchw.dtype
    cdtype = jnp.dtype(compute_dtype) if compute_dtype is not None else jnp.dtype(out_dtype)

    x_nhwc = jnp.transpose(x_nchw, (0, 2, 3, 1)).astype(cdtype)         # NCHW interface glue
    weff = _effective_weights(w_oihw).astype(cdtype)                    # (2, 2, 4, Cin, Cout)
    bias2 = jnp.tile(bias.astype(jnp.float32), (2,)).reshape(1, 2 * Cout)

    vmem_limit = _vmem_limit_bytes()
    if row_tile is not None and H % row_tile == 0:
        TH = int(row_tile)
    else:
        TH = _choose_row_tile(H, W, C, Cout, cdtype.itemsize, vmem_limit)
    nH = H // TH

    # Per-tile top/bottom halo rows (zeros at the image border) built with a tiny strided
    # gather — 2 rows per tile, so the kernel never zero-fills whole buffers or needs
    # overlapping input blocks.
    zrow = jnp.zeros((N, 1, W, C), dtype=cdtype)
    if nH > 1:
        top_idx = np.arange(1, nH) * TH - 1
        bot_idx = np.arange(1, nH) * TH
        top = jnp.concatenate([zrow, jnp.take(x_nhwc, top_idx, axis=1)], axis=1)
        bot = jnp.concatenate([jnp.take(x_nhwc, bot_idx, axis=1), zrow], axis=1)
    else:
        top = zrow
        bot = zrow
    halo = jnp.stack([top, bot], axis=2)                                # (N, nH, 2, W, C)

    wp = _round_up(W + 2, 8)

    out = pl.pallas_call(
        _upsample_conv_kernel,
        out_shape=jax.ShapeDtypeStruct((N, H, 2, W, 2 * Cout), out_dtype),
        grid_spec=pltpu.PrefetchScalarGridSpec(
            num_scalar_prefetch=0,
            grid=(N, nH),                                               # (batch, row tile)
            in_specs=[
                pl.BlockSpec((1, TH, W, C), lambda n, h: (n, h, 0, 0)),
                pl.BlockSpec((1, 1, 2, W, C), lambda n, h: (n, h, 0, 0, 0)),
                pl.BlockSpec((2, 2, 4, C, Cout),
                             lambda n, h: (0, 0, 0, 0, 0)),             # weights: resident
                pl.BlockSpec((1, 2 * Cout), lambda n, h: (0, 0)),       # bias: resident
            ],
            out_specs=pl.BlockSpec((1, TH, 2, W, 2 * Cout),
                                   lambda n, h: (n, h, 0, 0, 0)),
            scratch_shapes=[
                pltpu.VMEM((TH + 2, wp, C), cdtype),                    # padded row tile
            ],
        ),
        compiler_params=pltpu.CompilerParams(
            dimension_semantics=("parallel", "parallel"),
            vmem_limit_bytes=vmem_limit,
        ),
    )(x_nhwc, halo, weff, bias2)

    # (N, H, 2, W, 2*Cout) has exactly the NHWC (N, 2H, 2W, Cout) memory order: the reshape
    # is free (no pixel-shuffle transpose pass).  Only the NCHW interface transpose remains.
    y = out.reshape(N, 2 * H, 2 * W, Cout)
    return jnp.transpose(y, (0, 3, 1, 2))


def upsample_reference(x_nchw, w_oihw, bias):
    """Pure-JAX reference: nearest 2x upsample + 3x3 conv (pad=1), NCHW."""
    x_up = jnp.repeat(jnp.repeat(x_nchw, 2, axis=2), 2, axis=3)
    y = lax.conv_general_dilated(
        x_up, w_oihw, window_strides=(1, 1), padding=((1, 1), (1, 1)),
        dimension_numbers=("NCHW", "OIHW", "NCHW"))
    return y + bias[None, :, None, None]


if __name__ == "__main__":
    key = jax.random.PRNGKey(0)
    kx, kw, kb = jax.random.split(key, 3)

    # Upsample(channels=4, use_conv=True, unet_dim=2) on a (2, 4, 16, 16) input.
    N, C, H, W = 2, 4, 16, 16
    Cout = C  # out_channels defaults to channels

    x = jax.random.normal(kx, (N, C, H, W), dtype=jnp.float32)
    fan_in = C * 3 * 3
    w = jax.random.normal(kw, (Cout, C, 3, 3), dtype=jnp.float32) / jnp.sqrt(fan_in)
    b = 0.1 * jax.random.normal(kb, (Cout,), dtype=jnp.float32)

    y_ref = upsample_reference(x, w, b)

    # Default path (auto row tile — whole image at this size).
    y = jax.block_until_ready(upsample_forward(x, w, b))
    assert y.shape == (N, Cout, 2 * H, 2 * W), y.shape
    if not bool(jnp.allclose(y, y_ref, rtol=1e-3, atol=1e-3)):
        raise AssertionError(
            f"kernel mismatch, max abs err = {float(jnp.max(jnp.abs(y - y_ref)))}")

    # Forced H-tiling path (exercises the halo / multi-tile grid).
    y_t = jax.block_until_ready(upsample_forward(x, w, b, row_tile=4))
    if not bool(jnp.allclose(y_t, y_ref, rtol=1e-3, atol=1e-3)):
        raise AssertionError(
            f"tiled kernel mismatch, max abs err = {float(jnp.max(jnp.abs(y_t - y_ref)))}")

    print("KERNEL_OK")
</pallas_src>

<mosaic_0001>
module attributes {stable_mosaic.version = 11 : i64} {
  func.func @_upsample_conv_kernel(%arg0: i32, %arg1: i32, %arg2: memref<1x16x16x4xf32, #tpu.memory_space<vmem>>, %arg3: memref<1x1x2x16x4xf32, #tpu.memory_space<vmem>>, %arg4: memref<2x2x4x4x4xf32, #tpu.memory_space<vmem>>, %arg5: memref<1x8xf32, #tpu.memory_space<vmem>>, %arg6: memref<1x16x2x16x8xf32, #tpu.memory_space<vmem>>, %arg7: memref<18x24x4xf32, #tpu.memory_space<vmem>>) attributes {dimension_semantics = [#tpu.dimension_semantics<parallel>, #tpu.dimension_semantics<parallel>], iteration_bounds = array<i64: 2, 1>, scalar_prefetch = 0 : i64, scratch_operands = 1 : i64, tpu.core_type = #tpu.core_type<tc>, window_params = [{transform_indices = @transform_0, window_bounds = array<i64: 1, 16, 16, 4>}, {transform_indices = @transform_1, window_bounds = array<i64: 1, 1, 2, 16, 4>}, {pipeline_mode = #tpu.pipeline_mode<synchronous>, transform_indices = @transform_2, window_bounds = array<i64: 2, 2, 4, 4, 4>}, {pipeline_mode = #tpu.pipeline_mode<synchronous>, transform_indices = @transform_3, window_bounds = array<i64: 1, 8>}, {transform_indices = @transform_4, window_bounds = array<i64: 1, 16, 2, 16, 8>}]} {
    %cst = arith.constant 0.000000e+00 : f32
    %0 = vector.broadcast %cst : f32 to vector<18x1x4xf32>
    %c0 = arith.constant 0 : index
    %c0_0 = arith.constant 0 : index
    %c0_1 = arith.constant 0 : index
    %1 = vector.load %arg7[%c0, %c0_0, %c0_1] : memref<18x24x4xf32, #tpu.memory_space<vmem>>, vector<18x1x4xf32>
    tpu.vector_store %arg7[%c0, %c0_0, %c0_1], %0 {strides = array<i32>} : memref<18x24x4xf32, #tpu.memory_space<vmem>>, vector<18x1x4xf32>,
    %c0_2 = arith.constant 0 : index
    %c17 = arith.constant 17 : index
    %c0_3 = arith.constant 0 : index
    %2 = vector.load %arg7[%c0_2, %c17, %c0_3] : memref<18x24x4xf32, #tpu.memory_space<vmem>>, vector<18x1x4xf32>
    tpu.vector_store %arg7[%c0_2, %c17, %c0_3], %0 {strides = array<i32>} : memref<18x24x4xf32, #tpu.memory_space<vmem>>, vector<18x1x4xf32>,
    %c0_4 = arith.constant 0 : index
    %c0_5 = arith.constant 0 : index
    %c0_6 = arith.constant 0 : index
    %c0_7 = arith.constant 0 : index
    %c0_8 = arith.constant 0 : index
    %3 = vector.load %arg3[%c0_4, %c0_5, %c0_6, %c0_7, %c0_8] : memref<1x1x2x16x4xf32, #tpu.memory_space<vmem>>, vector<1x1x1x16x4xf32>
    %4 = vector.shape_cast %3 : vector<1x1x1x16x4xf32> to vector<16x4xf32>
    %c0_9 = arith.constant 0 : index
    %c1 = arith.constant 1 : index
    %c0_10 = arith.constant 0 : index
    %5 = vector.load %arg7[%c0_9, %c1, %c0_10] : memref<18x24x4xf32, #tpu.memory_space<vmem>>, vector<1x16x4xf32>
    %6 = vector.shape_cast %5 : vector<1x16x4xf32> to vector<16x4xf32>
    %7 = vector.shape_cast %4 : vector<16x4xf32> to vector<1x16x4xf32>
    tpu.vector_store %arg7[%c0_9, %c1, %c0_10], %7 {strides = array<i32>} : memref<18x24x4xf32, #tpu.memory_space<vmem>>, vector<1x16x4xf32>,
    %c0_11 = arith.constant 0 : index
    %c0_12 = arith.constant 0 : index
    %c1_13 = arith.constant 1 : index
    %c0_14 = arith.constant 0 : index
    %c0_15 = arith.constant 0 : index
    %8 = vector.load %arg3[%c0_11, %c0_12, %c1_13, %c0_14, %c0_15] : memref<1x1x2x16x4xf32, #tpu.memory_space<vmem>>, vector<1x1x1x16x4xf32>
    %9 = vector.shape_cast %8 : vector<1x1x1x16x4xf32> to vector<16x4xf32>
    %c17_16 = arith.constant 17 : index
    %c1_17 = arith.constant 1 : index
    %c0_18 = arith.constant 0 : index
    %10 = vector.load %arg7[%c17_16, %c1_17, %c0_18] : memref<18x24x4xf32, #tpu.memory_space<vmem>>, vector<1x16x4xf32>
    %11 = vector.shape_cast %10 : vector<1x16x4xf32> to vector<16x4xf32>
    %12 = vector.shape_cast %9 : vector<16x4xf32> to vector<1x16x4xf32>
    tpu.vector_store %arg7[%c17_16, %c1_17, %c0_18], %12 {strides = array<i32>} : memref<18x24x4xf32, #tpu.memory_space<vmem>>, vector<1x16x4xf32>,
    %c0_19 = arith.constant 0 : index
    %c0_20 = arith.constant 0 : index
    %c0_21 = arith.constant 0 : index
    %c0_22 = arith.constant 0 : index
    %13 = vector.load %arg2[%c0_19, %c0_20, %c0_21, %c0_22] : memref<1x16x16x4xf32, #tpu.memory_space<vmem>>, vector<1x16x16x4xf32>
    %14 = vector.shape_cast %13 : vector<1x16x16x4xf32> to vector<16x16x4xf32>
    %c1_23 = arith.constant 1 : index
    %c1_24 = arith.constant 1 : index
    %c0_25 = arith.constant 0 : index
    %15 = vector.load %arg7[%c1_23, %c1_24, %c0_25] : memref<18x24x4xf32, #tpu.memory_space<vmem>>, vector<16x16x4xf32>
    tpu.vector_store %arg7[%c1_23, %c1_24, %c0_25], %14 {strides = array<i32>} : memref<18x24x4xf32, #tpu.memory_space<vmem>>, vector<16x16x4xf32>,
    %c0_26 = arith.constant 0 : index
    %c0_27 = arith.constant 0 : index
    %16 = vector.load %arg5[%c0_26, %c0_27] : memref<1x8xf32, #tpu.memory_space<vmem>>, vector<1x8xf32>
    %cst_28 = arith.constant 0.000000e+00 : f32
    %17 = vector.broadcast %cst_28 : f32 to vector<256x4xf32>
    %c0_29 = arith.constant 0 : index
    %c0_30 = arith.constant 0 : index
    %c0_31 = arith.constant 0 : index
    %18 = vector.load %arg7[%c0_29, %c0_30, %c0_31] : memref<18x24x4xf32, #tpu.memory_space<vmem>>, vector<16x16x4xf32>
    %19 = vector.shape_cast %18 : vector<16x16x4xf32> to vector<256x4xf32>
    %c0_32 = arith.constant 0 : index
    %c0_33 = arith.constant 0 : index
    %c0_34 = arith.constant 0 : index
    %c0_35 = arith.constant 0 : index
    %c0_36 = arith.constant 0 : index
    %20 = vector.load %arg4[%c0_32, %c0_33, %c0_34, %c0_35, %c0_36] : memref<2x2x4x4x4xf32, #tpu.memory_space<vmem>>, vector<1x1x1x4x4xf32>
    %21 = vector.shape_cast %20 : vector<1x1x1x4x4xf32> to vector<4x4xf32>
    %cst_37 = arith.constant dense<0.000000e+00> : vector<256x4xf32>
    %22 = tpu.matmul %19, %21, %cst_37 {dimension_numbers = #tpu.dot_dimension_numbers<[1], [0], [0], [1], [0, 0, 1, 1], [], []>} : vector<256x4xf32>, vector<4x4xf32>, vector<256x4xf32> -> vector<256x4xf32>
    %23 = arith.addf %17, %22 : vector<256x4xf32>
    %c0_38 = arith.constant 0 : index
    %c1_39 = arith.constant 1 : index
    %c0_40 = arith.constant 0 : index
    %24 = vector.load %arg7[%c0_38, %c1_39, %c0_40] : memref<18x24x4xf32, #tpu.memory_space<vmem>>, vector<16x16x4xf32>
    %25 = vector.shape_cast %24 : vector<16x16x4xf32> to vector<256x4xf32>
    %c0_41 = arith.constant 0 : index
    %c0_42 = arith.constant 0 : index
    %c1_43 = arith.constant 1 : index
    %c0_44 = arith.constant 0 : index
    %c0_45 = arith.constant 0 : index
    %26 = vector.load %arg4[%c0_41, %c0_42, %c1_43, %c0_44, %c0_45] : memref<2x2x4x4x4xf32, #tpu.memory_space<vmem>>, vector<1x1x1x4x4xf32>
    %27 = vector.shape_cast %26 : vector<1x1x1x4x4xf32> to vector<4x4xf32>
    %cst_46 = arith.constant dense<0.000000e+00> : vector<256x4xf32>
    %28 = tpu.matmul %25, %27, %cst_46 {dimension_numbers = #tpu.dot_dimension_numbers<[1], [0], [0], [1], [0, 0, 1, 1], [], []>} : vector<256x4xf32>, vector<4x4xf32>, vector<256x4xf32> -> vector<256x4xf32>
    %29 = arith.addf %23, %28 : vector<256x4xf32>
    %c1_47 = arith.constant 1 : index
    %c0_48 = arith.constant 0 : index
    %c0_49 = arith.constant 0 : index
    %30 = vector.load %arg7[%c1_47, %c0_48, %c0_49] : memref<18x24x4xf32, #tpu.memory_space<vmem>>, vector<16x16x4xf32>
    %31 = vector.shape_cast %30 : vector<16x16x4xf32> to vector<256x4xf32>
    %c0_50 = arith.constant 0 : index
    %c0_51 = arith.constant 0 : index
    %c2 = arith.constant 2 : index
    %c0_52 = arith.constant 0 : index
    %c0_53 = arith.constant 0 : index
    %32 = vector.load %arg4[%c0_50, %c0_51, %c2, %c0_52, %c0_53] : memref<2x2x4x4x4xf32, #tpu.memory_space<vmem>>, vector<1x1x1x4x4xf32>
    %33 = vector.shape_cast %32 : vector<1x1x1x4x4xf32> to vector<4x4xf32>
    %cst_54 = arith.constant dense<0.000000e+00> : vector<256x4xf32>
    %34 = tpu.matmul %31, %33, %cst_54 {dimension_numbers = #tpu.dot_dimension_numbers<[1], [0], [0], [1], [0, 0, 1, 1], [], []>} : vector<256x4xf32>, vector<4x4xf32>, vector<256x4xf32> -> vector<256x4xf32>
    %35 = arith.addf %29, %34 : vector<256x4xf32>
    %c1_55 = arith.constant 1 : index
    %c1_56 = arith.constant 1 : index
    %c0_57 = arith.constant 0 : index
    %36 = vector.load %arg7[%c1_55, %c1_56, %c0_57] : memref<18x24x4xf32, #tpu.memory_space<vmem>>, vector<16x16x4xf32>
    %37 = vector.shape_cast %36 : vector<16x16x4xf32> to vector<256x4xf32>
    %c0_58 = arith.constant 0 : index
    %c0_59 = arith.constant 0 : index
    %c3 = arith.constant 3 : index
    %c0_60 = arith.constant 0 : index
    %c0_61 = arith.constant 0 : index
    %38 = vector.load %arg4[%c0_58, %c0_59, %c3, %c0_60, %c0_61] : memref<2x2x4x4x4xf32, #tpu.memory_space<vmem>>, vector<1x1x1x4x4xf32>
    %39 = vector.shape_cast %38 : vector<1x1x1x4x4xf32> to vector<4x4xf32>
    %cst_62 = arith.constant dense<0.000000e+00> : vector<256x4xf32>
    %40 = tpu.matmul %37, %39, %cst_62 {dimension_numbers = #tpu.dot_dimension_numbers<[1], [0], [0], [1], [0, 0, 1, 1], [], []>} : vector<256x4xf32>, vector<4x4xf32>, vector<256x4xf32> -> vector<256x4xf32>
    %41 = arith.addf %35, %40 : vector<256x4xf32>
    %cst_63 = arith.constant 0.000000e+00 : f32
    %42 = vector.broadcast %cst_63 : f32 to vector<256x4xf32>
    %c0_64 = arith.constant 0 : index
    %c1_65 = arith.constant 1 : index
    %c0_66 = arith.constant 0 : index
    %43 = vector.load %arg7[%c0_64, %c1_65, %c0_66] : memref<18x24x4xf32, #tpu.memory_space<vmem>>, vector<16x16x4xf32>
    %44 = vector.shape_cast %43 : vector<16x16x4xf32> to vector<256x4xf32>
    %c0_67 = arith.constant 0 : index
    %c1_68 = arith.constant 1 : index
    %c0_69 = arith.constant 0 : index
    %c0_70 = arith.constant 0 : index
    %c0_71 = arith.constant 0 : index
    %45 = vector.load %arg4[%c0_67, %c1_68, %c0_69, %c0_70, %c0_71] : memref<2x2x4x4x4xf32, #tpu.memory_space<vmem>>, vector<1x1x1x4x4xf32>
    %46 = vector.shape_cast %45 : vector<1x1x1x4x4xf32> to vector<4x4xf32>
    %cst_72 = arith.constant dense<0.000000e+00> : vector<256x4xf32>
    %47 = tpu.matmul %44, %46, %cst_72 {dimension_numbers = #tpu.dot_dimension_numbers<[1], [0], [0], [1], [0, 0, 1, 1], [], []>} : vector<256x4xf32>, vector<4x4xf32>, vector<256x4xf32> -> vector<256x4xf32>
    %48 = arith.addf %42, %47 : vector<256x4xf32>
    %c0_73 = arith.constant 0 : index
    %c2_74 = arith.constant 2 : index
    %c0_75 = arith.constant 0 : index
    %49 = vector.load %arg7[%c0_73, %c2_74, %c0_75] : memref<18x24x4xf32, #tpu.memory_space<vmem>>, vector<16x16x4xf32>
    %50 = vector.shape_cast %49 : vector<16x16x4xf32> to vector<256x4xf32>
    %c0_76 = arith.constant 0 : index
    %c1_77 = arith.constant 1 : index
    %c1_78 = arith.constant 1 : index
    %c0_79 = arith.constant 0 : index
    %c0_80 = arith.constant 0 : index
    %51 = vector.load %arg4[%c0_76, %c1_77, %c1_78, %c0_79, %c0_80] : memref<2x2x4x4x4xf32, #tpu.memory_space<vmem>>, vector<1x1x1x4x4xf32>
    %52 = vector.shape_cast %51 : vector<1x1x1x4x4xf32> to vector<4x4xf32>
    %cst_81 = arith.constant dense<0.000000e+00> : vector<256x4xf32>
    %53 = tpu.matmul %50, %52, %cst_81 {dimension_numbers = #tpu.dot_dimension_numbers<[1], [0], [0], [1], [0, 0, 1, 1], [], []>} : vector<256x4xf32>, vector<4x4xf32>, vector<256x4xf32> -> vector<256x4xf32>
    %54 = arith.addf %48, %53 : vector<256x4xf32>
    %c1_82 = arith.constant 1 : index
    %c1_83 = arith.constant 1 : index
    %c0_84 = arith.constant 0 : index
    %55 = vector.load %arg7[%c1_82, %c1_83, %c0_84] : memref<18x24x4xf32, #tpu.memory_space<vmem>>, vector<16x16x4xf32>
    %56 = vector.shape_cast %55 : vector<16x16x4xf32> to vector<256x4xf32>
    %c0_85 = arith.constant 0 : index
    %c1_86 = arith.constant 1 : index
    %c2_87 = arith.constant 2 : index
    %c0_88 = arith.constant 0 : index
    %c0_89 = arith.constant 0 : index
    %57 = vector.load %arg4[%c0_85, %c1_86, %c2_87, %c0_88, %c0_89] : memref<2x2x4x4x4xf32, #tpu.memory_space<vmem>>, vector<1x1x1x4x4xf32>
    %58 = vector.shape_cast %57 : vector<1x1x1x4x4xf32> to vector<4x4xf32>
    %cst_90 = arith.constant dense<0.000000e+00> : vector<256x4xf32>
    %59 = tpu.matmul %56, %58, %cst_90 {dimension_numbers = #tpu.dot_dimension_numbers<[1], [0], [0], [1], [0, 0, 1, 1], [], []>} : vector<256x4xf32>, vector<4x4xf32>, vector<256x4xf32> -> vector<256x4xf32>
    %60 = arith.addf %54, %59 : vector<256x4xf32>
    %c1_91 = arith.constant 1 : index
    %c2_92 = arith.constant 2 : index
    %c0_93 = arith.constant 0 : index
    %61 = vector.load %arg7[%c1_91, %c2_92, %c0_93] : memref<18x24x4xf32, #tpu.memory_space<vmem>>, vector<16x16x4xf32>
    %62 = vector.shape_cast %61 : vector<16x16x4xf32> to vector<256x4xf32>
    %c0_94 = arith.constant 0 : index
    %c1_95 = arith.constant 1 : index
    %c3_96 = arith.constant 3 : index
    %c0_97 = arith.constant 0 : index
    %c0_98 = arith.constant 0 : index
    %63 = vector.load %arg4[%c0_94, %c1_95, %c3_96, %c0_97, %c0_98] : memref<2x2x4x4x4xf32, #tpu.memory_space<vmem>>, vector<1x1x1x4x4xf32>
    %64 = vector.shape_cast %63 : vector<1x1x1x4x4xf32> to vector<4x4xf32>
    %cst_99 = arith.constant dense<0.000000e+00> : vector<256x4xf32>
    %65 = tpu.matmul %62, %64, %cst_99 {dimension_numbers = #tpu.dot_dimension_numbers<[1], [0], [0], [1], [0, 0, 1, 1], [], []>} : vector<256x4xf32>, vector<4x4xf32>, vector<256x4xf32> -> vector<256x4xf32>
    %66 = arith.addf %60, %65 : vector<256x4xf32>
    %67 = tpu.concatenate %41, %66 in 1 : vector<256x4xf32>, vector<256x4xf32> -> vector<256x8xf32>
    %68 = vector.broadcast %16 : vector<1x8xf32> to vector<256x8xf32>
    %69 = arith.addf %67, %68 : vector<256x8xf32>
    %70 = vector.shape_cast %69 : vector<256x8xf32> to vector<16x16x8xf32>
    %c0_100 = arith.constant 0 : index
    %c0_101 = arith.constant 0 : index
    %c0_102 = arith.constant 0 : index
    %c0_103 = arith.constant 0 : index
    %c0_104 = arith.constant 0 : index
    %71 = vector.load %arg6[%c0_100, %c0_101, %c0_102, %c0_103, %c0_104] : memref<1x16x2x16x8xf32, #tpu.memory_space<vmem>>, vector<1x16x1x16x8xf32>
    %72 = vector.shape_cast %71 : vector<1x16x1x16x8xf32> to vector<16x16x8xf32>
    %73 = vector.shape_cast %70 : vector<16x16x8xf32> to vector<1x16x1x16x8xf32>
    tpu.vector_store %arg6[%c0_100, %c0_101, %c0_102, %c0_103, %c0_104], %73 {strides = array<i32>} : memref<1x16x2x16x8xf32, #tpu.memory_space<vmem>>, vector<1x16x1x16x8xf32>,
    %cst_105 = arith.constant 0.000000e+00 : f32
    %74 = vector.broadcast %cst_105 : f32 to vector<256x4xf32>
    %c1_106 = arith.constant 1 : index
    %c0_107 = arith.constant 0 : index
    %c0_108 = arith.constant 0 : index
    %75 = vector.load %arg7[%c1_106, %c0_107, %c0_108] : memref<18x24x4xf32, #tpu.memory_space<vmem>>, vector<16x16x4xf32>
    %76 = vector.shape_cast %75 : vector<16x16x4xf32> to vector<256x4xf32>
    %c1_109 = arith.constant 1 : index
    %c0_110 = arith.constant 0 : index
    %c0_111 = arith.constant 0 : index
    %c0_112 = arith.constant 0 : index
    %c0_113 = arith.constant 0 : index
    %77 = vector.load %arg4[%c1_109, %c0_110, %c0_111, %c0_112, %c0_113] : memref<2x2x4x4x4xf32, #tpu.memory_space<vmem>>, vector<1x1x1x4x4xf32>
    %78 = vector.shape_cast %77 : vector<1x1x1x4x4xf32> to vector<4x4xf32>
    %cst_114 = arith.constant dense<0.000000e+00> : vector<256x4xf32>
    %79 = tpu.matmul %76, %78, %cst_114 {dimension_numbers = #tpu.dot_dimension_numbers<[1], [0], [0], [1], [0, 0, 1, 1], [], []>} : vector<256x4xf32>, vector<4x4xf32>, vector<256x4xf32> -> vector<256x4xf32>
    %80 = arith.addf %74, %79 : vector<256x4xf32>
    %c1_115 = arith.constant 1 : index
    %c1_116 = arith.constant 1 : index
    %c0_117 = arith.constant 0 : index
    %81 = vector.load %arg7[%c1_115, %c1_116, %c0_117] : memref<18x24x4xf32, #tpu.memory_space<vmem>>, vector<16x16x4xf32>
    %82 = vector.shape_cast %81 : vector<16x16x4xf32> to vector<256x4xf32>
    %c1_118 = arith.constant 1 : index
    %c0_119 = arith.constant 0 : index
    %c1_120 = arith.constant 1 : index
    %c0_121 = arith.constant 0 : index
    %c0_122 = arith.constant 0 : index
    %83 = vector.load %arg4[%c1_118, %c0_119, %c1_120, %c0_121, %c0_122] : memref<2x2x4x4x4xf32, #tpu.memory_space<vmem>>, vector<1x1x1x4x4xf32>
    %84 = vector.shape_cast %83 : vector<1x1x1x4x4xf32> to vector<4x4xf32>
    %cst_123 = arith.constant dense<0.000000e+00> : vector<256x4xf32>
    %85 = tpu.matmul %82, %84, %cst_123 {dimension_numbers = #tpu.dot_dimension_numbers<[1], [0], [0], [1], [0, 0, 1, 1], [], []>} : vector<256x4xf32>, vector<4x4xf32>, vector<256x4xf32> -> vector<256x4xf32>
    %86 = arith.addf %80, %85 : vector<256x4xf32>
    %c2_124 = arith.constant 2 : index
    %c0_125 = arith.constant 0 : index
    %c0_126 = arith.constant 0 : index
    %87 = vector.load %arg7[%c2_124, %c0_125, %c0_126] : memref<18x24x4xf32, #tpu.memory_space<vmem>>, vector<16x16x4xf32>
    %88 = vector.shape_cast %87 : vector<16x16x4xf32> to vector<256x4xf32>
    %c1_127 = arith.constant 1 : index
    %c0_128 = arith.constant 0 : index
    %c2_129 = arith.constant 2 : index
    %c0_130 = arith.constant 0 : index
    %c0_131 = arith.constant 0 : index
    %89 = vector.load %arg4[%c1_127, %c0_128, %c2_129, %c0_130, %c0_131] : memref<2x2x4x4x4xf32, #tpu.memory_space<vmem>>, vector<1x1x1x4x4xf32>
    %90 = vector.shape_cast %89 : vector<1x1x1x4x4xf32> to vector<4x4xf32>
    %cst_132 = arith.constant dense<0.000000e+00> : vector<256x4xf32>
    %91 = tpu.matmul %88, %90, %cst_132 {dimension_numbers = #tpu.dot_dimension_numbers<[1], [0], [0], [1], [0, 0, 1, 1], [], []>} : vector<256x4xf32>, vector<4x4xf32>, vector<256x4xf32> -> vector<256x4xf32>
    %92 = arith.addf %86, %91 : vector<256x4xf32>
    %c2_133 = arith.constant 2 : index
    %c1_134 = arith.constant 1 : index
    %c0_135 = arith.constant 0 : index
    %93 = vector.load %arg7[%c2_133, %c1_134, %c0_135] : memref<18x24x4xf32, #tpu.memory_space<vmem>>, vector<16x16x4xf32>
    %94 = vector.shape_cast %93 : vector<16x16x4xf32> to vector<256x4xf32>
    %c1_136 = arith.constant 1 : index
    %c0_137 = arith.constant 0 : index
    %c3_138 = arith.constant 3 : index
    %c0_139 = arith.constant 0 : index
    %c0_140 = arith.constant 0 : index
    %95 = vector.load %arg4[%c1_136, %c0_137, %c3_138, %c0_139, %c0_140] : memref<2x2x4x4x4xf32, #tpu.memory_space<vmem>>, vector<1x1x1x4x4xf32>
    %96 = vector.shape_cast %95 : vector<1x1x1x4x4xf32> to vector<4x4xf32>
    %cst_141 = arith.constant dense<0.000000e+00> : vector<256x4xf32>
    %97 = tpu.matmul %94, %96, %cst_141 {dimension_numbers = #tpu.dot_dimension_numbers<[1], [0], [0], [1], [0, 0, 1, 1], [], []>} : vector<256x4xf32>, vector<4x4xf32>, vector<256x4xf32> -> vector<256x4xf32>
    %98 = arith.addf %92, %97 : vector<256x4xf32>
    %cst_142 = arith.constant 0.000000e+00 : f32
    %99 = vector.broadcast %cst_142 : f32 to vector<256x4xf32>
    %c1_143 = arith.constant 1 : index
    %c1_144 = arith.constant 1 : index
    %c0_145 = arith.constant 0 : index
    %100 = vector.load %arg7[%c1_143, %c1_144, %c0_145] : memref<18x24x4xf32, #tpu.memory_space<vmem>>, vector<16x16x4xf32>
    %101 = vector.shape_cast %100 : vector<16x16x4xf32> to vector<256x4xf32>
    %c1_146 = arith.constant 1 : index
    %c1_147 = arith.constant 1 : index
    %c0_148 = arith.constant 0 : index
    %c0_149 = arith.constant 0 : index
    %c0_150 = arith.constant 0 : index
    %102 = vector.load %arg4[%c1_146, %c1_147, %c0_148, %c0_149, %c0_150] : memref<2x2x4x4x4xf32, #tpu.memory_space<vmem>>, vector<1x1x1x4x4xf32>
    %103 = vector.shape_cast %102 : vector<1x1x1x4x4xf32> to vector<4x4xf32>
    %cst_151 = arith.constant dense<0.000000e+00> : vector<256x4xf32>
    %104 = tpu.matmul %101, %103, %cst_151 {dimension_numbers = #tpu.dot_dimension_numbers<[1], [0], [0], [1], [0, 0, 1, 1], [], []>} : vector<256x4xf32>, vector<4x4xf32>, vector<256x4xf32> -> vector<256x4xf32>
    %105 = arith.addf %99, %104 : vector<256x4xf32>
    %c1_152 = arith.constant 1 : index
    %c2_153 = arith.constant 2 : index
    %c0_154 = arith.constant 0 : index
    %106 = vector.load %arg7[%c1_152, %c2_153, %c0_154] : memref<18x24x4xf32, #tpu.memory_space<vmem>>, vector<16x16x4xf32>
    %107 = vector.shape_cast %106 : vector<16x16x4xf32> to vector<256x4xf32>
    %c1_155 = arith.constant 1 : index
    %c1_156 = arith.constant 1 : index
    %c1_157 = arith.constant 1 : index
    %c0_158 = arith.constant 0 : index
    %c0_159 = arith.constant 0 : index
    %108 = vector.load %arg4[%c1_155, %c1_156, %c1_157, %c0_158, %c0_159] : memref<2x2x4x4x4xf32, #tpu.memory_space<vmem>>, vector<1x1x1x4x4xf32>
    %109 = vector.shape_cast %108 : vector<1x1x1x4x4xf32> to vector<4x4xf32>
    %cst_160 = arith.constant dense<0.000000e+00> : vector<256x4xf32>
    %110 = tpu.matmul %107, %109, %cst_160 {dimension_numbers = #tpu.dot_dimension_numbers<[1], [0], [0], [1], [0, 0, 1, 1], [], []>} : vector<256x4xf32>, vector<4x4xf32>, vector<256x4xf32> -> vector<256x4xf32>
    %111 = arith.addf %105, %110 : vector<256x4xf32>
    %c2_161 = arith.constant 2 : index
    %c1_162 = arith.constant 1 : index
    %c0_163 = arith.constant 0 : index
    %112 = vector.load %arg7[%c2_161, %c1_162, %c0_163] : memref<18x24x4xf32, #tpu.memory_space<vmem>>, vector<16x16x4xf32>
    %113 = vector.shape_cast %112 : vector<16x16x4xf32> to vector<256x4xf32>
    %c1_164 = arith.constant 1 : index
    %c1_165 = arith.constant 1 : index
    %c2_166 = arith.constant 2 : index
    %c0_167 = arith.constant 0 : index
    %c0_168 = arith.constant 0 : index
    %114 = vector.load %arg4[%c1_164, %c1_165, %c2_166, %c0_167, %c0_168] : memref<2x2x4x4x4xf32, #tpu.memory_space<vmem>>, vector<1x1x1x4x4xf32>
    %115 = vector.shape_cast %114 : vector<1x1x1x4x4xf32> to vector<4x4xf32>
    %cst_169 = arith.constant dense<0.000000e+00> : vector<256x4xf32>
    %116 = tpu.matmul %113, %115, %cst_169 {dimension_numbers = #tpu.dot_dimension_numbers<[1], [0], [0], [1], [0, 0, 1, 1], [], []>} : vector<256x4xf32>, vector<4x4xf32>, vector<256x4xf32> -> vector<256x4xf32>
    %117 = arith.addf %111, %116 : vector<256x4xf32>
    %c2_170 = arith.constant 2 : index
    %c2_171 = arith.constant 2 : index
    %c0_172 = arith.constant 0 : index
    %118 = vector.load %arg7[%c2_170, %c2_171, %c0_172] : memref<18x24x4xf32, #tpu.memory_space<vmem>>, vector<16x16x4xf32>
    %119 = vector.shape_cast %118 : vector<16x16x4xf32> to vector<256x4xf32>
    %c1_173 = arith.constant 1 : index
    %c1_174 = arith.constant 1 : index
    %c3_175 = arith.constant 3 : index
    %c0_176 = arith.constant 0 : index
    %c0_177 = arith.constant 0 : index
    %120 = vector.load %arg4[%c1_173, %c1_174, %c3_175, %c0_176, %c0_177] : memref<2x2x4x4x4xf32, #tpu.memory_space<vmem>>, vector<1x1x1x4x4xf32>
    %121 = vector.shape_cast %120 : vector<1x1x1x4x4xf32> to vector<4x4xf32>
    %cst_178 = arith.constant dense<0.000000e+00> : vector<256x4xf32>
    %122 = tpu.matmul %119, %121, %cst_178 {dimension_numbers = #tpu.dot_dimension_numbers<[1], [0], [0], [1], [0, 0, 1, 1], [], []>} : vector<256x4xf32>, vector<4x4xf32>, vector<256x4xf32> -> vector<256x4xf32>
    %123 = arith.addf %117, %122 : vector<256x4xf32>
    %124 = tpu.concatenate %98, %123 in 1 : vector<256x4xf32>, vector<256x4xf32> -> vector<256x8xf32>
    %125 = vector.broadcast %16 : vector<1x8xf32> to vector<256x8xf32>
    %126 = arith.addf %124, %125 : vector<256x8xf32>
    %127 = vector.shape_cast %126 : vector<256x8xf32> to vector<16x16x8xf32>
    %c0_179 = arith.constant 0 : index
    %c0_180 = arith.constant 0 : index
    %c1_181 = arith.constant 1 : index
    %c0_182 = arith.constant 0 : index
    %c0_183 = arith.constant 0 : index
    %128 = vector.load %arg6[%c0_179, %c0_180, %c1_181, %c0_182, %c0_183] : memref<1x16x2x16x8xf32, #tpu.memory_space<vmem>>, vector<1x16x1x16x8xf32>
    %129 = vector.shape_cast %128 : vector<1x16x1x16x8xf32> to vector<16x16x8xf32>
    %130 = vector.shape_cast %127 : vector<16x16x8xf32> to vector<1x16x1x16x8xf32>
    tpu.vector_store %arg6[%c0_179, %c0_180, %c1_181, %c0_182, %c0_183], %130 {strides = array<i32>} : memref<1x16x2x16x8xf32, #tpu.memory_space<vmem>>, vector<1x16x1x16x8xf32>,
    return
  }
  func.func @transform_0(%arg0: i32, %arg1: i32) -> (i32, i32, i32, i32) {
    %c0_i32 = arith.constant 0 : i32
    %c0_i32_0 = arith.constant 0 : i32
    %c0_i32_1 = arith.constant 0 : i32
    return %arg0, %arg1, %c0_i32, %c0_i32_0 : i32, i32, i32, i32
  }
  func.func @transform_1(%arg0: i32, %arg1: i32) -> (i32, i32, i32, i32, i32) {
    %c0_i32 = arith.constant 0 : i32
    %c0_i32_0 = arith.constant 0 : i32
    %c0_i32_1 = arith.constant 0 : i32
    %c0_i32_2 = arith.constant 0 : i32
    return %arg0, %arg1, %c0_i32, %c0_i32_0, %c0_i32_1 : i32, i32, i32, i32, i32
  }
  func.func @transform_2(%arg0: i32, %arg1: i32) -> (i32, i32, i32, i32, i32) {
    %c0_i32 = arith.constant 0 : i32
    %c0_i32_0 = arith.constant 0 : i32
    %c0_i32_1 = arith.constant 0 : i32
    %c0_i32_2 = arith.constant 0 : i32
    %c0_i32_3 = arith.constant 0 : i32
    %c0_i32_4 = arith.constant 0 : i32
    return %c0_i32, %c0_i32_0, %c0_i32_1, %c0_i32_2, %c0_i32_3 : i32, i32, i32, i32, i32
  }
  func.func @transform_3(%arg0: i32, %arg1: i32) -> (i32, i32) {
    %c0_i32 = arith.constant 0 : i32
    %c0_i32_0 = arith.constant 0 : i32
    %c0_i32_1 = arith.constant 0 : i32
    return %c0_i32, %c0_i32_0 : i32, i32
  }
  func.func @transform_4(%arg0: i32, %arg1: i32) -> (i32, i32, i32, i32, i32) {
    %c0_i32 = arith.constant 0 : i32
    %c0_i32_0 = arith.constant 0 : i32
    %c0_i32_1 = arith.constant 0 : i32
    %c0_i32_2 = arith.constant 0 : i32
    return %arg0, %arg1, %c0_i32, %c0_i32_0, %c0_i32_1 : i32, i32, i32, i32, i32
  }
}

</mosaic_0001>

<llo_original>
// kernel: tpu_custom_call.1
$region0: #{tpu_custom_call.1}
  #allocation0 [shape = 'u32[]', space=smem, size = 0x4, offset = 0x4, fixed_abs, tag = 'smem constant byte address 0x4 - core index']
  #allocation1 [shape = 'u32[144,128]{1,0:T(1,128)}', space=vmem, size = 0x12000, scoped, tag = 'internal scratch']
  #allocation2 [shape = 'f32[18,24,4]{2,1,0:T(8,128)}', space=vmem, size = 0x36000, scoped, tag = 'scratch operand']
  %s0 = inlined_call_operand.hbm [shape: f32[2,16,16,4], index: 0, kind: input, shape index: {}]
  %s1 = inlined_call_operand.hbm [shape: f32[2,1,2,16,4], index: 1, kind: input, shape index: {}]
  %s2 = inlined_call_operand.hbm [shape: f32[2,2,4,4,4], index: 2, kind: input, shape index: {}]
  %s3 = inlined_call_operand.hbm [shape: f32[1,8], index: 3, kind: input, shape index: {}]
  %s4 = inlined_call_operand.hbm [shape: f32[2,16,2,16,8], index: 4, kind: output, shape index: {}]
  %s5 = sld [smem:[#allocation0]]
  $region65: #{tpu_custom_call.1} parent=0
    _
  %s7 = ssub.s32 1, %s5
  %s8 = scalar_select 0, %s7, %s5
  $region1: #{tpu_custom_call.1} parent=0
    #allocation3 [shape = 'u8[262144]{0}', space=vmem, size = 0x40000, scoped, tag = 'input window, operand 0']
    #allocation4 [shape = 's32[2]{0}', space=sflag, size = 0x8, scoped, tag = 'scoped memory for tpu_custom_call.1']
    #allocation5 [shape = 's32[2]{0}', space=sflag, size = 0x8, scoped, tag = 'scoped memory for tpu_custom_call.1']
    #allocation6 [shape = 'u8[32768]{0}', space=vmem, size = 0x8000, scoped, tag = 'input window, operand 1']
    #allocation7 [shape = 's32[2]{0}', space=sflag, size = 0x8, scoped, tag = 'scoped memory for tpu_custom_call.1']
    #allocation8 [shape = 'u8[32768]{0}', space=vmem, size = 0x8000, scoped, tag = 'input window, operand 2, single buffered']
    #allocation9 [shape = 'u8[512]{0}', space=vmem, size = 0x400, scoped, tag = 'input window, operand 3, single buffered']
    #allocation10 [shape = 's32[1]{0}', space=sflag, size = 0x4, scoped, tag = 'scoped memory for tpu_custom_call.1']
    #allocation11 [shape = 'u8[524288]{0}', space=vmem, size = 0x80000, scoped, tag = 'output window, operand 0']
    %9 = vsyncpa [#allocation4], 0
    %s10 = scalar_lea.sflag [#allocation4], 1
    %11 = vsyncpa %s10, 0
    %12 = vsyncpa [#allocation7], 0
    %s13 = scalar_lea.sflag [#allocation7], 1
    %14 = vsyncpa %s13, 0
    %15 = vsyncpa [#allocation10], 0
    %16 = vsyncpa [#allocation5], 0
    %s17 = scalar_lea.sflag [#allocation5], 1
    %18 = vsyncpa %s17, 0
    loop: start=0, step=1, limit=4
    $region2: #{tpu_custom_call.1} parent=1 // loop_pre_header
      _
    $region3: #{tpu_custom_call.1} parent=1 // loop_header
      %s20 = sphi 0, %s24
      %p21 = scmp.ge.s32.totalorder %s20, 4
      %s27 = sphi 0, %s39
      %s28 = sphi 0, %s35
      %s29 = sphi 0, %s27
      %s30 = sphi 0, %s28
      %s31 = sphi 0, %s29
      %s32 = sphi 0, %s30
      %s44 = sphi 0, %s46
      %s47 = sphi 0, %s44
      %s48 = sphi 0, %s47
      %s64 = sphi 0, %s48
      %s72 = sphi 0, %s74
      %s75 = sphi 0, %s72
      %s76 = sphi 0, %s75
      %s92 = sphi 0, %s76
      %s96 = sphi 0, %s96
      %s98 = sphi 0, %s96
      %s99 = sphi 0, %s98
      %s113 = sphi 0, %s99
      %s117 = sphi 0, %s117
      %s119 = sphi 0, %s117
      %s120 = sphi 0, %s119
      %s134 = sphi 0, %s120
      %s142 = sphi 0, %s144
      %s145 = sphi 0, %s142
      %s146 = sphi 0, %s145
      %s162 = sphi 0, %s146
    $region4: #{tpu_custom_call.1} parent=1 // loop_header_branch
      %23 = sbr.rel (%p21) target = $region8
    $region5: #{tpu_custom_call.1} parent=1 // loop_body
      %s25 = ssub.s32 %s20, 1
      %s26 = ssub.s32 %s20, 2
      %s33 = sadd.s32 1, %s28
      %p34 = scmp.ge.s32.totalorder %s33, 1
      %s35 = scalar_select %p34, 0, %s33
      %s36 = sadd.s32 1, %s27
      %s37 = scalar_select %p34, %s36, %s27
      %p38 = scmp.ge.s32.totalorder %s37, 2
      %s39 = scalar_select %p38, 0, %s37
      %s40 = ssub.s32 %s27, %s39
      %s41 = ssub.s32 %s28, %s35
      %s42 = sor.u32 %s40, %s41
      %p43 = scmp.eq.s32.totalorder %s42, 0
      %s45 = sadd.s32 %s44, 1
      %s46 = scalar_select %p43, %s44, %s45
      %p49 = pneg %p43
      %p50 = scmp.eq.s32.totalorder %s20, 1
      %p51 = por %p49, %p50
      %p52 = scmp.ne.s32.totalorder %s44, %s47
      %p53 = scmp.eq.s32.totalorder %s20, 0
      %p54 = por %p52, %p53
      %p55 = scmp.ne.s32.totalorder %s44, %s47
      %p56 = scmp.eq.s32.totalorder %s25, 1
      %p57 = por %p55, %p56
      %p58 = scmp.ne.s32.totalorder %s47, %s48
      %p59 = scmp.eq.s32.totalorder %s25, 0
      %p60 = por %p58, %p59
      %p61 = scmp.ne.s32.totalorder %s47, %s48
      %p62 = scmp.eq.s32.totalorder %s26, 1
      %p63 = por %p61, %p62
      %p65 = scmp.ne.s32.totalorder %s48, %s64
      %p66 = scmp.eq.s32.totalorder %s26, 0
      %p67 = por %p65, %p66
      %s68 = ssub.s32 %s27, %s39
      %s69 = ssub.s32 %s28, %s35
      %s70 = sor.u32 %s68, %s69
      %p71 = scmp.eq.s32.totalorder %s70, 0
      %s73 = sadd.s32 %s72, 1
      %s74 = scalar_select %p71, %s72, %s73
      %p77 = pneg %p71
      %p78 = scmp.eq.s32.totalorder %s20, 1
      %p79 = por %p77, %p78
      %p80 = scmp.ne.s32.totalorder %s72, %s75
      %p81 = scmp.eq.s32.totalorder %s20, 0
      %p82 = por %p80, %p81
      %p83 = scmp.ne.s32.totalorder %s72, %s75
      %p84 = scmp.eq.s32.totalorder %s25, 1
      %p85 = por %p83, %p84
      %p86 = scmp.ne.s32.totalorder %s75, %s76
      %p87 = scmp.eq.s32.totalorder %s25, 0
      %p88 = por %p86, %p87
      %p89 = scmp.ne.s32.totalorder %s75, %s76
      %p90 = scmp.eq.s32.totalorder %s26, 1
      %p91 = por %p89, %p90
      %p93 = scmp.ne.s32.totalorder %s76, %s92
      %p94 = scmp.eq.s32.totalorder %s26, 0
      %p95 = por %p93, %p94
      %s97 = sadd.s32 %s96, 1
      %p100 = scmp.eq.s32.totalorder %s20, 1
      %p101 = scmp.ne.s32.totalorder %s96, %s98
      %p102 = scmp.eq.s32.totalorder %s20, 0
      %p103 = por %p101, %p102
      %p104 = scmp.ne.s32.totalorder %s96, %s98
      %p105 = scmp.eq.s32.totalorder %s25, 1
      %p106 = por %p104, %p105
      %p107 = scmp.ne.s32.totalorder %s98, %s99
      %p108 = scmp.eq.s32.totalorder %s25, 0
      %p109 = por %p107, %p108
      %p110 = scmp.ne.s32.totalorder %s98, %s99
      %p111 = scmp.eq.s32.totalorder %s26, 1
      %p112 = por %p110, %p111
      %p114 = scmp.ne.s32.totalorder %s99, %s113
      %p115 = scmp.eq.s32.totalorder %s26, 0
      %p116 = por %p114, %p115
      %s118 = sadd.s32 %s117, 1
      %p121 = scmp.eq.s32.totalorder %s20, 1
      %p122 = scmp.ne.s32.totalorder %s117, %s119
      %p123 = scmp.eq.s32.totalorder %s20, 0
      %p124 = por %p122, %p123
      %p125 = scmp.ne.s32.totalorder %s117, %s119
      %p126 = scmp.eq.s32.totalorder %s25, 1
      %p127 = por %p125, %p126
      %p128 = scmp.ne.s32.totalorder %s119, %s120
      %p129 = scmp.eq.s32.totalorder %s25, 0
      %p130 = por %p128, %p129
      %p131 = scmp.ne.s32.totalorder %s119, %s120
      %p132 = scmp.eq.s32.totalorder %s26, 1
      %p133 = por %p131, %p132
      %p135 = scmp.ne.s32.totalorder %s120, %s134
      %p136 = scmp.eq.s32.totalorder %s26, 0
      %p137 = por %p135, %p136
      %s138 = ssub.s32 %s27, %s39
      %s139 = ssub.s32 %s28, %s35
      %s140 = sor.u32 %s138, %s139
      %p141 = scmp.eq.s32.totalorder %s140, 0
      %s143 = sadd.s32 %s142, 1
      %s144 = scalar_select %p141, %s142, %s143
      %p147 = pneg %p141
      %p148 = scmp.eq.s32.totalorder %s20, 1
      %p149 = por %p147, %p148
      %p150 = scmp.ne.s32.totalorder %s142, %s145
      %p151 = scmp.eq.s32.totalorder %s20, 0
      %p152 = por %p150, %p151
      %p153 = scmp.ne.s32.totalorder %s142, %s145
      %p154 = scmp.eq.s32.totalorder %s25, 1
      %p155 = por %p153, %p154
      %p156 = scmp.ne.s32.totalorder %s145, %s146
      %p157 = scmp.eq.s32.totalorder %s25, 0
      %p158 = por %p156, %p157
      %p159 = scmp.ne.s32.totalorder %s145, %s146
      %p160 = scmp.eq.s32.totalorder %s26, 1
      %p161 = por %p159, %p160
      %p163 = scmp.ne.s32.totalorder %s146, %s162
      %p164 = scmp.eq.s32.totalorder %s26, 0
      %p165 = por %p163, %p164
      %p166 = scmp.le.s32.totalorder 1, %s20
      %p167 = scmp.lt.s32.totalorder %s20, 3
      %p168 = pnand %p166, %p167
      %p169 = pneg %p168
      // Predicated region
      $region9: #{tpu_custom_call.1} parent=5 // pred_check
        _
      $region10: #{tpu_custom_call.1} parent=5 // pred_check_branch
        %171 = sbr.rel (%p168) target = $region12
      $region11: #{tpu_custom_call.1} parent=5 // pred_region
        %s172 = ssub.s32 %s20, 1
        // Predicated region
        $region13: #{tpu_custom_call.1} parent=11 // pred_check
          %p173 = pneg %p109
        $region14: #{tpu_custom_call.1} parent=11 // pred_check_branch
          %175 = sbr.rel (%p173) target = $region16
        $region15: #{tpu_custom_call.1} parent=11 // pred_region
          %s177 = ssub.s32 1024, 1024
          %178 = vsyncadd [#allocation7], %s177
          %s179 = sshll.u32 [#allocation8], 4
          %s180 = int_to_ptr.vmem [resolvable:$true] %s179
          %185 = dma.hbm_to_vmem [thread:$0]  %s2, 1024, %s180, [#allocation7], 64, 64, 4
        $region16: #{tpu_custom_call.1} parent=11 // pred_fallthru
          _
        // Predicated region
        $region17: #{tpu_custom_call.1} parent=11 // pred_check
          %p186 = pneg %p130
        $region18: #{tpu_custom_call.1} parent=11 // pred_check_branch
          %188 = sbr.rel (%p186) target = $region20
        $region19: #{tpu_custom_call.1} parent=11 // pred_region
          %s190 = ssub.s32 16, 16
          %191 = vsyncadd [#allocation10], %s190
          %s193 = sshll.u32 [#allocation9], 4
          %s194 = int_to_ptr.vmem [resolvable:$true] %s193
          %196 = dma.hbm_to_vmem [thread:$0]  %s3, 16, %s194, [#allocation10]
        $region20: #{tpu_custom_call.1} parent=11 // pred_fallthru
          _
      $region12: #{tpu_custom_call.1} parent=5 // pred_fallthru
        _
      %p197 = scmp.lt.s32.totalorder %s20, 2
      // Predicated region
      $region21: #{tpu_custom_call.1} parent=5 // pred_check
        %p198 = pneg %p197
      $region22: #{tpu_custom_call.1} parent=5 // pred_check_branch
        %200 = sbr.rel (%p198) target = $region24
      $region23: #{tpu_custom_call.1} parent=5 // pred_region
        // Predicated region
        $region25: #{tpu_custom_call.1} parent=23 // pred_check
          %p201 = pneg %p54
        $region26: #{tpu_custom_call.1} parent=23 // pred_check_branch
          %203 = sbr.rel (%p201) target = $region28
        $region27: #{tpu_custom_call.1} parent=23 // pred_region
          %s204 = sand.u32 %s44, 1
          %s205 = scalar_lea.sflag [#allocation4], %s204
          %s206 = sand.u32 %s44, 1
          %s207 = smul.addr %s206, 256
          %s208 = scalar_lea.vmem [#allocation3], %s207
          %s209 = smul.u32 16, %s28
          %s211 = ssub.s32 4096, 4096
          %212 = vsyncadd %s205, %s211
          %s213 = smul.addr %s209, 2
          %s214 = smul.addr %s27, 32
          %s215 = sadd.s32 %s213, %s214
          %s216 = smul.addr %s215, 128
          %s217 = scalar_lea.hbm %s0, %s216
          %s218 = sshll.u32 %s208, 4
          %s219 = int_to_ptr.vmem [resolvable:$true] %s218
          %224 = dma.hbm_to_vmem [thread:$0]  %s217, 4096, %s219, %s205, 128, 128, 8
        $region28: #{tpu_custom_call.1} parent=23 // pred_fallthru
          _
        // Predicated region
        $region29: #{tpu_custom_call.1} parent=23 // pred_check
          %p225 = pneg %p82
        $region30: #{tpu_custom_call.1} parent=23 // pred_check_branch
          %227 = sbr.rel (%p225) target = $region32
        $region31: #{tpu_custom_call.1} parent=23 // pred_region
          %s228 = sand.u32 %s20, 1
          %s229 = scalar_lea.sflag [#allocation7], %s228
          %s230 = sand.u32 %s72, 1
          %s231 = smul.addr %s230, 32
          %s232 = scalar_lea.vmem [#allocation6], %s231
          %s234 = ssub.s32 512, 512
          %235 = vsyncadd %s229, %s234
          %s236 = smul.addr %s28, 4
          %s237 = smul.addr %s27, 4
          %s238 = sadd.s32 %s236, %s237
          %s239 = smul.addr %s238, 128
          %s240 = scalar_lea.hbm %s1, %s239
          %s241 = sshll.u32 %s232, 4
          %s242 = int_to_ptr.vmem [resolvable:$true] %s241
          %247 = dma.hbm_to_vmem [thread:$0]  %s240, 512, %s242, %s229, 128, 128, 8
        $region32: #{tpu_custom_call.1} parent=23 // pred_fallthru
          _
      $region24: #{tpu_custom_call.1} parent=5 // pred_fallthru
        _
      %p248 = scmp.le.s32.totalorder 1, %s20
      %p249 = scmp.lt.s32.totalorder %s20, 3
      %p250 = pnand %p248, %p249
      %p251 = pneg %p250
      // Predicated region
      $region33: #{tpu_custom_call.1} parent=5 // pred_check
        _
      $region34: #{tpu_custom_call.1} parent=5 // pred_check_branch
        %253 = sbr.rel (%p250) target = $region36
      $region35: #{tpu_custom_call.1} parent=5 // pred_region
        %s254 = ssub.s32 %s20, 1
        %s255 = sand.u32 %s47, 1
        %s256 = scalar_lea.sflag [#allocation4], %s255
        %s257 = sand.u32 %s47, 1
        %s258 = smul.addr %s257, 256
        %s259 = scalar_lea.vmem [#allocation3], %s258
        // Predicated region
        $region37: #{tpu_custom_call.1} parent=35 // pred_check
          %p260 = pneg %p60
        $region38: #{tpu_custom_call.1} parent=35 // pred_check_branch
          %262 = sbr.rel (%p260) target = $region40
        $region39: #{tpu_custom_call.1} parent=35 // pred_region
          %263 = dma.done %s256, 4096
        $region40: #{tpu_custom_call.1} parent=35 // pred_fallthru
          _
        %s264 = sand.u32 %s25, 1
        %s265 = scalar_lea.sflag [#allocation7], %s264
        %s266 = sand.u32 %s75, 1
        %s267 = smul.addr %s266, 32
        %s268 = scalar_lea.vmem [#allocation6], %s267
        // Predicated region
        $region41: #{tpu_custom_call.1} parent=35 // pred_check
          %p269 = pneg %p88
        $region42: #{tpu_custom_call.1} parent=35 // pred_check_branch
          %271 = sbr.rel (%p269) target = $region44
        $region43: #{tpu_custom_call.1} parent=35 // pred_region
          %272 = dma.done %s265, 512
        $region44: #{tpu_custom_call.1} parent=35 // pred_fallthru
          _
        // Predicated region
        $region45: #{tpu_custom_call.1} parent=35 // pred_check
          %p273 = pneg %p109
        $region46: #{tpu_custom_call.1} parent=35 // pred_check_branch
          %275 = sbr.rel (%p273) target = $region48
        $region47: #{tpu_custom_call.1} parent=35 // pred_region
          %276 = dma.done [#allocation7], 1024
        $region48: #{tpu_custom_call.1} parent=35 // pred_fallthru
          _
        // Predicated region
        $region49: #{tpu_custom_call.1} parent=35 // pred_check
          %p277 = pneg %p130
        $region50: #{tpu_custom_call.1} parent=35 // pred_check_branch
          %279 = sbr.rel (%p277) target = $region52
        $region51: #{tpu_custom_call.1} parent=35 // pred_region
          %280 = dma.done [#allocation10], 16
        $region52: #{tpu_custom_call.1} parent=35 // pred_fallthru
          _
        %s281 = sand.u32 %s47, 1
        %s282 = scalar_lea.sflag [#allocation4], %s281
        %s283 = sand.u32 %s47, 1
        %s284 = smul.addr %s283, 256
        %s285 = scalar_lea.vmem [#allocation3], %s284
        %p286 = pneg %p60
        %p287 = pneg %p57
        %s288 = sand.u32 %s25, 1
        %s289 = scalar_lea.sflag [#allocation7], %s288
        %s290 = sand.u32 %s75, 1
        %s291 = smul.addr %s290, 32
        %s292 = scalar_lea.vmem [#allocation6], %s291
        %p293 = pneg %p88
        %p294 = pneg %p85
        %p295 = pneg %p109
        %p296 = pneg %p106
        %p297 = pneg %p130
        %p298 = pneg %p127
        %p299 = pneg %p158
        %p300 = pneg %p155
        %s301 = sand.u32 %s145, 1
        %s302 = scalar_lea.sflag [#allocation5], %s301
        %s303 = sand.u32 %s145, 1
        %s304 = smul.addr %s303, 512
        %s305 = scalar_lea.vmem [#allocation11], %s304
        %s306 = smul.u32 16, %s30
        %s307 = smul.u32 16, %s30
        %vm308 = vcmask 24576
        %309 = vst.msk [vmem:[#allocation2] sm:$0x1] %vm308, 0.0
        %310 = vst.msk [vmem:[#allocation2 + $0x18] sm:$0x1] %vm308, 0.0
        %311 = vst.msk [vmem:[#allocation2 + $0x30] sm:$0x1] %vm308, 0.0
        %312 = vst.msk [vmem:[#allocation2 + $0x48] sm:$0x1] %vm308, 0.0
        %313 = vst.msk [vmem:[#allocation2 + $0x60] sm:$0x1] %vm308, 0.0
        %314 = vst.msk [vmem:[#allocation2 + $0x78] sm:$0x1] %vm308, 0.0
        %315 = vst.msk [vmem:[#allocation2 + $0x90] sm:$0x1] %vm308, 0.0
        %316 = vst.msk [vmem:[#allocation2 + $0xa8] sm:$0x1] %vm308, 0.0
        %317 = vst.msk [vmem:[#allocation2 + $0xc0] sm:$0x1] %vm308, 0.0
        %318 = vst.msk [vmem:[#allocation2 + $0xd8] sm:$0x1] %vm308, 0.0
        %319 = vst.msk [vmem:[#allocation2 + $0xf0] sm:$0x1] %vm308, 0.0
        %320 = vst.msk [vmem:[#allocation2 + $0x108] sm:$0x1] %vm308, 0.0
        %321 = vst.msk [vmem:[#allocation2 + $0x120] sm:$0x1] %vm308, 0.0
        %322 = vst.msk [vmem:[#allocation2 + $0x138] sm:$0x1] %vm308, 0.0
        %323 = vst.msk [vmem:[#allocation2 + $0x150] sm:$0x1] %vm308, 0.0
        %324 = vst.msk [vmem:[#allocation2 + $0x168] sm:$0x1] %vm308, 0.0
        %325 = vst.msk [vmem:[#allocation2 + $0x180] sm:$0x1] %vm308, 0.0
        %326 = vst.msk [vmem:[#allocation2 + $0x198] sm:$0x1] %vm308, 0.0
        %327 = vst.msk [vmem:[#allocation2 + $0x11] sm:$0x1] %vm308, 0.0
        %328 = vst.msk [vmem:[#allocation2 + $0x29] sm:$0x1] %vm308, 0.0
        %329 = vst.msk [vmem:[#allocation2 + $0x41] sm:$0x1] %vm308, 0.0
        %330 = vst.msk [vmem:[#allocation2 + $0x59] sm:$0x1] %vm308, 0.0
        %331 = vst.msk [vmem:[#allocation2 + $0x71] sm:$0x1] %vm308, 0.0
        %332 = vst.msk [vmem:[#allocation2 + $0x89] sm:$0x1] %vm308, 0.0
        %333 = vst.msk [vmem:[#allocation2 + $0xa1] sm:$0x1] %vm308, 0.0
        %334 = vst.msk [vmem:[#allocation2 + $0xb9] sm:$0x1] %vm308, 0.0
        %335 = vst.msk [vmem:[#allocation2 + $0xd1] sm:$0x1] %vm308, 0.0
        %336 = vst.msk [vmem:[#allocation2 + $0xe9] sm:$0x1] %vm308, 0.0
        %337 = vst.msk [vmem:[#allocation2 + $0x101] sm:$0x1] %vm308, 0.0
        %338 = vst.msk [vmem:[#allocation2 + $0x119] sm:$0x1] %vm308, 0.0
        %339 = vst.msk [vmem:[#allocation2 + $0x131] sm:$0x1] %vm308, 0.0
        %340 = vst.msk [vmem:[#allocation2 + $0x149] sm:$0x1] %vm308, 0.0
        %341 = vst.msk [vmem:[#allocation2 + $0x161] sm:$0x1] %vm308, 0.0
        %342 = vst.msk [vmem:[#allocation2 + $0x179] sm:$0x1] %vm308, 0.0
        %343 = vst.msk [vmem:[#allocation2 + $0x191] sm:$0x1] %vm308, 0.0
        %344 = vst.msk [vmem:[#allocation2 + $0x1a9] sm:$0x1] %vm308, 0.0
        %v345 = vld [vmem:[%s268] sm:$0xff]
        %v346 = vld [vmem:[%s268 + $0x8] sm:$0xff]
        %vm347 = vcmask 31744
        %348 = vst.msk [vmem:[#allocation2 + $0x1] sm:$0xff] %vm347, %v345
        %349 = vst.msk [vmem:[#allocation2 + $0x9] sm:$0xff] %vm347, %v346
        %s350 = scalar_lea.vmem %s268, 16 [#allocation6]
        %v351 = vld [vmem:[%s350] sm:$0xff]
        %v352 = vld [vmem:[%s350 + $0x8] sm:$0xff]
        %s353 = scalar_lea.vmem [#allocation2], 408
        %354 = vst.msk [vmem:[%s353 + $0x1] sm:$0xff] %vm347, %v351
        %355 = vst.msk [vmem:[%s353 + $0x9] sm:$0xff] %vm347, %v352
        %v356 = vld [vmem:[%s259] sm:$0xff]
        %v357 = vld [vmem:[%s259 + $0x8] sm:$0xff]
        %v358 = vld [vmem:[%s259 + $0x10] sm:$0xff]
        %v359 = vld [vmem:[%s259 + $0x18] sm:$0xff]
        %v360 = vld [vmem:[%s259 + $0x20] sm:$0xff]
        %v361 = vld [vmem:[%s259 + $0x28] sm:$0xff]
        %v362 = vld [vmem:[%s259 + $0x30] sm:$0xff]
        %v363 = vld [vmem:[%s259 + $0x38] sm:$0xff]
        %v364 = vld [vmem:[%s259 + $0x40] sm:$0xff]
        %v365 = vld [vmem:[%s259 + $0x48] sm:$0xff]
        %v366 = vld [vmem:[%s259 + $0x50] sm:$0xff]
        %v367 = vld [vmem:[%s259 + $0x58] sm:$0xff]
        %v368 = vld [vmem:[%s259 + $0x60] sm:$0xff]
        %v369 = vld [vmem:[%s259 + $0x68] sm:$0xff]
        %v370 = vld [vmem:[%s259 + $0x70] sm:$0xff]
        %v371 = vld [vmem:[%s259 + $0x78] sm:$0xff]
        %v372 = vld [vmem:[%s259 + $0x80] sm:$0xff]
        %v373 = vld [vmem:[%s259 + $0x88] sm:$0xff]
        %v374 = vld [vmem:[%s259 + $0x90] sm:$0xff]
        %v375 = vld [vmem:[%s259 + $0x98] sm:$0xff]
        %v376 = vld [vmem:[%s259 + $0xa0] sm:$0xff]
        %v377 = vld [vmem:[%s259 + $0xa8] sm:$0xff]
        %v378 = vld [vmem:[%s259 + $0xb0] sm:$0xff]
        %v379 = vld [vmem:[%s259 + $0xb8] sm:$0xff]
        %v380 = vld [vmem:[%s259 + $0xc0] sm:$0xff]
        %v381 = vld [vmem:[%s259 + $0xc8] sm:$0xff]
        %v382 = vld [vmem:[%s259 + $0xd0] sm:$0xff]
        %v383 = vld [vmem:[%s259 + $0xd8] sm:$0xff]
        %v384 = vld [vmem:[%s259 + $0xe0] sm:$0xff]
        %v385 = vld [vmem:[%s259 + $0xe8] sm:$0xff]
        %v386 = vld [vmem:[%s259 + $0xf0] sm:$0xff]
        %v387 = vld [vmem:[%s259 + $0xf8] sm:$0xff]
        %s388 = scalar_lea.vmem [#allocation2], 24
        %389 = vst.msk [vmem:[%s388 + $0x1] sm:$0xff] %vm347, %v356
        %390 = vst.msk [vmem:[%s388 + $0x9] sm:$0xff] %vm347, %v357
        %391 = vst.msk [vmem:[%s388 + $0x19] sm:$0xff] %vm347, %v358
        %392 = vst.msk [vmem:[%s388 + $0x21] sm:$0xff] %vm347, %v359
        %393 = vst.msk [vmem:[%s388 + $0x31] sm:$0xff] %vm347, %v360
        %394 = vst.msk [vmem:[%s388 + $0x39] sm:$0xff] %vm347, %v361
        %395 = vst.msk [vmem:[%s388 + $0x49] sm:$0xff] %vm347, %v362
        %396 = vst.msk [vmem:[%s388 + $0x51] sm:$0xff] %vm347, %v363
        %397 = vst.msk [vmem:[%s388 + $0x61] sm:$0xff] %vm347, %v364
        %398 = vst.msk [vmem:[%s388 + $0x69] sm:$0xff] %vm347, %v365
        %399 = vst.msk [vmem:[%s388 + $0x79] sm:$0xff] %vm347, %v366
        %400 = vst.msk [vmem:[%s388 + $0x81] sm:$0xff] %vm347, %v367
        %401 = vst.msk [vmem:[%s388 + $0x91] sm:$0xff] %vm347, %v368
        %402 = vst.msk [vmem:[%s388 + $0x99] sm:$0xff] %vm347, %v369
        %403 = vst.msk [vmem:[%s388 + $0xa9] sm:$0xff] %vm347, %v370
        %404 = vst.msk [vmem:[%s388 + $0xb1] sm:$0xff] %vm347, %v371
        %405 = vst.msk [vmem:[%s388 + $0xc1] sm:$0xff] %vm347, %v372
        %406 = vst.msk [vmem:[%s388 + $0xc9] sm:$0xff] %vm347, %v373
        %407 = vst.msk [vmem:[%s388 + $0xd9] sm:$0xff] %vm347, %v374
        %408 = vst.msk [vmem:[%s388 + $0xe1] sm:$0xff] %vm347, %v375
        %409 = vst.msk [vmem:[%s388 + $0xf1] sm:$0xff] %vm347, %v376
        %410 = vst.msk [vmem:[%s388 + $0xf9] sm:$0xff] %vm347, %v377
        %411 = vst.msk [vmem:[%s388 + $0x109] sm:$0xff] %vm347, %v378
        %412 = vst.msk [vmem:[%s388 + $0x111] sm:$0xff] %vm347, %v379
        %413 = vst.msk [vmem:[%s388 + $0x121] sm:$0xff] %vm347, %v380
        %414 = vst.msk [vmem:[%s388 + $0x129] sm:$0xff] %vm347, %v381
        %415 = vst.msk [vmem:[%s388 + $0x139] sm:$0xff] %vm347, %v382
        %416 = vst.msk [vmem:[%s388 + $0x141] sm:$0xff] %vm347, %v383
        %417 = vst.msk [vmem:[%s388 + $0x151] sm:$0xff] %vm347, %v384
        %418 = vst.msk [vmem:[%s388 + $0x159] sm:$0xff] %vm347, %v385
        %419 = vst.msk [vmem:[%s388 + $0x169] sm:$0xff] %vm347, %v386
        %420 = vst.msk [vmem:[%s388 + $0x171] sm:$0xff] %vm347, %v387
        %v421 = vld [vmem:[#allocation9] sm:$0x1]
        %v422 = vld [vmem:[#allocation2] sm:$0xff]
        %v423 = vld [vmem:[#allocation2 + $0x8] sm:$0xff]
        %v424 = vld [vmem:[#allocation2 + $0x18] sm:$0xff]
        %v425 = vld [vmem:[#allocation2 + $0x20] sm:$0xff]
        %v426 = vld [vmem:[#allocation2 + $0x30] sm:$0xff]
        %v427 = vld [vmem:[#allocation2 + $0x38] sm:$0xff]
        %v428 = vld [vmem:[#allocation2 + $0x48] sm:$0xff]
        %v429 = vld [vmem:[#allocation2 + $0x50] sm:$0xff]
        %v430 = vld [vmem:[#allocation2 + $0x60] sm:$0xff]
        %v431 = vld [vmem:[#allocation2 + $0x68] sm:$0xff]
        %v432 = vld [vmem:[#allocation2 + $0x78] sm:$0xff]
        %v433 = vld [vmem:[#allocation2 + $0x80] sm:$0xff]
        %v434 = vld [vmem:[#allocation2 + $0x90] sm:$0xff]
        %v435 = vld [vmem:[#allocation2 + $0x98] sm:$0xff]
        %v436 = vld [vmem:[#allocation2 + $0xa8] sm:$0xff]
        %v437 = vld [vmem:[#allocation2 + $0xb0] sm:$0xff]
        %v438 = vld [vmem:[#allocation2 + $0xc0] sm:$0xff]
        %v439 = vld [vmem:[#allocation2 + $0xc8] sm:$0xff]
        %v440 = vld [vmem:[#allocation2 + $0xd8] sm:$0xff]
        %v441 = vld [vmem:[#allocation2 + $0xe0] sm:$0xff]
        %v442 = vld [vmem:[#allocation2 + $0xf0] sm:$0xff]
        %v443 = vld [vmem:[#allocation2 + $0xf8] sm:$0xff]
        %v444 = vld [vmem:[#allocation2 + $0x108] sm:$0xff]
        %v445 = vld [vmem:[#allocation2 + $0x110] sm:$0xff]
        %v446 = vld [vmem:[#allocation2 + $0x120] sm:$0xff]
        %v447 = vld [vmem:[#allocation2 + $0x128] sm:$0xff]
        %v448 = vld [vmem:[#allocation2 + $0x138] sm:$0xff]
        %v449 = vld [vmem:[#allocation2 + $0x140] sm:$0xff]
        %v450 = vld [vmem:[#allocation2 + $0x150] sm:$0xff]
        %v451 = vld [vmem:[#allocation2 + $0x158] sm:$0xff]
        %v452 = vld [vmem:[#allocation2 + $0x168] sm:$0xff]
        %v453 = vld [vmem:[#allocation2 + $0x170] sm:$0xff]
        %v454 = vld [vmem:[#allocation8] sm:$0xf]
        %v455 = vld [vmem:[#allocation2 + $0x1] sm:$0xff]
        %v456 = vld [vmem:[#allocation2 + $0x9] sm:$0xff]
        %v457 = vld [vmem:[#allocation2 + $0x19] sm:$0xff]
        %v458 = vld [vmem:[#allocation2 + $0x21] sm:$0xff]
        %v459 = vld [vmem:[#allocation2 + $0x31] sm:$0xff]
        %v460 = vld [vmem:[#allocation2 + $0x39] sm:$0xff]
        %v461 = vld [vmem:[#allocation2 + $0x49] sm:$0xff]
        %v462 = vld [vmem:[#allocation2 + $0x51] sm:$0xff]
        %v463 = vld [vmem:[#allocation2 + $0x61] sm:$0xff]
        %v464 = vld [vmem:[#allocation2 + $0x69] sm:$0xff]
        %v465 = vld [vmem:[#allocation2 + $0x79] sm:$0xff]
        %v466 = vld [vmem:[#allocation2 + $0x81] sm:$0xff]
        %v467 = vld [vmem:[#allocation2 + $0x91] sm:$0xff]
        %v468 = vld [vmem:[#allocation2 + $0x99] sm:$0xff]
        %v469 = vld [vmem:[#allocation2 + $0xa9] sm:$0xff]
        %v470 = vld [vmem:[#allocation2 + $0xb1] sm:$0xff]
        %v471 = vld [vmem:[#allocation2 + $0xc1] sm:$0xff]
        %v472 = vld [vmem:[#allocation2 + $0xc9] sm:$0xff]
        %v473 = vld [vmem:[#allocation2 + $0xd9] sm:$0xff]
        %v474 = vld [vmem:[#allocation2 + $0xe1] sm:$0xff]
        %v475 = vld [vmem:[#allocation2 + $0xf1] sm:$0xff]
        %v476 = vld [vmem:[#allocation2 + $0xf9] sm:$0xff]
        %v477 = vld [vmem:[#allocation2 + $0x109] sm:$0xff]
        %v478 = vld [vmem:[#allocation2 + $0x111] sm:$0xff]
        %v479 = vld [vmem:[#allocation2 + $0x121] sm:$0xff]
        %v480 = vld [vmem:[#allocation2 + $0x129] sm:$0xff]
        %v481 = vld [vmem:[#allocation2 + $0x139] sm:$0xff]
        %v482 = vld [vmem:[#allocation2 + $0x141] sm:$0xff]
        %v483 = vld [vmem:[#allocation2 + $0x151] sm:$0xff]
        %v484 = vld [vmem:[#allocation2 + $0x159] sm:$0xff]
        %v485 = vld [vmem:[#allocation2 + $0x169] sm:$0xff]
        %v486 = vld [vmem:[#allocation2 + $0x171] sm:$0xff]
        %s487 = scalar_lea.vmem [#allocation8], 4
        %v488 = vld [vmem:[%s487] sm:$0xf]
        %v490 = vsel %vm347, %v455, 0
        %v493 = vsel %vm347, %v456, 0
        %v496 = vsel %vm347, %v457, 0
        %v499 = vsel %vm347, %v458, 0
        %v502 = vsel %vm347, %v459, 0
        %v505 = vsel %vm347, %v460, 0
        %v508 = vsel %vm347, %v461, 0
        %v511 = vsel %vm347, %v462, 0
        %v514 = vsel %vm347, %v463, 0
        %v517 = vsel %vm347, %v464, 0
        %v520 = vsel %vm347, %v465, 0
        %v523 = vsel %vm347, %v466, 0
        %v526 = vsel %vm347, %v467, 0
        %v529 = vsel %vm347, %v468, 0
        %v532 = vsel %vm347, %v469, 0
        %v535 = vsel %vm347, %v470, 0
        %v538 = vsel %vm347, %v471, 0
        %v541 = vsel %vm347, %v472, 0
        %v544 = vsel %vm347, %v473, 0
        %v547 = vsel %vm347, %v474, 0
        %v550 = vsel %vm347, %v475, 0
        %v553 = vsel %vm347, %v476, 0
        %v556 = vsel %vm347, %v477, 0
        %v559 = vsel %vm347, %v478, 0
        %v562 = vsel %vm347, %v479, 0
        %v565 = vsel %vm347, %v480, 0
        %v568 = vsel %vm347, %v481, 0
        %v571 = vsel %vm347, %v482, 0
        %v574 = vsel %vm347, %v483, 0
        %v577 = vsel %vm347, %v484, 0
        %v580 = vsel %vm347, %v485, 0
        %v583 = vsel %vm347, %v486, 0
        %vm585 = vcmask 1043456
        %v587 = vsel %vm585, %v488, 0
        %589 = vmatprep.subr.mxu0 0.0
        %590 = vmatpush1.msra.mxu0 %v587
        %591 = vmatprep.subr.mxu0 0.0
        %592 = vmatpush1.msra.mxu0 0.0
        %593 = vmatprep.subr.mxu0 0.0
        %594 = vmatpush1.msra.mxu0 0.0
        %595 = vmatprep.subr.mxu0 0.0
        %596 = vmatpush1.msra.mxu0 0.0
        %597 = vmatprep.subr.mxu0 0.0
        %598 = vmatpush1.msra.mxu0 0.0
        %599 = vmatprep.subr.mxu0 0.0
        %600 = vmatpush1.msra.mxu0 0.0
        %601 = vmatprep.subr.mxu0 0.0
        %602 = vmatpush1.msra.mxu0 0.0
        %603 = vmatprep.subr.mxu0 0.0
        %604 = vmatpush1.msra.mxu0 0.0
        %605 = vmatprep.subr.mxu0 0.0
        %606 = vmatpush1.msra.mxu0 0.0
        %607 = vmatprep.subr.mxu0 0.0
        %608 = vmatpush1.msra.mxu0 0.0
        %609 = vmatprep.subr.mxu0 0.0
        %610 = vmatpush1.msra.mxu0 0.0
        %611 = vmatprep.subr.mxu0 0.0
        %612 = vmatpush1.msra.mxu0 0.0
        %613 = vmatprep.subr.mxu0 0.0
        %614 = vmatpush1.msra.mxu0 0.0
        %615 = vmatprep.subr.mxu0 0.0
        %616 = vmatpush1.msra.mxu0 0.0
        %617 = vmatprep.subr.mxu0 0.0
        %618 = vmatpush1.msra.mxu0 0.0
        %619 = vmatprep.subr.mxu0 0.0
        %620 = vmatpush1.msra.mxu0 0.0
        %621 = vmatprep.subr.mxu0 0.0
        %622 = vmatpush1.msra.mxu0 0.0
        %623 = vmatprep.subr.mxu0 0.0
        %624 = vmatpush1.msra.mxu0 0.0
        %625 = vmatprep.subr.mxu0 0.0
        %626 = vmatpush1.msra.mxu0 0.0
        %627 = vmatprep.subr.mxu0 0.0
        %628 = vmatpush1.msra.mxu0 0.0
        %629 = vmatprep.subr.mxu0 0.0
        %630 = vmatpush1.msra.mxu0 0.0
        %631 = vmatprep.subr.mxu0 0.0
        %632 = vmatpush1.msra.mxu0 0.0
        %633 = vmatprep.subr.mxu0 0.0
        %634 = vmatpush1.msra.mxu0 0.0
        %635 = vmatprep.subr.mxu0 0.0
        %636 = vmatpush1.msra.mxu0 0.0
        %637 = vmatprep.subr.mxu0 0.0
        %638 = vmatpush1.msra.mxu0 0.0
        %639 = vmatprep.subr.mxu0 0.0
        %640 = vmatpush1.msra.mxu0 0.0
        %641 = vmatprep.subr.mxu0 0.0
        %642 = vmatpush1.msra.mxu0 0.0
        %643 = vmatprep.subr.mxu0 0.0
        %644 = vmatpush1.msra.mxu0 0.0
        %645 = vmatprep.subr.mxu0 0.0
        %646 = vmatpush1.msra.mxu0 0.0
        %647 = vmatprep.subr.mxu0 0.0
        %648 = vmatpush1.msra.mxu0 0.0
        %649 = vmatprep.subr.mxu0 0.0
        %650 = vmatpush1.msra.mxu0 0.0
        %651 = vmatprep.subr.mxu0 0.0
        %652 = vmatpush1.msra.mxu0 0.0
        %653 = vmatprep.mubr.f32.mxu0 0.0
        %654 = vmatmul.mubr.f32.gmra.mrb[0].mxu0 %v490
        %v655 = vpop.f32.mrb[0].mxu0
        %v656 = vadd.f32 0.0, %v655
        %v657 = vpop.f32.mrb[0].mxu0
        %658 = vmatprep.mubr.f32.mxu0 0.0
        %659 = vmatmul.mubr.f32.gmra.mrb[0].mxu0 %v493
        %v660 = vpop.f32.mrb[0].mxu0
        %v661 = vadd.f32 0.0, %v660
        %v662 = vpop.f32.mrb[0].mxu0
        %663 = vmatprep.mubr.f32.mxu0 0.0
        %664 = vmatmul.mubr.f32.gmra.mrb[0].mxu0 %v496
        %v665 = vpop.f32.mrb[0].mxu0
        %v666 = vadd.f32 0.0, %v665
        %v667 = vpop.f32.mrb[0].mxu0
        %668 = vmatprep.mubr.f32.mxu0 0.0
        %669 = vmatmul.mubr.f32.gmra.mrb[0].mxu0 %v499
        %v670 = vpop.f32.mrb[0].mxu0
        %v671 = vadd.f32 0.0, %v670
        %v672 = vpop.f32.mrb[0].mxu0
        %673 = vmatprep.mubr.f32.mxu0 0.0
        %674 = vmatmul.mubr.f32.gmra.mrb[0].mxu0 %v502
        %v675 = vpop.f32.mrb[0].mxu0
        %v676 = vadd.f32 0.0, %v675
        %v677 = vpop.f32.mrb[0].mxu0
        %678 = vmatprep.mubr.f32.mxu0 0.0
        %679 = vmatmul.mubr.f32.gmra.mrb[0].mxu0 %v505
        %v680 = vpop.f32.mrb[0].mxu0
        %v681 = vadd.f32 0.0, %v680
        %v682 = vpop.f32.mrb[0].mxu0
        %683 = vmatprep.mubr.f32.mxu0 0.0
        %684 = vmatmul.mubr.f32.gmra.mrb[0].mxu0 %v508
        %v685 = vpop.f32.mrb[0].mxu0
        %v686 = vadd.f32 0.0, %v685
        %v687 = vpop.f32.mrb[0].mxu0
        %688 = vmatprep.mubr.f32.mxu0 0.0
        %689 = vmatmul.mubr.f32.gmra.mrb[0].mxu0 %v511
        %v690 = vpop.f32.mrb[0].mxu0
        %v691 = vadd.f32 0.0, %v690
        %v692 = vpop.f32.mrb[0].mxu0
        %693 = vmatprep.mubr.f32.mxu0 0.0
        %694 = vmatmul.mubr.f32.gmra.mrb[0].mxu0 %v514
        %v695 = vpop.f32.mrb[0].mxu0
        %v696 = vadd.f32 0.0, %v695
        %v697 = vpop.f32.mrb[0].mxu0
        %698 = vmatprep.mubr.f32.mxu0 0.0
        %699 = vmatmul.mubr.f32.gmra.mrb[0].mxu0 %v517
        %v700 = vpop.f32.mrb[0].mxu0
        %v701 = vadd.f32 0.0, %v700
        %v702 = vpop.f32.mrb[0].mxu0
        %703 = vmatprep.mubr.f32.mxu0 0.0
        %704 = vmatmul.mubr.f32.gmra.mrb[0].mxu0 %v520
        %v705 = vpop.f32.mrb[0].mxu0
        %v706 = vadd.f32 0.0, %v705
        %v707 = vpop.f32.mrb[0].mxu0
        %708 = vmatprep.mubr.f32.mxu0 0.0
        %709 = vmatmul.mubr.f32.gmra.mrb[0].mxu0 %v523
        %v710 = vpop.f32.mrb[0].mxu0
        %v711 = vadd.f32 0.0, %v710
        %v712 = vpop.f32.mrb[0].mxu0
        %713 = vmatprep.mubr.f32.mxu0 0.0
        %714 = vmatmul.mubr.f32.gmra.mrb[0].mxu0 %v526
        %v715 = vpop.f32.mrb[0].mxu0
        %v716 = vadd.f32 0.0, %v715
        %v717 = vpop.f32.mrb[0].mxu0
        %718 = vmatprep.mubr.f32.mxu0 0.0
        %719 = vmatmul.mubr.f32.gmra.mrb[0].mxu0 %v529
        %v720 = vpop.f32.mrb[0].mxu0
        %v721 = vadd.f32 0.0, %v720
        %v722 = vpop.f32.mrb[0].mxu0
        %723 = vmatprep.mubr.f32.mxu0 0.0
        %724 = vmatmul.mubr.f32.gmra.mrb[0].mxu0 %v532
        %v725 = vpop.f32.mrb[0].mxu0
        %v726 = vadd.f32 0.0, %v725
        %v727 = vpop.f32.mrb[0].mxu0
        %728 = vmatprep.mubr.f32.mxu0 0.0
        %729 = vmatmul.mubr.f32.gmra.mrb[0].mxu0 %v535
        %v730 = vpop.f32.mrb[0].mxu0
        %v731 = vadd.f32 0.0, %v730
        %v732 = vpop.f32.mrb[0].mxu0
        %733 = vmatprep.mubr.f32.mxu0 0.0
        %734 = vmatmul.mubr.f32.gmra.mrb[0].mxu0 %v538
        %v735 = vpop.f32.mrb[0].mxu0
        %v736 = vadd.f32 0.0, %v735
        %v737 = vpop.f32.mrb[0].mxu0
        %738 = vmatprep.mubr.f32.mxu0 0.0
        %739 = vmatmul.mubr.f32.gmra.mrb[0].mxu0 %v541
        %v740 = vpop.f32.mrb[0].mxu0
        %v741 = vadd.f32 0.0, %v740
        %v742 = vpop.f32.mrb[0].mxu0
        %743 = vmatprep.mubr.f32.mxu0 0.0
        %744 = vmatmul.mubr.f32.gmra.mrb[0].mxu0 %v544
        %v745 = vpop.f32.mrb[0].mxu0
        %v746 = vadd.f32 0.0, %v745
        %v747 = vpop.f32.mrb[0].mxu0
        %748 = vmatprep.mubr.f32.mxu0 0.0
        %749 = vmatmul.mubr.f32.gmra.mrb[0].mxu0 %v547
        %v750 = vpop.f32.mrb[0].mxu0
        %v751 = vadd.f32 0.0, %v750
        %v752 = vpop.f32.mrb[0].mxu0
        %753 = vmatprep.mubr.f32.mxu0 0.0
        %754 = vmatmul.mubr.f32.gmra.mrb[0].mxu0 %v550
        %v755 = vpop.f32.mrb[0].mxu0
        %v756 = vadd.f32 0.0, %v755
        %v757 = vpop.f32.mrb[0].mxu0
        %758 = vmatprep.mubr.f32.mxu0 0.0
        %759 = vmatmul.mubr.f32.gmra.mrb[0].mxu0 %v553
        %v760 = vpop.f32.mrb[0].mxu0
        %v761 = vadd.f32 0.0, %v760
        %v762 = vpop.f32.mrb[0].mxu0
        %763 = vmatprep.mubr.f32.mxu0 0.0
        %764 = vmatmul.mubr.f32.gmra.mrb[0].mxu0 %v556
        %v765 = vpop.f32.mrb[0].mxu0
        %v766 = vadd.f32 0.0, %v765
        %v767 = vpop.f32.mrb[0].mxu0
        %768 = vmatprep.mubr.f32.mxu0 0.0
        %769 = vmatmul.mubr.f32.gmra.mrb[0].mxu0 %v559
        %v770 = vpop.f32.mrb[0].mxu0
        %v771 = vadd.f32 0.0, %v770
        %v772 = vpop.f32.mrb[0].mxu0
        %773 = vmatprep.mubr.f32.mxu0 0.0
        %774 = vmatmul.mubr.f32.gmra.mrb[0].mxu0 %v562
        %v775 = vpop.f32.mrb[0].mxu0
        %v776 = vadd.f32 0.0, %v775
        %v777 = vpop.f32.mrb[0].mxu0
        %778 = vmatprep.mubr.f32.mxu0 0.0
        %779 = vmatmul.mubr.f32.gmra.mrb[0].mxu0 %v565
        %v780 = vpop.f32.mrb[0].mxu0
        %v781 = vadd.f32 0.0, %v780
        %v782 = vpop.f32.mrb[0].mxu0
        %783 = vmatprep.mubr.f32.mxu0 0.0
        %784 = vmatmul.mubr.f32.gmra.mrb[0].mxu0 %v568
        %v785 = vpop.f32.mrb[0].mxu0
        %v786 = vadd.f32 0.0, %v785
        %v787 = vpop.f32.mrb[0].mxu0
        %788 = vmatprep.mubr.f32.mxu0 0.0
        %789 = vmatmul.mubr.f32.gmra.mrb[0].mxu0 %v571
        %v790 = vpop.f32.mrb[0].mxu0
        %v791 = vadd.f32 0.0, %v790
        %v792 = vpop.f32.mrb[0].mxu0
        %793 = vmatprep.mubr.f32.mxu0 0.0
        %794 = vmatmul.mubr.f32.gmra.mrb[0].mxu0 %v574
        %v795 = vpop.f32.mrb[0].mxu0
        %v796 = vadd.f32 0.0, %v795
        %v797 = vpop.f32.mrb[0].mxu0
        %798 = vmatprep.mubr.f32.mxu0 0.0
        %799 = vmatmul.mubr.f32.gmra.mrb[0].mxu0 %v577
        %v800 = vpop.f32.mrb[0].mxu0
        %v801 = vadd.f32 0.0, %v800
        %v802 = vpop.f32.mrb[0].mxu0
        %803 = vmatprep.mubr.f32.mxu0 0.0
        %804 = vmatmul.mubr.f32.gmra.mrb[0].mxu0 %v580
        %v805 = vpop.f32.mrb[0].mxu0
        %v806 = vadd.f32 0.0, %v805
        %v807 = vpop.f32.mrb[0].mxu0
        %808 = vmatprep.mubr.f32.mxu0 0.0
        %809 = vmatmul.mubr.f32.gmra.mrb[0].mxu0 %v583
        %v810 = vpop.f32.mrb[0].mxu0
        %v811 = vadd.f32 0.0, %v810
        %v812 = vpop.f32.mrb[0].mxu0
        %813 = vdwg.mxu0
        %v815 = vsel %vm347, %v422, 0
        %v818 = vsel %vm347, %v423, 0
        %v821 = vsel %vm347, %v424, 0
        %v824 = vsel %vm347, %v425, 0
        %v827 = vsel %vm347, %v426, 0
        %v830 = vsel %vm347, %v427, 0
        %v833 = vsel %vm347, %v428, 0
        %v836 = vsel %vm347, %v429, 0
        %v839 = vsel %vm347, %v430, 0
        %v842 = vsel %vm347, %v431, 0
        %v845 = vsel %vm347, %v432, 0
        %v848 = vsel %vm347, %v433, 0
        %v851 = vsel %vm347, %v434, 0
        %v854 = vsel %vm347, %v435, 0
        %v857 = vsel %vm347, %v436, 0
        %v860 = vsel %vm347, %v437, 0
        %v863 = vsel %vm347, %v438, 0
        %v866 = vsel %vm347, %v439, 0
        %v869 = vsel %vm347, %v440, 0
        %v872 = vsel %vm347, %v441, 0
        %v875 = vsel %vm347, %v442, 0
        %v878 = vsel %vm347, %v443, 0
        %v881 = vsel %vm347, %v444, 0
        %v884 = vsel %vm347, %v445, 0
        %v887 = vsel %vm347, %v446, 0
        %v890 = vsel %vm347, %v447, 0
        %v893 = vsel %vm347, %v448, 0
        %v896 = vsel %vm347, %v449, 0
        %v899 = vsel %vm347, %v450, 0
        %v902 = vsel %vm347, %v451, 0
        %v905 = vsel %vm347, %v452, 0
        %v908 = vsel %vm347, %v453, 0
        %v911 = vsel %vm585, %v454, 0
        %913 = vmatprep.subr.mxu0 0.0
        %914 = vmatpush1.msra.mxu0 %v911
        %915 = vmatprep.subr.mxu0 0.0
        %916 = vmatpush1.msra.mxu0 0.0
        %917 = vmatprep.subr.mxu0 0.0
        %918 = vmatpush1.msra.mxu0 0.0
        %919 = vmatprep.subr.mxu0 0.0
        %920 = vmatpush1.msra.mxu0 0.0
        %921 = vmatprep.subr.mxu0 0.0
        %922 = vmatpush1.msra.mxu0 0.0
        %923 = vmatprep.subr.mxu0 0.0
        %924 = vmatpush1.msra.mxu0 0.0
        %925 = vmatprep.subr.mxu0 0.0
        %926 = vmatpush1.msra.mxu0 0.0
        %927 = vmatprep.subr.mxu0 0.0
        %928 = vmatpush1.msra.mxu0 0.0
        %929 = vmatprep.subr.mxu0 0.0
        %930 = vmatpush1.msra.mxu0 0.0
        %931 = vmatprep.subr.mxu0 0.0
        %932 = vmatpush1.msra.mxu0 0.0
        %933 = vmatprep.subr.mxu0 0.0
        %934 = vmatpush1.msra.mxu0 0.0
        %935 = vmatprep.subr.mxu0 0.0
        %936 = vmatpush1.msra.mxu0 0.0
        %937 = vmatprep.subr.mxu0 0.0
        %938 = vmatpush1.msra.mxu0 0.0
        %939 = vmatprep.subr.mxu0 0.0
        %940 = vmatpush1.msra.mxu0 0.0
        %941 = vmatprep.subr.mxu0 0.0
        %942 = vmatpush1.msra.mxu0 0.0
        %943 = vmatprep.subr.mxu0 0.0
        %944 = vmatpush1.msra.mxu0 0.0
        %945 = vmatprep.subr.mxu0 0.0
        %946 = vmatpush1.msra.mxu0 0.0
        %947 = vmatprep.subr.mxu0 0.0
        %948 = vmatpush1.msra.mxu0 0.0
        %949 = vmatprep.subr.mxu0 0.0
        %950 = vmatpush1.msra.mxu0 0.0
        %951 = vmatprep.subr.mxu0 0.0
        %952 = vmatpush1.msra.mxu0 0.0
        %953 = vmatprep.subr.mxu0 0.0
        %954 = vmatpush1.msra.mxu0 0.0
        %955 = vmatprep.subr.mxu0 0.0
        %956 = vmatpush1.msra.mxu0 0.0
        %957 = vmatprep.subr.mxu0 0.0
        %958 = vmatpush1.msra.mxu0 0.0
        %959 = vmatprep.subr.mxu0 0.0
        %960 = vmatpush1.msra.mxu0 0.0
        %961 = vmatprep.subr.mxu0 0.0
        %962 = vmatpush1.msra.mxu0 0.0
        %963 = vmatprep.subr.mxu0 0.0
        %964 = vmatpush1.msra.mxu0 0.0
        %965 = vmatprep.subr.mxu0 0.0
        %966 = vmatpush1.msra.mxu0 0.0
        %967 = vmatprep.subr.mxu0 0.0
        %968 = vmatpush1.msra.mxu0 0.0
        %969 = vmatprep.subr.mxu0 0.0
        %970 = vmatpush1.msra.mxu0 0.0
        %971 = vmatprep.subr.mxu0 0.0
        %972 = vmatpush1.msra.mxu0 0.0
        %973 = vmatprep.subr.mxu0 0.0
        %974 = vmatpush1.msra.mxu0 0.0
        %975 = vmatprep.subr.mxu0 0.0
        %976 = vmatpush1.msra.mxu0 0.0
        %977 = vmatprep.mubr.f32.mxu0 0.0
        %978 = vmatmul.mubr.f32.gmra.mrb[0].mxu0 %v815
        %v979 = vpop.f32.mrb[0].mxu0
        %v980 = vadd.f32 %v656, %v979
        %v981 = vpop.f32.mrb[0].mxu0
        %982 = vmatprep.mubr.f32.mxu0 0.0
        %983 = vmatmul.mubr.f32.gmra.mrb[0].mxu0 %v818
        %v984 = vpop.f32.mrb[0].mxu0
        %v985 = vadd.f32 %v661, %v984
        %v986 = vpop.f32.mrb[0].mxu0
        %987 = vmatprep.mubr.f32.mxu0 0.0
        %988 = vmatmul.mubr.f32.gmra.mrb[0].mxu0 %v821
        %v989 = vpop.f32.mrb[0].mxu0
        %v990 = vadd.f32 %v666, %v989
        %v991 = vpop.f32.mrb[0].mxu0
        %992 = vmatprep.mubr.f32.mxu0 0.0
        %993 = vmatmul.mubr.f32.gmra.mrb[0].mxu0 %v824
        %v994 = vpop.f32.mrb[0].mxu0
        %v995 = vadd.f32 %v671, %v994
        %v996 = vpop.f32.mrb[0].mxu0
        %997 = vmatprep.mubr.f32.mxu0 0.0
        %998 = vmatmul.mubr.f32.gmra.mrb[0].mxu0 %v827
        %v999 = vpop.f32.mrb[0].mxu0
        %v1000 = vadd.f32 %v676, %v999
        %v1001 = vpop.f32.mrb[0].mxu0
        %1002 = vmatprep.mubr.f32.mxu0 0.0
        %1003 = vmatmul.mubr.f32.gmra.mrb[0].mxu0 %v830
        %v1004 = vpop.f32.mrb[0].mxu0
        %v1005 = vadd.f32 %v681, %v1004
        %v1006 = vpop.f32.mrb[0].mxu0
        %1007 = vmatprep.mubr.f32.mxu0 0.0
        %1008 = vmatmul.mubr.f32.gmra.mrb[0].mxu0 %v833
        %v1009 = vpop.f32.mrb[0].mxu0
        %v1010 = vadd.f32 %v686, %v1009
        %v1011 = vpop.f32.mrb[0].mxu0
        %1012 = vmatprep.mubr.f32.mxu0 0.0
        %1013 = vmatmul.mubr.f32.gmra.mrb[0].mxu0 %v836
        %v1014 = vpop.f32.mrb[0].mxu0
        %v1015 = vadd.f32 %v691, %v1014
        %v1016 = vpop.f32.mrb[0].mxu0
        %1017 = vmatprep.mubr.f32.mxu0 0.0
        %1018 = vmatmul.mubr.f32.gmra.mrb[0].mxu0 %v839
        %v1019 = vpop.f32.mrb[0].mxu0
        %v1020 = vadd.f32 %v696, %v1019
        %v1021 = vpop.f32.mrb[0].mxu0
        %1022 = vmatprep.mubr.f32.mxu0 0.0
        %1023 = vmatmul.mubr.f32.gmra.mrb[0].mxu0 %v842
        %v1024 = vpop.f32.mrb[0].mxu0
        %v1025 = vadd.f32 %v701, %v1024
        %v1026 = vpop.f32.mrb[0].mxu0
        %1027 = vmatprep.mubr.f32.mxu0 0.0
        %1028 = vmatmul.mubr.f32.gmra.mrb[0].mxu0 %v845
        %v1029 = vpop.f32.mrb[0].mxu0
        %v1030 = vadd.f32 %v706, %v1029
        %v1031 = vpop.f32.mrb[0].mxu0
        %1032 = vmatprep.mubr.f32.mxu0 0.0
        %1033 = vmatmul.mubr.f32.gmra.mrb[0].mxu0 %v848
        %v1034 = vpop.f32.mrb[0].mxu0
        %v1035 = vadd.f32 %v711, %v1034
        %v1036 = vpop.f32.mrb[0].mxu0
        %1037 = vmatprep.mubr.f32.mxu0 0.0
        %1038 = vmatmul.mubr.f32.gmra.mrb[0].mxu0 %v851
        %v1039 = vpop.f32.mrb[0].mxu0
        %v1040 = vadd.f32 %v716, %v1039
        %v1041 = vpop.f32.mrb[0].mxu0
        %1042 = vmatprep.mubr.f32.mxu0 0.0
        %1043 = vmatmul.mubr.f32.gmra.mrb[0].mxu0 %v854
        %v1044 = vpop.f32.mrb[0].mxu0
        %v1045 = vadd.f32 %v721, %v1044
        %v1046 = vpop.f32.mrb[0].mxu0
        %1047 = vmatprep.mubr.f32.mxu0 0.0
        %1048 = vmatmul.mubr.f32.gmra.mrb[0].mxu0 %v857
        %v1049 = vpop.f32.mrb[0].mxu0
        %v1050 = vadd.f32 %v726, %v1049
        %v1051 = vpop.f32.mrb[0].mxu0
        %1052 = vmatprep.mubr.f32.mxu0 0.0
        %1053 = vmatmul.mubr.f32.gmra.mrb[0].mxu0 %v860
        %v1054 = vpop.f32.mrb[0].mxu0
        %v1055 = vadd.f32 %v731, %v1054
        %v1056 = vpop.f32.mrb[0].mxu0
        %1057 = vmatprep.mubr.f32.mxu0 0.0
        %1058 = vmatmul.mubr.f32.gmra.mrb[0].mxu0 %v863
        %v1059 = vpop.f32.mrb[0].mxu0
        %v1060 = vadd.f32 %v736, %v1059
        %v1061 = vpop.f32.mrb[0].mxu0
        %1062 = vmatprep.mubr.f32.mxu0 0.0
        %1063 = vmatmul.mubr.f32.gmra.mrb[0].mxu0 %v866
        %v1064 = vpop.f32.mrb[0].mxu0
        %v1065 = vadd.f32 %v741, %v1064
        %v1066 = vpop.f32.mrb[0].mxu0
        %1067 = vmatprep.mubr.f32.mxu0 0.0
        %1068 = vmatmul.mubr.f32.gmra.mrb[0].mxu0 %v869
        %v1069 = vpop.f32.mrb[0].mxu0
        %v1070 = vadd.f32 %v746, %v1069
        %v1071 = vpop.f32.mrb[0].mxu0
        %1072 = vmatprep.mubr.f32.mxu0 0.0
        %1073 = vmatmul.mubr.f32.gmra.mrb[0].mxu0 %v872
        %v1074 = vpop.f32.mrb[0].mxu0
        %v1075 = vadd.f32 %v751, %v1074
        %v1076 = vpop.f32.mrb[0].mxu0
        %1077 = vmatprep.mubr.f32.mxu0 0.0
        %1078 = vmatmul.mubr.f32.gmra.mrb[0].mxu0 %v875
        %v1079 = vpop.f32.mrb[0].mxu0
        %v1080 = vadd.f32 %v756, %v1079
        %v1081 = vpop.f32.mrb[0].mxu0
        %1082 = vmatprep.mubr.f32.mxu0 0.0
        %1083 = vmatmul.mubr.f32.gmra.mrb[0].mxu0 %v878
        %v1084 = vpop.f32.mrb[0].mxu0
        %v1085 = vadd.f32 %v761, %v1084
        %v1086 = vpop.f32.mrb[0].mxu0
        %1087 = vmatprep.mubr.f32.mxu0 0.0
        %1088 = vmatmul.mubr.f32.gmra.mrb[0].mxu0 %v881
        %v1089 = vpop.f32.mrb[0].mxu0
        %v1090 = vadd.f32 %v766, %v1089
        %v1091 = vpop.f32.mrb[0].mxu0
        %1092 = vmatprep.mubr.f32.mxu0 0.0
        %1093 = vmatmul.mubr.f32.gmra.mrb[0].mxu0 %v884
        %v1094 = vpop.f32.mrb[0].mxu0
        %v1095 = vadd.f32 %v771, %v1094
        %v1096 = vpop.f32.mrb[0].mxu0
        %1097 = vmatprep.mubr.f32.mxu0 0.0
        %1098 = vmatmul.mubr.f32.gmra.mrb[0].mxu0 %v887
        %v1099 = vpop.f32.mrb[0].mxu0
        %v1100 = vadd.f32 %v776, %v1099
        %v1101 = vpop.f32.mrb[0].mxu0
        %1102 = vmatprep.mubr.f32.mxu0 0.0
        %1103 = vmatmul.mubr.f32.gmra.mrb[0].mxu0 %v890
        %v1104 = vpop.f32.mrb[0].mxu0
        %v1105 = vadd.f32 %v781, %v1104
        %v1106 = vpop.f32.mrb[0].mxu0
        %1107 = vmatprep.mubr.f32.mxu0 0.0
        %1108 = vmatmul.mubr.f32.gmra.mrb[0].mxu0 %v893
        %v1109 = vpop.f32.mrb[0].mxu0
        %v1110 = vadd.f32 %v786, %v1109
        %v1111 = vpop.f32.mrb[0].mxu0
        %1112 = vmatprep.mubr.f32.mxu0 0.0
        %1113 = vmatmul.mubr.f32.gmra.mrb[0].mxu0 %v896
        %v1114 = vpop.f32.mrb[0].mxu0
        %v1115 = vadd.f32 %v791, %v1114
        %v1116 = vpop.f32.mrb[0].mxu0
        %1117 = vmatprep.mubr.f32.mxu0 0.0
        %1118 = vmatmul.mubr.f32.gmra.mrb[0].mxu0 %v899
        %v1119 = vpop.f32.mrb[0].mxu0
        %v1120 = vadd.f32 %v796, %v1119
        %v1121 = vpop.f32.mrb[0].mxu0
        %1122 = vmatprep.mubr.f32.mxu0 0.0
        %1123 = vmatmul.mubr.f32.gmra.mrb[0].mxu0 %v902
        %v1124 = vpop.f32.mrb[0].mxu0
        %v1125 = vadd.f32 %v801, %v1124
        %v1126 = vpop.f32.mrb[0].mxu0
        %1127 = vmatprep.mubr.f32.mxu0 0.0
        %1128 = vmatmul.mubr.f32.gmra.mrb[0].mxu0 %v905
        %v1129 = vpop.f32.mrb[0].mxu0
        %v1130 = vadd.f32 %v806, %v1129
        %v1131 = vpop.f32.mrb[0].mxu0
        %1132 = vmatprep.mubr.f32.mxu0 0.0
        %1133 = vmatmul.mubr.f32.gmra.mrb[0].mxu0 %v908
        %v1134 = vpop.f32.mrb[0].mxu0
        %v1135 = vadd.f32 %v811, %v1134
        %v1136 = vpop.f32.mrb[0].mxu0
        %1137 = vdwg.mxu0
        %v1138 = vld [vmem:[%s388] sm:$0xff]
        %v1139 = vld [vmem:[%s388 + $0x8] sm:$0xff]
        %v1140 = vld [vmem:[%s388 + $0x18] sm:$0xff]
        %v1141 = vld [vmem:[%s388 + $0x20] sm:$0xff]
        %v1142 = vld [vmem:[%s388 + $0x30] sm:$0xff]
        %v1143 = vld [vmem:[%s388 + $0x38] sm:$0xff]
        %v1144 = vld [vmem:[%s388 + $0x48] sm:$0xff]
        %v1145 = vld [vmem:[%s388 + $0x50] sm:$0xff]
        %v1146 = vld [vmem:[%s388 + $0x60] sm:$0xff]
        %v1147 = vld [vmem:[%s388 + $0x68] sm:$0xff]
        %v1148 = vld [vmem:[%s388 + $0x78] sm:$0xff]
        %v1149 = vld [vmem:[%s388 + $0x80] sm:$0xff]
        %v1150 = vld [vmem:[%s388 + $0x90] sm:$0xff]
        %v1151 = vld [vmem:[%s388 + $0x98] sm:$0xff]
        %v1152 = vld [vmem:[%s388 + $0xa8] sm:$0xff]
        %v1153 = vld [vmem:[%s388 + $0xb0] sm:$0xff]
        %v1154 = vld [vmem:[%s388 + $0xc0] sm:$0xff]
        %v1155 = vld [vmem:[%s388 + $0xc8] sm:$0xff]
        %v1156 = vld [vmem:[%s388 + $0xd8] sm:$0xff]
        %v1157 = vld [vmem:[%s388 + $0xe0] sm:$0xff]
        %v1158 = vld [vmem:[%s388 + $0xf0] sm:$0xff]
        %v1159 = vld [vmem:[%s388 + $0xf8] sm:$0xff]
        %v1160 = vld [vmem:[%s388 + $0x108] sm:$0xff]
        %v1161 = vld [vmem:[%s388 + $0x110] sm:$0xff]
        %v1162 = vld [vmem:[%s388 + $0x120] sm:$0xff]
        %v1163 = vld [vmem:[%s388 + $0x128] sm:$0xff]
        %v1164 = vld [vmem:[%s388 + $0x138] sm:$0xff]
        %v1165 = vld [vmem:[%s388 + $0x140] sm:$0xff]
        %v1166 = vld [vmem:[%s388 + $0x150] sm:$0xff]
        %v1167 = vld [vmem:[%s388 + $0x158] sm:$0xff]
        %v1168 = vld [vmem:[%s388 + $0x168] sm:$0xff]
        %v1169 = vld [vmem:[%s388 + $0x170] sm:$0xff]
        %s1170 = scalar_lea.vmem [#allocation8], 8
        %v1171 = vld [vmem:[%s1170] sm:$0xf]
        %v1173 = vsel %vm347, %v1138, 0
        %v1176 = vsel %vm347, %v1139, 0
        %v1179 = vsel %vm347, %v1140, 0
        %v1182 = vsel %vm347, %v1141, 0
        %v1185 = vsel %vm347, %v1142, 0
        %v1188 = vsel %vm347, %v1143, 0
        %v1191 = vsel %vm347, %v1144, 0
        %v1194 = vsel %vm347, %v1145, 0
        %v1197 = vsel %vm347, %v1146, 0
        %v1200 = vsel %vm347, %v1147, 0
        %v1203 = vsel %vm347, %v1148, 0
        %v1206 = vsel %vm347, %v1149, 0
        %v1209 = vsel %vm347, %v1150, 0
        %v1212 = vsel %vm347, %v1151, 0
        %v1215 = vsel %vm347, %v1152, 0
        %v1218 = vsel %vm347, %v1153, 0
        %v1221 = vsel %vm347, %v1154, 0
        %v1224 = vsel %vm347, %v1155, 0
        %v1227 = vsel %vm347, %v1156, 0
        %v1230 = vsel %vm347, %v1157, 0
        %v1233 = vsel %vm347, %v1158, 0
        %v1236 = vsel %vm347, %v1159, 0
        %v1239 = vsel %vm347, %v1160, 0
        %v1242 = vsel %vm347, %v1161, 0
        %v1245 = vsel %vm347, %v1162, 0
        %v1248 = vsel %vm347, %v1163, 0
        %v1251 = vsel %vm347, %v1164, 0
        %v1254 = vsel %vm347, %v1165, 0
        %v1257 = vsel %vm347, %v1166, 0
        %v1260 = vsel %vm347, %v1167, 0
        %v1263 = vsel %vm347, %v1168, 0
        %v1266 = vsel %vm347, %v1169, 0
        %v1269 = vsel %vm585, %v1171, 0
        %1271 = vmatprep.subr.mxu0 0.0
        %1272 = vmatpush1.msra.mxu0 %v1269
        %1273 = vmatprep.subr.mxu0 0.0
        %1274 = vmatpush1.msra.mxu0 0.0
        %1275 = vmatprep.subr.mxu0 0.0
        %1276 = vmatpush1.msra.mxu0 0.0
        %1277 = vmatprep.subr.mxu0 0.0
        %1278 = vmatpush1.msra.mxu0 0.0
        %1279 = vmatprep.subr.mxu0 0.0
        %1280 = vmatpush1.msra.mxu0 0.0
        %1281 = vmatprep.subr.mxu0 0.0
        %1282 = vmatpush1.msra.mxu0 0.0
        %1283 = vmatprep.subr.mxu0 0.0
        %1284 = vmatpush1.msra.mxu0 0.0
        %1285 = vmatprep.subr.mxu0 0.0
        %1286 = vmatpush1.msra.mxu0 0.0
        %1287 = vmatprep.subr.mxu0 0.0
        %1288 = vmatpush1.msra.mxu0 0.0
        %1289 = vmatprep.subr.mxu0 0.0
        %1290 = vmatpush1.msra.mxu0 0.0
        %1291 = vmatprep.subr.mxu0 0.0
        %1292 = vmatpush1.msra.mxu0 0.0
        %1293 = vmatprep.subr.mxu0 0.0
        %1294 = vmatpush1.msra.mxu0 0.0
        %1295 = vmatprep.subr.mxu0 0.0
        %1296 = vmatpush1.msra.mxu0 0.0
        %1297 = vmatprep.subr.mxu0 0.0
        %1298 = vmatpush1.msra.mxu0 0.0
        %1299 = vmatprep.subr.mxu0 0.0
        %1300 = vmatpush1.msra.mxu0 0.0
        %1301 = vmatprep.subr.mxu0 0.0
        %1302 = vmatpush1.msra.mxu0 0.0
        %1303 = vmatprep.subr.mxu0 0.0
        %1304 = vmatpush1.msra.mxu0 0.0
        %1305 = vmatprep.subr.mxu0 0.0
        %1306 = vmatpush1.msra.mxu0 0.0
        %1307 = vmatprep.subr.mxu0 0.0
        %1308 = vmatpush1.msra.mxu0 0.0
        %1309 = vmatprep.subr.mxu0 0.0
        %1310 = vmatpush1.msra.mxu0 0.0
        %1311 = vmatprep.subr.mxu0 0.0
        %1312 = vmatpush1.msra.mxu0 0.0
        %1313 = vmatprep.subr.mxu0 0.0
        %1314 = vmatpush1.msra.mxu0 0.0
        %1315 = vmatprep.subr.mxu0 0.0
        %1316 = vmatpush1.msra.mxu0 0.0
        %1317 = vmatprep.subr.mxu0 0.0
        %1318 = vmatpush1.msra.mxu0 0.0
        %1319 = vmatprep.subr.mxu0 0.0
        %1320 = vmatpush1.msra.mxu0 0.0
        %1321 = vmatprep.subr.mxu0 0.0
        %1322 = vmatpush1.msra.mxu0 0.0
        %1323 = vmatprep.subr.mxu0 0.0
        %1324 = vmatpush1.msra.mxu0 0.0
        %1325 = vmatprep.subr.mxu0 0.0
        %1326 = vmatpush1.msra.mxu0 0.0
        %1327 = vmatprep.subr.mxu0 0.0
        %1328 = vmatpush1.msra.mxu0 0.0
        %1329 = vmatprep.subr.mxu0 0.0
        %1330 = vmatpush1.msra.mxu0 0.0
        %1331 = vmatprep.subr.mxu0 0.0
        %1332 = vmatpush1.msra.mxu0 0.0
        %1333 = vmatprep.subr.mxu0 0.0
        %1334 = vmatpush1.msra.mxu0 0.0
        %1335 = vmatprep.mubr.f32.mxu0 0.0
        %1336 = vmatmul.mubr.f32.gmra.mrb[0].mxu0 %v1173
        %v1337 = vpop.f32.mrb[0].mxu0
        %v1338 = vadd.f32 0.0, %v1337
        %v1339 = vpop.f32.mrb[0].mxu0
        %1340 = vmatprep.mubr.f32.mxu0 0.0
        %1341 = vmatmul.mubr.f32.gmra.mrb[0].mxu0 %v1176
        %v1342 = vpop.f32.mrb[0].mxu0
        %v1343 = vadd.f32 0.0, %v1342
        %v1344 = vpop.f32.mrb[0].mxu0
        %1345 = vmatprep.mubr.f32.mxu0 0.0
        %1346 = vmatmul.mubr.f32.gmra.mrb[0].mxu0 %v1179
        %v1347 = vpop.f32.mrb[0].mxu0
        %v1348 = vadd.f32 0.0, %v1347
        %v1349 = vpop.f32.mrb[0].mxu0
        %1350 = vmatprep.mubr.f32.mxu0 0.0
        %1351 = vmatmul.mubr.f32.gmra.mrb[0].mxu0 %v1182
        %v1352 = vpop.f32.mrb[0].mxu0
        %v1353 = vadd.f32 0.0, %v1352
        %v1354 = vpop.f32.mrb[0].mxu0
        %1355 = vmatprep.mubr.f32.mxu0 0.0
        %1356 = vmatmul.mubr.f32.gmra.mrb[0].mxu0 %v1185
        %v1357 = vpop.f32.mrb[0].mxu0
        %v1358 = vadd.f32 0.0, %v1357
        %v1359 = vpop.f32.mrb[0].mxu0
        %1360 = vmatprep.mubr.f32.mxu0 0.0
        %1361 = vmatmul.mubr.f32.gmra.mrb[0].mxu0 %v1188
        %v1362 = vpop.f32.mrb[0].mxu0
        %v1363 = vadd.f32 0.0, %v1362
        %v1364 = vpop.f32.mrb[0].mxu0
        %1365 = vmatprep.mubr.f32.mxu0 0.0
        %1366 = vmatmul.mubr.f32.gmra.mrb[0].mxu0 %v1191
        %v1367 = vpop.f32.mrb[0].mxu0
        %v1368 = vadd.f32 0.0, %v1367
        %v1369 = vpop.f32.mrb[0].mxu0
        %1370 = vmatprep.mubr.f32.mxu0 0.0
        %1371 = vmatmul.mubr.f32.gmra.mrb[0].mxu0 %v1194
        %v1372 = vpop.f32.mrb[0].mxu0
        %v1373 = vadd.f32 0.0, %v1372
        %v1374 = vpop.f32.mrb[0].mxu0
        %1375 = vmatprep.mubr.f32.mxu0 0.0
        %1376 = vmatmul.mubr.f32.gmra.mrb[0].mxu0 %v1197
        %v1377 = vpop.f32.mrb[0].mxu0
        %v1378 = vadd.f32 0.0, %v1377
        %v1379 = vpop.f32.mrb[0].mxu0
        %1380 = vmatprep.mubr.f32.mxu0 0.0
        %1381 = vmatmul.mubr.f32.gmra.mrb[0].mxu0 %v1200
        %v1382 = vpop.f32.mrb[0].mxu0
        %v1383 = vadd.f32 0.0, %v1382
        %v1384 = vpop.f32.mrb[0].mxu0
        %1385 = vmatprep.mubr.f32.mxu0 0.0
        %1386 = vmatmul.mubr.f32.gmra.mrb[0].mxu0 %v1203
        %v1387 = vpop.f32.mrb[0].mxu0
        %v1388 = vadd.f32 0.0, %v1387
        %v1389 = vpop.f32.mrb[0].mxu0
        %1390 = vmatprep.mubr.f32.mxu0 0.0
        %1391 = vmatmul.mubr.f32.gmra.mrb[0].mxu0 %v1206
        %v1392 = vpop.f32.mrb[0].mxu0
        %v1393 = vadd.f32 0.0, %v1392
        %v1394 = vpop.f32.mrb[0].mxu0
        %1395 = vmatprep.mubr.f32.mxu0 0.0
        %1396 = vmatmul.mubr.f32.gmra.mrb[0].mxu0 %v1209
        %v1397 = vpop.f32.mrb[0].mxu0
        %v1398 = vadd.f32 0.0, %v1397
        %v1399 = vpop.f32.mrb[0].mxu0
        %1400 = vmatprep.mubr.f32.mxu0 0.0
        %1401 = vmatmul.mubr.f32.gmra.mrb[0].mxu0 %v1212
        %v1402 = vpop.f32.mrb[0].mxu0
        %v1403 = vadd.f32 0.0, %v1402
        %v1404 = vpop.f32.mrb[0].mxu0
        %1405 = vmatprep.mubr.f32.mxu0 0.0
        %1406 = vmatmul.mubr.f32.gmra.mrb[0].mxu0 %v1215
        %v1407 = vpop.f32.mrb[0].mxu0
        %v1408 = vadd.f32 0.0, %v1407
        %v1409 = vpop.f32.mrb[0].mxu0
        %1410 = vmatprep.mubr.f32.mxu0 0.0
        %1411 = vmatmul.mubr.f32.gmra.mrb[0].mxu0 %v1218
        %v1412 = vpop.f32.mrb[0].mxu0
        %v1413 = vadd.f32 0.0, %v1412
        %v1414 = vpop.f32.mrb[0].mxu0
        %1415 = vmatprep.mubr.f32.mxu0 0.0
        %1416 = vmatmul.mubr.f32.gmra.mrb[0].mxu0 %v1221
        %v1417 = vpop.f32.mrb[0].mxu0
        %v1418 = vadd.f32 0.0, %v1417
        %v1419 = vpop.f32.mrb[0].mxu0
        %1420 = vmatprep.mubr.f32.mxu0 0.0
        %1421 = vmatmul.mubr.f32.gmra.mrb[0].mxu0 %v1224
        %v1422 = vpop.f32.mrb[0].mxu0
        %v1423 = vadd.f32 0.0, %v1422
        %v1424 = vpop.f32.mrb[0].mxu0
        %1425 = vmatprep.mubr.f32.mxu0 0.0
        %1426 = vmatmul.mubr.f32.gmra.mrb[0].mxu0 %v1227
        %v1427 = vpop.f32.mrb[0].mxu0
        %v1428 = vadd.f32 0.0, %v1427
        %v1429 = vpop.f32.mrb[0].mxu0
        %1430 = vmatprep.mubr.f32.mxu0 0.0
        %1431 = vmatmul.mubr.f32.gmra.mrb[0].mxu0 %v1230
        %v1432 = vpop.f32.mrb[0].mxu0
        %v1433 = vadd.f32 0.0, %v1432
        %v1434 = vpop.f32.mrb[0].mxu0
        %1435 = vmatprep.mubr.f32.mxu0 0.0
        %1436 = vmatmul.mubr.f32.gmra.mrb[0].mxu0 %v1233
        %v1437 = vpop.f32.mrb[0].mxu0
        %v1438 = vadd.f32 0.0, %v1437
        %v1439 = vpop.f32.mrb[0].mxu0
        %1440 = vmatprep.mubr.f32.mxu0 0.0
        %1441 = vmatmul.mubr.f32.gmra.mrb[0].mxu0 %v1236
        %v1442 = vpop.f32.mrb[0].mxu0
        %v1443 = vadd.f32 0.0, %v1442
        %v1444 = vpop.f32.mrb[0].mxu0
        %1445 = vmatprep.mubr.f32.mxu0 0.0
        %1446 = vmatmul.mubr.f32.gmra.mrb[0].mxu0 %v1239
        %v1447 = vpop.f32.mrb[0].mxu0
        %v1448 = vadd.f32 0.0, %v1447
        %v1449 = vpop.f32.mrb[0].mxu0
        %1450 = vmatprep.mubr.f32.mxu0 0.0
        %1451 = vmatmul.mubr.f32.gmra.mrb[0].mxu0 %v1242
        %v1452 = vpop.f32.mrb[0].mxu0
        %v1453 = vadd.f32 0.0, %v1452
        %v1454 = vpop.f32.mrb[0].mxu0
        %1455 = vmatprep.mubr.f32.mxu0 0.0
        %1456 = vmatmul.mubr.f32.gmra.mrb[0].mxu0 %v1245
        %v1457 = vpop.f32.mrb[0].mxu0
        %v1458 = vadd.f32 0.0, %v1457
        %v1459 = vpop.f32.mrb[0].mxu0
        %1460 = vmatprep.mubr.f32.mxu0 0.0
        %1461 = vmatmul.mubr.f32.gmra.mrb[0].mxu0 %v1248
        %v1462 = vpop.f32.mrb[0].mxu0
        %v1463 = vadd.f32 0.0, %v1462
        %v1464 = vpop.f32.mrb[0].mxu0
        %1465 = vmatprep.mubr.f32.mxu0 0.0
        %1466 = vmatmul.mubr.f32.gmra.mrb[0].mxu0 %v1251
        %v1467 = vpop.f32.mrb[0].mxu0
        %v1468 = vadd.f32 0.0, %v1467
        %v1469 = vpop.f32.mrb[0].mxu0
        %1470 = vmatprep.mubr.f32.mxu0 0.0
        %1471 = vmatmul.mubr.f32.gmra.mrb[0].mxu0 %v1254
        %v1472 = vpop.f32.mrb[0].mxu0
        %v1473 = vadd.f32 0.0, %v1472
        %v1474 = vpop.f32.mrb[0].mxu0
        %1475 = vmatprep.mubr.f32.mxu0 0.0
        %1476 = vmatmul.mubr.f32.gmra.mrb[0].mxu0 %v1257
        %v1477 = vpop.f32.mrb[0].mxu0
        %v1478 = vadd.f32 0.0, %v1477
        %v1479 = vpop.f32.mrb[0].mxu0
        %1480 = vmatprep.mubr.f32.mxu0 0.0
        %1481 = vmatmul.mubr.f32.gmra.mrb[0].mxu0 %v1260
        %v1482 = vpop.f32.mrb[0].mxu0
        %v1483 = vadd.f32 0.0, %v1482
        %v1484 = vpop.f32.mrb[0].mxu0
        %1485 = vmatprep.mubr.f32.mxu0 0.0
        %1486 = vmatmul.mubr.f32.gmra.mrb[0].mxu0 %v1263
        %v1487 = vpop.f32.mrb[0].mxu0
        %v1488 = vadd.f32 0.0, %v1487
        %v1489 = vpop.f32.mrb[0].mxu0
        %1490 = vmatprep.mubr.f32.mxu0 0.0
        %1491 = vmatmul.mubr.f32.gmra.mrb[0].mxu0 %v1266
        %v1492 = vpop.f32.mrb[0].mxu0
        %v1493 = vadd.f32 0.0, %v1492
        %v1494 = vpop.f32.mrb[0].mxu0
        %1495 = vdwg.mxu0
        %v1496 = vadd.f32 %v980, %v1338
        %v1497 = vadd.f32 %v985, %v1343
        %v1498 = vadd.f32 %v990, %v1348
        %v1499 = vadd.f32 %v995, %v1353
        %v1500 = vadd.f32 %v1000, %v1358
        %v1501 = vadd.f32 %v1005, %v1363
        %v1502 = vadd.f32 %v1010, %v1368
        %v1503 = vadd.f32 %v1015, %v1373
        %v1504 = vadd.f32 %v1020, %v1378
        %v1505 = vadd.f32 %v1025, %v1383
        %v1506 = vadd.f32 %v1030, %v1388
        %v1507 = vadd.f32 %v1035, %v1393
        %v1508 = vadd.f32 %v1040, %v1398
        %v1509 = vadd.f32 %v1045, %v1403
        %v1510 = vadd.f32 %v1050, %v1408
        %v1511 = vadd.f32 %v1055, %v1413
        %v1512 = vadd.f32 %v1060, %v1418
        %v1513 = vadd.f32 %v1065, %v1423
        %v1514 = vadd.f32 %v1070, %v1428
        %v1515 = vadd.f32 %v1075, %v1433
        %v1516 = vadd.f32 %v1080, %v1438
        %v1517 = vadd.f32 %v1085, %v1443
        %v1518 = vadd.f32 %v1090, %v1448
        %v1519 = vadd.f32 %v1095, %v1453
        %v1520 = vadd.f32 %v1100, %v1458
        %v1521 = vadd.f32 %v1105, %v1463
        %v1522 = vadd.f32 %v1110, %v1468
        %v1523 = vadd.f32 %v1115, %v1473
        %v1524 = vadd.f32 %v1120, %v1478
        %v1525 = vadd.f32 %v1125, %v1483
        %v1526 = vadd.f32 %v1130, %v1488
        %v1527 = vadd.f32 %v1135, %v1493
        %v1528 = vld [vmem:[%s388 + $0x1] sm:$0xff]
        %v1529 = vld [vmem:[%s388 + $0x9] sm:$0xff]
        %v1530 = vld [vmem:[%s388 + $0x19] sm:$0xff]
        %v1531 = vld [vmem:[%s388 + $0x21] sm:$0xff]
        %v1532 = vld [vmem:[%s388 + $0x31] sm:$0xff]
        %v1533 = vld [vmem:[%s388 + $0x39] sm:$0xff]
        %v1534 = vld [vmem:[%s388 + $0x49] sm:$0xff]
        %v1535 = vld [vmem:[%s388 + $0x51] sm:$0xff]
        %v1536 = vld [vmem:[%s388 + $0x61] sm:$0xff]
        %v1537 = vld [vmem:[%s388 + $0x69] sm:$0xff]
        %v1538 = vld [vmem:[%s388 + $0x79] sm:$0xff]
        %v1539 = vld [vmem:[%s388 + $0x81] sm:$0xff]
        %v1540 = vld [vmem:[%s388 + $0x91] sm:$0xff]
        %v1541 = vld [vmem:[%s388 + $0x99] sm:$0xff]
        %v1542 = vld [vmem:[%s388 + $0xa9] sm:$0xff]
        %v1543 = vld [vmem:[%s388 + $0xb1] sm:$0xff]
        %v1544 = vld [vmem:[%s388 + $0xc1] sm:$0xff]
        %v1545 = vld [vmem:[%s388 + $0xc9] sm:$0xff]
        %v1546 = vld [vmem:[%s388 + $0xd9] sm:$0xff]
        %v1547 = vld [vmem:[%s388 + $0xe1] sm:$0xff]
        %v1548 = vld [vmem:[%s388 + $0xf1] sm:$0xff]
        %v1549 = vld [vmem:[%s388 + $0xf9] sm:$0xff]
        %v1550 = vld [vmem:[%s388 + $0x109] sm:$0xff]
        %v1551 = vld [vmem:[%s388 + $0x111] sm:$0xff]
        %v1552 = vld [vmem:[%s388 + $0x121] sm:$0xff]
        %v1553 = vld [vmem:[%s388 + $0x129] sm:$0xff]
        %v1554 = vld [vmem:[%s388 + $0x139] sm:$0xff]
        %v1555 = vld [vmem:[%s388 + $0x141] sm:$0xff]
        %v1556 = vld [vmem:[%s388 + $0x151] sm:$0xff]
        %v1557 = vld [vmem:[%s388 + $0x159] sm:$0xff]
        %v1558 = vld [vmem:[%s388 + $0x169] sm:$0xff]
        %v1559 = vld [vmem:[%s388 + $0x171] sm:$0xff]
        %s1560 = scalar_lea.vmem [#allocation8], 12
        %v1561 = vld [vmem:[%s1560] sm:$0xf]
        %v1563 = vsel %vm347, %v1528, 0
        %v1566 = vsel %vm347, %v1529, 0
        %v1569 = vsel %vm347, %v1530, 0
        %v1572 = vsel %vm347, %v1531, 0
        %v1575 = vsel %vm347, %v1532, 0
        %v1578 = vsel %vm347, %v1533, 0
        %v1581 = vsel %vm347, %v1534, 0
        %v1584 = vsel %vm347, %v1535, 0
        %v1587 = vsel %vm347, %v1536, 0
        %v1590 = vsel %vm347, %v1537, 0
        %v1593 = vsel %vm347, %v1538, 0
        %v1596 = vsel %vm347, %v1539, 0
        %v1599 = vsel %vm347, %v1540, 0
        %v1602 = vsel %vm347, %v1541, 0
        %v1605 = vsel %vm347, %v1542, 0
        %v1608 = vsel %vm347, %v1543, 0
        %v1611 = vsel %vm347, %v1544, 0
        %v1614 = vsel %vm347, %v1545, 0
        %v1617 = vsel %vm347, %v1546, 0
        %v1620 = vsel %vm347, %v1547, 0
        %v1623 = vsel %vm347, %v1548, 0
        %v1626 = vsel %vm347, %v1549, 0
        %v1629 = vsel %vm347, %v1550, 0
        %v1632 = vsel %vm347, %v1551, 0
        %v1635 = vsel %vm347, %v1552, 0
        %v1638 = vsel %vm347, %v1553, 0
        %v1641 = vsel %vm347, %v1554, 0
        %v1644 = vsel %vm347, %v1555, 0
        %v1647 = vsel %vm347, %v1556, 0
        %v1650 = vsel %vm347, %v1557, 0
        %v1653 = vsel %vm347, %v1558, 0
        %v1656 = vsel %vm347, %v1559, 0
        %v1659 = vsel %vm585, %v1561, 0
        %1661 = vmatprep.subr.mxu0 0.0
        %1662 = vmatpush1.msra.mxu0 %v1659
        %1663 = vmatprep.subr.mxu0 0.0
        %1664 = vmatpush1.msra.mxu0 0.0
        %1665 = vmatprep.subr.mxu0 0.0
        %1666 = vmatpush1.msra.mxu0 0.0
        %1667 = vmatprep.subr.mxu0 0.0
        %1668 = vmatpush1.msra.mxu0 0.0
        %1669 = vmatprep.subr.mxu0 0.0
        %1670 = vmatpush1.msra.mxu0 0.0
        %1671 = vmatprep.subr.mxu0 0.0
        %1672 = vmatpush1.msra.mxu0 0.0
        %1673 = vmatprep.subr.mxu0 0.0
        %1674 = vmatpush1.msra.mxu0 0.0
        %1675 = vmatprep.subr.mxu0 0.0
        %1676 = vmatpush1.msra.mxu0 0.0
        %1677 = vmatprep.subr.mxu0 0.0
        %1678 = vmatpush1.msra.mxu0 0.0
        %1679 = vmatprep.subr.mxu0 0.0
        %1680 = vmatpush1.msra.mxu0 0.0
        %1681 = vmatprep.subr.mxu0 0.0
        %1682 = vmatpush1.msra.mxu0 0.0
        %1683 = vmatprep.subr.mxu0 0.0
        %1684 = vmatpush1.msra.mxu0 0.0
        %1685 = vmatprep.subr.mxu0 0.0
        %1686 = vmatpush1.msra.mxu0 0.0
        %1687 = vmatprep.subr.mxu0 0.0
        %1688 = vmatpush1.msra.mxu0 0.0
        %1689 = vmatprep.subr.mxu0 0.0
        %1690 = vmatpush1.msra.mxu0 0.0
        %1691 = vmatprep.subr.mxu0 0.0
        %1692 = vmatpush1.msra.mxu0 0.0
        %1693 = vmatprep.subr.mxu0 0.0
        %1694 = vmatpush1.msra.mxu0 0.0
        %1695 = vmatprep.subr.mxu0 0.0
        %1696 = vmatpush1.msra.mxu0 0.0
        %1697 = vmatprep.subr.mxu0 0.0
        %1698 = vmatpush1.msra.mxu0 0.0
        %1699 = vmatprep.subr.mxu0 0.0
        %1700 = vmatpush1.msra.mxu0 0.0
        %1701 = vmatprep.subr.mxu0 0.0
        %1702 = vmatpush1.msra.mxu0 0.0
        %1703 = vmatprep.subr.mxu0 0.0
        %1704 = vmatpush1.msra.mxu0 0.0
        %1705 = vmatprep.subr.mxu0 0.0
        %1706 = vmatpush1.msra.mxu0 0.0
        %1707 = vmatprep.subr.mxu0 0.0
        %1708 = vmatpush1.msra.mxu0 0.0
        %1709 = vmatprep.subr.mxu0 0.0
        %1710 = vmatpush1.msra.mxu0 0.0
        %1711 = vmatprep.subr.mxu0 0.0
        %1712 = vmatpush1.msra.mxu0 0.0
        %1713 = vmatprep.subr.mxu0 0.0
        %1714 = vmatpush1.msra.mxu0 0.0
        %1715 = vmatprep.subr.mxu0 0.0
        %1716 = vmatpush1.msra.mxu0 0.0
        %1717 = vmatprep.subr.mxu0 0.0
        %1718 = vmatpush1.msra.mxu0 0.0
        %1719 = vmatprep.subr.mxu0 0.0
        %1720 = vmatpush1.msra.mxu0 0.0
        %1721 = vmatprep.subr.mxu0 0.0
        %1722 = vmatpush1.msra.mxu0 0.0
        %1723 = vmatprep.subr.mxu0 0.0
        %1724 = vmatpush1.msra.mxu0 0.0
        %1725 = vmatprep.mubr.f32.mxu0 0.0
        %1726 = vmatmul.mubr.f32.gmra.mrb[0].mxu0 %v1563
        %v1727 = vpop.f32.mrb[0].mxu0
        %v1728 = vadd.f32 0.0, %v1727
        %v1729 = vpop.f32.mrb[0].mxu0
        %1730 = vmatprep.mubr.f32.mxu0 0.0
        %1731 = vmatmul.mubr.f32.gmra.mrb[0].mxu0 %v1566
        %v1732 = vpop.f32.mrb[0].mxu0
        %v1733 = vadd.f32 0.0, %v1732
        %v1734 = vpop.f32.mrb[0].mxu0
        %1735 = vmatprep.mubr.f32.mxu0 0.0
        %1736 = vmatmul.mubr.f32.gmra.mrb[0].mxu0 %v1569
        %v1737 = vpop.f32.mrb[0].mxu0
        %v1738 = vadd.f32 0.0, %v1737
        %v1739 = vpop.f32.mrb[0].mxu0
        %1740 = vmatprep.mubr.f32.mxu0 0.0
        %1741 = vmatmul.mubr.f32.gmra.mrb[0].mxu0 %v1572
        %v1742 = vpop.f32.mrb[0].mxu0
        %v1743 = vadd.f32 0.0, %v1742
        %v1744 = vpop.f32.mrb[0].mxu0
        %1745 = vmatprep.mubr.f32.mxu0 0.0
        %1746 = vmatmul.mubr.f32.gmra.mrb[0].mxu0 %v1575
        %v1747 = vpop.f32.mrb[0].mxu0
        %v1748 = vadd.f32 0.0, %v1747
        %v1749 = vpop.f32.mrb[0].mxu0
        %1750 = vmatprep.mubr.f32.mxu0 0.0
        %1751 = vmatmul.mubr.f32.gmra.mrb[0].mxu0 %v1578
        %v1752 = vpop.f32.mrb[0].mxu0
        %v1753 = vadd.f32 0.0, %v1752
        %v1754 = vpop.f32.mrb[0].mxu0
        %1755 = vmatprep.mubr.f32.mxu0 0.0
        %1756 = vmatmul.mubr.f32.gmra.mrb[0].mxu0 %v1581
        %v1757 = vpop.f32.mrb[0].mxu0
        %v1758 = vadd.f32 0.0, %v1757
        %v1759 = vpop.f32.mrb[0].mxu0
        %1760 = vmatprep.mubr.f32.mxu0 0.0
        %1761 = vmatmul.mubr.f32.gmra.mrb[0].mxu0 %v1584
        %v1762 = vpop.f32.mrb[0].mxu0
        %v1763 = vadd.f32 0.0, %v1762
        %v1764 = vpop.f32.mrb[0].mxu0
        %1765 = vmatprep.mubr.f32.mxu0 0.0
        %1766 = vmatmul.mubr.f32.gmra.mrb[0].mxu0 %v1587
        %v1767 = vpop.f32.mrb[0].mxu0
        %v1768 = vadd.f32 0.0, %v1767
        %v1769 = vpop.f32.mrb[0].mxu0
        %1770 = vmatprep.mubr.f32.mxu0 0.0
        %1771 = vmatmul.mubr.f32.gmra.mrb[0].mxu0 %v1590
        %v1772 = vpop.f32.mrb[0].mxu0
        %v1773 = vadd.f32 0.0, %v1772
        %v1774 = vpop.f32.mrb[0].mxu0
        %1775 = vmatprep.mubr.f32.mxu0 0.0
        %1776 = vmatmul.mubr.f32.gmra.mrb[0].mxu0 %v1593
        %v1777 = vpop.f32.mrb[0].mxu0
        %v1778 = vadd.f32 0.0, %v1777
        %v1779 = vpop.f32.mrb[0].mxu0
        %1780 = vmatprep.mubr.f32.mxu0 0.0
        %1781 = vmatmul.mubr.f32.gmra.mrb[0].mxu0 %v1596
        %v1782 = vpop.f32.mrb[0].mxu0
        %v1783 = vadd.f32 0.0, %v1782
        %v1784 = vpop.f32.mrb[0].mxu0
        %1785 = vmatprep.mubr.f32.mxu0 0.0
        %1786 = vmatmul.mubr.f32.gmra.mrb[0].mxu0 %v1599
        %v1787 = vpop.f32.mrb[0].mxu0
        %v1788 = vadd.f32 0.0, %v1787
        %v1789 = vpop.f32.mrb[0].mxu0
        %1790 = vmatprep.mubr.f32.mxu0 0.0
        %1791 = vmatmul.mubr.f32.gmra.mrb[0].mxu0 %v1602
        %v1792 = vpop.f32.mrb[0].mxu0
        %v1793 = vadd.f32 0.0, %v1792
        %v1794 = vpop.f32.mrb[0].mxu0
        %1795 = vmatprep.mubr.f32.mxu0 0.0
        %1796 = vmatmul.mubr.f32.gmra.mrb[0].mxu0 %v1605
        %v1797 = vpop.f32.mrb[0].mxu0
        %v1798 = vadd.f32 0.0, %v1797
        %v1799 = vpop.f32.mrb[0].mxu0
        %1800 = vmatprep.mubr.f32.mxu0 0.0
        %1801 = vmatmul.mubr.f32.gmra.mrb[0].mxu0 %v1608
        %v1802 = vpop.f32.mrb[0].mxu0
        %v1803 = vadd.f32 0.0, %v1802
        %v1804 = vpop.f32.mrb[0].mxu0
        %1805 = vmatprep.mubr.f32.mxu0 0.0
        %1806 = vmatmul.mubr.f32.gmra.mrb[0].mxu0 %v1611
        %v1807 = vpop.f32.mrb[0].mxu0
        %v1808 = vadd.f32 0.0, %v1807
        %v1809 = vpop.f32.mrb[0].mxu0
        %1810 = vmatprep.mubr.f32.mxu0 0.0
        %1811 = vmatmul.mubr.f32.gmra.mrb[0].mxu0 %v1614
        %v1812 = vpop.f32.mrb[0].mxu0
        %v1813 = vadd.f32 0.0, %v1812
        %v1814 = vpop.f32.mrb[0].mxu0
        %1815 = vmatprep.mubr.f32.mxu0 0.0
        %1816 = vmatmul.mubr.f32.gmra.mrb[0].mxu0 %v1617
        %v1817 = vpop.f32.mrb[0].mxu0
        %v1818 = vadd.f32 0.0, %v1817
        %v1819 = vpop.f32.mrb[0].mxu0
        %1820 = vmatprep.mubr.f32.mxu0 0.0
        %1821 = vmatmul.mubr.f32.gmra.mrb[0].mxu0 %v1620
        %v1822 = vpop.f32.mrb[0].mxu0
        %v1823 = vadd.f32 0.0, %v1822
        %v1824 = vpop.f32.mrb[0].mxu0
        %1825 = vmatprep.mubr.f32.mxu0 0.0
        %1826 = vmatmul.mubr.f32.gmra.mrb[0].mxu0 %v1623
        %v1827 = vpop.f32.mrb[0].mxu0
        %v1828 = vadd.f32 0.0, %v1827
        %v1829 = vpop.f32.mrb[0].mxu0
        %1830 = vmatprep.mubr.f32.mxu0 0.0
        %1831 = vmatmul.mubr.f32.gmra.mrb[0].mxu0 %v1626
        %v1832 = vpop.f32.mrb[0].mxu0
        %v1833 = vadd.f32 0.0, %v1832
        %v1834 = vpop.f32.mrb[0].mxu0
        %1835 = vmatprep.mubr.f32.mxu0 0.0
        %1836 = vmatmul.mubr.f32.gmra.mrb[0].mxu0 %v1629
        %v1837 = vpop.f32.mrb[0].mxu0
        %v1838 = vadd.f32 0.0, %v1837
        %v1839 = vpop.f32.mrb[0].mxu0
        %1840 = vmatprep.mubr.f32.mxu0 0.0
        %1841 = vmatmul.mubr.f32.gmra.mrb[0].mxu0 %v1632
        %v1842 = vpop.f32.mrb[0].mxu0
        %v1843 = vadd.f32 0.0, %v1842
        %v1844 = vpop.f32.mrb[0].mxu0
        %1845 = vmatprep.mubr.f32.mxu0 0.0
        %1846 = vmatmul.mubr.f32.gmra.mrb[0].mxu0 %v1635
        %v1847 = vpop.f32.mrb[0].mxu0
        %v1848 = vadd.f32 0.0, %v1847
        %v1849 = vpop.f32.mrb[0].mxu0
        %1850 = vmatprep.mubr.f32.mxu0 0.0
        %1851 = vmatmul.mubr.f32.gmra.mrb[0].mxu0 %v1638
        %v1852 = vpop.f32.mrb[0].mxu0
        %v1853 = vadd.f32 0.0, %v1852
        %v1854 = vpop.f32.mrb[0].mxu0
        %1855 = vmatprep.mubr.f32.mxu0 0.0
        %1856 = vmatmul.mubr.f32.gmra.mrb[0].mxu0 %v1641
        %v1857 = vpop.f32.mrb[0].mxu0
        %v1858 = vadd.f32 0.0, %v1857
        %v1859 = vpop.f32.mrb[0].mxu0
        %1860 = vmatprep.mubr.f32.mxu0 0.0
        %1861 = vmatmul.mubr.f32.gmra.mrb[0].mxu0 %v1644
        %v1862 = vpop.f32.mrb[0].mxu0
        %v1863 = vadd.f32 0.0, %v1862
        %v1864 = vpop.f32.mrb[0].mxu0
        %1865 = vmatprep.mubr.f32.mxu0 0.0
        %1866 = vmatmul.mubr.f32.gmra.mrb[0].mxu0 %v1647
        %v1867 = vpop.f32.mrb[0].mxu0
        %v1868 = vadd.f32 0.0, %v1867
        %v1869 = vpop.f32.mrb[0].mxu0
        %1870 = vmatprep.mubr.f32.mxu0 0.0
        %1871 = vmatmul.mubr.f32.gmra.mrb[0].mxu0 %v1650
        %v1872 = vpop.f32.mrb[0].mxu0
        %v1873 = vadd.f32 0.0, %v1872
        %v1874 = vpop.f32.mrb[0].mxu0
        %1875 = vmatprep.mubr.f32.mxu0 0.0
        %1876 = vmatmul.mubr.f32.gmra.mrb[0].mxu0 %v1653
        %v1877 = vpop.f32.mrb[0].mxu0
        %v1878 = vadd.f32 0.0, %v1877
        %v1879 = vpop.f32.mrb[0].mxu0
        %1880 = vmatprep.mubr.f32.mxu0 0.0
        %1881 = vmatmul.mubr.f32.gmra.mrb[0].mxu0 %v1656
        %v1882 = vpop.f32.mrb[0].mxu0
        %v1883 = vadd.f32 0.0, %v1882
        %v1884 = vpop.f32.mrb[0].mxu0
        %1885 = vdwg.mxu0
        %v1886 = vadd.f32 %v1496, %v1728
        %v1887 = vadd.f32 %v1497, %v1733
        %v1888 = vadd.f32 %v1498, %v1738
        %v1889 = vadd.f32 %v1499, %v1743
        %v1890 = vadd.f32 %v1500, %v1748
        %v1891 = vadd.f32 %v1501, %v1753
        %v1892 = vadd.f32 %v1502, %v1758
        %v1893 = vadd.f32 %v1503, %v1763
        %v1894 = vadd.f32 %v1504, %v1768
        %v1895 = vadd.f32 %v1505, %v1773
        %v1896 = vadd.f32 %v1506, %v1778
        %v1897 = vadd.f32 %v1507, %v1783
        %v1898 = vadd.f32 %v1508, %v1788
        %v1899 = vadd.f32 %v1509, %v1793
        %v1900 = vadd.f32 %v1510, %v1798
        %v1901 = vadd.f32 %v1511, %v1803
        %v1902 = vadd.f32 %v1512, %v1808
        %v1903 = vadd.f32 %v1513, %v1813
        %v1904 = vadd.f32 %v1514, %v1818
        %v1905 = vadd.f32 %v1515, %v1823
        %v1906 = vadd.f32 %v1516, %v1828
        %v1907 = vadd.f32 %v1517, %v1833
        %v1908 = vadd.f32 %v1518, %v1838
        %v1909 = vadd.f32 %v1519, %v1843
        %v1910 = vadd.f32 %v1520, %v1848
        %v1911 = vadd.f32 %v1521, %v1853
        %v1912 = vadd.f32 %v1522, %v1858
        %v1913 = vadd.f32 %v1523, %v1863
        %v1914 = vadd.f32 %v1524, %v1868
        %v1915 = vadd.f32 %v1525, %v1873
        %v1916 = vadd.f32 %v1526, %v1878
        %v1917 = vadd.f32 %v1527, %v1883
        %s1918 = scalar_lea.vmem [#allocation8], 16
        %v1919 = vld [vmem:[%s1918] sm:$0xf]
        %v1920 = vld [vmem:[#allocation2 + $0x2] sm:$0xff]
        %v1921 = vld [vmem:[#allocation2 + $0xa] sm:$0xff]
        %v1922 = vld [vmem:[#allocation2 + $0x1a] sm:$0xff]
        %v1923 = vld [vmem:[#allocation2 + $0x22] sm:$0xff]
        %v1924 = vld [vmem:[#allocation2 + $0x32] sm:$0xff]
        %v1925 = vld [vmem:[#allocation2 + $0x3a] sm:$0xff]
        %v1926 = vld [vmem:[#allocation2 + $0x4a] sm:$0xff]
        %v1927 = vld [vmem:[#allocation2 + $0x52] sm:$0xff]
        %v1928 = vld [vmem:[#allocation2 + $0x62] sm:$0xff]
        %v1929 = vld [vmem:[#allocation2 + $0x6a] sm:$0xff]
        %v1930 = vld [vmem:[#allocation2 + $0x7a] sm:$0xff]
        %v1931 = vld [vmem:[#allocation2 + $0x82] sm:$0xff]
        %v1932 = vld [vmem:[#allocation2 + $0x92] sm:$0xff]
        %v1933 = vld [vmem:[#allocation2 + $0x9a] sm:$0xff]
        %v1934 = vld [vmem:[#allocation2 + $0xaa] sm:$0xff]
        %v1935 = vld [vmem:[#allocation2 + $0xb2] sm:$0xff]
        %v1936 = vld [vmem:[#allocation2 + $0xc2] sm:$0xff]
        %v1937 = vld [vmem:[#allocation2 + $0xca] sm:$0xff]
        %v1938 = vld [vmem:[#allocation2 + $0xda] sm:$0xff]
        %v1939 = vld [vmem:[#allocation2 + $0xe2] sm:$0xff]
        %v1940 = vld [vmem:[#allocation2 + $0xf2] sm:$0xff]
        %v1941 = vld [vmem:[#allocation2 + $0xfa] sm:$0xff]
        %v1942 = vld [vmem:[#allocation2 + $0x10a] sm:$0xff]
        %v1943 = vld [vmem:[#allocation2 + $0x112] sm:$0xff]
        %v1944 = vld [vmem:[#allocation2 + $0x122] sm:$0xff]
        %v1945 = vld [vmem:[#allocation2 + $0x12a] sm:$0xff]
        %v1946 = vld [vmem:[#allocation2 + $0x13a] sm:$0xff]
        %v1947 = vld [vmem:[#allocation2 + $0x142] sm:$0xff]
        %v1948 = vld [vmem:[#allocation2 + $0x152] sm:$0xff]
        %v1949 = vld [vmem:[#allocation2 + $0x15a] sm:$0xff]
        %v1950 = vld [vmem:[#allocation2 + $0x16a] sm:$0xff]
        %v1951 = vld [vmem:[#allocation2 + $0x172] sm:$0xff]
        %s1952 = scalar_lea.vmem [#allocation8], 20
        %v1953 = vld [vmem:[%s1952] sm:$0xf]
        %v1955 = vsel %vm347, %v1920, 0
        %v1958 = vsel %vm347, %v1921, 0
        %v1961 = vsel %vm347, %v1922, 0
        %v1964 = vsel %vm347, %v1923, 0
        %v1967 = vsel %vm347, %v1924, 0
        %v1970 = vsel %vm347, %v1925, 0
        %v1973 = vsel %vm347, %v1926, 0
        %v1976 = vsel %vm347, %v1927, 0
        %v1979 = vsel %vm347, %v1928, 0
        %v1982 = vsel %vm347, %v1929, 0
        %v1985 = vsel %vm347, %v1930, 0
        %v1988 = vsel %vm347, %v1931, 0
        %v1991 = vsel %vm347, %v1932, 0
        %v1994 = vsel %vm347, %v1933, 0
        %v1997 = vsel %vm347, %v1934, 0
        %v2000 = vsel %vm347, %v1935, 0
        %v2003 = vsel %vm347, %v1936, 0
        %v2006 = vsel %vm347, %v1937, 0
        %v2009 = vsel %vm347, %v1938, 0
        %v2012 = vsel %vm347, %v1939, 0
        %v2015 = vsel %vm347, %v1940, 0
        %v2018 = vsel %vm347, %v1941, 0
        %v2021 = vsel %vm347, %v1942, 0
        %v2024 = vsel %vm347, %v1943, 0
        %v2027 = vsel %vm347, %v1944, 0
        %v2030 = vsel %vm347, %v1945, 0
        %v2033 = vsel %vm347, %v1946, 0
        %v2036 = vsel %vm347, %v1947, 0
        %v2039 = vsel %vm347, %v1948, 0
        %v2042 = vsel %vm347, %v1949, 0
        %v2045 = vsel %vm347, %v1950, 0
        %v2048 = vsel %vm347, %v1951, 0
        %v2051 = vsel %vm585, %v1953, 0
        %2053 = vmatprep.subr.mxu0 0.0
        %2054 = vmatpush1.msra.mxu0 %v2051
        %2055 = vmatprep.subr.mxu0 0.0
        %2056 = vmatpush1.msra.mxu0 0.0
        %2057 = vmatprep.subr.mxu0 0.0
        %2058 = vmatpush1.msra.mxu0 0.0
        %2059 = vmatprep.subr.mxu0 0.0
        %2060 = vmatpush1.msra.mxu0 0.0
        %2061 = vmatprep.subr.mxu0 0.0
        %2062 = vmatpush1.msra.mxu0 0.0
        %2063 = vmatprep.subr.mxu0 0.0
        %2064 = vmatpush1.msra.mxu0 0.0
        %2065 = vmatprep.subr.mxu0 0.0
        %2066 = vmatpush1.msra.mxu0 0.0
        %2067 = vmatprep.subr.mxu0 0.0
        %2068 = vmatpush1.msra.mxu0 0.0
        %2069 = vmatprep.subr.mxu0 0.0
        %2070 = vmatpush1.msra.mxu0 0.0
        %2071 = vmatprep.subr.mxu0 0.0
        %2072 = vmatpush1.msra.mxu0 0.0
        %2073 = vmatprep.subr.mxu0 0.0
        %2074 = vmatpush1.msra.mxu0 0.0
        %2075 = vmatprep.subr.mxu0 0.0
        %2076 = vmatpush1.msra.mxu0 0.0
        %2077 = vmatprep.subr.mxu0 0.0
        %2078 = vmatpush1.msra.mxu0 0.0
        %2079 = vmatprep.subr.mxu0 0.0
        %2080 = vmatpush1.msra.mxu0 0.0
        %2081 = vmatprep.subr.mxu0 0.0
        %2082 = vmatpush1.msra.mxu0 0.0
        %2083 = vmatprep.subr.mxu0 0.0
        %2084 = vmatpush1.msra.mxu0 0.0
        %2085 = vmatprep.subr.mxu0 0.0
        %2086 = vmatpush1.msra.mxu0 0.0
        %2087 = vmatprep.subr.mxu0 0.0
        %2088 = vmatpush1.msra.mxu0 0.0
        %2089 = vmatprep.subr.mxu0 0.0
        %2090 = vmatpush1.msra.mxu0 0.0
        %2091 = vmatprep.subr.mxu0 0.0
        %2092 = vmatpush1.msra.mxu0 0.0
        %2093 = vmatprep.subr.mxu0 0.0
        %2094 = vmatpush1.msra.mxu0 0.0
        %2095 = vmatprep.subr.mxu0 0.0
        %2096 = vmatpush1.msra.mxu0 0.0
        %2097 = vmatprep.subr.mxu0 0.0
        %2098 = vmatpush1.msra.mxu0 0.0
        %2099 = vmatprep.subr.mxu0 0.0
        %2100 = vmatpush1.msra.mxu0 0.0
        %2101 = vmatprep.subr.mxu0 0.0
        %2102 = vmatpush1.msra.mxu0 0.0
        %2103 = vmatprep.subr.mxu0 0.0
        %2104 = vmatpush1.msra.mxu0 0.0
        %2105 = vmatprep.subr.mxu0 0.0
        %2106 = vmatpush1.msra.mxu0 0.0
        %2107 = vmatprep.subr.mxu0 0.0
        %2108 = vmatpush1.msra.mxu0 0.0
        %2109 = vmatprep.subr.mxu0 0.0
        %2110 = vmatpush1.msra.mxu0 0.0
        %2111 = vmatprep.subr.mxu0 0.0
        %2112 = vmatpush1.msra.mxu0 0.0
        %2113 = vmatprep.subr.mxu0 0.0
        %2114 = vmatpush1.msra.mxu0 0.0
        %2115 = vmatprep.subr.mxu0 0.0
        %2116 = vmatpush1.msra.mxu0 0.0
        %2117 = vmatprep.mubr.f32.mxu0 0.0
        %2118 = vmatmul.mubr.f32.gmra.mrb[0].mxu0 %v1955
        %v2119 = vpop.f32.mrb[0].mxu0
        %v2120 = vadd.f32 0.0, %v2119
        %v2121 = vpop.f32.mrb[0].mxu0
        %2122 = vmatprep.mubr.f32.mxu0 0.0
        %2123 = vmatmul.mubr.f32.gmra.mrb[0].mxu0 %v1958
        %v2124 = vpop.f32.mrb[0].mxu0
        %v2125 = vadd.f32 0.0, %v2124
        %v2126 = vpop.f32.mrb[0].mxu0
        %2127 = vmatprep.mubr.f32.mxu0 0.0
        %2128 = vmatmul.mubr.f32.gmra.mrb[0].mxu0 %v1961
        %v2129 = vpop.f32.mrb[0].mxu0
        %v2130 = vadd.f32 0.0, %v2129
        %v2131 = vpop.f32.mrb[0].mxu0
        %2132 = vmatprep.mubr.f32.mxu0 0.0
        %2133 = vmatmul.mubr.f32.gmra.mrb[0].mxu0 %v1964
        %v2134 = vpop.f32.mrb[0].mxu0
        %v2135 = vadd.f32 0.0, %v2134
        %v2136 = vpop.f32.mrb[0].mxu0
        %2137 = vmatprep.mubr.f32.mxu0 0.0
        %2138 = vmatmul.mubr.f32.gmra.mrb[0].mxu0 %v1967
        %v2139 = vpop.f32.mrb[0].mxu0
        %v2140 = vadd.f32 0.0, %v2139
        %v2141 = vpop.f32.mrb[0].mxu0
        %2142 = vmatprep.mubr.f32.mxu0 0.0
        %2143 = vmatmul.mubr.f32.gmra.mrb[0].mxu0 %v1970
        %v2144 = vpop.f32.mrb[0].mxu0
        %v2145 = vadd.f32 0.0, %v2144
        %v2146 = vpop.f32.mrb[0].mxu0
        %2147 = vmatprep.mubr.f32.mxu0 0.0
        %2148 = vmatmul.mubr.f32.gmra.mrb[0].mxu0 %v1973
        %v2149 = vpop.f32.mrb[0].mxu0
        %v2150 = vadd.f32 0.0, %v2149
        %v2151 = vpop.f32.mrb[0].mxu0
        %2152 = vmatprep.mubr.f32.mxu0 0.0
        %2153 = vmatmul.mubr.f32.gmra.mrb[0].mxu0 %v1976
        %v2154 = vpop.f32.mrb[0].mxu0
        %v2155 = vadd.f32 0.0, %v2154
        %v2156 = vpop.f32.mrb[0].mxu0
        %2157 = vmatprep.mubr.f32.mxu0 0.0
        %2158 = vmatmul.mubr.f32.gmra.mrb[0].mxu0 %v1979
        %v2159 = vpop.f32.mrb[0].mxu0
        %v2160 = vadd.f32 0.0, %v2159
        %v2161 = vpop.f32.mrb[0].mxu0
        %2162 = vmatprep.mubr.f32.mxu0 0.0
        %2163 = vmatmul.mubr.f32.gmra.mrb[0].mxu0 %v1982
        %v2164 = vpop.f32.mrb[0].mxu0
        %v2165 = vadd.f32 0.0, %v2164
        %v2166 = vpop.f32.mrb[0].mxu0
        %2167 = vmatprep.mubr.f32.mxu0 0.0
        %2168 = vmatmul.mubr.f32.gmra.mrb[0].mxu0 %v1985
        %v2169 = vpop.f32.mrb[0].mxu0
        %v2170 = vadd.f32 0.0, %v2169
        %v2171 = vpop.f32.mrb[0].mxu0
        %2172 = vmatprep.mubr.f32.mxu0 0.0
        %2173 = vmatmul.mubr.f32.gmra.mrb[0].mxu0 %v1988
        %v2174 = vpop.f32.mrb[0].mxu0
        %v2175 = vadd.f32 0.0, %v2174
        %v2176 = vpop.f32.mrb[0].mxu0
        %2177 = vmatprep.mubr.f32.mxu0 0.0
        %2178 = vmatmul.mubr.f32.gmra.mrb[0].mxu0 %v1991
        %v2179 = vpop.f32.mrb[0].mxu0
        %v2180 = vadd.f32 0.0, %v2179
        %v2181 = vpop.f32.mrb[0].mxu0
        %2182 = vmatprep.mubr.f32.mxu0 0.0
        %2183 = vmatmul.mubr.f32.gmra.mrb[0].mxu0 %v1994
        %v2184 = vpop.f32.mrb[0].mxu0
        %v2185 = vadd.f32 0.0, %v2184
        %v2186 = vpop.f32.mrb[0].mxu0
        %2187 = vmatprep.mubr.f32.mxu0 0.0
        %2188 = vmatmul.mubr.f32.gmra.mrb[0].mxu0 %v1997
        %v2189 = vpop.f32.mrb[0].mxu0
        %v2190 = vadd.f32 0.0, %v2189
        %v2191 = vpop.f32.mrb[0].mxu0
        %2192 = vmatprep.mubr.f32.mxu0 0.0
        %2193 = vmatmul.mubr.f32.gmra.mrb[0].mxu0 %v2000
        %v2194 = vpop.f32.mrb[0].mxu0
        %v2195 = vadd.f32 0.0, %v2194
        %v2196 = vpop.f32.mrb[0].mxu0
        %2197 = vmatprep.mubr.f32.mxu0 0.0
        %2198 = vmatmul.mubr.f32.gmra.mrb[0].mxu0 %v2003
        %v2199 = vpop.f32.mrb[0].mxu0
        %v2200 = vadd.f32 0.0, %v2199
        %v2201 = vpop.f32.mrb[0].mxu0
        %2202 = vmatprep.mubr.f32.mxu0 0.0
        %2203 = vmatmul.mubr.f32.gmra.mrb[0].mxu0 %v2006
        %v2204 = vpop.f32.mrb[0].mxu0
        %v2205 = vadd.f32 0.0, %v2204
        %v2206 = vpop.f32.mrb[0].mxu0
        %2207 = vmatprep.mubr.f32.mxu0 0.0
        %2208 = vmatmul.mubr.f32.gmra.mrb[0].mxu0 %v2009
        %v2209 = vpop.f32.mrb[0].mxu0
        %v2210 = vadd.f32 0.0, %v2209
        %v2211 = vpop.f32.mrb[0].mxu0
        %2212 = vmatprep.mubr.f32.mxu0 0.0
        %2213 = vmatmul.mubr.f32.gmra.mrb[0].mxu0 %v2012
        %v2214 = vpop.f32.mrb[0].mxu0
        %v2215 = vadd.f32 0.0, %v2214
        %v2216 = vpop.f32.mrb[0].mxu0
        %2217 = vmatprep.mubr.f32.mxu0 0.0
        %2218 = vmatmul.mubr.f32.gmra.mrb[0].mxu0 %v2015
        %v2219 = vpop.f32.mrb[0].mxu0
        %v2220 = vadd.f32 0.0, %v2219
        %v2221 = vpop.f32.mrb[0].mxu0
        %2222 = vmatprep.mubr.f32.mxu0 0.0
        %2223 = vmatmul.mubr.f32.gmra.mrb[0].mxu0 %v2018
        %v2224 = vpop.f32.mrb[0].mxu0
        %v2225 = vadd.f32 0.0, %v2224
        %v2226 = vpop.f32.mrb[0].mxu0
        %2227 = vmatprep.mubr.f32.mxu0 0.0
        %2228 = vmatmul.mubr.f32.gmra.mrb[0].mxu0 %v2021
        %v2229 = vpop.f32.mrb[0].mxu0
        %v2230 = vadd.f32 0.0, %v2229
        %v2231 = vpop.f32.mrb[0].mxu0
        %2232 = vmatprep.mubr.f32.mxu0 0.0
        %2233 = vmatmul.mubr.f32.gmra.mrb[0].mxu0 %v2024
        %v2234 = vpop.f32.mrb[0].mxu0
        %v2235 = vadd.f32 0.0, %v2234
        %v2236 = vpop.f32.mrb[0].mxu0
        %2237 = vmatprep.mubr.f32.mxu0 0.0
        %2238 = vmatmul.mubr.f32.gmra.mrb[0].mxu0 %v2027
        %v2239 = vpop.f32.mrb[0].mxu0
        %v2240 = vadd.f32 0.0, %v2239
        %v2241 = vpop.f32.mrb[0].mxu0
        %2242 = vmatprep.mubr.f32.mxu0 0.0
        %2243 = vmatmul.mubr.f32.gmra.mrb[0].mxu0 %v2030
        %v2244 = vpop.f32.mrb[0].mxu0
        %v2245 = vadd.f32 0.0, %v2244
        %v2246 = vpop.f32.mrb[0].mxu0
        %2247 = vmatprep.mubr.f32.mxu0 0.0
        %2248 = vmatmul.mubr.f32.gmra.mrb[0].mxu0 %v2033
        %v2249 = vpop.f32.mrb[0].mxu0
        %v2250 = vadd.f32 0.0, %v2249
        %v2251 = vpop.f32.mrb[0].mxu0
        %2252 = vmatprep.mubr.f32.mxu0 0.0
        %2253 = vmatmul.mubr.f32.gmra.mrb[0].mxu0 %v2036
        %v2254 = vpop.f32.mrb[0].mxu0
        %v2255 = vadd.f32 0.0, %v2254
        %v2256 = vpop.f32.mrb[0].mxu0
        %2257 = vmatprep.mubr.f32.mxu0 0.0
        %2258 = vmatmul.mubr.f32.gmra.mrb[0].mxu0 %v2039
        %v2259 = vpop.f32.mrb[0].mxu0
        %v2260 = vadd.f32 0.0, %v2259
        %v2261 = vpop.f32.mrb[0].mxu0
        %2262 = vmatprep.mubr.f32.mxu0 0.0
        %2263 = vmatmul.mubr.f32.gmra.mrb[0].mxu0 %v2042
        %v2264 = vpop.f32.mrb[0].mxu0
        %v2265 = vadd.f32 0.0, %v2264
        %v2266 = vpop.f32.mrb[0].mxu0
        %2267 = vmatprep.mubr.f32.mxu0 0.0
        %2268 = vmatmul.mubr.f32.gmra.mrb[0].mxu0 %v2045
        %v2269 = vpop.f32.mrb[0].mxu0
        %v2270 = vadd.f32 0.0, %v2269
        %v2271 = vpop.f32.mrb[0].mxu0
        %2272 = vmatprep.mubr.f32.mxu0 0.0
        %2273 = vmatmul.mubr.f32.gmra.mrb[0].mxu0 %v2048
        %v2274 = vpop.f32.mrb[0].mxu0
        %v2275 = vadd.f32 0.0, %v2274
        %v2276 = vpop.f32.mrb[0].mxu0
        %2277 = vdwg.mxu0
        %v2279 = vsel %vm585, %v1919, 0
        %2281 = vmatprep.subr.mxu0 0.0
        %2282 = vmatpush1.msra.mxu0 %v2279
        %2283 = vmatprep.subr.mxu0 0.0
        %2284 = vmatpush1.msra.mxu0 0.0
        %2285 = vmatprep.subr.mxu0 0.0
        %2286 = vmatpush1.msra.mxu0 0.0
        %2287 = vmatprep.subr.mxu0 0.0
        %2288 = vmatpush1.msra.mxu0 0.0
        %2289 = vmatprep.subr.mxu0 0.0
        %2290 = vmatpush1.msra.mxu0 0.0
        %2291 = vmatprep.subr.mxu0 0.0
        %2292 = vmatpush1.msra.mxu0 0.0
        %2293 = vmatprep.subr.mxu0 0.0
        %2294 = vmatpush1.msra.mxu0 0.0
        %2295 = vmatprep.subr.mxu0 0.0
        %2296 = vmatpush1.msra.mxu0 0.0
        %2297 = vmatprep.subr.mxu0 0.0
        %2298 = vmatpush1.msra.mxu0 0.0
        %2299 = vmatprep.subr.mxu0 0.0
        %2300 = vmatpush1.msra.mxu0 0.0
        %2301 = vmatprep.subr.mxu0 0.0
        %2302 = vmatpush1.msra.mxu0 0.0
        %2303 = vmatprep.subr.mxu0 0.0
        %2304 = vmatpush1.msra.mxu0 0.0
        %2305 = vmatprep.subr.mxu0 0.0
        %2306 = vmatpush1.msra.mxu0 0.0
        %2307 = vmatprep.subr.mxu0 0.0
        %2308 = vmatpush1.msra.mxu0 0.0
        %2309 = vmatprep.subr.mxu0 0.0
        %2310 = vmatpush1.msra.mxu0 0.0
        %2311 = vmatprep.subr.mxu0 0.0
        %2312 = vmatpush1.msra.mxu0 0.0
        %2313 = vmatprep.subr.mxu0 0.0
        %2314 = vmatpush1.msra.mxu0 0.0
        %2315 = vmatprep.subr.mxu0 0.0
        %2316 = vmatpush1.msra.mxu0 0.0
        %2317 = vmatprep.subr.mxu0 0.0
        %2318 = vmatpush1.msra.mxu0 0.0
        %2319 = vmatprep.subr.mxu0 0.0
        %2320 = vmatpush1.msra.mxu0 0.0
        %2321 = vmatprep.subr.mxu0 0.0
        %2322 = vmatpush1.msra.mxu0 0.0
        %2323 = vmatprep.subr.mxu0 0.0
        %2324 = vmatpush1.msra.mxu0 0.0
        %2325 = vmatprep.subr.mxu0 0.0
        %2326 = vmatpush1.msra.mxu0 0.0
        %2327 = vmatprep.subr.mxu0 0.0
        %2328 = vmatpush1.msra.mxu0 0.0
        %2329 = vmatprep.subr.mxu0 0.0
        %2330 = vmatpush1.msra.mxu0 0.0
        %2331 = vmatprep.subr.mxu0 0.0
        %2332 = vmatpush1.msra.mxu0 0.0
        %2333 = vmatprep.subr.mxu0 0.0
        %2334 = vmatpush1.msra.mxu0 0.0
        %2335 = vmatprep.subr.mxu0 0.0
        %2336 = vmatpush1.msra.mxu0 0.0
        %2337 = vmatprep.subr.mxu0 0.0
        %2338 = vmatpush1.msra.mxu0 0.0
        %2339 = vmatprep.subr.mxu0 0.0
        %2340 = vmatpush1.msra.mxu0 0.0
        %2341 = vmatprep.subr.mxu0 0.0
        %2342 = vmatpush1.msra.mxu0 0.0
        %2343 = vmatprep.subr.mxu0 0.0
        %2344 = vmatpush1.msra.mxu0 0.0
        %2345 = vmatprep.mubr.f32.mxu0 0.0
        %2346 = vmatmul.mubr.f32.gmra.mrb[0].mxu0 %v490
        %v2347 = vpop.f32.mrb[0].mxu0
        %v2348 = vadd.f32 %v2120, %v2347
        %v2349 = vpop.f32.mrb[0].mxu0
        %2350 = vmatprep.mubr.f32.mxu0 0.0
        %2351 = vmatmul.mubr.f32.gmra.mrb[0].mxu0 %v493
        %v2352 = vpop.f32.mrb[0].mxu0
        %v2353 = vadd.f32 %v2125, %v2352
        %v2354 = vpop.f32.mrb[0].mxu0
        %2355 = vmatprep.mubr.f32.mxu0 0.0
        %2356 = vmatmul.mubr.f32.gmra.mrb[0].mxu0 %v496
        %v2357 = vpop.f32.mrb[0].mxu0
        %v2358 = vadd.f32 %v2130, %v2357
        %v2359 = vpop.f32.mrb[0].mxu0
        %2360 = vmatprep.mubr.f32.mxu0 0.0
        %2361 = vmatmul.mubr.f32.gmra.mrb[0].mxu0 %v499
        %v2362 = vpop.f32.mrb[0].mxu0
        %v2363 = vadd.f32 %v2135, %v2362
        %v2364 = vpop.f32.mrb[0].mxu0
        %2365 = vmatprep.mubr.f32.mxu0 0.0
        %2366 = vmatmul.mubr.f32.gmra.mrb[0].mxu0 %v502
        %v2367 = vpop.f32.mrb[0].mxu0
        %v2368 = vadd.f32 %v2140, %v2367
        %v2369 = vpop.f32.mrb[0].mxu0
        %2370 = vmatprep.mubr.f32.mxu0 0.0
        %2371 = vmatmul.mubr.f32.gmra.mrb[0].mxu0 %v505
        %v2372 = vpop.f32.mrb[0].mxu0
        %v2373 = vadd.f32 %v2145, %v2372
        %v2374 = vpop.f32.mrb[0].mxu0
        %2375 = vmatprep.mubr.f32.mxu0 0.0
        %2376 = vmatmul.mubr.f32.gmra.mrb[0].mxu0 %v508
        %v2377 = vpop.f32.mrb[0].mxu0
        %v2378 = vadd.f32 %v2150, %v2377
        %v2379 = vpop.f32.mrb[0].mxu0
        %2380 = vmatprep.mubr.f32.mxu0 0.0
        %2381 = vmatmul.mubr.f32.gmra.mrb[0].mxu0 %v511
        %v2382 = vpop.f32.mrb[0].mxu0
        %v2383 = vadd.f32 %v2155, %v2382
        %v2384 = vpop.f32.mrb[0].mxu0
        %2385 = vmatprep.mubr.f32.mxu0 0.0
        %2386 = vmatmul.mubr.f32.gmra.mrb[0].mxu0 %v514
        %v2387 = vpop.f32.mrb[0].mxu0
        %v2388 = vadd.f32 %v2160, %v2387
        %v2389 = vpop.f32.mrb[0].mxu0
        %2390 = vmatprep.mubr.f32.mxu0 0.0
        %2391 = vmatmul.mubr.f32.gmra.mrb[0].mxu0 %v517
        %v2392 = vpop.f32.mrb[0].mxu0
        %v2393 = vadd.f32 %v2165, %v2392
        %v2394 = vpop.f32.mrb[0].mxu0
        %2395 = vmatprep.mubr.f32.mxu0 0.0
        %2396 = vmatmul.mubr.f32.gmra.mrb[0].mxu0 %v520
        %v2397 = vpop.f32.mrb[0].mxu0
        %v2398 = vadd.f32 %v2170, %v2397
        %v2399 = vpop.f32.mrb[0].mxu0
        %2400 = vmatprep.mubr.f32.mxu0 0.0
        %2401 = vmatmul.mubr.f32.gmra.mrb[0].mxu0 %v523
        %v2402 = vpop.f32.mrb[0].mxu0
        %v2403 = vadd.f32 %v2175, %v2402
        %v2404 = vpop.f32.mrb[0].mxu0
        %2405 = vmatprep.mubr.f32.mxu0 0.0
        %2406 = vmatmul.mubr.f32.gmra.mrb[0].mxu0 %v526
        %v2407 = vpop.f32.mrb[0].mxu0
        %v2408 = vadd.f32 %v2180, %v2407
        %v2409 = vpop.f32.mrb[0].mxu0
        %2410 = vmatprep.mubr.f32.mxu0 0.0
        %2411 = vmatmul.mubr.f32.gmra.mrb[0].mxu0 %v529
        %v2412 = vpop.f32.mrb[0].mxu0
        %v2413 = vadd.f32 %v2185, %v2412
        %v2414 = vpop.f32.mrb[0].mxu0
        %2415 = vmatprep.mubr.f32.mxu0 0.0
        %2416 = vmatmul.mubr.f32.gmra.mrb[0].mxu0 %v532
        %v2417 = vpop.f32.mrb[0].mxu0
        %v2418 = vadd.f32 %v2190, %v2417
        %v2419 = vpop.f32.mrb[0].mxu0
        %2420 = vmatprep.mubr.f32.mxu0 0.0
        %2421 = vmatmul.mubr.f32.gmra.mrb[0].mxu0 %v535
        %v2422 = vpop.f32.mrb[0].mxu0
        %v2423 = vadd.f32 %v2195, %v2422
        %v2424 = vpop.f32.mrb[0].mxu0
        %2425 = vmatprep.mubr.f32.mxu0 0.0
        %2426 = vmatmul.mubr.f32.gmra.mrb[0].mxu0 %v538
        %v2427 = vpop.f32.mrb[0].mxu0
        %v2428 = vadd.f32 %v2200, %v2427
        %v2429 = vpop.f32.mrb[0].mxu0
        %2430 = vmatprep.mubr.f32.mxu0 0.0
        %2431 = vmatmul.mubr.f32.gmra.mrb[0].mxu0 %v541
        %v2432 = vpop.f32.mrb[0].mxu0
        %v2433 = vadd.f32 %v2205, %v2432
        %v2434 = vpop.f32.mrb[0].mxu0
        %2435 = vmatprep.mubr.f32.mxu0 0.0
        %2436 = vmatmul.mubr.f32.gmra.mrb[0].mxu0 %v544
        %v2437 = vpop.f32.mrb[0].mxu0
        %v2438 = vadd.f32 %v2210, %v2437
        %v2439 = vpop.f32.mrb[0].mxu0
        %2440 = vmatprep.mubr.f32.mxu0 0.0
        %2441 = vmatmul.mubr.f32.gmra.mrb[0].mxu0 %v547
        %v2442 = vpop.f32.mrb[0].mxu0
        %v2443 = vadd.f32 %v2215, %v2442
        %v2444 = vpop.f32.mrb[0].mxu0
        %2445 = vmatprep.mubr.f32.mxu0 0.0
        %2446 = vmatmul.mubr.f32.gmra.mrb[0].mxu0 %v550
        %v2447 = vpop.f32.mrb[0].mxu0
        %v2448 = vadd.f32 %v2220, %v2447
        %v2449 = vpop.f32.mrb[0].mxu0
        %2450 = vmatprep.mubr.f32.mxu0 0.0
        %2451 = vmatmul.mubr.f32.gmra.mrb[0].mxu0 %v553
        %v2452 = vpop.f32.mrb[0].mxu0
        %v2453 = vadd.f32 %v2225, %v2452
        %v2454 = vpop.f32.mrb[0].mxu0
        %2455 = vmatprep.mubr.f32.mxu0 0.0
        %2456 = vmatmul.mubr.f32.gmra.mrb[0].mxu0 %v556
        %v2457 = vpop.f32.mrb[0].mxu0
        %v2458 = vadd.f32 %v2230, %v2457
        %v2459 = vpop.f32.mrb[0].mxu0
        %2460 = vmatprep.mubr.f32.mxu0 0.0
        %2461 = vmatmul.mubr.f32.gmra.mrb[0].mxu0 %v559
        %v2462 = vpop.f32.mrb[0].mxu0
        %v2463 = vadd.f32 %v2235, %v2462
        %v2464 = vpop.f32.mrb[0].mxu0
        %2465 = vmatprep.mubr.f32.mxu0 0.0
        %2466 = vmatmul.mubr.f32.gmra.mrb[0].mxu0 %v562
        %v2467 = vpop.f32.mrb[0].mxu0
        %v2468 = vadd.f32 %v2240, %v2467
        %v2469 = vpop.f32.mrb[0].mxu0
        %2470 = vmatprep.mubr.f32.mxu0 0.0
        %2471 = vmatmul.mubr.f32.gmra.mrb[0].mxu0 %v565
        %v2472 = vpop.f32.mrb[0].mxu0
        %v2473 = vadd.f32 %v2245, %v2472
        %v2474 = vpop.f32.mrb[0].mxu0
        %2475 = vmatprep.mubr.f32.mxu0 0.0
        %2476 = vmatmul.mubr.f32.gmra.mrb[0].mxu0 %v568
        %v2477 = vpop.f32.mrb[0].mxu0
        %v2478 = vadd.f32 %v2250, %v2477
        %v2479 = vpop.f32.mrb[0].mxu0
        %2480 = vmatprep.mubr.f32.mxu0 0.0
        %2481 = vmatmul.mubr.f32.gmra.mrb[0].mxu0 %v571
        %v2482 = vpop.f32.mrb[0].mxu0
        %v2483 = vadd.f32 %v2255, %v2482
        %v2484 = vpop.f32.mrb[0].mxu0
        %2485 = vmatprep.mubr.f32.mxu0 0.0
        %2486 = vmatmul.mubr.f32.gmra.mrb[0].mxu0 %v574
        %v2487 = vpop.f32.mrb[0].mxu0
        %v2488 = vadd.f32 %v2260, %v2487
        %v2489 = vpop.f32.mrb[0].mxu0
        %2490 = vmatprep.mubr.f32.mxu0 0.0
        %2491 = vmatmul.mubr.f32.gmra.mrb[0].mxu0 %v577
        %v2492 = vpop.f32.mrb[0].mxu0
        %v2493 = vadd.f32 %v2265, %v2492
        %v2494 = vpop.f32.mrb[0].mxu0
        %2495 = vmatprep.mubr.f32.mxu0 0.0
        %2496 = vmatmul.mubr.f32.gmra.mrb[0].mxu0 %v580
        %v2497 = vpop.f32.mrb[0].mxu0
        %v2498 = vadd.f32 %v2270, %v2497
        %v2499 = vpop.f32.mrb[0].mxu0
        %2500 = vmatprep.mubr.f32.mxu0 0.0
        %2501 = vmatmul.mubr.f32.gmra.mrb[0].mxu0 %v583
        %v2502 = vpop.f32.mrb[0].mxu0
        %v2503 = vadd.f32 %v2275, %v2502
        %v2504 = vpop.f32.mrb[0].mxu0
        %2505 = vdwg.mxu0
        %s2506 = scalar_lea.vmem [#allocation8], 24
        %v2507 = vld [vmem:[%s2506] sm:$0xf]
        %v2509 = vsel %vm585, %v2507, 0
        %2511 = vmatprep.subr.mxu0 0.0
        %2512 = vmatpush1.msra.mxu0 %v2509
        %2513 = vmatprep.subr.mxu0 0.0
        %2514 = vmatpush1.msra.mxu0 0.0
        %2515 = vmatprep.subr.mxu0 0.0
        %2516 = vmatpush1.msra.mxu0 0.0
        %2517 = vmatprep.subr.mxu0 0.0
        %2518 = vmatpush1.msra.mxu0 0.0
        %2519 = vmatprep.subr.mxu0 0.0
        %2520 = vmatpush1.msra.mxu0 0.0
        %2521 = vmatprep.subr.mxu0 0.0
        %2522 = vmatpush1.msra.mxu0 0.0
        %2523 = vmatprep.subr.mxu0 0.0
        %2524 = vmatpush1.msra.mxu0 0.0
        %2525 = vmatprep.subr.mxu0 0.0
        %2526 = vmatpush1.msra.mxu0 0.0
        %2527 = vmatprep.subr.mxu0 0.0
        %2528 = vmatpush1.msra.mxu0 0.0
        %2529 = vmatprep.subr.mxu0 0.0
        %2530 = vmatpush1.msra.mxu0 0.0
        %2531 = vmatprep.subr.mxu0 0.0
        %2532 = vmatpush1.msra.mxu0 0.0
        %2533 = vmatprep.subr.mxu0 0.0
        %2534 = vmatpush1.msra.mxu0 0.0
        %2535 = vmatprep.subr.mxu0 0.0
        %2536 = vmatpush1.msra.mxu0 0.0
        %2537 = vmatprep.subr.mxu0 0.0
        %2538 = vmatpush1.msra.mxu0 0.0
        %2539 = vmatprep.subr.mxu0 0.0
        %2540 = vmatpush1.msra.mxu0 0.0
        %2541 = vmatprep.subr.mxu0 0.0
        %2542 = vmatpush1.msra.mxu0 0.0
        %2543 = vmatprep.subr.mxu0 0.0
        %2544 = vmatpush1.msra.mxu0 0.0
        %2545 = vmatprep.subr.mxu0 0.0
        %2546 = vmatpush1.msra.mxu0 0.0
        %2547 = vmatprep.subr.mxu0 0.0
        %2548 = vmatpush1.msra.mxu0 0.0
        %2549 = vmatprep.subr.mxu0 0.0
        %2550 = vmatpush1.msra.mxu0 0.0
        %2551 = vmatprep.subr.mxu0 0.0
        %2552 = vmatpush1.msra.mxu0 0.0
        %2553 = vmatprep.subr.mxu0 0.0
        %2554 = vmatpush1.msra.mxu0 0.0
        %2555 = vmatprep.subr.mxu0 0.0
        %2556 = vmatpush1.msra.mxu0 0.0
        %2557 = vmatprep.subr.mxu0 0.0
        %2558 = vmatpush1.msra.mxu0 0.0
        %2559 = vmatprep.subr.mxu0 0.0
        %2560 = vmatpush1.msra.mxu0 0.0
        %2561 = vmatprep.subr.mxu0 0.0
        %2562 = vmatpush1.msra.mxu0 0.0
        %2563 = vmatprep.subr.mxu0 0.0
        %2564 = vmatpush1.msra.mxu0 0.0
        %2565 = vmatprep.subr.mxu0 0.0
        %2566 = vmatpush1.msra.mxu0 0.0
        %2567 = vmatprep.subr.mxu0 0.0
        %2568 = vmatpush1.msra.mxu0 0.0
        %2569 = vmatprep.subr.mxu0 0.0
        %2570 = vmatpush1.msra.mxu0 0.0
        %2571 = vmatprep.subr.mxu0 0.0
        %2572 = vmatpush1.msra.mxu0 0.0
        %2573 = vmatprep.subr.mxu0 0.0
        %2574 = vmatpush1.msra.mxu0 0.0
        %2575 = vmatprep.mubr.f32.mxu0 0.0
        %2576 = vmatmul.mubr.f32.gmra.mrb[0].mxu0 %v1563
        %v2577 = vpop.f32.mrb[0].mxu0
        %v2578 = vadd.f32 0.0, %v2577
        %v2579 = vpop.f32.mrb[0].mxu0
        %2580 = vmatprep.mubr.f32.mxu0 0.0
        %2581 = vmatmul.mubr.f32.gmra.mrb[0].mxu0 %v1566
        %v2582 = vpop.f32.mrb[0].mxu0
        %v2583 = vadd.f32 0.0, %v2582
        %v2584 = vpop.f32.mrb[0].mxu0
        %2585 = vmatprep.mubr.f32.mxu0 0.0
        %2586 = vmatmul.mubr.f32.gmra.mrb[0].mxu0 %v1569
        %v2587 = vpop.f32.mrb[0].mxu0
        %v2588 = vadd.f32 0.0, %v2587
        %v2589 = vpop.f32.mrb[0].mxu0
        %2590 = vmatprep.mubr.f32.mxu0 0.0
        %2591 = vmatmul.mubr.f32.gmra.mrb[0].mxu0 %v1572
        %v2592 = vpop.f32.mrb[0].mxu0
        %v2593 = vadd.f32 0.0, %v2592
        %v2594 = vpop.f32.mrb[0].mxu0
        %2595 = vmatprep.mubr.f32.mxu0 0.0
        %2596 = vmatmul.mubr.f32.gmra.mrb[0].mxu0 %v1575
        %v2597 = vpop.f32.mrb[0].mxu0
        %v2598 = vadd.f32 0.0, %v2597
        %v2599 = vpop.f32.mrb[0].mxu0
        %2600 = vmatprep.mubr.f32.mxu0 0.0
        %2601 = vmatmul.mubr.f32.gmra.mrb[0].mxu0 %v1578
        %v2602 = vpop.f32.mrb[0].mxu0
        %v2603 = vadd.f32 0.0, %v2602
        %v2604 = vpop.f32.mrb[0].mxu0
        %2605 = vmatprep.mubr.f32.mxu0 0.0
        %2606 = vmatmul.mubr.f32.gmra.mrb[0].mxu0 %v1581
        %v2607 = vpop.f32.mrb[0].mxu0
        %v2608 = vadd.f32 0.0, %v2607
        %v2609 = vpop.f32.mrb[0].mxu0
        %2610 = vmatprep.mubr.f32.mxu0 0.0
        %2611 = vmatmul.mubr.f32.gmra.mrb[0].mxu0 %v1584
        %v2612 = vpop.f32.mrb[0].mxu0
        %v2613 = vadd.f32 0.0, %v2612
        %v2614 = vpop.f32.mrb[0].mxu0
        %2615 = vmatprep.mubr.f32.mxu0 0.0
        %2616 = vmatmul.mubr.f32.gmra.mrb[0].mxu0 %v1587
        %v2617 = vpop.f32.mrb[0].mxu0
        %v2618 = vadd.f32 0.0, %v2617
        %v2619 = vpop.f32.mrb[0].mxu0
        %2620 = vmatprep.mubr.f32.mxu0 0.0
        %2621 = vmatmul.mubr.f32.gmra.mrb[0].mxu0 %v1590
        %v2622 = vpop.f32.mrb[0].mxu0
        %v2623 = vadd.f32 0.0, %v2622
        %v2624 = vpop.f32.mrb[0].mxu0
        %2625 = vmatprep.mubr.f32.mxu0 0.0
        %2626 = vmatmul.mubr.f32.gmra.mrb[0].mxu0 %v1593
        %v2627 = vpop.f32.mrb[0].mxu0
        %v2628 = vadd.f32 0.0, %v2627
        %v2629 = vpop.f32.mrb[0].mxu0
        %2630 = vmatprep.mubr.f32.mxu0 0.0
        %2631 = vmatmul.mubr.f32.gmra.mrb[0].mxu0 %v1596
        %v2632 = vpop.f32.mrb[0].mxu0
        %v2633 = vadd.f32 0.0, %v2632
        %v2634 = vpop.f32.mrb[0].mxu0
        %2635 = vmatprep.mubr.f32.mxu0 0.0
        %2636 = vmatmul.mubr.f32.gmra.mrb[0].mxu0 %v1599
        %v2637 = vpop.f32.mrb[0].mxu0
        %v2638 = vadd.f32 0.0, %v2637
        %v2639 = vpop.f32.mrb[0].mxu0
        %2640 = vmatprep.mubr.f32.mxu0 0.0
        %2641 = vmatmul.mubr.f32.gmra.mrb[0].mxu0 %v1602
        %v2642 = vpop.f32.mrb[0].mxu0
        %v2643 = vadd.f32 0.0, %v2642
        %v2644 = vpop.f32.mrb[0].mxu0
        %2645 = vmatprep.mubr.f32.mxu0 0.0
        %2646 = vmatmul.mubr.f32.gmra.mrb[0].mxu0 %v1605
        %v2647 = vpop.f32.mrb[0].mxu0
        %v2648 = vadd.f32 0.0, %v2647
        %v2649 = vpop.f32.mrb[0].mxu0
        %2650 = vmatprep.mubr.f32.mxu0 0.0
        %2651 = vmatmul.mubr.f32.gmra.mrb[0].mxu0 %v1608
        %v2652 = vpop.f32.mrb[0].mxu0
        %v2653 = vadd.f32 0.0, %v2652
        %v2654 = vpop.f32.mrb[0].mxu0
        %2655 = vmatprep.mubr.f32.mxu0 0.0
        %2656 = vmatmul.mubr.f32.gmra.mrb[0].mxu0 %v1611
        %v2657 = vpop.f32.mrb[0].mxu0
        %v2658 = vadd.f32 0.0, %v2657
        %v2659 = vpop.f32.mrb[0].mxu0
        %2660 = vmatprep.mubr.f32.mxu0 0.0
        %2661 = vmatmul.mubr.f32.gmra.mrb[0].mxu0 %v1614
        %v2662 = vpop.f32.mrb[0].mxu0
        %v2663 = vadd.f32 0.0, %v2662
        %v2664 = vpop.f32.mrb[0].mxu0
        %2665 = vmatprep.mubr.f32.mxu0 0.0
        %2666 = vmatmul.mubr.f32.gmra.mrb[0].mxu0 %v1617
        %v2667 = vpop.f32.mrb[0].mxu0
        %v2668 = vadd.f32 0.0, %v2667
        %v2669 = vpop.f32.mrb[0].mxu0
        %2670 = vmatprep.mubr.f32.mxu0 0.0
        %2671 = vmatmul.mubr.f32.gmra.mrb[0].mxu0 %v1620
        %v2672 = vpop.f32.mrb[0].mxu0
        %v2673 = vadd.f32 0.0, %v2672
        %v2674 = vpop.f32.mrb[0].mxu0
        %2675 = vmatprep.mubr.f32.mxu0 0.0
        %2676 = vmatmul.mubr.f32.gmra.mrb[0].mxu0 %v1623
        %v2677 = vpop.f32.mrb[0].mxu0
        %v2678 = vadd.f32 0.0, %v2677
        %v2679 = vpop.f32.mrb[0].mxu0
        %2680 = vmatprep.mubr.f32.mxu0 0.0
        %2681 = vmatmul.mubr.f32.gmra.mrb[0].mxu0 %v1626
        %v2682 = vpop.f32.mrb[0].mxu0
        %v2683 = vadd.f32 0.0, %v2682
        %v2684 = vpop.f32.mrb[0].mxu0
        %2685 = vmatprep.mubr.f32.mxu0 0.0
        %2686 = vmatmul.mubr.f32.gmra.mrb[0].mxu0 %v1629
        %v2687 = vpop.f32.mrb[0].mxu0
        %v2688 = vadd.f32 0.0, %v2687
        %v2689 = vpop.f32.mrb[0].mxu0
        %2690 = vmatprep.mubr.f32.mxu0 0.0
        %2691 = vmatmul.mubr.f32.gmra.mrb[0].mxu0 %v1632
        %v2692 = vpop.f32.mrb[0].mxu0
        %v2693 = vadd.f32 0.0, %v2692
        %v2694 = vpop.f32.mrb[0].mxu0
        %2695 = vmatprep.mubr.f32.mxu0 0.0
        %2696 = vmatmul.mubr.f32.gmra.mrb[0].mxu0 %v1635
        %v2697 = vpop.f32.mrb[0].mxu0
        %v2698 = vadd.f32 0.0, %v2697
        %v2699 = vpop.f32.mrb[0].mxu0
        %2700 = vmatprep.mubr.f32.mxu0 0.0
        %2701 = vmatmul.mubr.f32.gmra.mrb[0].mxu0 %v1638
        %v2702 = vpop.f32.mrb[0].mxu0
        %v2703 = vadd.f32 0.0, %v2702
        %v2704 = vpop.f32.mrb[0].mxu0
        %2705 = vmatprep.mubr.f32.mxu0 0.0
        %2706 = vmatmul.mubr.f32.gmra.mrb[0].mxu0 %v1641
        %v2707 = vpop.f32.mrb[0].mxu0
        %v2708 = vadd.f32 0.0, %v2707
        %v2709 = vpop.f32.mrb[0].mxu0
        %2710 = vmatprep.mubr.f32.mxu0 0.0
        %2711 = vmatmul.mubr.f32.gmra.mrb[0].mxu0 %v1644
        %v2712 = vpop.f32.mrb[0].mxu0
        %v2713 = vadd.f32 0.0, %v2712
        %v2714 = vpop.f32.mrb[0].mxu0
        %2715 = vmatprep.mubr.f32.mxu0 0.0
        %2716 = vmatmul.mubr.f32.gmra.mrb[0].mxu0 %v1647
        %v2717 = vpop.f32.mrb[0].mxu0
        %v2718 = vadd.f32 0.0, %v2717
        %v2719 = vpop.f32.mrb[0].mxu0
        %2720 = vmatprep.mubr.f32.mxu0 0.0
        %2721 = vmatmul.mubr.f32.gmra.mrb[0].mxu0 %v1650
        %v2722 = vpop.f32.mrb[0].mxu0
        %v2723 = vadd.f32 0.0, %v2722
        %v2724 = vpop.f32.mrb[0].mxu0
        %2725 = vmatprep.mubr.f32.mxu0 0.0
        %2726 = vmatmul.mubr.f32.gmra.mrb[0].mxu0 %v1653
        %v2727 = vpop.f32.mrb[0].mxu0
        %v2728 = vadd.f32 0.0, %v2727
        %v2729 = vpop.f32.mrb[0].mxu0
        %2730 = vmatprep.mubr.f32.mxu0 0.0
        %2731 = vmatmul.mubr.f32.gmra.mrb[0].mxu0 %v1656
        %v2732 = vpop.f32.mrb[0].mxu0
        %v2733 = vadd.f32 0.0, %v2732
        %v2734 = vpop.f32.mrb[0].mxu0
        %2735 = vdwg.mxu0
        %v2736 = vadd.f32 %v2348, %v2578
        %v2737 = vadd.f32 %v2353, %v2583
        %v2738 = vadd.f32 %v2358, %v2588
        %v2739 = vadd.f32 %v2363, %v2593
        %v2740 = vadd.f32 %v2368, %v2598
        %v2741 = vadd.f32 %v2373, %v2603
        %v2742 = vadd.f32 %v2378, %v2608
        %v2743 = vadd.f32 %v2383, %v2613
        %v2744 = vadd.f32 %v2388, %v2618
        %v2745 = vadd.f32 %v2393, %v2623
        %v2746 = vadd.f32 %v2398, %v2628
        %v2747 = vadd.f32 %v2403, %v2633
        %v2748 = vadd.f32 %v2408, %v2638
        %v2749 = vadd.f32 %v2413, %v2643
        %v2750 = vadd.f32 %v2418, %v2648
        %v2751 = vadd.f32 %v2423, %v2653
        %v2752 = vadd.f32 %v2428, %v2658
        %v2753 = vadd.f32 %v2433, %v2663
        %v2754 = vadd.f32 %v2438, %v2668
        %v2755 = vadd.f32 %v2443, %v2673
        %v2756 = vadd.f32 %v2448, %v2678
        %v2757 = vadd.f32 %v2453, %v2683
        %v2758 = vadd.f32 %v2458, %v2688
        %v2759 = vadd.f32 %v2463, %v2693
        %v2760 = vadd.f32 %v2468, %v2698
        %v2761 = vadd.f32 %v2473, %v2703
        %v2762 = vadd.f32 %v2478, %v2708
        %v2763 = vadd.f32 %v2483, %v2713
        %v2764 = vadd.f32 %v2488, %v2718
        %v2765 = vadd.f32 %v2493, %v2723
        %v2766 = vadd.f32 %v2498, %v2728
        %v2767 = vadd.f32 %v2503, %v2733
        %v2768 = vld [vmem:[%s388 + $0x2] sm:$0xff]
        %v2769 = vld [vmem:[%s388 + $0xa] sm:$0xff]
        %v2770 = vld [vmem:[%s388 + $0x1a] sm:$0xff]
        %v2771 = vld [vmem:[%s388 + $0x22] sm:$0xff]
        %v2772 = vld [vmem:[%s388 + $0x32] sm:$0xff]
        %v2773 = vld [vmem:[%s388 + $0x3a] sm:$0xff]
        %v2774 = vld [vmem:[%s388 + $0x4a] sm:$0xff]
        %v2775 = vld [vmem:[%s388 + $0x52] sm:$0xff]
        %v2776 = vld [vmem:[%s388 + $0x62] sm:$0xff]
        %v2777 = vld [vmem:[%s388 + $0x6a] sm:$0xff]
        %v2778 = vld [vmem:[%s388 + $0x7a] sm:$0xff]
        %v2779 = vld [vmem:[%s388 + $0x82] sm:$0xff]
        %v2780 = vld [vmem:[%s388 + $0x92] sm:$0xff]
        %v2781 = vld [vmem:[%s388 + $0x9a] sm:$0xff]
        %v2782 = vld [vmem:[%s388 + $0xaa] sm:$0xff]
        %v2783 = vld [vmem:[%s388 + $0xb2] sm:$0xff]
        %v2784 = vld [vmem:[%s388 + $0xc2] sm:$0xff]
        %v2785 = vld [vmem:[%s388 + $0xca] sm:$0xff]
        %v2786 = vld [vmem:[%s388 + $0xda] sm:$0xff]
        %v2787 = vld [vmem:[%s388 + $0xe2] sm:$0xff]
        %v2788 = vld [vmem:[%s388 + $0xf2] sm:$0xff]
        %v2789 = vld [vmem:[%s388 + $0xfa] sm:$0xff]
        %v2790 = vld [vmem:[%s388 + $0x10a] sm:$0xff]
        %v2791 = vld [vmem:[%s388 + $0x112] sm:$0xff]
        %v2792 = vld [vmem:[%s388 + $0x122] sm:$0xff]
        %v2793 = vld [vmem:[%s388 + $0x12a] sm:$0xff]
        %v2794 = vld [vmem:[%s388 + $0x13a] sm:$0xff]
        %v2795 = vld [vmem:[%s388 + $0x142] sm:$0xff]
        %v2796 = vld [vmem:[%s388 + $0x152] sm:$0xff]
        %v2797 = vld [vmem:[%s388 + $0x15a] sm:$0xff]
        %v2798 = vld [vmem:[%s388 + $0x16a] sm:$0xff]
        %v2799 = vld [vmem:[%s388 + $0x172] sm:$0xff]
        %s2800 = scalar_lea.vmem [#allocation8], 28
        %v2801 = vld [vmem:[%s2800] sm:$0xf]
        %v2803 = vsel %vm347, %v2768, 0
        %v2806 = vsel %vm347, %v2769, 0
        %v2809 = vsel %vm347, %v2770, 0
        %v2812 = vsel %vm347, %v2771, 0
        %v2815 = vsel %vm347, %v2772, 0
        %v2818 = vsel %vm347, %v2773, 0
        %v2821 = vsel %vm347, %v2774, 0
        %v2824 = vsel %vm347, %v2775, 0
        %v2827 = vsel %vm347, %v2776, 0
        %v2830 = vsel %vm347, %v2777, 0
        %v2833 = vsel %vm347, %v2778, 0
        %v2836 = vsel %vm347, %v2779, 0
        %v2839 = vsel %vm347, %v2780, 0
        %v2842 = vsel %vm347, %v2781, 0
        %v2845 = vsel %vm347, %v2782, 0
        %v2848 = vsel %vm347, %v2783, 0
        %v2851 = vsel %vm347, %v2784, 0
        %v2854 = vsel %vm347, %v2785, 0
        %v2857 = vsel %vm347, %v2786, 0
        %v2860 = vsel %vm347, %v2787, 0
        %v2863 = vsel %vm347, %v2788, 0
        %v2866 = vsel %vm347, %v2789, 0
        %v2869 = vsel %vm347, %v2790, 0
        %v2872 = vsel %vm347, %v2791, 0
        %v2875 = vsel %vm347, %v2792, 0
        %v2878 = vsel %vm347, %v2793, 0
        %v2881 = vsel %vm347, %v2794, 0
        %v2884 = vsel %vm347, %v2795, 0
        %v2887 = vsel %vm347, %v2796, 0
        %v2890 = vsel %vm347, %v2797, 0
        %v2893 = vsel %vm347, %v2798, 0
        %v2896 = vsel %vm347, %v2799, 0
        %v2899 = vsel %vm585, %v2801, 0
        %2901 = vmatprep.subr.mxu0 0.0
        %2902 = vmatpush1.msra.mxu0 %v2899
        %2903 = vmatprep.subr.mxu0 0.0
        %2904 = vmatpush1.msra.mxu0 0.0
        %2905 = vmatprep.subr.mxu0 0.0
        %2906 = vmatpush1.msra.mxu0 0.0
        %2907 = vmatprep.subr.mxu0 0.0
        %2908 = vmatpush1.msra.mxu0 0.0
        %2909 = vmatprep.subr.mxu0 0.0
        %2910 = vmatpush1.msra.mxu0 0.0
        %2911 = vmatprep.subr.mxu0 0.0
        %2912 = vmatpush1.msra.mxu0 0.0
        %2913 = vmatprep.subr.mxu0 0.0
        %2914 = vmatpush1.msra.mxu0 0.0
        %2915 = vmatprep.subr.mxu0 0.0
        %2916 = vmatpush1.msra.mxu0 0.0
        %2917 = vmatprep.subr.mxu0 0.0
        %2918 = vmatpush1.msra.mxu0 0.0
        %2919 = vmatprep.subr.mxu0 0.0
        %2920 = vmatpush1.msra.mxu0 0.0
        %2921 = vmatprep.subr.mxu0 0.0
        %2922 = vmatpush1.msra.mxu0 0.0
        %2923 = vmatprep.subr.mxu0 0.0
        %2924 = vmatpush1.msra.mxu0 0.0
        %2925 = vmatprep.subr.mxu0 0.0
        %2926 = vmatpush1.msra.mxu0 0.0
        %2927 = vmatprep.subr.mxu0 0.0
        %2928 = vmatpush1.msra.mxu0 0.0
        %2929 = vmatprep.subr.mxu0 0.0
        %2930 = vmatpush1.msra.mxu0 0.0
        %2931 = vmatprep.subr.mxu0 0.0
        %2932 = vmatpush1.msra.mxu0 0.0
        %2933 = vmatprep.subr.mxu0 0.0
        %2934 = vmatpush1.msra.mxu0 0.0
        %2935 = vmatprep.subr.mxu0 0.0
        %2936 = vmatpush1.msra.mxu0 0.0
        %2937 = vmatprep.subr.mxu0 0.0
        %2938 = vmatpush1.msra.mxu0 0.0
        %2939 = vmatprep.subr.mxu0 0.0
        %2940 = vmatpush1.msra.mxu0 0.0
        %2941 = vmatprep.subr.mxu0 0.0
        %2942 = vmatpush1.msra.mxu0 0.0
        %2943 = vmatprep.subr.mxu0 0.0
        %2944 = vmatpush1.msra.mxu0 0.0
        %2945 = vmatprep.subr.mxu0 0.0
        %2946 = vmatpush1.msra.mxu0 0.0
        %2947 = vmatprep.subr.mxu0 0.0
        %2948 = vmatpush1.msra.mxu0 0.0
        %2949 = vmatprep.subr.mxu0 0.0
        %2950 = vmatpush1.msra.mxu0 0.0
        %2951 = vmatprep.subr.mxu0 0.0
        %2952 = vmatpush1.msra.mxu0 0.0
        %2953 = vmatprep.subr.mxu0 0.0
        %2954 = vmatpush1.msra.mxu0 0.0
        %2955 = vmatprep.subr.mxu0 0.0
        %2956 = vmatpush1.msra.mxu0 0.0
        %2957 = vmatprep.subr.mxu0 0.0
        %2958 = vmatpush1.msra.mxu0 0.0
        %2959 = vmatprep.subr.mxu0 0.0
        %2960 = vmatpush1.msra.mxu0 0.0
        %2961 = vmatprep.subr.mxu0 0.0
        %2962 = vmatpush1.msra.mxu0 0.0
        %2963 = vmatprep.subr.mxu0 0.0
        %2964 = vmatpush1.msra.mxu0 0.0
        %2965 = vmatprep.mubr.f32.mxu0 0.0
        %2966 = vmatmul.mubr.f32.gmra.mrb[0].mxu0 %v2803
        %v2967 = vpop.f32.mrb[0].mxu0
        %v2968 = vadd.f32 0.0, %v2967
        %v2969 = vpop.f32.mrb[0].mxu0
        %2970 = vmatprep.mubr.f32.mxu0 0.0
        %2971 = vmatmul.mubr.f32.gmra.mrb[0].mxu0 %v2806
        %v2972 = vpop.f32.mrb[0].mxu0
        %v2973 = vadd.f32 0.0, %v2972
        %v2974 = vpop.f32.mrb[0].mxu0
        %2975 = vmatprep.mubr.f32.mxu0 0.0
        %2976 = vmatmul.mubr.f32.gmra.mrb[0].mxu0 %v2809
        %v2977 = vpop.f32.mrb[0].mxu0
        %v2978 = vadd.f32 0.0, %v2977
        %v2979 = vpop.f32.mrb[0].mxu0
        %2980 = vmatprep.mubr.f32.mxu0 0.0
        %2981 = vmatmul.mubr.f32.gmra.mrb[0].mxu0 %v2812
        %v2982 = vpop.f32.mrb[0].mxu0
        %v2983 = vadd.f32 0.0, %v2982
        %v2984 = vpop.f32.mrb[0].mxu0
        %2985 = vmatprep.mubr.f32.mxu0 0.0
        %2986 = vmatmul.mubr.f32.gmra.mrb[0].mxu0 %v2815
        %v2987 = vpop.f32.mrb[0].mxu0
        %v2988 = vadd.f32 0.0, %v2987
        %v2989 = vpop.f32.mrb[0].mxu0
        %2990 = vmatprep.mubr.f32.mxu0 0.0
        %2991 = vmatmul.mubr.f32.gmra.mrb[0].mxu0 %v2818
        %v2992 = vpop.f32.mrb[0].mxu0
        %v2993 = vadd.f32 0.0, %v2992
        %v2994 = vpop.f32.mrb[0].mxu0
        %2995 = vmatprep.mubr.f32.mxu0 0.0
        %2996 = vmatmul.mubr.f32.gmra.mrb[0].mxu0 %v2821
        %v2997 = vpop.f32.mrb[0].mxu0
        %v2998 = vadd.f32 0.0, %v2997
        %v2999 = vpop.f32.mrb[0].mxu0
        %3000 = vmatprep.mubr.f32.mxu0 0.0
        %3001 = vmatmul.mubr.f32.gmra.mrb[0].mxu0 %v2824
        %v3002 = vpop.f32.mrb[0].mxu0
        %v3003 = vadd.f32 0.0, %v3002
        %v3004 = vpop.f32.mrb[0].mxu0
        %3005 = vmatprep.mubr.f32.mxu0 0.0
        %3006 = vmatmul.mubr.f32.gmra.mrb[0].mxu0 %v2827
        %v3007 = vpop.f32.mrb[0].mxu0
        %v3008 = vadd.f32 0.0, %v3007
        %v3009 = vpop.f32.mrb[0].mxu0
        %3010 = vmatprep.mubr.f32.mxu0 0.0
        %3011 = vmatmul.mubr.f32.gmra.mrb[0].mxu0 %v2830
        %v3012 = vpop.f32.mrb[0].mxu0
        %v3013 = vadd.f32 0.0, %v3012
        %v3014 = vpop.f32.mrb[0].mxu0
        %3015 = vmatprep.mubr.f32.mxu0 0.0
        %3016 = vmatmul.mubr.f32.gmra.mrb[0].mxu0 %v2833
        %v3017 = vpop.f32.mrb[0].mxu0
        %v3018 = vadd.f32 0.0, %v3017
        %v3019 = vpop.f32.mrb[0].mxu0
        %3020 = vmatprep.mubr.f32.mxu0 0.0
        %3021 = vmatmul.mubr.f32.gmra.mrb[0].mxu0 %v2836
        %v3022 = vpop.f32.mrb[0].mxu0
        %v3023 = vadd.f32 0.0, %v3022
        %v3024 = vpop.f32.mrb[0].mxu0
        %3025 = vmatprep.mubr.f32.mxu0 0.0
        %3026 = vmatmul.mubr.f32.gmra.mrb[0].mxu0 %v2839
        %v3027 = vpop.f32.mrb[0].mxu0
        %v3028 = vadd.f32 0.0, %v3027
        %v3029 = vpop.f32.mrb[0].mxu0
        %3030 = vmatprep.mubr.f32.mxu0 0.0
        %3031 = vmatmul.mubr.f32.gmra.mrb[0].mxu0 %v2842
        %v3032 = vpop.f32.mrb[0].mxu0
        %v3033 = vadd.f32 0.0, %v3032
        %v3034 = vpop.f32.mrb[0].mxu0
        %3035 = vmatprep.mubr.f32.mxu0 0.0
        %3036 = vmatmul.mubr.f32.gmra.mrb[0].mxu0 %v2845
        %v3037 = vpop.f32.mrb[0].mxu0
        %v3038 = vadd.f32 0.0, %v3037
        %v3039 = vpop.f32.mrb[0].mxu0
        %3040 = vmatprep.mubr.f32.mxu0 0.0
        %3041 = vmatmul.mubr.f32.gmra.mrb[0].mxu0 %v2848
        %v3042 = vpop.f32.mrb[0].mxu0
        %v3043 = vadd.f32 0.0, %v3042
        %v3044 = vpop.f32.mrb[0].mxu0
        %3045 = vmatprep.mubr.f32.mxu0 0.0
        %3046 = vmatmul.mubr.f32.gmra.mrb[0].mxu0 %v2851
        %v3047 = vpop.f32.mrb[0].mxu0
        %v3048 = vadd.f32 0.0, %v3047
        %v3049 = vpop.f32.mrb[0].mxu0
        %3050 = vmatprep.mubr.f32.mxu0 0.0
        %3051 = vmatmul.mubr.f32.gmra.mrb[0].mxu0 %v2854
        %v3052 = vpop.f32.mrb[0].mxu0
        %v3053 = vadd.f32 0.0, %v3052
        %v3054 = vpop.f32.mrb[0].mxu0
        %3055 = vmatprep.mubr.f32.mxu0 0.0
        %3056 = vmatmul.mubr.f32.gmra.mrb[0].mxu0 %v2857
        %v3057 = vpop.f32.mrb[0].mxu0
        %v3058 = vadd.f32 0.0, %v3057
        %v3059 = vpop.f32.mrb[0].mxu0
        %3060 = vmatprep.mubr.f32.mxu0 0.0
        %3061 = vmatmul.mubr.f32.gmra.mrb[0].mxu0 %v2860
        %v3062 = vpop.f32.mrb[0].mxu0
        %v3063 = vadd.f32 0.0, %v3062
        %v3064 = vpop.f32.mrb[0].mxu0
        %3065 = vmatprep.mubr.f32.mxu0 0.0
        %3066 = vmatmul.mubr.f32.gmra.mrb[0].mxu0 %v2863
        %v3067 = vpop.f32.mrb[0].mxu0
        %v3068 = vadd.f32 0.0, %v3067
        %v3069 = vpop.f32.mrb[0].mxu0
        %3070 = vmatprep.mubr.f32.mxu0 0.0
        %3071 = vmatmul.mubr.f32.gmra.mrb[0].mxu0 %v2866
        %v3072 = vpop.f32.mrb[0].mxu0
        %v3073 = vadd.f32 0.0, %v3072
        %v3074 = vpop.f32.mrb[0].mxu0
        %3075 = vmatprep.mubr.f32.mxu0 0.0
        %3076 = vmatmul.mubr.f32.gmra.mrb[0].mxu0 %v2869
        %v3077 = vpop.f32.mrb[0].mxu0
        %v3078 = vadd.f32 0.0, %v3077
        %v3079 = vpop.f32.mrb[0].mxu0
        %3080 = vmatprep.mubr.f32.mxu0 0.0
        %3081 = vmatmul.mubr.f32.gmra.mrb[0].mxu0 %v2872
        %v3082 = vpop.f32.mrb[0].mxu0
        %v3083 = vadd.f32 0.0, %v3082
        %v3084 = vpop.f32.mrb[0].mxu0
        %3085 = vmatprep.mubr.f32.mxu0 0.0
        %3086 = vmatmul.mubr.f32.gmra.mrb[0].mxu0 %v2875
        %v3087 = vpop.f32.mrb[0].mxu0
        %v3088 = vadd.f32 0.0, %v3087
        %v3089 = vpop.f32.mrb[0].mxu0
        %3090 = vmatprep.mubr.f32.mxu0 0.0
        %3091 = vmatmul.mubr.f32.gmra.mrb[0].mxu0 %v2878
        %v3092 = vpop.f32.mrb[0].mxu0
        %v3093 = vadd.f32 0.0, %v3092
        %v3094 = vpop.f32.mrb[0].mxu0
        %3095 = vmatprep.mubr.f32.mxu0 0.0
        %3096 = vmatmul.mubr.f32.gmra.mrb[0].mxu0 %v2881
        %v3097 = vpop.f32.mrb[0].mxu0
        %v3098 = vadd.f32 0.0, %v3097
        %v3099 = vpop.f32.mrb[0].mxu0
        %3100 = vmatprep.mubr.f32.mxu0 0.0
        %3101 = vmatmul.mubr.f32.gmra.mrb[0].mxu0 %v2884
        %v3102 = vpop.f32.mrb[0].mxu0
        %v3103 = vadd.f32 0.0, %v3102
        %v3104 = vpop.f32.mrb[0].mxu0
        %3105 = vmatprep.mubr.f32.mxu0 0.0
        %3106 = vmatmul.mubr.f32.gmra.mrb[0].mxu0 %v2887
        %v3107 = vpop.f32.mrb[0].mxu0
        %v3108 = vadd.f32 0.0, %v3107
        %v3109 = vpop.f32.mrb[0].mxu0
        %3110 = vmatprep.mubr.f32.mxu0 0.0
        %3111 = vmatmul.mubr.f32.gmra.mrb[0].mxu0 %v2890
        %v3112 = vpop.f32.mrb[0].mxu0
        %v3113 = vadd.f32 0.0, %v3112
        %v3114 = vpop.f32.mrb[0].mxu0
        %3115 = vmatprep.mubr.f32.mxu0 0.0
        %3116 = vmatmul.mubr.f32.gmra.mrb[0].mxu0 %v2893
        %v3117 = vpop.f32.mrb[0].mxu0
        %v3118 = vadd.f32 0.0, %v3117
        %v3119 = vpop.f32.mrb[0].mxu0
        %3120 = vmatprep.mubr.f32.mxu0 0.0
        %3121 = vmatmul.mubr.f32.gmra.mrb[0].mxu0 %v2896
        %v3122 = vpop.f32.mrb[0].mxu0
        %v3123 = vadd.f32 0.0, %v3122
        %v3124 = vpop.f32.mrb[0].mxu0
        %3125 = vdwg.mxu0
        %v3126 = vadd.f32 %v2736, %v2968
        %v3127 = vadd.f32 %v2737, %v2973
        %v3128 = vadd.f32 %v2738, %v2978
        %v3129 = vadd.f32 %v2739, %v2983
        %v3130 = vadd.f32 %v2740, %v2988
        %v3131 = vadd.f32 %v2741, %v2993
        %v3132 = vadd.f32 %v2742, %v2998
        %v3133 = vadd.f32 %v2743, %v3003
        %v3134 = vadd.f32 %v2744, %v3008
        %v3135 = vadd.f32 %v2745, %v3013
        %v3136 = vadd.f32 %v2746, %v3018
        %v3137 = vadd.f32 %v2747, %v3023
        %v3138 = vadd.f32 %v2748, %v3028
        %v3139 = vadd.f32 %v2749, %v3033
        %v3140 = vadd.f32 %v2750, %v3038
        %v3141 = vadd.f32 %v2751, %v3043
        %v3142 = vadd.f32 %v2752, %v3048
        %v3143 = vadd.f32 %v2753, %v3053
        %v3144 = vadd.f32 %v2754, %v3058
        %v3145 = vadd.f32 %v2755, %v3063
        %v3146 = vadd.f32 %v2756, %v3068
        %v3147 = vadd.f32 %v2757, %v3073
        %v3148 = vadd.f32 %v2758, %v3078
        %v3149 = vadd.f32 %v2759, %v3083
        %v3150 = vadd.f32 %v2760, %v3088
        %v3151 = vadd.f32 %v2761, %v3093
        %v3152 = vadd.f32 %v2762, %v3098
        %v3153 = vadd.f32 %v2763, %v3103
        %v3154 = vadd.f32 %v2764, %v3108
        %v3155 = vadd.f32 %v2765, %v3113
        %v3156 = vadd.f32 %v2766, %v3118
        %v3157 = vadd.f32 %v2767, %v3123
        %3190 = vrot.lane.b32.xlu0 %v3126, 4
        %v3191 = vpop.permute.xlu0 %3190
        %3192 = vrot.lane.b32.xlu0 %v3127, 4
        %v3193 = vpop.permute.xlu0 %3192
        %3194 = vrot.lane.b32.xlu0 %v3128, 4
        %v3195 = vpop.permute.xlu0 %3194
        %3196 = vrot.lane.b32.xlu0 %v3129, 4
        %v3197 = vpop.permute.xlu0 %3196
        %3198 = vrot.lane.b32.xlu0 %v3130, 4
        %v3199 = vpop.permute.xlu0 %3198
        %3200 = vrot.lane.b32.xlu0 %v3131, 4
        %v3201 = vpop.permute.xlu0 %3200
        %3202 = vrot.lane.b32.xlu0 %v3132, 4
        %v3203 = vpop.permute.xlu0 %3202
        %3204 = vrot.lane.b32.xlu0 %v3133, 4
        %v3205 = vpop.permute.xlu0 %3204
        %3206 = vrot.lane.b32.xlu0 %v3134, 4
        %v3207 = vpop.permute.xlu0 %3206
        %3208 = vrot.lane.b32.xlu0 %v3135, 4
        %v3209 = vpop.permute.xlu0 %3208
        %3210 = vrot.lane.b32.xlu0 %v3136, 4
        %v3211 = vpop.permute.xlu0 %3210
        %3212 = vrot.lane.b32.xlu0 %v3137, 4
        %v3213 = vpop.permute.xlu0 %3212
        %3214 = vrot.lane.b32.xlu0 %v3138, 4
        %v3215 = vpop.permute.xlu0 %3214
        %3216 = vrot.lane.b32.xlu0 %v3139, 4
        %v3217 = vpop.permute.xlu0 %3216
        %3218 = vrot.lane.b32.xlu0 %v3140, 4
        %v3219 = vpop.permute.xlu0 %3218
        %3220 = vrot.lane.b32.xlu0 %v3141, 4
        %v3221 = vpop.permute.xlu0 %3220
        %3222 = vrot.lane.b32.xlu0 %v3142, 4
        %v3223 = vpop.permute.xlu0 %3222
        %3224 = vrot.lane.b32.xlu0 %v3143, 4
        %v3225 = vpop.permute.xlu0 %3224
        %3226 = vrot.lane.b32.xlu0 %v3144, 4
        %v3227 = vpop.permute.xlu0 %3226
        %3228 = vrot.lane.b32.xlu0 %v3145, 4
        %v3229 = vpop.permute.xlu0 %3228
        %3230 = vrot.lane.b32.xlu0 %v3146, 4
        %v3231 = vpop.permute.xlu0 %3230
        %3232 = vrot.lane.b32.xlu0 %v3147, 4
        %v3233 = vpop.permute.xlu0 %3232
        %3234 = vrot.lane.b32.xlu0 %v3148, 4
        %v3235 = vpop.permute.xlu0 %3234
        %3236 = vrot.lane.b32.xlu0 %v3149, 4
        %v3237 = vpop.permute.xlu0 %3236
        %3238 = vrot.lane.b32.xlu0 %v3150, 4
        %v3239 = vpop.permute.xlu0 %3238
        %3240 = vrot.lane.b32.xlu0 %v3151, 4
        %v3241 = vpop.permute.xlu0 %3240
        %3242 = vrot.lane.b32.xlu0 %v3152, 4
        %v3243 = vpop.permute.xlu0 %3242
        %3244 = vrot.lane.b32.xlu0 %v3153, 4
        %v3245 = vpop.permute.xlu0 %3244
        %3246 = vrot.lane.b32.xlu0 %v3154, 4
        %v3247 = vpop.permute.xlu0 %3246
        %3248 = vrot.lane.b32.xlu0 %v3155, 4
        %v3249 = vpop.permute.xlu0 %3248
        %3250 = vrot.lane.b32.xlu0 %v3156, 4
        %v3251 = vpop.permute.xlu0 %3250
        %3252 = vrot.lane.b32.xlu0 %v3157, 4
        %v3253 = vpop.permute.xlu0 %3252
        %v3286 = vsel %vm347, %v1886, %v3191
        %v3287 = vsel %vm347, %v1887, %v3193
        %v3288 = vsel %vm347, %v1888, %v3195
        %v3289 = vsel %vm347, %v1889, %v3197
        %v3290 = vsel %vm347, %v1890, %v3199
        %v3291 = vsel %vm347, %v1891, %v3201
        %v3292 = vsel %vm347, %v1892, %v3203
        %v3293 = vsel %vm347, %v1893, %v3205
        %v3294 = vsel %vm347, %v1894, %v3207
        %v3295 = vsel %vm347, %v1895, %v3209
        %v3296 = vsel %vm347, %v1896, %v3211
        %v3297 = vsel %vm347, %v1897, %v3213
        %v3298 = vsel %vm347, %v1898, %v3215
        %v3299 = vsel %vm347, %v1899, %v3217
        %v3300 = vsel %vm347, %v1900, %v3219
        %v3301 = vsel %vm347, %v1901, %v3221
        %v3302 = vsel %vm347, %v1902, %v3223
        %v3303 = vsel %vm347, %v1903, %v3225
        %v3304 = vsel %vm347, %v1904, %v3227
        %v3305 = vsel %vm347, %v1905, %v3229
        %v3306 = vsel %vm347, %v1906, %v3231
        %v3307 = vsel %vm347, %v1907, %v3233
        %v3308 = vsel %vm347, %v1908, %v3235
        %v3309 = vsel %vm347, %v1909, %v3237
        %v3310 = vsel %vm347, %v1910, %v3239
        %v3311 = vsel %vm347, %v1911, %v3241
        %v3312 = vsel %vm347, %v1912, %v3243
        %v3313 = vsel %vm347, %v1913, %v3245
        %v3314 = vsel %vm347, %v1914, %v3247
        %v3315 = vsel %vm347, %v1915, %v3249
        %v3316 = vsel %vm347, %v1916, %v3251
        %v3317 = vsel %vm347, %v1917, %v3253
        %v3319 = vlaneseq
        %v3320 = vshrl.u32 %v3319, 7
        %v3321 = vsub.s32 0, %v3320
        %v3322 = vrot.slane %v421, %v3321
        %v3324 = vadd.f32 %v3286, %v3322
        %v3325 = vadd.f32 %v3287, %v3322
        %v3326 = vadd.f32 %v3288, %v3322
        %v3327 = vadd.f32 %v3289, %v3322
        %v3328 = vadd.f32 %v3290, %v3322
        %v3329 = vadd.f32 %v3291, %v3322
        %v3330 = vadd.f32 %v3292, %v3322
        %v3331 = vadd.f32 %v3293, %v3322
        %v3332 = vadd.f32 %v3294, %v3322
        %v3333 = vadd.f32 %v3295, %v3322
        %v3334 = vadd.f32 %v3296, %v3322
        %v3335 = vadd.f32 %v3297, %v3322
        %v3336 = vadd.f32 %v3298, %v3322
        %v3337 = vadd.f32 %v3299, %v3322
        %v3338 = vadd.f32 %v3300, %v3322
        %v3339 = vadd.f32 %v3301, %v3322
        %v3340 = vadd.f32 %v3302, %v3322
        %v3341 = vadd.f32 %v3303, %v3322
        %v3342 = vadd.f32 %v3304, %v3322
        %v3343 = vadd.f32 %v3305, %v3322
        %v3344 = vadd.f32 %v3306, %v3322
        %v3345 = vadd.f32 %v3307, %v3322
        %v3346 = vadd.f32 %v3308, %v3322
        %v3347 = vadd.f32 %v3309, %v3322
        %v3348 = vadd.f32 %v3310, %v3322
        %v3349 = vadd.f32 %v3311, %v3322
        %v3350 = vadd.f32 %v3312, %v3322
        %v3351 = vadd.f32 %v3313, %v3322
        %v3352 = vadd.f32 %v3314, %v3322
        %v3353 = vadd.f32 %v3315, %v3322
        %v3354 = vadd.f32 %v3316, %v3322
        %v3355 = vadd.f32 %v3317, %v3322
        %vm3356 = vcmask 64512
        %3357 = vst.msk [vmem:[%s305] sm:$0xff] %vm3356, %v3324
        %3358 = vst.msk [vmem:[%s305 + $0x8] sm:$0xff] %vm3356, %v3325
        %3359 = vst.msk [vmem:[%s305 + $0x20] sm:$0xff] %vm3356, %v3326
        %3360 = vst.msk [vmem:[%s305 + $0x28] sm:$0xff] %vm3356, %v3327
        %3361 = vst.msk [vmem:[%s305 + $0x40] sm:$0xff] %vm3356, %v3328
        %3362 = vst.msk [vmem:[%s305 + $0x48] sm:$0xff] %vm3356, %v3329
        %3363 = vst.msk [vmem:[%s305 + $0x60] sm:$0xff] %vm3356, %v3330
        %3364 = vst.msk [vmem:[%s305 + $0x68] sm:$0xff] %vm3356, %v3331
        %3365 = vst.msk [vmem:[%s305 + $0x80] sm:$0xff] %vm3356, %v3332
        %3366 = vst.msk [vmem:[%s305 + $0x88] sm:$0xff] %vm3356, %v3333
        %3367 = vst.msk [vmem:[%s305 + $0xa0] sm:$0xff] %vm3356, %v3334
        %3368 = vst.msk [vmem:[%s305 + $0xa8] sm:$0xff] %vm3356, %v3335
        %3369 = vst.msk [vmem:[%s305 + $0xc0] sm:$0xff] %vm3356, %v3336
        %3370 = vst.msk [vmem:[%s305 + $0xc8] sm:$0xff] %vm3356, %v3337
        %3371 = vst.msk [vmem:[%s305 + $0xe0] sm:$0xff] %vm3356, %v3338
        %3372 = vst.msk [vmem:[%s305 + $0xe8] sm:$0xff] %vm3356, %v3339
        %3373 = vst.msk [vmem:[%s305 + $0x100] sm:$0xff] %vm3356, %v3340
        %3374 = vst.msk [vmem:[%s305 + $0x108] sm:$0xff] %vm3356, %v3341
        %3375 = vst.msk [vmem:[%s305 + $0x120] sm:$0xff] %vm3356, %v3342
        %3376 = vst.msk [vmem:[%s305 + $0x128] sm:$0xff] %vm3356, %v3343
        %3377 = vst.msk [vmem:[%s305 + $0x140] sm:$0xff] %vm3356, %v3344
        %3378 = vst.msk [vmem:[%s305 + $0x148] sm:$0xff] %vm3356, %v3345
        %3379 = vst.msk [vmem:[%s305 + $0x160] sm:$0xff] %vm3356, %v3346
        %3380 = vst.msk [vmem:[%s305 + $0x168] sm:$0xff] %vm3356, %v3347
        %3381 = vst.msk [vmem:[%s305 + $0x180] sm:$0xff] %vm3356, %v3348
        %3382 = vst.msk [vmem:[%s305 + $0x188] sm:$0xff] %vm3356, %v3349
        %3383 = vst.msk [vmem:[%s305 + $0x1a0] sm:$0xff] %vm3356, %v3350
        %3384 = vst.msk [vmem:[%s305 + $0x1a8] sm:$0xff] %vm3356, %v3351
        %3385 = vst.msk [vmem:[%s305 + $0x1c0] sm:$0xff] %vm3356, %v3352
        %3386 = vst.msk [vmem:[%s305 + $0x1c8] sm:$0xff] %vm3356, %v3353
        %3387 = vst.msk [vmem:[%s305 + $0x1e0] sm:$0xff] %vm3356, %v3354
        %3388 = vst.msk [vmem:[%s305 + $0x1e8] sm:$0xff] %vm3356, %v3355
        %v3389 = vld [vmem:[%s388] sm:$0xff]
        %v3390 = vld [vmem:[%s388 + $0x8] sm:$0xff]
        %v3391 = vld [vmem:[%s388 + $0x18] sm:$0xff]
        %v3392 = vld [vmem:[%s388 + $0x20] sm:$0xff]
        %v3393 = vld [vmem:[%s388 + $0x30] sm:$0xff]
        %v3394 = vld [vmem:[%s388 + $0x38] sm:$0xff]
        %v3395 = vld [vmem:[%s388 + $0x48] sm:$0xff]
        %v3396 = vld [vmem:[%s388 + $0x50] sm:$0xff]
        %v3397 = vld [vmem:[%s388 + $0x60] sm:$0xff]
        %v3398 = vld [vmem:[%s388 + $0x68] sm:$0xff]
        %v3399 = vld [vmem:[%s388 + $0x78] sm:$0xff]
        %v3400 = vld [vmem:[%s388 + $0x80] sm:$0xff]
        %v3401 = vld [vmem:[%s388 + $0x90] sm:$0xff]
        %v3402 = vld [vmem:[%s388 + $0x98] sm:$0xff]
        %v3403 = vld [vmem:[%s388 + $0xa8] sm:$0xff]
        %v3404 = vld [vmem:[%s388 + $0xb0] sm:$0xff]
        %v3405 = vld [vmem:[%s388 + $0xc0] sm:$0xff]
        %v3406 = vld [vmem:[%s388 + $0xc8] sm:$0xff]
        %v3407 = vld [vmem:[%s388 + $0xd8] sm:$0xff]
        %v3408 = vld [vmem:[%s388 + $0xe0] sm:$0xff]
        %v3409 = vld [vmem:[%s388 + $0xf0] sm:$0xff]
        %v3410 = vld [vmem:[%s388 + $0xf8] sm:$0xff]
        %v3411 = vld [vmem:[%s388 + $0x108] sm:$0xff]
        %v3412 = vld [vmem:[%s388 + $0x110] sm:$0xff]
        %v3413 = vld [vmem:[%s388 + $0x120] sm:$0xff]
        %v3414 = vld [vmem:[%s388 + $0x128] sm:$0xff]
        %v3415 = vld [vmem:[%s388 + $0x138] sm:$0xff]
        %v3416 = vld [vmem:[%s388 + $0x140] sm:$0xff]
        %v3417 = vld [vmem:[%s388 + $0x150] sm:$0xff]
        %v3418 = vld [vmem:[%s388 + $0x158] sm:$0xff]
        %v3419 = vld [vmem:[%s388 + $0x168] sm:$0xff]
        %v3420 = vld [vmem:[%s388 + $0x170] sm:$0xff]
        %s3421 = scalar_lea.vmem [#allocation8], 32
        %v3422 = vld [vmem:[%s3421] sm:$0xf]
        %v3423 = vld [vmem:[%s388 + $0x1] sm:$0xff]
        %v3424 = vld [vmem:[%s388 + $0x9] sm:$0xff]
        %v3425 = vld [vmem:[%s388 + $0x19] sm:$0xff]
        %v3426 = vld [vmem:[%s388 + $0x21] sm:$0xff]
        %v3427 = vld [vmem:[%s388 + $0x31] sm:$0xff]
        %v3428 = vld [vmem:[%s388 + $0x39] sm:$0xff]
        %v3429 = vld [vmem:[%s388 + $0x49] sm:$0xff]
        %v3430 = vld [vmem:[%s388 + $0x51] sm:$0xff]
        %v3431 = vld [vmem:[%s388 + $0x61] sm:$0xff]
        %v3432 = vld [vmem:[%s388 + $0x69] sm:$0xff]
        %v3433 = vld [vmem:[%s388 + $0x79] sm:$0xff]
        %v3434 = vld [vmem:[%s388 + $0x81] sm:$0xff]
        %v3435 = vld [vmem:[%s388 + $0x91] sm:$0xff]
        %v3436 = vld [vmem:[%s388 + $0x99] sm:$0xff]
        %v3437 = vld [vmem:[%s388 + $0xa9] sm:$0xff]
        %v3438 = vld [vmem:[%s388 + $0xb1] sm:$0xff]
        %v3439 = vld [vmem:[%s388 + $0xc1] sm:$0xff]
        %v3440 = vld [vmem:[%s388 + $0xc9] sm:$0xff]
        %v3441 = vld [vmem:[%s388 + $0xd9] sm:$0xff]
        %v3442 = vld [vmem:[%s388 + $0xe1] sm:$0xff]
        %v3443 = vld [vmem:[%s388 + $0xf1] sm:$0xff]
        %v3444 = vld [vmem:[%s388 + $0xf9] sm:$0xff]
        %v3445 = vld [vmem:[%s388 + $0x109] sm:$0xff]
        %v3446 = vld [vmem:[%s388 + $0x111] sm:$0xff]
        %v3447 = vld [vmem:[%s388 + $0x121] sm:$0xff]
        %v3448 = vld [vmem:[%s388 + $0x129] sm:$0xff]
        %v3449 = vld [vmem:[%s388 + $0x139] sm:$0xff]
        %v3450 = vld [vmem:[%s388 + $0x141] sm:$0xff]
        %v3451 = vld [vmem:[%s388 + $0x151] sm:$0xff]
        %v3452 = vld [vmem:[%s388 + $0x159] sm:$0xff]
        %v3453 = vld [vmem:[%s388 + $0x169] sm:$0xff]
        %v3454 = vld [vmem:[%s388 + $0x171] sm:$0xff]
        %s3455 = scalar_lea.vmem [#allocation8], 36
        %v3456 = vld [vmem:[%s3455] sm:$0xf]
        %v3458 = vsel %vm347, %v3423, 0
        %v3461 = vsel %vm347, %v3424, 0
        %v3464 = vsel %vm347, %v3425, 0
        %v3467 = vsel %vm347, %v3426, 0
        %v3470 = vsel %vm347, %v3427, 0
        %v3473 = vsel %vm347, %v3428, 0
        %v3476 = vsel %vm347, %v3429, 0
        %v3479 = vsel %vm347, %v3430, 0
        %v3482 = vsel %vm347, %v3431, 0
        %v3485 = vsel %vm347, %v3432, 0
        %v3488 = vsel %vm347, %v3433, 0
        %v3491 = vsel %vm347, %v3434, 0
        %v3494 = vsel %vm347, %v3435, 0
        %v3497 = vsel %vm347, %v3436, 0
        %v3500 = vsel %vm347, %v3437, 0
        %v3503 = vsel %vm347, %v3438, 0
        %v3506 = vsel %vm347, %v3439, 0
        %v3509 = vsel %vm347, %v3440, 0
        %v3512 = vsel %vm347, %v3441, 0
        %v3515 = vsel %vm347, %v3442, 0
        %v3518 = vsel %vm347, %v3443, 0
        %v3521 = vsel %vm347, %v3444, 0
        %v3524 = vsel %vm347, %v3445, 0
        %v3527 = vsel %vm347, %v3446, 0
        %v3530 = vsel %vm347, %v3447, 0
        %v3533 = vsel %vm347, %v3448, 0
        %v3536 = vsel %vm347, %v3449, 0
        %v3539 = vsel %vm347, %v3450, 0
        %v3542 = vsel %vm347, %v3451, 0
        %v3545 = vsel %vm347, %v3452, 0
        %v3548 = vsel %vm347, %v3453, 0
        %v3551 = vsel %vm347, %v3454, 0
        %v3554 = vsel %vm585, %v3456, 0
        %3556 = vmatprep.subr.mxu0 0.0
        %3557 = vmatpush1.msra.mxu0 %v3554
        %3558 = vmatprep.subr.mxu0 0.0
        %3559 = vmatpush1.msra.mxu0 0.0
        %3560 = vmatprep.subr.mxu0 0.0
        %3561 = vmatpush1.msra.mxu0 0.0
        %3562 = vmatprep.subr.mxu0 0.0
        %3563 = vmatpush1.msra.mxu0 0.0
        %3564 = vmatprep.subr.mxu0 0.0
        %3565 = vmatpush1.msra.mxu0 0.0
        %3566 = vmatprep.subr.mxu0 0.0
        %3567 = vmatpush1.msra.mxu0 0.0
        %3568 = vmatprep.subr.mxu0 0.0
        %3569 = vmatpush1.msra.mxu0 0.0
        %3570 = vmatprep.subr.mxu0 0.0
        %3571 = vmatpush1.msra.mxu0 0.0
        %3572 = vmatprep.subr.mxu0 0.0
        %3573 = vmatpush1.msra.mxu0 0.0
        %3574 = vmatprep.subr.mxu0 0.0
        %3575 = vmatpush1.msra.mxu0 0.0
        %3576 = vmatprep.subr.mxu0 0.0
        %3577 = vmatpush1.msra.mxu0 0.0
        %3578 = vmatprep.subr.mxu0 0.0
        %3579 = vmatpush1.msra.mxu0 0.0
        %3580 = vmatprep.subr.mxu0 0.0
        %3581 = vmatpush1.msra.mxu0 0.0
        %3582 = vmatprep.subr.mxu0 0.0
        %3583 = vmatpush1.msra.mxu0 0.0
        %3584 = vmatprep.subr.mxu0 0.0
        %3585 = vmatpush1.msra.mxu0 0.0
        %3586 = vmatprep.subr.mxu0 0.0
        %3587 = vmatpush1.msra.mxu0 0.0
        %3588 = vmatprep.subr.mxu0 0.0
        %3589 = vmatpush1.msra.mxu0 0.0
        %3590 = vmatprep.subr.mxu0 0.0
        %3591 = vmatpush1.msra.mxu0 0.0
        %3592 = vmatprep.subr.mxu0 0.0
        %3593 = vmatpush1.msra.mxu0 0.0
        %3594 = vmatprep.subr.mxu0 0.0
        %3595 = vmatpush1.msra.mxu0 0.0
        %3596 = vmatprep.subr.mxu0 0.0
        %3597 = vmatpush1.msra.mxu0 0.0
        %3598 = vmatprep.subr.mxu0 0.0
        %3599 = vmatpush1.msra.mxu0 0.0
        %3600 = vmatprep.subr.mxu0 0.0
        %3601 = vmatpush1.msra.mxu0 0.0
        %3602 = vmatprep.subr.mxu0 0.0
        %3603 = vmatpush1.msra.mxu0 0.0
        %3604 = vmatprep.subr.mxu0 0.0
        %3605 = vmatpush1.msra.mxu0 0.0
        %3606 = vmatprep.subr.mxu0 0.0
        %3607 = vmatpush1.msra.mxu0 0.0
        %3608 = vmatprep.subr.mxu0 0.0
        %3609 = vmatpush1.msra.mxu0 0.0
        %3610 = vmatprep.subr.mxu0 0.0
        %3611 = vmatpush1.msra.mxu0 0.0
        %3612 = vmatprep.subr.mxu0 0.0
        %3613 = vmatpush1.msra.mxu0 0.0
        %3614 = vmatprep.subr.mxu0 0.0
        %3615 = vmatpush1.msra.mxu0 0.0
        %3616 = vmatprep.subr.mxu0 0.0
        %3617 = vmatpush1.msra.mxu0 0.0
        %3618 = vmatprep.subr.mxu0 0.0
        %3619 = vmatpush1.msra.mxu0 0.0
        %3620 = vmatprep.mubr.f32.mxu0 0.0
        %3621 = vmatmul.mubr.f32.gmra.mrb[0].mxu0 %v3458
        %v3622 = vpop.f32.mrb[0].mxu0
        %v3623 = vadd.f32 0.0, %v3622
        %v3624 = vpop.f32.mrb[0].mxu0
        %3625 = vmatprep.mubr.f32.mxu0 0.0
        %3626 = vmatmul.mubr.f32.gmra.mrb[0].mxu0 %v3461
        %v3627 = vpop.f32.mrb[0].mxu0
        %v3628 = vadd.f32 0.0, %v3627
        %v3629 = vpop.f32.mrb[0].mxu0
        %3630 = vmatprep.mubr.f32.mxu0 0.0
        %3631 = vmatmul.mubr.f32.gmra.mrb[0].mxu0 %v3464
        %v3632 = vpop.f32.mrb[0].mxu0
        %v3633 = vadd.f32 0.0, %v3632
        %v3634 = vpop.f32.mrb[0].mxu0
        %3635 = vmatprep.mubr.f32.mxu0 0.0
        %3636 = vmatmul.mubr.f32.gmra.mrb[0].mxu0 %v3467
        %v3637 = vpop.f32.mrb[0].mxu0
        %v3638 = vadd.f32 0.0, %v3637
        %v3639 = vpop.f32.mrb[0].mxu0
        %3640 = vmatprep.mubr.f32.mxu0 0.0
        %3641 = vmatmul.mubr.f32.gmra.mrb[0].mxu0 %v3470
        %v3642 = vpop.f32.mrb[0].mxu0
        %v3643 = vadd.f32 0.0, %v3642
        %v3644 = vpop.f32.mrb[0].mxu0
        %3645 = vmatprep.mubr.f32.mxu0 0.0
        %3646 = vmatmul.mubr.f32.gmra.mrb[0].mxu0 %v3473
        %v3647 = vpop.f32.mrb[0].mxu0
        %v3648 = vadd.f32 0.0, %v3647
        %v3649 = vpop.f32.mrb[0].mxu0
        %3650 = vmatprep.mubr.f32.mxu0 0.0
        %3651 = vmatmul.mubr.f32.gmra.mrb[0].mxu0 %v3476
        %v3652 = vpop.f32.mrb[0].mxu0
        %v3653 = vadd.f32 0.0, %v3652
        %v3654 = vpop.f32.mrb[0].mxu0
        %3655 = vmatprep.mubr.f32.mxu0 0.0
        %3656 = vmatmul.mubr.f32.gmra.mrb[0].mxu0 %v3479
        %v3657 = vpop.f32.mrb[0].mxu0
        %v3658 = vadd.f32 0.0, %v3657
        %v3659 = vpop.f32.mrb[0].mxu0
        %3660 = vmatprep.mubr.f32.mxu0 0.0
        %3661 = vmatmul.mubr.f32.gmra.mrb[0].mxu0 %v3482
        %v3662 = vpop.f32.mrb[0].mxu0
        %v3663 = vadd.f32 0.0, %v3662
        %v3664 = vpop.f32.mrb[0].mxu0
        %3665 = vmatprep.mubr.f32.mxu0 0.0
        %3666 = vmatmul.mubr.f32.gmra.mrb[0].mxu0 %v3485
        %v3667 = vpop.f32.mrb[0].mxu0
        %v3668 = vadd.f32 0.0, %v3667
        %v3669 = vpop.f32.mrb[0].mxu0
        %3670 = vmatprep.mubr.f32.mxu0 0.0
        %3671 = vmatmul.mubr.f32.gmra.mrb[0].mxu0 %v3488
        %v3672 = vpop.f32.mrb[0].mxu0
        %v3673 = vadd.f32 0.0, %v3672
        %v3674 = vpop.f32.mrb[0].mxu0
        %3675 = vmatprep.mubr.f32.mxu0 0.0
        %3676 = vmatmul.mubr.f32.gmra.mrb[0].mxu0 %v3491
        %v3677 = vpop.f32.mrb[0].mxu0
        %v3678 = vadd.f32 0.0, %v3677
        %v3679 = vpop.f32.mrb[0].mxu0
        %3680 = vmatprep.mubr.f32.mxu0 0.0
        %3681 = vmatmul.mubr.f32.gmra.mrb[0].mxu0 %v3494
        %v3682 = vpop.f32.mrb[0].mxu0
        %v3683 = vadd.f32 0.0, %v3682
        %v3684 = vpop.f32.mrb[0].mxu0
        %3685 = vmatprep.mubr.f32.mxu0 0.0
        %3686 = vmatmul.mubr.f32.gmra.mrb[0].mxu0 %v3497
        %v3687 = vpop.f32.mrb[0].mxu0
        %v3688 = vadd.f32 0.0, %v3687
        %v3689 = vpop.f32.mrb[0].mxu0
        %3690 = vmatprep.mubr.f32.mxu0 0.0
        %3691 = vmatmul.mubr.f32.gmra.mrb[0].mxu0 %v3500
        %v3692 = vpop.f32.mrb[0].mxu0
        %v3693 = vadd.f32 0.0, %v3692
        %v3694 = vpop.f32.mrb[0].mxu0
        %3695 = vmatprep.mubr.f32.mxu0 0.0
        %3696 = vmatmul.mubr.f32.gmra.mrb[0].mxu0 %v3503
        %v3697 = vpop.f32.mrb[0].mxu0
        %v3698 = vadd.f32 0.0, %v3697
        %v3699 = vpop.f32.mrb[0].mxu0
        %3700 = vmatprep.mubr.f32.mxu0 0.0
        %3701 = vmatmul.mubr.f32.gmra.mrb[0].mxu0 %v3506
        %v3702 = vpop.f32.mrb[0].mxu0
        %v3703 = vadd.f32 0.0, %v3702
        %v3704 = vpop.f32.mrb[0].mxu0
        %3705 = vmatprep.mubr.f32.mxu0 0.0
        %3706 = vmatmul.mubr.f32.gmra.mrb[0].mxu0 %v3509
        %v3707 = vpop.f32.mrb[0].mxu0
        %v3708 = vadd.f32 0.0, %v3707
        %v3709 = vpop.f32.mrb[0].mxu0
        %3710 = vmatprep.mubr.f32.mxu0 0.0
        %3711 = vmatmul.mubr.f32.gmra.mrb[0].mxu0 %v3512
        %v3712 = vpop.f32.mrb[0].mxu0
        %v3713 = vadd.f32 0.0, %v3712
        %v3714 = vpop.f32.mrb[0].mxu0
        %3715 = vmatprep.mubr.f32.mxu0 0.0
        %3716 = vmatmul.mubr.f32.gmra.mrb[0].mxu0 %v3515
        %v3717 = vpop.f32.mrb[0].mxu0
        %v3718 = vadd.f32 0.0, %v3717
        %v3719 = vpop.f32.mrb[0].mxu0
        %3720 = vmatprep.mubr.f32.mxu0 0.0
        %3721 = vmatmul.mubr.f32.gmra.mrb[0].mxu0 %v3518
        %v3722 = vpop.f32.mrb[0].mxu0
        %v3723 = vadd.f32 0.0, %v3722
        %v3724 = vpop.f32.mrb[0].mxu0
        %3725 = vmatprep.mubr.f32.mxu0 0.0
        %3726 = vmatmul.mubr.f32.gmra.mrb[0].mxu0 %v3521
        %v3727 = vpop.f32.mrb[0].mxu0
        %v3728 = vadd.f32 0.0, %v3727
        %v3729 = vpop.f32.mrb[0].mxu0
        %3730 = vmatprep.mubr.f32.mxu0 0.0
        %3731 = vmatmul.mubr.f32.gmra.mrb[0].mxu0 %v3524
        %v3732 = vpop.f32.mrb[0].mxu0
        %v3733 = vadd.f32 0.0, %v3732
        %v3734 = vpop.f32.mrb[0].mxu0
        %3735 = vmatprep.mubr.f32.mxu0 0.0
        %3736 = vmatmul.mubr.f32.gmra.mrb[0].mxu0 %v3527
        %v3737 = vpop.f32.mrb[0].mxu0
        %v3738 = vadd.f32 0.0, %v3737
        %v3739 = vpop.f32.mrb[0].mxu0
        %3740 = vmatprep.mubr.f32.mxu0 0.0
        %3741 = vmatmul.mubr.f32.gmra.mrb[0].mxu0 %v3530
        %v3742 = vpop.f32.mrb[0].mxu0
        %v3743 = vadd.f32 0.0, %v3742
        %v3744 = vpop.f32.mrb[0].mxu0
        %3745 = vmatprep.mubr.f32.mxu0 0.0
        %3746 = vmatmul.mubr.f32.gmra.mrb[0].mxu0 %v3533
        %v3747 = vpop.f32.mrb[0].mxu0
        %v3748 = vadd.f32 0.0, %v3747
        %v3749 = vpop.f32.mrb[0].mxu0
        %3750 = vmatprep.mubr.f32.mxu0 0.0
        %3751 = vmatmul.mubr.f32.gmra.mrb[0].mxu0 %v3536
        %v3752 = vpop.f32.mrb[0].mxu0
        %v3753 = vadd.f32 0.0, %v3752
        %v3754 = vpop.f32.mrb[0].mxu0
        %3755 = vmatprep.mubr.f32.mxu0 0.0
        %3756 = vmatmul.mubr.f32.gmra.mrb[0].mxu0 %v3539
        %v3757 = vpop.f32.mrb[0].mxu0
        %v3758 = vadd.f32 0.0, %v3757
        %v3759 = vpop.f32.mrb[0].mxu0
        %3760 = vmatprep.mubr.f32.mxu0 0.0
        %3761 = vmatmul.mubr.f32.gmra.mrb[0].mxu0 %v3542
        %v3762 = vpop.f32.mrb[0].mxu0
        %v3763 = vadd.f32 0.0, %v3762
        %v3764 = vpop.f32.mrb[0].mxu0
        %3765 = vmatprep.mubr.f32.mxu0 0.0
        %3766 = vmatmul.mubr.f32.gmra.mrb[0].mxu0 %v3545
        %v3767 = vpop.f32.mrb[0].mxu0
        %v3768 = vadd.f32 0.0, %v3767
        %v3769 = vpop.f32.mrb[0].mxu0
        %3770 = vmatprep.mubr.f32.mxu0 0.0
        %3771 = vmatmul.mubr.f32.gmra.mrb[0].mxu0 %v3548
        %v3772 = vpop.f32.mrb[0].mxu0
        %v3773 = vadd.f32 0.0, %v3772
        %v3774 = vpop.f32.mrb[0].mxu0
        %3775 = vmatprep.mubr.f32.mxu0 0.0
        %3776 = vmatmul.mubr.f32.gmra.mrb[0].mxu0 %v3551
        %v3777 = vpop.f32.mrb[0].mxu0
        %v3778 = vadd.f32 0.0, %v3777
        %v3779 = vpop.f32.mrb[0].mxu0
        %3780 = vdwg.mxu0
        %v3782 = vsel %vm347, %v3389, 0
        %v3785 = vsel %vm347, %v3390, 0
        %v3788 = vsel %vm347, %v3391, 0
        %v3791 = vsel %vm347, %v3392, 0
        %v3794 = vsel %vm347, %v3393, 0
        %v3797 = vsel %vm347, %v3394, 0
        %v3800 = vsel %vm347, %v3395, 0
        %v3803 = vsel %vm347, %v3396, 0
        %v3806 = vsel %vm347, %v3397, 0
        %v3809 = vsel %vm347, %v3398, 0
        %v3812 = vsel %vm347, %v3399, 0
        %v3815 = vsel %vm347, %v3400, 0
        %v3818 = vsel %vm347, %v3401, 0
        %v3821 = vsel %vm347, %v3402, 0
        %v3824 = vsel %vm347, %v3403, 0
        %v3827 = vsel %vm347, %v3404, 0
        %v3830 = vsel %vm347, %v3405, 0
        %v3833 = vsel %vm347, %v3406, 0
        %v3836 = vsel %vm347, %v3407, 0
        %v3839 = vsel %vm347, %v3408, 0
        %v3842 = vsel %vm347, %v3409, 0
        %v3845 = vsel %vm347, %v3410, 0
        %v3848 = vsel %vm347, %v3411, 0
        %v3851 = vsel %vm347, %v3412, 0
        %v3854 = vsel %vm347, %v3413, 0
        %v3857 = vsel %vm347, %v3414, 0
        %v3860 = vsel %vm347, %v3415, 0
        %v3863 = vsel %vm347, %v3416, 0
        %v3866 = vsel %vm347, %v3417, 0
        %v3869 = vsel %vm347, %v3418, 0
        %v3872 = vsel %vm347, %v3419, 0
        %v3875 = vsel %vm347, %v3420, 0
        %v3878 = vsel %vm585, %v3422, 0
        %3880 = vmatprep.subr.mxu0 0.0
        %3881 = vmatpush1.msra.mxu0 %v3878
        %3882 = vmatprep.subr.mxu0 0.0
        %3883 = vmatpush1.msra.mxu0 0.0
        %3884 = vmatprep.subr.mxu0 0.0
        %3885 = vmatpush1.msra.mxu0 0.0
        %3886 = vmatprep.subr.mxu0 0.0
        %3887 = vmatpush1.msra.mxu0 0.0
        %3888 = vmatprep.subr.mxu0 0.0
        %3889 = vmatpush1.msra.mxu0 0.0
        %3890 = vmatprep.subr.mxu0 0.0
        %3891 = vmatpush1.msra.mxu0 0.0
        %3892 = vmatprep.subr.mxu0 0.0
        %3893 = vmatpush1.msra.mxu0 0.0
        %3894 = vmatprep.subr.mxu0 0.0
        %3895 = vmatpush1.msra.mxu0 0.0
        %3896 = vmatprep.subr.mxu0 0.0
        %3897 = vmatpush1.msra.mxu0 0.0
        %3898 = vmatprep.subr.mxu0 0.0
        %3899 = vmatpush1.msra.mxu0 0.0
        %3900 = vmatprep.subr.mxu0 0.0
        %3901 = vmatpush1.msra.mxu0 0.0
        %3902 = vmatprep.subr.mxu0 0.0
        %3903 = vmatpush1.msra.mxu0 0.0
        %3904 = vmatprep.subr.mxu0 0.0
        %3905 = vmatpush1.msra.mxu0 0.0
        %3906 = vmatprep.subr.mxu0 0.0
        %3907 = vmatpush1.msra.mxu0 0.0
        %3908 = vmatprep.subr.mxu0 0.0
        %3909 = vmatpush1.msra.mxu0 0.0
        %3910 = vmatprep.subr.mxu0 0.0
        %3911 = vmatpush1.msra.mxu0 0.0
        %3912 = vmatprep.subr.mxu0 0.0
        %3913 = vmatpush1.msra.mxu0 0.0
        %3914 = vmatprep.subr.mxu0 0.0
        %3915 = vmatpush1.msra.mxu0 0.0
        %3916 = vmatprep.subr.mxu0 0.0
        %3917 = vmatpush1.msra.mxu0 0.0
        %3918 = vmatprep.subr.mxu0 0.0
        %3919 = vmatpush1.msra.mxu0 0.0
        %3920 = vmatprep.subr.mxu0 0.0
        %3921 = vmatpush1.msra.mxu0 0.0
        %3922 = vmatprep.subr.mxu0 0.0
        %3923 = vmatpush1.msra.mxu0 0.0
        %3924 = vmatprep.subr.mxu0 0.0
        %3925 = vmatpush1.msra.mxu0 0.0
        %3926 = vmatprep.subr.mxu0 0.0
        %3927 = vmatpush1.msra.mxu0 0.0
        %3928 = vmatprep.subr.mxu0 0.0
        %3929 = vmatpush1.msra.mxu0 0.0
        %3930 = vmatprep.subr.mxu0 0.0
        %3931 = vmatpush1.msra.mxu0 0.0
        %3932 = vmatprep.subr.mxu0 0.0
        %3933 = vmatpush1.msra.mxu0 0.0
        %3934 = vmatprep.subr.mxu0 0.0
        %3935 = vmatpush1.msra.mxu0 0.0
        %3936 = vmatprep.subr.mxu0 0.0
        %3937 = vmatpush1.msra.mxu0 0.0
        %3938 = vmatprep.subr.mxu0 0.0
        %3939 = vmatpush1.msra.mxu0 0.0
        %3940 = vmatprep.subr.mxu0 0.0
        %3941 = vmatpush1.msra.mxu0 0.0
        %3942 = vmatprep.subr.mxu0 0.0
        %3943 = vmatpush1.msra.mxu0 0.0
        %3944 = vmatprep.mubr.f32.mxu0 0.0
        %3945 = vmatmul.mubr.f32.gmra.mrb[0].mxu0 %v3782
        %v3946 = vpop.f32.mrb[0].mxu0
        %v3947 = vadd.f32 %v3623, %v3946
        %v3948 = vpop.f32.mrb[0].mxu0
        %3949 = vmatprep.mubr.f32.mxu0 0.0
        %3950 = vmatmul.mubr.f32.gmra.mrb[0].mxu0 %v3785
        %v3951 = vpop.f32.mrb[0].mxu0
        %v3952 = vadd.f32 %v3628, %v3951
        %v3953 = vpop.f32.mrb[0].mxu0
        %3954 = vmatprep.mubr.f32.mxu0 0.0
        %3955 = vmatmul.mubr.f32.gmra.mrb[0].mxu0 %v3788
        %v3956 = vpop.f32.mrb[0].mxu0
        %v3957 = vadd.f32 %v3633, %v3956
        %v3958 = vpop.f32.mrb[0].mxu0
        %3959 = vmatprep.mubr.f32.mxu0 0.0
        %3960 = vmatmul.mubr.f32.gmra.mrb[0].mxu0 %v3791
        %v3961 = vpop.f32.mrb[0].mxu0
        %v3962 = vadd.f32 %v3638, %v3961
        %v3963 = vpop.f32.mrb[0].mxu0
        %3964 = vmatprep.mubr.f32.mxu0 0.0
        %3965 = vmatmul.mubr.f32.gmra.mrb[0].mxu0 %v3794
        %v3966 = vpop.f32.mrb[0].mxu0
        %v3967 = vadd.f32 %v3643, %v3966
        %v3968 = vpop.f32.mrb[0].mxu0
        %3969 = vmatprep.mubr.f32.mxu0 0.0
        %3970 = vmatmul.mubr.f32.gmra.mrb[0].mxu0 %v3797
        %v3971 = vpop.f32.mrb[0].mxu0
        %v3972 = vadd.f32 %v3648, %v3971
        %v3973 = vpop.f32.mrb[0].mxu0
        %3974 = vmatprep.mubr.f32.mxu0 0.0
        %3975 = vmatmul.mubr.f32.gmra.mrb[0].mxu0 %v3800
        %v3976 = vpop.f32.mrb[0].mxu0
        %v3977 = vadd.f32 %v3653, %v3976
        %v3978 = vpop.f32.mrb[0].mxu0
        %3979 = vmatprep.mubr.f32.mxu0 0.0
        %3980 = vmatmul.mubr.f32.gmra.mrb[0].mxu0 %v3803
        %v3981 = vpop.f32.mrb[0].mxu0
        %v3982 = vadd.f32 %v3658, %v3981
        %v3983 = vpop.f32.mrb[0].mxu0
        %3984 = vmatprep.mubr.f32.mxu0 0.0
        %3985 = vmatmul.mubr.f32.gmra.mrb[0].mxu0 %v3806
        %v3986 = vpop.f32.mrb[0].mxu0
        %v3987 = vadd.f32 %v3663, %v3986
        %v3988 = vpop.f32.mrb[0].mxu0
        %3989 = vmatprep.mubr.f32.mxu0 0.0
        %3990 = vmatmul.mubr.f32.gmra.mrb[0].mxu0 %v3809
        %v3991 = vpop.f32.mrb[0].mxu0
        %v3992 = vadd.f32 %v3668, %v3991
        %v3993 = vpop.f32.mrb[0].mxu0
        %3994 = vmatprep.mubr.f32.mxu0 0.0
        %3995 = vmatmul.mubr.f32.gmra.mrb[0].mxu0 %v3812
        %v3996 = vpop.f32.mrb[0].mxu0
        %v3997 = vadd.f32 %v3673, %v3996
        %v3998 = vpop.f32.mrb[0].mxu0
        %3999 = vmatprep.mubr.f32.mxu0 0.0
        %4000 = vmatmul.mubr.f32.gmra.mrb[0].mxu0 %v3815
        %v4001 = vpop.f32.mrb[0].mxu0
        %v4002 = vadd.f32 %v3678, %v4001
        %v4003 = vpop.f32.mrb[0].mxu0
        %4004 = vmatprep.mubr.f32.mxu0 0.0
        %4005 = vmatmul.mubr.f32.gmra.mrb[0].mxu0 %v3818
        %v4006 = vpop.f32.mrb[0].mxu0
        %v4007 = vadd.f32 %v3683, %v4006
        %v4008 = vpop.f32.mrb[0].mxu0
        %4009 = vmatprep.mubr.f32.mxu0 0.0
        %4010 = vmatmul.mubr.f32.gmra.mrb[0].mxu0 %v3821
        %v4011 = vpop.f32.mrb[0].mxu0
        %v4012 = vadd.f32 %v3688, %v4011
        %v4013 = vpop.f32.mrb[0].mxu0
        %4014 = vmatprep.mubr.f32.mxu0 0.0
        %4015 = vmatmul.mubr.f32.gmra.mrb[0].mxu0 %v3824
        %v4016 = vpop.f32.mrb[0].mxu0
        %v4017 = vadd.f32 %v3693, %v4016
        %v4018 = vpop.f32.mrb[0].mxu0
        %4019 = vmatprep.mubr.f32.mxu0 0.0
        %4020 = vmatmul.mubr.f32.gmra.mrb[0].mxu0 %v3827
        %v4021 = vpop.f32.mrb[0].mxu0
        %v4022 = vadd.f32 %v3698, %v4021
        %v4023 = vpop.f32.mrb[0].mxu0
        %4024 = vmatprep.mubr.f32.mxu0 0.0
        %4025 = vmatmul.mubr.f32.gmra.mrb[0].mxu0 %v3830
        %v4026 = vpop.f32.mrb[0].mxu0
        %v4027 = vadd.f32 %v3703, %v4026
        %v4028 = vpop.f32.mrb[0].mxu0
        %4029 = vmatprep.mubr.f32.mxu0 0.0
        %4030 = vmatmul.mubr.f32.gmra.mrb[0].mxu0 %v3833
        %v4031 = vpop.f32.mrb[0].mxu0
        %v4032 = vadd.f32 %v3708, %v4031
        %v4033 = vpop.f32.mrb[0].mxu0
        %4034 = vmatprep.mubr.f32.mxu0 0.0
        %4035 = vmatmul.mubr.f32.gmra.mrb[0].mxu0 %v3836
        %v4036 = vpop.f32.mrb[0].mxu0
        %v4037 = vadd.f32 %v3713, %v4036
        %v4038 = vpop.f32.mrb[0].mxu0
        %4039 = vmatprep.mubr.f32.mxu0 0.0
        %4040 = vmatmul.mubr.f32.gmra.mrb[0].mxu0 %v3839
        %v4041 = vpop.f32.mrb[0].mxu0
        %v4042 = vadd.f32 %v3718, %v4041
        %v4043 = vpop.f32.mrb[0].mxu0
        %4044 = vmatprep.mubr.f32.mxu0 0.0
        %4045 = vmatmul.mubr.f32.gmra.mrb[0].mxu0 %v3842
        %v4046 = vpop.f32.mrb[0].mxu0
        %v4047 = vadd.f32 %v3723, %v4046
        %v4048 = vpop.f32.mrb[0].mxu0
        %4049 = vmatprep.mubr.f32.mxu0 0.0
        %4050 = vmatmul.mubr.f32.gmra.mrb[0].mxu0 %v3845
        %v4051 = vpop.f32.mrb[0].mxu0
        %v4052 = vadd.f32 %v3728, %v4051
        %v4053 = vpop.f32.mrb[0].mxu0
        %4054 = vmatprep.mubr.f32.mxu0 0.0
        %4055 = vmatmul.mubr.f32.gmra.mrb[0].mxu0 %v3848
        %v4056 = vpop.f32.mrb[0].mxu0
        %v4057 = vadd.f32 %v3733, %v4056
        %v4058 = vpop.f32.mrb[0].mxu0
        %4059 = vmatprep.mubr.f32.mxu0 0.0
        %4060 = vmatmul.mubr.f32.gmra.mrb[0].mxu0 %v3851
        %v4061 = vpop.f32.mrb[0].mxu0
        %v4062 = vadd.f32 %v3738, %v4061
        %v4063 = vpop.f32.mrb[0].mxu0
        %4064 = vmatprep.mubr.f32.mxu0 0.0
        %4065 = vmatmul.mubr.f32.gmra.mrb[0].mxu0 %v3854
        %v4066 = vpop.f32.mrb[0].mxu0
        %v4067 = vadd.f32 %v3743, %v4066
        %v4068 = vpop.f32.mrb[0].mxu0
        %4069 = vmatprep.mubr.f32.mxu0 0.0
        %4070 = vmatmul.mubr.f32.gmra.mrb[0].mxu0 %v3857
        %v4071 = vpop.f32.mrb[0].mxu0
        %v4072 = vadd.f32 %v3748, %v4071
        %v4073 = vpop.f32.mrb[0].mxu0
        %4074 = vmatprep.mubr.f32.mxu0 0.0
        %4075 = vmatmul.mubr.f32.gmra.mrb[0].mxu0 %v3860
        %v4076 = vpop.f32.mrb[0].mxu0
        %v4077 = vadd.f32 %v3753, %v4076
        %v4078 = vpop.f32.mrb[0].mxu0
        %4079 = vmatprep.mubr.f32.mxu0 0.0
        %4080 = vmatmul.mubr.f32.gmra.mrb[0].mxu0 %v3863
        %v4081 = vpop.f32.mrb[0].mxu0
        %v4082 = vadd.f32 %v3758, %v4081
        %v4083 = vpop.f32.mrb[0].mxu0
        %4084 = vmatprep.mubr.f32.mxu0 0.0
        %4085 = vmatmul.mubr.f32.gmra.mrb[0].mxu0 %v3866
        %v4086 = vpop.f32.mrb[0].mxu0
        %v4087 = vadd.f32 %v3763, %v4086
        %v4088 = vpop.f32.mrb[0].mxu0
        %4089 = vmatprep.mubr.f32.mxu0 0.0
        %4090 = vmatmul.mubr.f32.gmra.mrb[0].mxu0 %v3869
        %v4091 = vpop.f32.mrb[0].mxu0
        %v4092 = vadd.f32 %v3768, %v4091
        %v4093 = vpop.f32.mrb[0].mxu0
        %4094 = vmatprep.mubr.f32.mxu0 0.0
        %4095 = vmatmul.mubr.f32.gmra.mrb[0].mxu0 %v3872
        %v4096 = vpop.f32.mrb[0].mxu0
        %v4097 = vadd.f32 %v3773, %v4096
        %v4098 = vpop.f32.mrb[0].mxu0
        %4099 = vmatprep.mubr.f32.mxu0 0.0
        %4100 = vmatmul.mubr.f32.gmra.mrb[0].mxu0 %v3875
        %v4101 = vpop.f32.mrb[0].mxu0
        %v4102 = vadd.f32 %v3778, %v4101
        %v4103 = vpop.f32.mrb[0].mxu0
        %4104 = vdwg.mxu0
        %s4105 = scalar_lea.vmem [#allocation2], 48
        %v4106 = vld [vmem:[%s4105] sm:$0xff]
        %v4107 = vld [vmem:[%s4105 + $0x8] sm:$0xff]
        %v4108 = vld [vmem:[%s4105 + $0x18] sm:$0xff]
        %v4109 = vld [vmem:[%s4105 + $0x20] sm:$0xff]
        %v4110 = vld [vmem:[%s4105 + $0x30] sm:$0xff]
        %v4111 = vld [vmem:[%s4105 + $0x38] sm:$0xff]
        %v4112 = vld [vmem:[%s4105 + $0x48] sm:$0xff]
        %v4113 = vld [vmem:[%s4105 + $0x50] sm:$0xff]
        %v4114 = vld [vmem:[%s4105 + $0x60] sm:$0xff]
        %v4115 = vld [vmem:[%s4105 + $0x68] sm:$0xff]
        %v4116 = vld [vmem:[%s4105 + $0x78] sm:$0xff]
        %v4117 = vld [vmem:[%s4105 + $0x80] sm:$0xff]
        %v4118 = vld [vmem:[%s4105 + $0x90] sm:$0xff]
        %v4119 = vld [vmem:[%s4105 + $0x98] sm:$0xff]
        %v4120 = vld [vmem:[%s4105 + $0xa8] sm:$0xff]
        %v4121 = vld [vmem:[%s4105 + $0xb0] sm:$0xff]
        %v4122 = vld [vmem:[%s4105 + $0xc0] sm:$0xff]
        %v4123 = vld [vmem:[%s4105 + $0xc8] sm:$0xff]
        %v4124 = vld [vmem:[%s4105 + $0xd8] sm:$0xff]
        %v4125 = vld [vmem:[%s4105 + $0xe0] sm:$0xff]
        %v4126 = vld [vmem:[%s4105 + $0xf0] sm:$0xff]
        %v4127 = vld [vmem:[%s4105 + $0xf8] sm:$0xff]
        %v4128 = vld [vmem:[%s4105 + $0x108] sm:$0xff]
        %v4129 = vld [vmem:[%s4105 + $0x110] sm:$0xff]
        %v4130 = vld [vmem:[%s4105 + $0x120] sm:$0xff]
        %v4131 = vld [vmem:[%s4105 + $0x128] sm:$0xff]
        %v4132 = vld [vmem:[%s4105 + $0x138] sm:$0xff]
        %v4133 = vld [vmem:[%s4105 + $0x140] sm:$0xff]
        %v4134 = vld [vmem:[%s4105 + $0x150] sm:$0xff]
        %v4135 = vld [vmem:[%s4105 + $0x158] sm:$0xff]
        %v4136 = vld [vmem:[%s4105 + $0x168] sm:$0xff]
        %v4137 = vld [vmem:[%s4105 + $0x170] sm:$0xff]
        %s4138 = scalar_lea.vmem [#allocation8], 40
        %v4139 = vld [vmem:[%s4138] sm:$0xf]
        %v4141 = vsel %vm347, %v4106, 0
        %v4144 = vsel %vm347, %v4107, 0
        %v4147 = vsel %vm347, %v4108, 0
        %v4150 = vsel %vm347, %v4109, 0
        %v4153 = vsel %vm347, %v4110, 0
        %v4156 = vsel %vm347, %v4111, 0
        %v4159 = vsel %vm347, %v4112, 0
        %v4162 = vsel %vm347, %v4113, 0
        %v4165 = vsel %vm347, %v4114, 0
        %v4168 = vsel %vm347, %v4115, 0
        %v4171 = vsel %vm347, %v4116, 0
        %v4174 = vsel %vm347, %v4117, 0
        %v4177 = vsel %vm347, %v4118, 0
        %v4180 = vsel %vm347, %v4119, 0
        %v4183 = vsel %vm347, %v4120, 0
        %v4186 = vsel %vm347, %v4121, 0
        %v4189 = vsel %vm347, %v4122, 0
        %v4192 = vsel %vm347, %v4123, 0
        %v4195 = vsel %vm347, %v4124, 0
        %v4198 = vsel %vm347, %v4125, 0
        %v4201 = vsel %vm347, %v4126, 0
        %v4204 = vsel %vm347, %v4127, 0
        %v4207 = vsel %vm347, %v4128, 0
        %v4210 = vsel %vm347, %v4129, 0
        %v4213 = vsel %vm347, %v4130, 0
        %v4216 = vsel %vm347, %v4131, 0
        %v4219 = vsel %vm347, %v4132, 0
        %v4222 = vsel %vm347, %v4133, 0
        %v4225 = vsel %vm347, %v4134, 0
        %v4228 = vsel %vm347, %v4135, 0
        %v4231 = vsel %vm347, %v4136, 0
        %v4234 = vsel %vm347, %v4137, 0
        %v4237 = vsel %vm585, %v4139, 0
        %4239 = vmatprep.subr.mxu0 0.0
        %4240 = vmatpush1.msra.mxu0 %v4237
        %4241 = vmatprep.subr.mxu0 0.0
        %4242 = vmatpush1.msra.mxu0 0.0
        %4243 = vmatprep.subr.mxu0 0.0
        %4244 = vmatpush1.msra.mxu0 0.0
        %4245 = vmatprep.subr.mxu0 0.0
        %4246 = vmatpush1.msra.mxu0 0.0
        %4247 = vmatprep.subr.mxu0 0.0
        %4248 = vmatpush1.msra.mxu0 0.0
        %4249 = vmatprep.subr.mxu0 0.0
        %4250 = vmatpush1.msra.mxu0 0.0
        %4251 = vmatprep.subr.mxu0 0.0
        %4252 = vmatpush1.msra.mxu0 0.0
        %4253 = vmatprep.subr.mxu0 0.0
        %4254 = vmatpush1.msra.mxu0 0.0
        %4255 = vmatprep.subr.mxu0 0.0
        %4256 = vmatpush1.msra.mxu0 0.0
        %4257 = vmatprep.subr.mxu0 0.0
        %4258 = vmatpush1.msra.mxu0 0.0
        %4259 = vmatprep.subr.mxu0 0.0
        %4260 = vmatpush1.msra.mxu0 0.0
        %4261 = vmatprep.subr.mxu0 0.0
        %4262 = vmatpush1.msra.mxu0 0.0
        %4263 = vmatprep.subr.mxu0 0.0
        %4264 = vmatpush1.msra.mxu0 0.0
        %4265 = vmatprep.subr.mxu0 0.0
        %4266 = vmatpush1.msra.mxu0 0.0
        %4267 = vmatprep.subr.mxu0 0.0
        %4268 = vmatpush1.msra.mxu0 0.0
        %4269 = vmatprep.subr.mxu0 0.0
        %4270 = vmatpush1.msra.mxu0 0.0
        %4271 = vmatprep.subr.mxu0 0.0
        %4272 = vmatpush1.msra.mxu0 0.0
        %4273 = vmatprep.subr.mxu0 0.0
        %4274 = vmatpush1.msra.mxu0 0.0
        %4275 = vmatprep.subr.mxu0 0.0
        %4276 = vmatpush1.msra.mxu0 0.0
        %4277 = vmatprep.subr.mxu0 0.0
        %4278 = vmatpush1.msra.mxu0 0.0
        %4279 = vmatprep.subr.mxu0 0.0
        %4280 = vmatpush1.msra.mxu0 0.0
        %4281 = vmatprep.subr.mxu0 0.0
        %4282 = vmatpush1.msra.mxu0 0.0
        %4283 = vmatprep.subr.mxu0 0.0
        %4284 = vmatpush1.msra.mxu0 0.0
        %4285 = vmatprep.subr.mxu0 0.0
        %4286 = vmatpush1.msra.mxu0 0.0
        %4287 = vmatprep.subr.mxu0 0.0
        %4288 = vmatpush1.msra.mxu0 0.0
        %4289 = vmatprep.subr.mxu0 0.0
        %4290 = vmatpush1.msra.mxu0 0.0
        %4291 = vmatprep.subr.mxu0 0.0
        %4292 = vmatpush1.msra.mxu0 0.0
        %4293 = vmatprep.subr.mxu0 0.0
        %4294 = vmatpush1.msra.mxu0 0.0
        %4295 = vmatprep.subr.mxu0 0.0
        %4296 = vmatpush1.msra.mxu0 0.0
        %4297 = vmatprep.subr.mxu0 0.0
        %4298 = vmatpush1.msra.mxu0 0.0
        %4299 = vmatprep.subr.mxu0 0.0
        %4300 = vmatpush1.msra.mxu0 0.0
        %4301 = vmatprep.subr.mxu0 0.0
        %4302 = vmatpush1.msra.mxu0 0.0
        %4303 = vmatprep.mubr.f32.mxu0 0.0
        %4304 = vmatmul.mubr.f32.gmra.mrb[0].mxu0 %v4141
        %v4305 = vpop.f32.mrb[0].mxu0
        %v4306 = vadd.f32 0.0, %v4305
        %v4307 = vpop.f32.mrb[0].mxu0
        %4308 = vmatprep.mubr.f32.mxu0 0.0
        %4309 = vmatmul.mubr.f32.gmra.mrb[0].mxu0 %v4144
        %v4310 = vpop.f32.mrb[0].mxu0
        %v4311 = vadd.f32 0.0, %v4310
        %v4312 = vpop.f32.mrb[0].mxu0
        %4313 = vmatprep.mubr.f32.mxu0 0.0
        %4314 = vmatmul.mubr.f32.gmra.mrb[0].mxu0 %v4147
        %v4315 = vpop.f32.mrb[0].mxu0
        %v4316 = vadd.f32 0.0, %v4315
        %v4317 = vpop.f32.mrb[0].mxu0
        %4318 = vmatprep.mubr.f32.mxu0 0.0
        %4319 = vmatmul.mubr.f32.gmra.mrb[0].mxu0 %v4150
        %v4320 = vpop.f32.mrb[0].mxu0
        %v4321 = vadd.f32 0.0, %v4320
        %v4322 = vpop.f32.mrb[0].mxu0
        %4323 = vmatprep.mubr.f32.mxu0 0.0
        %4324 = vmatmul.mubr.f32.gmra.mrb[0].mxu0 %v4153
        %v4325 = vpop.f32.mrb[0].mxu0
        %v4326 = vadd.f32 0.0, %v4325
        %v4327 = vpop.f32.mrb[0].mxu0
        %4328 = vmatprep.mubr.f32.mxu0 0.0
        %4329 = vmatmul.mubr.f32.gmra.mrb[0].mxu0 %v4156
        %v4330 = vpop.f32.mrb[0].mxu0
        %v4331 = vadd.f32 0.0, %v4330
        %v4332 = vpop.f32.mrb[0].mxu0
        %4333 = vmatprep.mubr.f32.mxu0 0.0
        %4334 = vmatmul.mubr.f32.gmra.mrb[0].mxu0 %v4159
        %v4335 = vpop.f32.mrb[0].mxu0
        %v4336 = vadd.f32 0.0, %v4335
        %v4337 = vpop.f32.mrb[0].mxu0
        %4338 = vmatprep.mubr.f32.mxu0 0.0
        %4339 = vmatmul.mubr.f32.gmra.mrb[0].mxu0 %v4162
        %v4340 = vpop.f32.mrb[0].mxu0
        %v4341 = vadd.f32 0.0, %v4340
        %v4342 = vpop.f32.mrb[0].mxu0
        %4343 = vmatprep.mubr.f32.mxu0 0.0
        %4344 = vmatmul.mubr.f32.gmra.mrb[0].mxu0 %v4165
        %v4345 = vpop.f32.mrb[0].mxu0
        %v4346 = vadd.f32 0.0, %v4345
        %v4347 = vpop.f32.mrb[0].mxu0
        %4348 = vmatprep.mubr.f32.mxu0 0.0
        %4349 = vmatmul.mubr.f32.gmra.mrb[0].mxu0 %v4168
        %v4350 = vpop.f32.mrb[0].mxu0
        %v4351 = vadd.f32 0.0, %v4350
        %v4352 = vpop.f32.mrb[0].mxu0
        %4353 = vmatprep.mubr.f32.mxu0 0.0
        %4354 = vmatmul.mubr.f32.gmra.mrb[0].mxu0 %v4171
        %v4355 = vpop.f32.mrb[0].mxu0
        %v4356 = vadd.f32 0.0, %v4355
        %v4357 = vpop.f32.mrb[0].mxu0
        %4358 = vmatprep.mubr.f32.mxu0 0.0
        %4359 = vmatmul.mubr.f32.gmra.mrb[0].mxu0 %v4174
        %v4360 = vpop.f32.mrb[0].mxu0
        %v4361 = vadd.f32 0.0, %v4360
        %v4362 = vpop.f32.mrb[0].mxu0
        %4363 = vmatprep.mubr.f32.mxu0 0.0
        %4364 = vmatmul.mubr.f32.gmra.mrb[0].mxu0 %v4177
        %v4365 = vpop.f32.mrb[0].mxu0
        %v4366 = vadd.f32 0.0, %v4365
        %v4367 = vpop.f32.mrb[0].mxu0
        %4368 = vmatprep.mubr.f32.mxu0 0.0
        %4369 = vmatmul.mubr.f32.gmra.mrb[0].mxu0 %v4180
        %v4370 = vpop.f32.mrb[0].mxu0
        %v4371 = vadd.f32 0.0, %v4370
        %v4372 = vpop.f32.mrb[0].mxu0
        %4373 = vmatprep.mubr.f32.mxu0 0.0
        %4374 = vmatmul.mubr.f32.gmra.mrb[0].mxu0 %v4183
        %v4375 = vpop.f32.mrb[0].mxu0
        %v4376 = vadd.f32 0.0, %v4375
        %v4377 = vpop.f32.mrb[0].mxu0
        %4378 = vmatprep.mubr.f32.mxu0 0.0
        %4379 = vmatmul.mubr.f32.gmra.mrb[0].mxu0 %v4186
        %v4380 = vpop.f32.mrb[0].mxu0
        %v4381 = vadd.f32 0.0, %v4380
        %v4382 = vpop.f32.mrb[0].mxu0
        %4383 = vmatprep.mubr.f32.mxu0 0.0
        %4384 = vmatmul.mubr.f32.gmra.mrb[0].mxu0 %v4189
        %v4385 = vpop.f32.mrb[0].mxu0
        %v4386 = vadd.f32 0.0, %v4385
        %v4387 = vpop.f32.mrb[0].mxu0
        %4388 = vmatprep.mubr.f32.mxu0 0.0
        %4389 = vmatmul.mubr.f32.gmra.mrb[0].mxu0 %v4192
        %v4390 = vpop.f32.mrb[0].mxu0
        %v4391 = vadd.f32 0.0, %v4390
        %v4392 = vpop.f32.mrb[0].mxu0
        %4393 = vmatprep.mubr.f32.mxu0 0.0
        %4394 = vmatmul.mubr.f32.gmra.mrb[0].mxu0 %v4195
        %v4395 = vpop.f32.mrb[0].mxu0
        %v4396 = vadd.f32 0.0, %v4395
        %v4397 = vpop.f32.mrb[0].mxu0
        %4398 = vmatprep.mubr.f32.mxu0 0.0
        %4399 = vmatmul.mubr.f32.gmra.mrb[0].mxu0 %v4198
        %v4400 = vpop.f32.mrb[0].mxu0
        %v4401 = vadd.f32 0.0, %v4400
        %v4402 = vpop.f32.mrb[0].mxu0
        %4403 = vmatprep.mubr.f32.mxu0 0.0
        %4404 = vmatmul.mubr.f32.gmra.mrb[0].mxu0 %v4201
        %v4405 = vpop.f32.mrb[0].mxu0
        %v4406 = vadd.f32 0.0, %v4405
        %v4407 = vpop.f32.mrb[0].mxu0
        %4408 = vmatprep.mubr.f32.mxu0 0.0
        %4409 = vmatmul.mubr.f32.gmra.mrb[0].mxu0 %v4204
        %v4410 = vpop.f32.mrb[0].mxu0
        %v4411 = vadd.f32 0.0, %v4410
        %v4412 = vpop.f32.mrb[0].mxu0
        %4413 = vmatprep.mubr.f32.mxu0 0.0
        %4414 = vmatmul.mubr.f32.gmra.mrb[0].mxu0 %v4207
        %v4415 = vpop.f32.mrb[0].mxu0
        %v4416 = vadd.f32 0.0, %v4415
        %v4417 = vpop.f32.mrb[0].mxu0
        %4418 = vmatprep.mubr.f32.mxu0 0.0
        %4419 = vmatmul.mubr.f32.gmra.mrb[0].mxu0 %v4210
        %v4420 = vpop.f32.mrb[0].mxu0
        %v4421 = vadd.f32 0.0, %v4420
        %v4422 = vpop.f32.mrb[0].mxu0
        %4423 = vmatprep.mubr.f32.mxu0 0.0
        %4424 = vmatmul.mubr.f32.gmra.mrb[0].mxu0 %v4213
        %v4425 = vpop.f32.mrb[0].mxu0
        %v4426 = vadd.f32 0.0, %v4425
        %v4427 = vpop.f32.mrb[0].mxu0
        %4428 = vmatprep.mubr.f32.mxu0 0.0
        %4429 = vmatmul.mubr.f32.gmra.mrb[0].mxu0 %v4216
        %v4430 = vpop.f32.mrb[0].mxu0
        %v4431 = vadd.f32 0.0, %v4430
        %v4432 = vpop.f32.mrb[0].mxu0
        %4433 = vmatprep.mubr.f32.mxu0 0.0
        %4434 = vmatmul.mubr.f32.gmra.mrb[0].mxu0 %v4219
        %v4435 = vpop.f32.mrb[0].mxu0
        %v4436 = vadd.f32 0.0, %v4435
        %v4437 = vpop.f32.mrb[0].mxu0
        %4438 = vmatprep.mubr.f32.mxu0 0.0
        %4439 = vmatmul.mubr.f32.gmra.mrb[0].mxu0 %v4222
        %v4440 = vpop.f32.mrb[0].mxu0
        %v4441 = vadd.f32 0.0, %v4440
        %v4442 = vpop.f32.mrb[0].mxu0
        %4443 = vmatprep.mubr.f32.mxu0 0.0
        %4444 = vmatmul.mubr.f32.gmra.mrb[0].mxu0 %v4225
        %v4445 = vpop.f32.mrb[0].mxu0
        %v4446 = vadd.f32 0.0, %v4445
        %v4447 = vpop.f32.mrb[0].mxu0
        %4448 = vmatprep.mubr.f32.mxu0 0.0
        %4449 = vmatmul.mubr.f32.gmra.mrb[0].mxu0 %v4228
        %v4450 = vpop.f32.mrb[0].mxu0
        %v4451 = vadd.f32 0.0, %v4450
        %v4452 = vpop.f32.mrb[0].mxu0
        %4453 = vmatprep.mubr.f32.mxu0 0.0
        %4454 = vmatmul.mubr.f32.gmra.mrb[0].mxu0 %v4231
        %v4455 = vpop.f32.mrb[0].mxu0
        %v4456 = vadd.f32 0.0, %v4455
        %v4457 = vpop.f32.mrb[0].mxu0
        %4458 = vmatprep.mubr.f32.mxu0 0.0
        %4459 = vmatmul.mubr.f32.gmra.mrb[0].mxu0 %v4234
        %v4460 = vpop.f32.mrb[0].mxu0
        %v4461 = vadd.f32 0.0, %v4460
        %v4462 = vpop.f32.mrb[0].mxu0
        %4463 = vdwg.mxu0
        %v4464 = vadd.f32 %v3947, %v4306
        %v4465 = vadd.f32 %v3952, %v4311
        %v4466 = vadd.f32 %v3957, %v4316
        %v4467 = vadd.f32 %v3962, %v4321
        %v4468 = vadd.f32 %v3967, %v4326
        %v4469 = vadd.f32 %v3972, %v4331
        %v4470 = vadd.f32 %v3977, %v4336
        %v4471 = vadd.f32 %v3982, %v4341
        %v4472 = vadd.f32 %v3987, %v4346
        %v4473 = vadd.f32 %v3992, %v4351
        %v4474 = vadd.f32 %v3997, %v4356
        %v4475 = vadd.f32 %v4002, %v4361
        %v4476 = vadd.f32 %v4007, %v4366
        %v4477 = vadd.f32 %v4012, %v4371
        %v4478 = vadd.f32 %v4017, %v4376
        %v4479 = vadd.f32 %v4022, %v4381
        %v4480 = vadd.f32 %v4027, %v4386
        %v4481 = vadd.f32 %v4032, %v4391
        %v4482 = vadd.f32 %v4037, %v4396
        %v4483 = vadd.f32 %v4042, %v4401
        %v4484 = vadd.f32 %v4047, %v4406
        %v4485 = vadd.f32 %v4052, %v4411
        %v4486 = vadd.f32 %v4057, %v4416
        %v4487 = vadd.f32 %v4062, %v4421
        %v4488 = vadd.f32 %v4067, %v4426
        %v4489 = vadd.f32 %v4072, %v4431
        %v4490 = vadd.f32 %v4077, %v4436
        %v4491 = vadd.f32 %v4082, %v4441
        %v4492 = vadd.f32 %v4087, %v4446
        %v4493 = vadd.f32 %v4092, %v4451
        %v4494 = vadd.f32 %v4097, %v4456
        %v4495 = vadd.f32 %v4102, %v4461
        %v4496 = vld [vmem:[%s4105 + $0x1] sm:$0xff]
        %v4497 = vld [vmem:[%s4105 + $0x9] sm:$0xff]
        %v4498 = vld [vmem:[%s4105 + $0x19] sm:$0xff]
        %v4499 = vld [vmem:[%s4105 + $0x21] sm:$0xff]
        %v4500 = vld [vmem:[%s4105 + $0x31] sm:$0xff]
        %v4501 = vld [vmem:[%s4105 + $0x39] sm:$0xff]
        %v4502 = vld [vmem:[%s4105 + $0x49] sm:$0xff]
        %v4503 = vld [vmem:[%s4105 + $0x51] sm:$0xff]
        %v4504 = vld [vmem:[%s4105 + $0x61] sm:$0xff]
        %v4505 = vld [vmem:[%s4105 + $0x69] sm:$0xff]
        %v4506 = vld [vmem:[%s4105 + $0x79] sm:$0xff]
        %v4507 = vld [vmem:[%s4105 + $0x81] sm:$0xff]
        %v4508 = vld [vmem:[%s4105 + $0x91] sm:$0xff]
        %v4509 = vld [vmem:[%s4105 + $0x99] sm:$0xff]
        %v4510 = vld [vmem:[%s4105 + $0xa9] sm:$0xff]
        %v4511 = vld [vmem:[%s4105 + $0xb1] sm:$0xff]
        %v4512 = vld [vmem:[%s4105 + $0xc1] sm:$0xff]
        %v4513 = vld [vmem:[%s4105 + $0xc9] sm:$0xff]
        %v4514 = vld [vmem:[%s4105 + $0xd9] sm:$0xff]
        %v4515 = vld [vmem:[%s4105 + $0xe1] sm:$0xff]
        %v4516 = vld [vmem:[%s4105 + $0xf1] sm:$0xff]
        %v4517 = vld [vmem:[%s4105 + $0xf9] sm:$0xff]
        %v4518 = vld [vmem:[%s4105 + $0x109] sm:$0xff]
        %v4519 = vld [vmem:[%s4105 + $0x111] sm:$0xff]
        %v4520 = vld [vmem:[%s4105 + $0x121] sm:$0xff]
        %v4521 = vld [vmem:[%s4105 + $0x129] sm:$0xff]
        %v4522 = vld [vmem:[%s4105 + $0x139] sm:$0xff]
        %v4523 = vld [vmem:[%s4105 + $0x141] sm:$0xff]
        %v4524 = vld [vmem:[%s4105 + $0x151] sm:$0xff]
        %v4525 = vld [vmem:[%s4105 + $0x159] sm:$0xff]
        %v4526 = vld [vmem:[%s4105 + $0x169] sm:$0xff]
        %v4527 = vld [vmem:[%s4105 + $0x171] sm:$0xff]
        %s4528 = scalar_lea.vmem [#allocation8], 44
        %v4529 = vld [vmem:[%s4528] sm:$0xf]
        %v4531 = vsel %vm347, %v4496, 0
        %v4534 = vsel %vm347, %v4497, 0
        %v4537 = vsel %vm347, %v4498, 0
        %v4540 = vsel %vm347, %v4499, 0
        %v4543 = vsel %vm347, %v4500, 0
        %v4546 = vsel %vm347, %v4501, 0
        %v4549 = vsel %vm347, %v4502, 0
        %v4552 = vsel %vm347, %v4503, 0
        %v4555 = vsel %vm347, %v4504, 0
        %v4558 = vsel %vm347, %v4505, 0
        %v4561 = vsel %vm347, %v4506, 0
        %v4564 = vsel %vm347, %v4507, 0
        %v4567 = vsel %vm347, %v4508, 0
        %v4570 = vsel %vm347, %v4509, 0
        %v4573 = vsel %vm347, %v4510, 0
        %v4576 = vsel %vm347, %v4511, 0
        %v4579 = vsel %vm347, %v4512, 0
        %v4582 = vsel %vm347, %v4513, 0
        %v4585 = vsel %vm347, %v4514, 0
        %v4588 = vsel %vm347, %v4515, 0
        %v4591 = vsel %vm347, %v4516, 0
        %v4594 = vsel %vm347, %v4517, 0
        %v4597 = vsel %vm347, %v4518, 0
        %v4600 = vsel %vm347, %v4519, 0
        %v4603 = vsel %vm347, %v4520, 0
        %v4606 = vsel %vm347, %v4521, 0
        %v4609 = vsel %vm347, %v4522, 0
        %v4612 = vsel %vm347, %v4523, 0
        %v4615 = vsel %vm347, %v4524, 0
        %v4618 = vsel %vm347, %v4525, 0
        %v4621 = vsel %vm347, %v4526, 0
        %v4624 = vsel %vm347, %v4527, 0
        %v4627 = vsel %vm585, %v4529, 0
        %4629 = vmatprep.subr.mxu0 0.0
        %4630 = vmatpush1.msra.mxu0 %v4627
        %4631 = vmatprep.subr.mxu0 0.0
        %4632 = vmatpush1.msra.mxu0 0.0
        %4633 = vmatprep.subr.mxu0 0.0
        %4634 = vmatpush1.msra.mxu0 0.0
        %4635 = vmatprep.subr.mxu0 0.0
        %4636 = vmatpush1.msra.mxu0 0.0
        %4637 = vmatprep.subr.mxu0 0.0
        %4638 = vmatpush1.msra.mxu0 0.0
        %4639 = vmatprep.subr.mxu0 0.0
        %4640 = vmatpush1.msra.mxu0 0.0
        %4641 = vmatprep.subr.mxu0 0.0
        %4642 = vmatpush1.msra.mxu0 0.0
        %4643 = vmatprep.subr.mxu0 0.0
        %4644 = vmatpush1.msra.mxu0 0.0
        %4645 = vmatprep.subr.mxu0 0.0
        %4646 = vmatpush1.msra.mxu0 0.0
        %4647 = vmatprep.subr.mxu0 0.0
        %4648 = vmatpush1.msra.mxu0 0.0
        %4649 = vmatprep.subr.mxu0 0.0
        %4650 = vmatpush1.msra.mxu0 0.0
        %4651 = vmatprep.subr.mxu0 0.0
        %4652 = vmatpush1.msra.mxu0 0.0
        %4653 = vmatprep.subr.mxu0 0.0
        %4654 = vmatpush1.msra.mxu0 0.0
        %4655 = vmatprep.subr.mxu0 0.0
        %4656 = vmatpush1.msra.mxu0 0.0
        %4657 = vmatprep.subr.mxu0 0.0
        %4658 = vmatpush1.msra.mxu0 0.0
        %4659 = vmatprep.subr.mxu0 0.0
        %4660 = vmatpush1.msra.mxu0 0.0
        %4661 = vmatprep.subr.mxu0 0.0
        %4662 = vmatpush1.msra.mxu0 0.0
        %4663 = vmatprep.subr.mxu0 0.0
        %4664 = vmatpush1.msra.mxu0 0.0
        %4665 = vmatprep.subr.mxu0 0.0
        %4666 = vmatpush1.msra.mxu0 0.0
        %4667 = vmatprep.subr.mxu0 0.0
        %4668 = vmatpush1.msra.mxu0 0.0
        %4669 = vmatprep.subr.mxu0 0.0
        %4670 = vmatpush1.msra.mxu0 0.0
        %4671 = vmatprep.subr.mxu0 0.0
        %4672 = vmatpush1.msra.mxu0 0.0
        %4673 = vmatprep.subr.mxu0 0.0
        %4674 = vmatpush1.msra.mxu0 0.0
        %4675 = vmatprep.subr.mxu0 0.0
        %4676 = vmatpush1.msra.mxu0 0.0
        %4677 = vmatprep.subr.mxu0 0.0
        %4678 = vmatpush1.msra.mxu0 0.0
        %4679 = vmatprep.subr.mxu0 0.0
        %4680 = vmatpush1.msra.mxu0 0.0
        %4681 = vmatprep.subr.mxu0 0.0
        %4682 = vmatpush1.msra.mxu0 0.0
        %4683 = vmatprep.subr.mxu0 0.0
        %4684 = vmatpush1.msra.mxu0 0.0
        %4685 = vmatprep.subr.mxu0 0.0
        %4686 = vmatpush1.msra.mxu0 0.0
        %4687 = vmatprep.subr.mxu0 0.0
        %4688 = vmatpush1.msra.mxu0 0.0
        %4689 = vmatprep.subr.mxu0 0.0
        %4690 = vmatpush1.msra.mxu0 0.0
        %4691 = vmatprep.subr.mxu0 0.0
        %4692 = vmatpush1.msra.mxu0 0.0
        %4693 = vmatprep.mubr.f32.mxu0 0.0
        %4694 = vmatmul.mubr.f32.gmra.mrb[0].mxu0 %v4531
        %v4695 = vpop.f32.mrb[0].mxu0
        %v4696 = vadd.f32 0.0, %v4695
        %v4697 = vpop.f32.mrb[0].mxu0
        %4698 = vmatprep.mubr.f32.mxu0 0.0
        %4699 = vmatmul.mubr.f32.gmra.mrb[0].mxu0 %v4534
        %v4700 = vpop.f32.mrb[0].mxu0
        %v4701 = vadd.f32 0.0, %v4700
        %v4702 = vpop.f32.mrb[0].mxu0
        %4703 = vmatprep.mubr.f32.mxu0 0.0
        %4704 = vmatmul.mubr.f32.gmra.mrb[0].mxu0 %v4537
        %v4705 = vpop.f32.mrb[0].mxu0
        %v4706 = vadd.f32 0.0, %v4705
        %v4707 = vpop.f32.mrb[0].mxu0
        %4708 = vmatprep.mubr.f32.mxu0 0.0
        %4709 = vmatmul.mubr.f32.gmra.mrb[0].mxu0 %v4540
        %v4710 = vpop.f32.mrb[0].mxu0
        %v4711 = vadd.f32 0.0, %v4710
        %v4712 = vpop.f32.mrb[0].mxu0
        %4713 = vmatprep.mubr.f32.mxu0 0.0
        %4714 = vmatmul.mubr.f32.gmra.mrb[0].mxu0 %v4543
        %v4715 = vpop.f32.mrb[0].mxu0
        %v4716 = vadd.f32 0.0, %v4715
        %v4717 = vpop.f32.mrb[0].mxu0
        %4718 = vmatprep.mubr.f32.mxu0 0.0
        %4719 = vmatmul.mubr.f32.gmra.mrb[0].mxu0 %v4546
        %v4720 = vpop.f32.mrb[0].mxu0
        %v4721 = vadd.f32 0.0, %v4720
        %v4722 = vpop.f32.mrb[0].mxu0
        %4723 = vmatprep.mubr.f32.mxu0 0.0
        %4724 = vmatmul.mubr.f32.gmra.mrb[0].mxu0 %v4549
        %v4725 = vpop.f32.mrb[0].mxu0
        %v4726 = vadd.f32 0.0, %v4725
        %v4727 = vpop.f32.mrb[0].mxu0
        %4728 = vmatprep.mubr.f32.mxu0 0.0
        %4729 = vmatmul.mubr.f32.gmra.mrb[0].mxu0 %v4552
        %v4730 = vpop.f32.mrb[0].mxu0
        %v4731 = vadd.f32 0.0, %v4730
        %v4732 = vpop.f32.mrb[0].mxu0
        %4733 = vmatprep.mubr.f32.mxu0 0.0
        %4734 = vmatmul.mubr.f32.gmra.mrb[0].mxu0 %v4555
        %v4735 = vpop.f32.mrb[0].mxu0
        %v4736 = vadd.f32 0.0, %v4735
        %v4737 = vpop.f32.mrb[0].mxu0
        %4738 = vmatprep.mubr.f32.mxu0 0.0
        %4739 = vmatmul.mubr.f32.gmra.mrb[0].mxu0 %v4558
        %v4740 = vpop.f32.mrb[0].mxu0
        %v4741 = vadd.f32 0.0, %v4740
        %v4742 = vpop.f32.mrb[0].mxu0
        %4743 = vmatprep.mubr.f32.mxu0 0.0
        %4744 = vmatmul.mubr.f32.gmra.mrb[0].mxu0 %v4561
        %v4745 = vpop.f32.mrb[0].mxu0
        %v4746 = vadd.f32 0.0, %v4745
        %v4747 = vpop.f32.mrb[0].mxu0
        %4748 = vmatprep.mubr.f32.mxu0 0.0
        %4749 = vmatmul.mubr.f32.gmra.mrb[0].mxu0 %v4564
        %v4750 = vpop.f32.mrb[0].mxu0
        %v4751 = vadd.f32 0.0, %v4750
        %v4752 = vpop.f32.mrb[0].mxu0
        %4753 = vmatprep.mubr.f32.mxu0 0.0
        %4754 = vmatmul.mubr.f32.gmra.mrb[0].mxu0 %v4567
        %v4755 = vpop.f32.mrb[0].mxu0
        %v4756 = vadd.f32 0.0, %v4755
        %v4757 = vpop.f32.mrb[0].mxu0
        %4758 = vmatprep.mubr.f32.mxu0 0.0
        %4759 = vmatmul.mubr.f32.gmra.mrb[0].mxu0 %v4570
        %v4760 = vpop.f32.mrb[0].mxu0
        %v4761 = vadd.f32 0.0, %v4760
        %v4762 = vpop.f32.mrb[0].mxu0
        %4763 = vmatprep.mubr.f32.mxu0 0.0
        %4764 = vmatmul.mubr.f32.gmra.mrb[0].mxu0 %v4573
        %v4765 = vpop.f32.mrb[0].mxu0
        %v4766 = vadd.f32 0.0, %v4765
        %v4767 = vpop.f32.mrb[0].mxu0
        %4768 = vmatprep.mubr.f32.mxu0 0.0
        %4769 = vmatmul.mubr.f32.gmra.mrb[0].mxu0 %v4576
        %v4770 = vpop.f32.mrb[0].mxu0
        %v4771 = vadd.f32 0.0, %v4770
        %v4772 = vpop.f32.mrb[0].mxu0
        %4773 = vmatprep.mubr.f32.mxu0 0.0
        %4774 = vmatmul.mubr.f32.gmra.mrb[0].mxu0 %v4579
        %v4775 = vpop.f32.mrb[0].mxu0
        %v4776 = vadd.f32 0.0, %v4775
        %v4777 = vpop.f32.mrb[0].mxu0
        %4778 = vmatprep.mubr.f32.mxu0 0.0
        %4779 = vmatmul.mubr.f32.gmra.mrb[0].mxu0 %v4582
        %v4780 = vpop.f32.mrb[0].mxu0
        %v4781 = vadd.f32 0.0, %v4780
        %v4782 = vpop.f32.mrb[0].mxu0
        %4783 = vmatprep.mubr.f32.mxu0 0.0
        %4784 = vmatmul.mubr.f32.gmra.mrb[0].mxu0 %v4585
        %v4785 = vpop.f32.mrb[0].mxu0
        %v4786 = vadd.f32 0.0, %v4785
        %v4787 = vpop.f32.mrb[0].mxu0
        %4788 = vmatprep.mubr.f32.mxu0 0.0
        %4789 = vmatmul.mubr.f32.gmra.mrb[0].mxu0 %v4588
        %v4790 = vpop.f32.mrb[0].mxu0
        %v4791 = vadd.f32 0.0, %v4790
        %v4792 = vpop.f32.mrb[0].mxu0
        %4793 = vmatprep.mubr.f32.mxu0 0.0
        %4794 = vmatmul.mubr.f32.gmra.mrb[0].mxu0 %v4591
        %v4795 = vpop.f32.mrb[0].mxu0
        %v4796 = vadd.f32 0.0, %v4795
        %v4797 = vpop.f32.mrb[0].mxu0
        %4798 = vmatprep.mubr.f32.mxu0 0.0
        %4799 = vmatmul.mubr.f32.gmra.mrb[0].mxu0 %v4594
        %v4800 = vpop.f32.mrb[0].mxu0
        %v4801 = vadd.f32 0.0, %v4800
        %v4802 = vpop.f32.mrb[0].mxu0
        %4803 = vmatprep.mubr.f32.mxu0 0.0
        %4804 = vmatmul.mubr.f32.gmra.mrb[0].mxu0 %v4597
        %v4805 = vpop.f32.mrb[0].mxu0
        %v4806 = vadd.f32 0.0, %v4805
        %v4807 = vpop.f32.mrb[0].mxu0
        %4808 = vmatprep.mubr.f32.mxu0 0.0
        %4809 = vmatmul.mubr.f32.gmra.mrb[0].mxu0 %v4600
        %v4810 = vpop.f32.mrb[0].mxu0
        %v4811 = vadd.f32 0.0, %v4810
        %v4812 = vpop.f32.mrb[0].mxu0
        %4813 = vmatprep.mubr.f32.mxu0 0.0
        %4814 = vmatmul.mubr.f32.gmra.mrb[0].mxu0 %v4603
        %v4815 = vpop.f32.mrb[0].mxu0
        %v4816 = vadd.f32 0.0, %v4815
        %v4817 = vpop.f32.mrb[0].mxu0
        %4818 = vmatprep.mubr.f32.mxu0 0.0
        %4819 = vmatmul.mubr.f32.gmra.mrb[0].mxu0 %v4606
        %v4820 = vpop.f32.mrb[0].mxu0
        %v4821 = vadd.f32 0.0, %v4820
        %v4822 = vpop.f32.mrb[0].mxu0
        %4823 = vmatprep.mubr.f32.mxu0 0.0
        %4824 = vmatmul.mubr.f32.gmra.mrb[0].mxu0 %v4609
        %v4825 = vpop.f32.mrb[0].mxu0
        %v4826 = vadd.f32 0.0, %v4825
        %v4827 = vpop.f32.mrb[0].mxu0
        %4828 = vmatprep.mubr.f32.mxu0 0.0
        %4829 = vmatmul.mubr.f32.gmra.mrb[0].mxu0 %v4612
        %v4830 = vpop.f32.mrb[0].mxu0
        %v4831 = vadd.f32 0.0, %v4830
        %v4832 = vpop.f32.mrb[0].mxu0
        %4833 = vmatprep.mubr.f32.mxu0 0.0
        %4834 = vmatmul.mubr.f32.gmra.mrb[0].mxu0 %v4615
        %v4835 = vpop.f32.mrb[0].mxu0
        %v4836 = vadd.f32 0.0, %v4835
        %v4837 = vpop.f32.mrb[0].mxu0
        %4838 = vmatprep.mubr.f32.mxu0 0.0
        %4839 = vmatmul.mubr.f32.gmra.mrb[0].mxu0 %v4618
        %v4840 = vpop.f32.mrb[0].mxu0
        %v4841 = vadd.f32 0.0, %v4840
        %v4842 = vpop.f32.mrb[0].mxu0
        %4843 = vmatprep.mubr.f32.mxu0 0.0
        %4844 = vmatmul.mubr.f32.gmra.mrb[0].mxu0 %v4621
        %v4845 = vpop.f32.mrb[0].mxu0
        %v4846 = vadd.f32 0.0, %v4845
        %v4847 = vpop.f32.mrb[0].mxu0
        %4848 = vmatprep.mubr.f32.mxu0 0.0
        %4849 = vmatmul.mubr.f32.gmra.mrb[0].mxu0 %v4624
        %v4850 = vpop.f32.mrb[0].mxu0
        %v4851 = vadd.f32 0.0, %v4850
        %v4852 = vpop.f32.mrb[0].mxu0
        %4853 = vdwg.mxu0
        %v4854 = vadd.f32 %v4464, %v4696
        %v4855 = vadd.f32 %v4465, %v4701
        %v4856 = vadd.f32 %v4466, %v4706
        %v4857 = vadd.f32 %v4467, %v4711
        %v4858 = vadd.f32 %v4468, %v4716
        %v4859 = vadd.f32 %v4469, %v4721
        %v4860 = vadd.f32 %v4470, %v4726
        %v4861 = vadd.f32 %v4471, %v4731
        %v4862 = vadd.f32 %v4472, %v4736
        %v4863 = vadd.f32 %v4473, %v4741
        %v4864 = vadd.f32 %v4474, %v4746
        %v4865 = vadd.f32 %v4475, %v4751
        %v4866 = vadd.f32 %v4476, %v4756
        %v4867 = vadd.f32 %v4477, %v4761
        %v4868 = vadd.f32 %v4478, %v4766
        %v4869 = vadd.f32 %v4479, %v4771
        %v4870 = vadd.f32 %v4480, %v4776
        %v4871 = vadd.f32 %v4481, %v4781
        %v4872 = vadd.f32 %v4482, %v4786
        %v4873 = vadd.f32 %v4483, %v4791
        %v4874 = vadd.f32 %v4484, %v4796
        %v4875 = vadd.f32 %v4485, %v4801
        %v4876 = vadd.f32 %v4486, %v4806
        %v4877 = vadd.f32 %v4487, %v4811
        %v4878 = vadd.f32 %v4488, %v4816
        %v4879 = vadd.f32 %v4489, %v4821
        %v4880 = vadd.f32 %v4490, %v4826
        %v4881 = vadd.f32 %v4491, %v4831
        %v4882 = vadd.f32 %v4492, %v4836
        %v4883 = vadd.f32 %v4493, %v4841
        %v4884 = vadd.f32 %v4494, %v4846
        %v4885 = vadd.f32 %v4495, %v4851
        %s4886 = scalar_lea.vmem [#allocation8], 48
        %v4887 = vld [vmem:[%s4886] sm:$0xf]
        %v4888 = vld [vmem:[%s388 + $0x2] sm:$0xff]
        %v4889 = vld [vmem:[%s388 + $0xa] sm:$0xff]
        %v4890 = vld [vmem:[%s388 + $0x1a] sm:$0xff]
        %v4891 = vld [vmem:[%s388 + $0x22] sm:$0xff]
        %v4892 = vld [vmem:[%s388 + $0x32] sm:$0xff]
        %v4893 = vld [vmem:[%s388 + $0x3a] sm:$0xff]
        %v4894 = vld [vmem:[%s388 + $0x4a] sm:$0xff]
        %v4895 = vld [vmem:[%s388 + $0x52] sm:$0xff]
        %v4896 = vld [vmem:[%s388 + $0x62] sm:$0xff]
        %v4897 = vld [vmem:[%s388 + $0x6a] sm:$0xff]
        %v4898 = vld [vmem:[%s388 + $0x7a] sm:$0xff]
        %v4899 = vld [vmem:[%s388 + $0x82] sm:$0xff]
        %v4900 = vld [vmem:[%s388 + $0x92] sm:$0xff]
        %v4901 = vld [vmem:[%s388 + $0x9a] sm:$0xff]
        %v4902 = vld [vmem:[%s388 + $0xaa] sm:$0xff]
        %v4903 = vld [vmem:[%s388 + $0xb2] sm:$0xff]
        %v4904 = vld [vmem:[%s388 + $0xc2] sm:$0xff]
        %v4905 = vld [vmem:[%s388 + $0xca] sm:$0xff]
        %v4906 = vld [vmem:[%s388 + $0xda] sm:$0xff]
        %v4907 = vld [vmem:[%s388 + $0xe2] sm:$0xff]
        %v4908 = vld [vmem:[%s388 + $0xf2] sm:$0xff]
        %v4909 = vld [vmem:[%s388 + $0xfa] sm:$0xff]
        %v4910 = vld [vmem:[%s388 + $0x10a] sm:$0xff]
        %v4911 = vld [vmem:[%s388 + $0x112] sm:$0xff]
        %v4912 = vld [vmem:[%s388 + $0x122] sm:$0xff]
        %v4913 = vld [vmem:[%s388 + $0x12a] sm:$0xff]
        %v4914 = vld [vmem:[%s388 + $0x13a] sm:$0xff]
        %v4915 = vld [vmem:[%s388 + $0x142] sm:$0xff]
        %v4916 = vld [vmem:[%s388 + $0x152] sm:$0xff]
        %v4917 = vld [vmem:[%s388 + $0x15a] sm:$0xff]
        %v4918 = vld [vmem:[%s388 + $0x16a] sm:$0xff]
        %v4919 = vld [vmem:[%s388 + $0x172] sm:$0xff]
        %s4920 = scalar_lea.vmem [#allocation8], 52
        %v4921 = vld [vmem:[%s4920] sm:$0xf]
        %v4923 = vsel %vm347, %v4888, 0
        %v4926 = vsel %vm347, %v4889, 0
        %v4929 = vsel %vm347, %v4890, 0
        %v4932 = vsel %vm347, %v4891, 0
        %v4935 = vsel %vm347, %v4892, 0
        %v4938 = vsel %vm347, %v4893, 0
        %v4941 = vsel %vm347, %v4894, 0
        %v4944 = vsel %vm347, %v4895, 0
        %v4947 = vsel %vm347, %v4896, 0
        %v4950 = vsel %vm347, %v4897, 0
        %v4953 = vsel %vm347, %v4898, 0
        %v4956 = vsel %vm347, %v4899, 0
        %v4959 = vsel %vm347, %v4900, 0
        %v4962 = vsel %vm347, %v4901, 0
        %v4965 = vsel %vm347, %v4902, 0
        %v4968 = vsel %vm347, %v4903, 0
        %v4971 = vsel %vm347, %v4904, 0
        %v4974 = vsel %vm347, %v4905, 0
        %v4977 = vsel %vm347, %v4906, 0
        %v4980 = vsel %vm347, %v4907, 0
        %v4983 = vsel %vm347, %v4908, 0
        %v4986 = vsel %vm347, %v4909, 0
        %v4989 = vsel %vm347, %v4910, 0
        %v4992 = vsel %vm347, %v4911, 0
        %v4995 = vsel %vm347, %v4912, 0
        %v4998 = vsel %vm347, %v4913, 0
        %v5001 = vsel %vm347, %v4914, 0
        %v5004 = vsel %vm347, %v4915, 0
        %v5007 = vsel %vm347, %v4916, 0
        %v5010 = vsel %vm347, %v4917, 0
        %v5013 = vsel %vm347, %v4918, 0
        %v5016 = vsel %vm347, %v4919, 0
        %v5019 = vsel %vm585, %v4921, 0
        %5021 = vmatprep.subr.mxu0 0.0
        %5022 = vmatpush1.msra.mxu0 %v5019
        %5023 = vmatprep.subr.mxu0 0.0
        %5024 = vmatpush1.msra.mxu0 0.0
        %5025 = vmatprep.subr.mxu0 0.0
        %5026 = vmatpush1.msra.mxu0 0.0
        %5027 = vmatprep.subr.mxu0 0.0
        %5028 = vmatpush1.msra.mxu0 0.0
        %5029 = vmatprep.subr.mxu0 0.0
        %5030 = vmatpush1.msra.mxu0 0.0
        %5031 = vmatprep.subr.mxu0 0.0
        %5032 = vmatpush1.msra.mxu0 0.0
        %5033 = vmatprep.subr.mxu0 0.0
        %5034 = vmatpush1.msra.mxu0 0.0
        %5035 = vmatprep.subr.mxu0 0.0
        %5036 = vmatpush1.msra.mxu0 0.0
        %5037 = vmatprep.subr.mxu0 0.0
        %5038 = vmatpush1.msra.mxu0 0.0
        %5039 = vmatprep.subr.mxu0 0.0
        %5040 = vmatpush1.msra.mxu0 0.0
        %5041 = vmatprep.subr.mxu0 0.0
        %5042 = vmatpush1.msra.mxu0 0.0
        %5043 = vmatprep.subr.mxu0 0.0
        %5044 = vmatpush1.msra.mxu0 0.0
        %5045 = vmatprep.subr.mxu0 0.0
        %5046 = vmatpush1.msra.mxu0 0.0
        %5047 = vmatprep.subr.mxu0 0.0
        %5048 = vmatpush1.msra.mxu0 0.0
        %5049 = vmatprep.subr.mxu0 0.0
        %5050 = vmatpush1.msra.mxu0 0.0
        %5051 = vmatprep.subr.mxu0 0.0
        %5052 = vmatpush1.msra.mxu0 0.0
        %5053 = vmatprep.subr.mxu0 0.0
        %5054 = vmatpush1.msra.mxu0 0.0
        %5055 = vmatprep.subr.mxu0 0.0
        %5056 = vmatpush1.msra.mxu0 0.0
        %5057 = vmatprep.subr.mxu0 0.0
        %5058 = vmatpush1.msra.mxu0 0.0
        %5059 = vmatprep.subr.mxu0 0.0
        %5060 = vmatpush1.msra.mxu0 0.0
        %5061 = vmatprep.subr.mxu0 0.0
        %5062 = vmatpush1.msra.mxu0 0.0
        %5063 = vmatprep.subr.mxu0 0.0
        %5064 = vmatpush1.msra.mxu0 0.0
        %5065 = vmatprep.subr.mxu0 0.0
        %5066 = vmatpush1.msra.mxu0 0.0
        %5067 = vmatprep.subr.mxu0 0.0
        %5068 = vmatpush1.msra.mxu0 0.0
        %5069 = vmatprep.subr.mxu0 0.0
        %5070 = vmatpush1.msra.mxu0 0.0
        %5071 = vmatprep.subr.mxu0 0.0
        %5072 = vmatpush1.msra.mxu0 0.0
        %5073 = vmatprep.subr.mxu0 0.0
        %5074 = vmatpush1.msra.mxu0 0.0
        %5075 = vmatprep.subr.mxu0 0.0
        %5076 = vmatpush1.msra.mxu0 0.0
        %5077 = vmatprep.subr.mxu0 0.0
        %5078 = vmatpush1.msra.mxu0 0.0
        %5079 = vmatprep.subr.mxu0 0.0
        %5080 = vmatpush1.msra.mxu0 0.0
        %5081 = vmatprep.subr.mxu0 0.0
        %5082 = vmatpush1.msra.mxu0 0.0
        %5083 = vmatprep.subr.mxu0 0.0
        %5084 = vmatpush1.msra.mxu0 0.0
        %5085 = vmatprep.mubr.f32.mxu0 0.0
        %5086 = vmatmul.mubr.f32.gmra.mrb[0].mxu0 %v4923
        %v5087 = vpop.f32.mrb[0].mxu0
        %v5088 = vadd.f32 0.0, %v5087
        %v5089 = vpop.f32.mrb[0].mxu0
        %5090 = vmatprep.mubr.f32.mxu0 0.0
        %5091 = vmatmul.mubr.f32.gmra.mrb[0].mxu0 %v4926
        %v5092 = vpop.f32.mrb[0].mxu0
        %v5093 = vadd.f32 0.0, %v5092
        %v5094 = vpop.f32.mrb[0].mxu0
        %5095 = vmatprep.mubr.f32.mxu0 0.0
        %5096 = vmatmul.mubr.f32.gmra.mrb[0].mxu0 %v4929
        %v5097 = vpop.f32.mrb[0].mxu0
        %v5098 = vadd.f32 0.0, %v5097
        %v5099 = vpop.f32.mrb[0].mxu0
        %5100 = vmatprep.mubr.f32.mxu0 0.0
        %5101 = vmatmul.mubr.f32.gmra.mrb[0].mxu0 %v4932
        %v5102 = vpop.f32.mrb[0].mxu0
        %v5103 = vadd.f32 0.0, %v5102
        %v5104 = vpop.f32.mrb[0].mxu0
        %5105 = vmatprep.mubr.f32.mxu0 0.0
        %5106 = vmatmul.mubr.f32.gmra.mrb[0].mxu0 %v4935
        %v5107 = vpop.f32.mrb[0].mxu0
        %v5108 = vadd.f32 0.0, %v5107
        %v5109 = vpop.f32.mrb[0].mxu0
        %5110 = vmatprep.mubr.f32.mxu0 0.0
        %5111 = vmatmul.mubr.f32.gmra.mrb[0].mxu0 %v4938
        %v5112 = vpop.f32.mrb[0].mxu0
        %v5113 = vadd.f32 0.0, %v5112
        %v5114 = vpop.f32.mrb[0].mxu0
        %5115 = vmatprep.mubr.f32.mxu0 0.0
        %5116 = vmatmul.mubr.f32.gmra.mrb[0].mxu0 %v4941
        %v5117 = vpop.f32.mrb[0].mxu0
        %v5118 = vadd.f32 0.0, %v5117
        %v5119 = vpop.f32.mrb[0].mxu0
        %5120 = vmatprep.mubr.f32.mxu0 0.0
        %5121 = vmatmul.mubr.f32.gmra.mrb[0].mxu0 %v4944
        %v5122 = vpop.f32.mrb[0].mxu0
        %v5123 = vadd.f32 0.0, %v5122
        %v5124 = vpop.f32.mrb[0].mxu0
        %5125 = vmatprep.mubr.f32.mxu0 0.0
        %5126 = vmatmul.mubr.f32.gmra.mrb[0].mxu0 %v4947
        %v5127 = vpop.f32.mrb[0].mxu0
        %v5128 = vadd.f32 0.0, %v5127
        %v5129 = vpop.f32.mrb[0].mxu0
        %5130 = vmatprep.mubr.f32.mxu0 0.0
        %5131 = vmatmul.mubr.f32.gmra.mrb[0].mxu0 %v4950
        %v5132 = vpop.f32.mrb[0].mxu0
        %v5133 = vadd.f32 0.0, %v5132
        %v5134 = vpop.f32.mrb[0].mxu0
        %5135 = vmatprep.mubr.f32.mxu0 0.0
        %5136 = vmatmul.mubr.f32.gmra.mrb[0].mxu0 %v4953
        %v5137 = vpop.f32.mrb[0].mxu0
        %v5138 = vadd.f32 0.0, %v5137
        %v5139 = vpop.f32.mrb[0].mxu0
        %5140 = vmatprep.mubr.f32.mxu0 0.0
        %5141 = vmatmul.mubr.f32.gmra.mrb[0].mxu0 %v4956
        %v5142 = vpop.f32.mrb[0].mxu0
        %v5143 = vadd.f32 0.0, %v5142
        %v5144 = vpop.f32.mrb[0].mxu0
        %5145 = vmatprep.mubr.f32.mxu0 0.0
        %5146 = vmatmul.mubr.f32.gmra.mrb[0].mxu0 %v4959
        %v5147 = vpop.f32.mrb[0].mxu0
        %v5148 = vadd.f32 0.0, %v5147
        %v5149 = vpop.f32.mrb[0].mxu0
        %5150 = vmatprep.mubr.f32.mxu0 0.0
        %5151 = vmatmul.mubr.f32.gmra.mrb[0].mxu0 %v4962
        %v5152 = vpop.f32.mrb[0].mxu0
        %v5153 = vadd.f32 0.0, %v5152
        %v5154 = vpop.f32.mrb[0].mxu0
        %5155 = vmatprep.mubr.f32.mxu0 0.0
        %5156 = vmatmul.mubr.f32.gmra.mrb[0].mxu0 %v4965
        %v5157 = vpop.f32.mrb[0].mxu0
        %v5158 = vadd.f32 0.0, %v5157
        %v5159 = vpop.f32.mrb[0].mxu0
        %5160 = vmatprep.mubr.f32.mxu0 0.0
        %5161 = vmatmul.mubr.f32.gmra.mrb[0].mxu0 %v4968
        %v5162 = vpop.f32.mrb[0].mxu0
        %v5163 = vadd.f32 0.0, %v5162
        %v5164 = vpop.f32.mrb[0].mxu0
        %5165 = vmatprep.mubr.f32.mxu0 0.0
        %5166 = vmatmul.mubr.f32.gmra.mrb[0].mxu0 %v4971
        %v5167 = vpop.f32.mrb[0].mxu0
        %v5168 = vadd.f32 0.0, %v5167
        %v5169 = vpop.f32.mrb[0].mxu0
        %5170 = vmatprep.mubr.f32.mxu0 0.0
        %5171 = vmatmul.mubr.f32.gmra.mrb[0].mxu0 %v4974
        %v5172 = vpop.f32.mrb[0].mxu0
        %v5173 = vadd.f32 0.0, %v5172
        %v5174 = vpop.f32.mrb[0].mxu0
        %5175 = vmatprep.mubr.f32.mxu0 0.0
        %5176 = vmatmul.mubr.f32.gmra.mrb[0].mxu0 %v4977
        %v5177 = vpop.f32.mrb[0].mxu0
        %v5178 = vadd.f32 0.0, %v5177
        %v5179 = vpop.f32.mrb[0].mxu0
        %5180 = vmatprep.mubr.f32.mxu0 0.0
        %5181 = vmatmul.mubr.f32.gmra.mrb[0].mxu0 %v4980
        %v5182 = vpop.f32.mrb[0].mxu0
        %v5183 = vadd.f32 0.0, %v5182
        %v5184 = vpop.f32.mrb[0].mxu0
        %5185 = vmatprep.mubr.f32.mxu0 0.0
        %5186 = vmatmul.mubr.f32.gmra.mrb[0].mxu0 %v4983
        %v5187 = vpop.f32.mrb[0].mxu0
        %v5188 = vadd.f32 0.0, %v5187
        %v5189 = vpop.f32.mrb[0].mxu0
        %5190 = vmatprep.mubr.f32.mxu0 0.0
        %5191 = vmatmul.mubr.f32.gmra.mrb[0].mxu0 %v4986
        %v5192 = vpop.f32.mrb[0].mxu0
        %v5193 = vadd.f32 0.0, %v5192
        %v5194 = vpop.f32.mrb[0].mxu0
        %5195 = vmatprep.mubr.f32.mxu0 0.0
        %5196 = vmatmul.mubr.f32.gmra.mrb[0].mxu0 %v4989
        %v5197 = vpop.f32.mrb[0].mxu0
        %v5198 = vadd.f32 0.0, %v5197
        %v5199 = vpop.f32.mrb[0].mxu0
        %5200 = vmatprep.mubr.f32.mxu0 0.0
        %5201 = vmatmul.mubr.f32.gmra.mrb[0].mxu0 %v4992
        %v5202 = vpop.f32.mrb[0].mxu0
        %v5203 = vadd.f32 0.0, %v5202
        %v5204 = vpop.f32.mrb[0].mxu0
        %5205 = vmatprep.mubr.f32.mxu0 0.0
        %5206 = vmatmul.mubr.f32.gmra.mrb[0].mxu0 %v4995
        %v5207 = vpop.f32.mrb[0].mxu0
        %v5208 = vadd.f32 0.0, %v5207
        %v5209 = vpop.f32.mrb[0].mxu0
        %5210 = vmatprep.mubr.f32.mxu0 0.0
        %5211 = vmatmul.mubr.f32.gmra.mrb[0].mxu0 %v4998
        %v5212 = vpop.f32.mrb[0].mxu0
        %v5213 = vadd.f32 0.0, %v5212
        %v5214 = vpop.f32.mrb[0].mxu0
        %5215 = vmatprep.mubr.f32.mxu0 0.0
        %5216 = vmatmul.mubr.f32.gmra.mrb[0].mxu0 %v5001
        %v5217 = vpop.f32.mrb[0].mxu0
        %v5218 = vadd.f32 0.0, %v5217
        %v5219 = vpop.f32.mrb[0].mxu0
        %5220 = vmatprep.mubr.f32.mxu0 0.0
        %5221 = vmatmul.mubr.f32.gmra.mrb[0].mxu0 %v5004
        %v5222 = vpop.f32.mrb[0].mxu0
        %v5223 = vadd.f32 0.0, %v5222
        %v5224 = vpop.f32.mrb[0].mxu0
        %5225 = vmatprep.mubr.f32.mxu0 0.0
        %5226 = vmatmul.mubr.f32.gmra.mrb[0].mxu0 %v5007
        %v5227 = vpop.f32.mrb[0].mxu0
        %v5228 = vadd.f32 0.0, %v5227
        %v5229 = vpop.f32.mrb[0].mxu0
        %5230 = vmatprep.mubr.f32.mxu0 0.0
        %5231 = vmatmul.mubr.f32.gmra.mrb[0].mxu0 %v5010
        %v5232 = vpop.f32.mrb[0].mxu0
        %v5233 = vadd.f32 0.0, %v5232
        %v5234 = vpop.f32.mrb[0].mxu0
        %5235 = vmatprep.mubr.f32.mxu0 0.0
        %5236 = vmatmul.mubr.f32.gmra.mrb[0].mxu0 %v5013
        %v5237 = vpop.f32.mrb[0].mxu0
        %v5238 = vadd.f32 0.0, %v5237
        %v5239 = vpop.f32.mrb[0].mxu0
        %5240 = vmatprep.mubr.f32.mxu0 0.0
        %5241 = vmatmul.mubr.f32.gmra.mrb[0].mxu0 %v5016
        %v5242 = vpop.f32.mrb[0].mxu0
        %v5243 = vadd.f32 0.0, %v5242
        %v5244 = vpop.f32.mrb[0].mxu0
        %5245 = vdwg.mxu0
        %v5247 = vsel %vm585, %v4887, 0
        %5249 = vmatprep.subr.mxu0 0.0
        %5250 = vmatpush1.msra.mxu0 %v5247
        %5251 = vmatprep.subr.mxu0 0.0
        %5252 = vmatpush1.msra.mxu0 0.0
        %5253 = vmatprep.subr.mxu0 0.0
        %5254 = vmatpush1.msra.mxu0 0.0
        %5255 = vmatprep.subr.mxu0 0.0
        %5256 = vmatpush1.msra.mxu0 0.0
        %5257 = vmatprep.subr.mxu0 0.0
        %5258 = vmatpush1.msra.mxu0 0.0
        %5259 = vmatprep.subr.mxu0 0.0
        %5260 = vmatpush1.msra.mxu0 0.0
        %5261 = vmatprep.subr.mxu0 0.0
        %5262 = vmatpush1.msra.mxu0 0.0
        %5263 = vmatprep.subr.mxu0 0.0
        %5264 = vmatpush1.msra.mxu0 0.0
        %5265 = vmatprep.subr.mxu0 0.0
        %5266 = vmatpush1.msra.mxu0 0.0
        %5267 = vmatprep.subr.mxu0 0.0
        %5268 = vmatpush1.msra.mxu0 0.0
        %5269 = vmatprep.subr.mxu0 0.0
        %5270 = vmatpush1.msra.mxu0 0.0
        %5271 = vmatprep.subr.mxu0 0.0
        %5272 = vmatpush1.msra.mxu0 0.0
        %5273 = vmatprep.subr.mxu0 0.0
        %5274 = vmatpush1.msra.mxu0 0.0
        %5275 = vmatprep.subr.mxu0 0.0
        %5276 = vmatpush1.msra.mxu0 0.0
        %5277 = vmatprep.subr.mxu0 0.0
        %5278 = vmatpush1.msra.mxu0 0.0
        %5279 = vmatprep.subr.mxu0 0.0
        %5280 = vmatpush1.msra.mxu0 0.0
        %5281 = vmatprep.subr.mxu0 0.0
        %5282 = vmatpush1.msra.mxu0 0.0
        %5283 = vmatprep.subr.mxu0 0.0
        %5284 = vmatpush1.msra.mxu0 0.0
        %5285 = vmatprep.subr.mxu0 0.0
        %5286 = vmatpush1.msra.mxu0 0.0
        %5287 = vmatprep.subr.mxu0 0.0
        %5288 = vmatpush1.msra.mxu0 0.0
        %5289 = vmatprep.subr.mxu0 0.0
        %5290 = vmatpush1.msra.mxu0 0.0
        %5291 = vmatprep.subr.mxu0 0.0
        %5292 = vmatpush1.msra.mxu0 0.0
        %5293 = vmatprep.subr.mxu0 0.0
        %5294 = vmatpush1.msra.mxu0 0.0
        %5295 = vmatprep.subr.mxu0 0.0
        %5296 = vmatpush1.msra.mxu0 0.0
        %5297 = vmatprep.subr.mxu0 0.0
        %5298 = vmatpush1.msra.mxu0 0.0
        %5299 = vmatprep.subr.mxu0 0.0
        %5300 = vmatpush1.msra.mxu0 0.0
        %5301 = vmatprep.subr.mxu0 0.0
        %5302 = vmatpush1.msra.mxu0 0.0
        %5303 = vmatprep.subr.mxu0 0.0
        %5304 = vmatpush1.msra.mxu0 0.0
        %5305 = vmatprep.subr.mxu0 0.0
        %5306 = vmatpush1.msra.mxu0 0.0
        %5307 = vmatprep.subr.mxu0 0.0
        %5308 = vmatpush1.msra.mxu0 0.0
        %5309 = vmatprep.subr.mxu0 0.0
        %5310 = vmatpush1.msra.mxu0 0.0
        %5311 = vmatprep.subr.mxu0 0.0
        %5312 = vmatpush1.msra.mxu0 0.0
        %5313 = vmatprep.mubr.f32.mxu0 0.0
        %5314 = vmatmul.mubr.f32.gmra.mrb[0].mxu0 %v3458
        %v5315 = vpop.f32.mrb[0].mxu0
        %v5316 = vadd.f32 %v5088, %v5315
        %v5317 = vpop.f32.mrb[0].mxu0
        %5318 = vmatprep.mubr.f32.mxu0 0.0
        %5319 = vmatmul.mubr.f32.gmra.mrb[0].mxu0 %v3461
        %v5320 = vpop.f32.mrb[0].mxu0
        %v5321 = vadd.f32 %v5093, %v5320
        %v5322 = vpop.f32.mrb[0].mxu0
        %5323 = vmatprep.mubr.f32.mxu0 0.0
        %5324 = vmatmul.mubr.f32.gmra.mrb[0].mxu0 %v3464
        %v5325 = vpop.f32.mrb[0].mxu0
        %v5326 = vadd.f32 %v5098, %v5325
        %v5327 = vpop.f32.mrb[0].mxu0
        %5328 = vmatprep.mubr.f32.mxu0 0.0
        %5329 = vmatmul.mubr.f32.gmra.mrb[0].mxu0 %v3467
        %v5330 = vpop.f32.mrb[0].mxu0
        %v5331 = vadd.f32 %v5103, %v5330
        %v5332 = vpop.f32.mrb[0].mxu0
        %5333 = vmatprep.mubr.f32.mxu0 0.0
        %5334 = vmatmul.mubr.f32.gmra.mrb[0].mxu0 %v3470
        %v5335 = vpop.f32.mrb[0].mxu0
        %v5336 = vadd.f32 %v5108, %v5335
        %v5337 = vpop.f32.mrb[0].mxu0
        %5338 = vmatprep.mubr.f32.mxu0 0.0
        %5339 = vmatmul.mubr.f32.gmra.mrb[0].mxu0 %v3473
        %v5340 = vpop.f32.mrb[0].mxu0
        %v5341 = vadd.f32 %v5113, %v5340
        %v5342 = vpop.f32.mrb[0].mxu0
        %5343 = vmatprep.mubr.f32.mxu0 0.0
        %5344 = vmatmul.mubr.f32.gmra.mrb[0].mxu0 %v3476
        %v5345 = vpop.f32.mrb[0].mxu0
        %v5346 = vadd.f32 %v5118, %v5345
        %v5347 = vpop.f32.mrb[0].mxu0
        %5348 = vmatprep.mubr.f32.mxu0 0.0
        %5349 = vmatmul.mubr.f32.gmra.mrb[0].mxu0 %v3479
        %v5350 = vpop.f32.mrb[0].mxu0
        %v5351 = vadd.f32 %v5123, %v5350
        %v5352 = vpop.f32.mrb[0].mxu0
        %5353 = vmatprep.mubr.f32.mxu0 0.0
        %5354 = vmatmul.mubr.f32.gmra.mrb[0].mxu0 %v3482
        %v5355 = vpop.f32.mrb[0].mxu0
        %v5356 = vadd.f32 %v5128, %v5355
        %v5357 = vpop.f32.mrb[0].mxu0
        %5358 = vmatprep.mubr.f32.mxu0 0.0
        %5359 = vmatmul.mubr.f32.gmra.mrb[0].mxu0 %v3485
        %v5360 = vpop.f32.mrb[0].mxu0
        %v5361 = vadd.f32 %v5133, %v5360
        %v5362 = vpop.f32.mrb[0].mxu0
        %5363 = vmatprep.mubr.f32.mxu0 0.0
        %5364 = vmatmul.mubr.f32.gmra.mrb[0].mxu0 %v3488
        %v5365 = vpop.f32.mrb[0].mxu0
        %v5366 = vadd.f32 %v5138, %v5365
        %v5367 = vpop.f32.mrb[0].mxu0
        %5368 = vmatprep.mubr.f32.mxu0 0.0
        %5369 = vmatmul.mubr.f32.gmra.mrb[0].mxu0 %v3491
        %v5370 = vpop.f32.mrb[0].mxu0
        %v5371 = vadd.f32 %v5143, %v5370
        %v5372 = vpop.f32.mrb[0].mxu0
        %5373 = vmatprep.mubr.f32.mxu0 0.0
        %5374 = vmatmul.mubr.f32.gmra.mrb[0].mxu0 %v3494
        %v5375 = vpop.f32.mrb[0].mxu0
        %v5376 = vadd.f32 %v5148, %v5375
        %v5377 = vpop.f32.mrb[0].mxu0
        %5378 = vmatprep.mubr.f32.mxu0 0.0
        %5379 = vmatmul.mubr.f32.gmra.mrb[0].mxu0 %v3497
        %v5380 = vpop.f32.mrb[0].mxu0
        %v5381 = vadd.f32 %v5153, %v5380
        %v5382 = vpop.f32.mrb[0].mxu0
        %5383 = vmatprep.mubr.f32.mxu0 0.0
        %5384 = vmatmul.mubr.f32.gmra.mrb[0].mxu0 %v3500
        %v5385 = vpop.f32.mrb[0].mxu0
        %v5386 = vadd.f32 %v5158, %v5385
        %v5387 = vpop.f32.mrb[0].mxu0
        %5388 = vmatprep.mubr.f32.mxu0 0.0
        %5389 = vmatmul.mubr.f32.gmra.mrb[0].mxu0 %v3503
        %v5390 = vpop.f32.mrb[0].mxu0
        %v5391 = vadd.f32 %v5163, %v5390
        %v5392 = vpop.f32.mrb[0].mxu0
        %5393 = vmatprep.mubr.f32.mxu0 0.0
        %5394 = vmatmul.mubr.f32.gmra.mrb[0].mxu0 %v3506
        %v5395 = vpop.f32.mrb[0].mxu0
        %v5396 = vadd.f32 %v5168, %v5395
        %v5397 = vpop.f32.mrb[0].mxu0
        %5398 = vmatprep.mubr.f32.mxu0 0.0
        %5399 = vmatmul.mubr.f32.gmra.mrb[0].mxu0 %v3509
        %v5400 = vpop.f32.mrb[0].mxu0
        %v5401 = vadd.f32 %v5173, %v5400
        %v5402 = vpop.f32.mrb[0].mxu0
        %5403 = vmatprep.mubr.f32.mxu0 0.0
        %5404 = vmatmul.mubr.f32.gmra.mrb[0].mxu0 %v3512
        %v5405 = vpop.f32.mrb[0].mxu0
        %v5406 = vadd.f32 %v5178, %v5405
        %v5407 = vpop.f32.mrb[0].mxu0
        %5408 = vmatprep.mubr.f32.mxu0 0.0
        %5409 = vmatmul.mubr.f32.gmra.mrb[0].mxu0 %v3515
        %v5410 = vpop.f32.mrb[0].mxu0
        %v5411 = vadd.f32 %v5183, %v5410
        %v5412 = vpop.f32.mrb[0].mxu0
        %5413 = vmatprep.mubr.f32.mxu0 0.0
        %5414 = vmatmul.mubr.f32.gmra.mrb[0].mxu0 %v3518
        %v5415 = vpop.f32.mrb[0].mxu0
        %v5416 = vadd.f32 %v5188, %v5415
        %v5417 = vpop.f32.mrb[0].mxu0
        %5418 = vmatprep.mubr.f32.mxu0 0.0
        %5419 = vmatmul.mubr.f32.gmra.mrb[0].mxu0 %v3521
        %v5420 = vpop.f32.mrb[0].mxu0
        %v5421 = vadd.f32 %v5193, %v5420
        %v5422 = vpop.f32.mrb[0].mxu0
        %5423 = vmatprep.mubr.f32.mxu0 0.0
        %5424 = vmatmul.mubr.f32.gmra.mrb[0].mxu0 %v3524
        %v5425 = vpop.f32.mrb[0].mxu0
        %v5426 = vadd.f32 %v5198, %v5425
        %v5427 = vpop.f32.mrb[0].mxu0
        %5428 = vmatprep.mubr.f32.mxu0 0.0
        %5429 = vmatmul.mubr.f32.gmra.mrb[0].mxu0 %v3527
        %v5430 = vpop.f32.mrb[0].mxu0
        %v5431 = vadd.f32 %v5203, %v5430
        %v5432 = vpop.f32.mrb[0].mxu0
        %5433 = vmatprep.mubr.f32.mxu0 0.0
        %5434 = vmatmul.mubr.f32.gmra.mrb[0].mxu0 %v3530
        %v5435 = vpop.f32.mrb[0].mxu0
        %v5436 = vadd.f32 %v5208, %v5435
        %v5437 = vpop.f32.mrb[0].mxu0
        %5438 = vmatprep.mubr.f32.mxu0 0.0
        %5439 = vmatmul.mubr.f32.gmra.mrb[0].mxu0 %v3533
        %v5440 = vpop.f32.mrb[0].mxu0
        %v5441 = vadd.f32 %v5213, %v5440
        %v5442 = vpop.f32.mrb[0].mxu0
        %5443 = vmatprep.mubr.f32.mxu0 0.0
        %5444 = vmatmul.mubr.f32.gmra.mrb[0].mxu0 %v3536
        %v5445 = vpop.f32.mrb[0].mxu0
        %v5446 = vadd.f32 %v5218, %v5445
        %v5447 = vpop.f32.mrb[0].mxu0
        %5448 = vmatprep.mubr.f32.mxu0 0.0
        %5449 = vmatmul.mubr.f32.gmra.mrb[0].mxu0 %v3539
        %v5450 = vpop.f32.mrb[0].mxu0
        %v5451 = vadd.f32 %v5223, %v5450
        %v5452 = vpop.f32.mrb[0].mxu0
        %5453 = vmatprep.mubr.f32.mxu0 0.0
        %5454 = vmatmul.mubr.f32.gmra.mrb[0].mxu0 %v3542
        %v5455 = vpop.f32.mrb[0].mxu0
        %v5456 = vadd.f32 %v5228, %v5455
        %v5457 = vpop.f32.mrb[0].mxu0
        %5458 = vmatprep.mubr.f32.mxu0 0.0
        %5459 = vmatmul.mubr.f32.gmra.mrb[0].mxu0 %v3545
        %v5460 = vpop.f32.mrb[0].mxu0
        %v5461 = vadd.f32 %v5233, %v5460
        %v5462 = vpop.f32.mrb[0].mxu0
        %5463 = vmatprep.mubr.f32.mxu0 0.0
        %5464 = vmatmul.mubr.f32.gmra.mrb[0].mxu0 %v3548
        %v5465 = vpop.f32.mrb[0].mxu0
        %v5466 = vadd.f32 %v5238, %v5465
        %v5467 = vpop.f32.mrb[0].mxu0
        %5468 = vmatprep.mubr.f32.mxu0 0.0
        %5469 = vmatmul.mubr.f32.gmra.mrb[0].mxu0 %v3551
        %v5470 = vpop.f32.mrb[0].mxu0
        %v5471 = vadd.f32 %v5243, %v5470
        %v5472 = vpop.f32.mrb[0].mxu0
        %5473 = vdwg.mxu0
        %s5474 = scalar_lea.vmem [#allocation8], 56
        %v5475 = vld [vmem:[%s5474] sm:$0xf]
        %v5477 = vsel %vm585, %v5475, 0
        %5479 = vmatprep.subr.mxu0 0.0
        %5480 = vmatpush1.msra.mxu0 %v5477
        %5481 = vmatprep.subr.mxu0 0.0
        %5482 = vmatpush1.msra.mxu0 0.0
        %5483 = vmatprep.subr.mxu0 0.0
        %5484 = vmatpush1.msra.mxu0 0.0
        %5485 = vmatprep.subr.mxu0 0.0
        %5486 = vmatpush1.msra.mxu0 0.0
        %5487 = vmatprep.subr.mxu0 0.0
        %5488 = vmatpush1.msra.mxu0 0.0
        %5489 = vmatprep.subr.mxu0 0.0
        %5490 = vmatpush1.msra.mxu0 0.0
        %5491 = vmatprep.subr.mxu0 0.0
        %5492 = vmatpush1.msra.mxu0 0.0
        %5493 = vmatprep.subr.mxu0 0.0
        %5494 = vmatpush1.msra.mxu0 0.0
        %5495 = vmatprep.subr.mxu0 0.0
        %5496 = vmatpush1.msra.mxu0 0.0
        %5497 = vmatprep.subr.mxu0 0.0
        %5498 = vmatpush1.msra.mxu0 0.0
        %5499 = vmatprep.subr.mxu0 0.0
        %5500 = vmatpush1.msra.mxu0 0.0
        %5501 = vmatprep.subr.mxu0 0.0
        %5502 = vmatpush1.msra.mxu0 0.0
        %5503 = vmatprep.subr.mxu0 0.0
        %5504 = vmatpush1.msra.mxu0 0.0
        %5505 = vmatprep.subr.mxu0 0.0
        %5506 = vmatpush1.msra.mxu0 0.0
        %5507 = vmatprep.subr.mxu0 0.0
        %5508 = vmatpush1.msra.mxu0 0.0
        %5509 = vmatprep.subr.mxu0 0.0
        %5510 = vmatpush1.msra.mxu0 0.0
        %5511 = vmatprep.subr.mxu0 0.0
        %5512 = vmatpush1.msra.mxu0 0.0
        %5513 = vmatprep.subr.mxu0 0.0
        %5514 = vmatpush1.msra.mxu0 0.0
        %5515 = vmatprep.subr.mxu0 0.0
        %5516 = vmatpush1.msra.mxu0 0.0
        %5517 = vmatprep.subr.mxu0 0.0
        %5518 = vmatpush1.msra.mxu0 0.0
        %5519 = vmatprep.subr.mxu0 0.0
        %5520 = vmatpush1.msra.mxu0 0.0
        %5521 = vmatprep.subr.mxu0 0.0
        %5522 = vmatpush1.msra.mxu0 0.0
        %5523 = vmatprep.subr.mxu0 0.0
        %5524 = vmatpush1.msra.mxu0 0.0
        %5525 = vmatprep.subr.mxu0 0.0
        %5526 = vmatpush1.msra.mxu0 0.0
        %5527 = vmatprep.subr.mxu0 0.0
        %5528 = vmatpush1.msra.mxu0 0.0
        %5529 = vmatprep.subr.mxu0 0.0
        %5530 = vmatpush1.msra.mxu0 0.0
        %5531 = vmatprep.subr.mxu0 0.0
        %5532 = vmatpush1.msra.mxu0 0.0
        %5533 = vmatprep.subr.mxu0 0.0
        %5534 = vmatpush1.msra.mxu0 0.0
        %5535 = vmatprep.subr.mxu0 0.0
        %5536 = vmatpush1.msra.mxu0 0.0
        %5537 = vmatprep.subr.mxu0 0.0
        %5538 = vmatpush1.msra.mxu0 0.0
        %5539 = vmatprep.subr.mxu0 0.0
        %5540 = vmatpush1.msra.mxu0 0.0
        %5541 = vmatprep.subr.mxu0 0.0
        %5542 = vmatpush1.msra.mxu0 0.0
        %5543 = vmatprep.mubr.f32.mxu0 0.0
        %5544 = vmatmul.mubr.f32.gmra.mrb[0].mxu0 %v4531
        %v5545 = vpop.f32.mrb[0].mxu0
        %v5546 = vadd.f32 0.0, %v5545
        %v5547 = vpop.f32.mrb[0].mxu0
        %5548 = vmatprep.mubr.f32.mxu0 0.0
        %5549 = vmatmul.mubr.f32.gmra.mrb[0].mxu0 %v4534
        %v5550 = vpop.f32.mrb[0].mxu0
        %v5551 = vadd.f32 0.0, %v5550
        %v5552 = vpop.f32.mrb[0].mxu0
        %5553 = vmatprep.mubr.f32.mxu0 0.0
        %5554 = vmatmul.mubr.f32.gmra.mrb[0].mxu0 %v4537
        %v5555 = vpop.f32.mrb[0].mxu0
        %v5556 = vadd.f32 0.0, %v5555
        %v5557 = vpop.f32.mrb[0].mxu0
        %5558 = vmatprep.mubr.f32.mxu0 0.0
        %5559 = vmatmul.mubr.f32.gmra.mrb[0].mxu0 %v4540
        %v5560 = vpop.f32.mrb[0].mxu0
        %v5561 = vadd.f32 0.0, %v5560
        %v5562 = vpop.f32.mrb[0].mxu0
        %5563 = vmatprep.mubr.f32.mxu0 0.0
        %5564 = vmatmul.mubr.f32.gmra.mrb[0].mxu0 %v4543
        %v5565 = vpop.f32.mrb[0].mxu0
        %v5566 = vadd.f32 0.0, %v5565
        %v5567 = vpop.f32.mrb[0].mxu0
        %5568 = vmatprep.mubr.f32.mxu0 0.0
        %5569 = vmatmul.mubr.f32.gmra.mrb[0].mxu0 %v4546
        %v5570 = vpop.f32.mrb[0].mxu0
        %v5571 = vadd.f32 0.0, %v5570
        %v5572 = vpop.f32.mrb[0].mxu0
        %5573 = vmatprep.mubr.f32.mxu0 0.0
        %5574 = vmatmul.mubr.f32.gmra.mrb[0].mxu0 %v4549
        %v5575 = vpop.f32.mrb[0].mxu0
        %v5576 = vadd.f32 0.0, %v5575
        %v5577 = vpop.f32.mrb[0].mxu0
        %5578 = vmatprep.mubr.f32.mxu0 0.0
        %5579 = vmatmul.mubr.f32.gmra.mrb[0].mxu0 %v4552
        %v5580 = vpop.f32.mrb[0].mxu0
        %v5581 = vadd.f32 0.0, %v5580
        %v5582 = vpop.f32.mrb[0].mxu0
        %5583 = vmatprep.mubr.f32.mxu0 0.0
        %5584 = vmatmul.mubr.f32.gmra.mrb[0].mxu0 %v4555
        %v5585 = vpop.f32.mrb[0].mxu0
        %v5586 = vadd.f32 0.0, %v5585
        %v5587 = vpop.f32.mrb[0].mxu0
        %5588 = vmatprep.mubr.f32.mxu0 0.0
        %5589 = vmatmul.mubr.f32.gmra.mrb[0].mxu0 %v4558
        %v5590 = vpop.f32.mrb[0].mxu0
        %v5591 = vadd.f32 0.0, %v5590
        %v5592 = vpop.f32.mrb[0].mxu0
        %5593 = vmatprep.mubr.f32.mxu0 0.0
        %5594 = vmatmul.mubr.f32.gmra.mrb[0].mxu0 %v4561
        %v5595 = vpop.f32.mrb[0].mxu0
        %v5596 = vadd.f32 0.0, %v5595
        %v5597 = vpop.f32.mrb[0].mxu0
        %5598 = vmatprep.mubr.f32.mxu0 0.0
        %5599 = vmatmul.mubr.f32.gmra.mrb[0].mxu0 %v4564
        %v5600 = vpop.f32.mrb[0].mxu0
        %v5601 = vadd.f32 0.0, %v5600
        %v5602 = vpop.f32.mrb[0].mxu0
        %5603 = vmatprep.mubr.f32.mxu0 0.0
        %5604 = vmatmul.mubr.f32.gmra.mrb[0].mxu0 %v4567
        %v5605 = vpop.f32.mrb[0].mxu0
        %v5606 = vadd.f32 0.0, %v5605
        %v5607 = vpop.f32.mrb[0].mxu0
        %5608 = vmatprep.mubr.f32.mxu0 0.0
        %5609 = vmatmul.mubr.f32.gmra.mrb[0].mxu0 %v4570
        %v5610 = vpop.f32.mrb[0].mxu0
        %v5611 = vadd.f32 0.0, %v5610
        %v5612 = vpop.f32.mrb[0].mxu0
        %5613 = vmatprep.mubr.f32.mxu0 0.0
        %5614 = vmatmul.mubr.f32.gmra.mrb[0].mxu0 %v4573
        %v5615 = vpop.f32.mrb[0].mxu0
        %v5616 = vadd.f32 0.0, %v5615
        %v5617 = vpop.f32.mrb[0].mxu0
        %5618 = vmatprep.mubr.f32.mxu0 0.0
        %5619 = vmatmul.mubr.f32.gmra.mrb[0].mxu0 %v4576
        %v5620 = vpop.f32.mrb[0].mxu0
        %v5621 = vadd.f32 0.0, %v5620
        %v5622 = vpop.f32.mrb[0].mxu0
        %5623 = vmatprep.mubr.f32.mxu0 0.0
        %5624 = vmatmul.mubr.f32.gmra.mrb[0].mxu0 %v4579
        %v5625 = vpop.f32.mrb[0].mxu0
        %v5626 = vadd.f32 0.0, %v5625
        %v5627 = vpop.f32.mrb[0].mxu0
        %5628 = vmatprep.mubr.f32.mxu0 0.0
        %5629 = vmatmul.mubr.f32.gmra.mrb[0].mxu0 %v4582
        %v5630 = vpop.f32.mrb[0].mxu0
        %v5631 = vadd.f32 0.0, %v5630
        %v5632 = vpop.f32.mrb[0].mxu0
        %5633 = vmatprep.mubr.f32.mxu0 0.0
        %5634 = vmatmul.mubr.f32.gmra.mrb[0].mxu0 %v4585
        %v5635 = vpop.f32.mrb[0].mxu0
        %v5636 = vadd.f32 0.0, %v5635
        %v5637 = vpop.f32.mrb[0].mxu0
        %5638 = vmatprep.mubr.f32.mxu0 0.0
        %5639 = vmatmul.mubr.f32.gmra.mrb[0].mxu0 %v4588
        %v5640 = vpop.f32.mrb[0].mxu0
        %v5641 = vadd.f32 0.0, %v5640
        %v5642 = vpop.f32.mrb[0].mxu0
        %5643 = vmatprep.mubr.f32.mxu0 0.0
        %5644 = vmatmul.mubr.f32.gmra.mrb[0].mxu0 %v4591
        %v5645 = vpop.f32.mrb[0].mxu0
        %v5646 = vadd.f32 0.0, %v5645
        %v5647 = vpop.f32.mrb[0].mxu0
        %5648 = vmatprep.mubr.f32.mxu0 0.0
        %5649 = vmatmul.mubr.f32.gmra.mrb[0].mxu0 %v4594
        %v5650 = vpop.f32.mrb[0].mxu0
        %v5651 = vadd.f32 0.0, %v5650
        %v5652 = vpop.f32.mrb[0].mxu0
        %5653 = vmatprep.mubr.f32.mxu0 0.0
        %5654 = vmatmul.mubr.f32.gmra.mrb[0].mxu0 %v4597
        %v5655 = vpop.f32.mrb[0].mxu0
        %v5656 = vadd.f32 0.0, %v5655
        %v5657 = vpop.f32.mrb[0].mxu0
        %5658 = vmatprep.mubr.f32.mxu0 0.0
        %5659 = vmatmul.mubr.f32.gmra.mrb[0].mxu0 %v4600
        %v5660 = vpop.f32.mrb[0].mxu0
        %v5661 = vadd.f32 0.0, %v5660
        %v5662 = vpop.f32.mrb[0].mxu0
        %5663 = vmatprep.mubr.f32.mxu0 0.0
        %5664 = vmatmul.mubr.f32.gmra.mrb[0].mxu0 %v4603
        %v5665 = vpop.f32.mrb[0].mxu0
        %v5666 = vadd.f32 0.0, %v5665
        %v5667 = vpop.f32.mrb[0].mxu0
        %5668 = vmatprep.mubr.f32.mxu0 0.0
        %5669 = vmatmul.mubr.f32.gmra.mrb[0].mxu0 %v4606
        %v5670 = vpop.f32.mrb[0].mxu0
        %v5671 = vadd.f32 0.0, %v5670
        %v5672 = vpop.f32.mrb[0].mxu0
        %5673 = vmatprep.mubr.f32.mxu0 0.0
        %5674 = vmatmul.mubr.f32.gmra.mrb[0].mxu0 %v4609
        %v5675 = vpop.f32.mrb[0].mxu0
        %v5676 = vadd.f32 0.0, %v5675
        %v5677 = vpop.f32.mrb[0].mxu0
        %5678 = vmatprep.mubr.f32.mxu0 0.0
        %5679 = vmatmul.mubr.f32.gmra.mrb[0].mxu0 %v4612
        %v5680 = vpop.f32.mrb[0].mxu0
        %v5681 = vadd.f32 0.0, %v5680
        %v5682 = vpop.f32.mrb[0].mxu0
        %5683 = vmatprep.mubr.f32.mxu0 0.0
        %5684 = vmatmul.mubr.f32.gmra.mrb[0].mxu0 %v4615
        %v5685 = vpop.f32.mrb[0].mxu0
        %v5686 = vadd.f32 0.0, %v5685
        %v5687 = vpop.f32.mrb[0].mxu0
        %5688 = vmatprep.mubr.f32.mxu0 0.0
        %5689 = vmatmul.mubr.f32.gmra.mrb[0].mxu0 %v4618
        %v5690 = vpop.f32.mrb[0].mxu0
        %v5691 = vadd.f32 0.0, %v5690
        %v5692 = vpop.f32.mrb[0].mxu0
        %5693 = vmatprep.mubr.f32.mxu0 0.0
        %5694 = vmatmul.mubr.f32.gmra.mrb[0].mxu0 %v4621
        %v5695 = vpop.f32.mrb[0].mxu0
        %v5696 = vadd.f32 0.0, %v5695
        %v5697 = vpop.f32.mrb[0].mxu0
        %5698 = vmatprep.mubr.f32.mxu0 0.0
        %5699 = vmatmul.mubr.f32.gmra.mrb[0].mxu0 %v4624
        %v5700 = vpop.f32.mrb[0].mxu0
        %v5701 = vadd.f32 0.0, %v5700
        %v5702 = vpop.f32.mrb[0].mxu0
        %5703 = vdwg.mxu0
        %v5704 = vadd.f32 %v5316, %v5546
        %v5705 = vadd.f32 %v5321, %v5551
        %v5706 = vadd.f32 %v5326, %v5556
        %v5707 = vadd.f32 %v5331, %v5561
        %v5708 = vadd.f32 %v5336, %v5566
        %v5709 = vadd.f32 %v5341, %v5571
        %v5710 = vadd.f32 %v5346, %v5576
        %v5711 = vadd.f32 %v5351, %v5581
        %v5712 = vadd.f32 %v5356, %v5586
        %v5713 = vadd.f32 %v5361, %v5591
        %v5714 = vadd.f32 %v5366, %v5596
        %v5715 = vadd.f32 %v5371, %v5601
        %v5716 = vadd.f32 %v5376, %v5606
        %v5717 = vadd.f32 %v5381, %v5611
        %v5718 = vadd.f32 %v5386, %v5616
        %v5719 = vadd.f32 %v5391, %v5621
        %v5720 = vadd.f32 %v5396, %v5626
        %v5721 = vadd.f32 %v5401, %v5631
        %v5722 = vadd.f32 %v5406, %v5636
        %v5723 = vadd.f32 %v5411, %v5641
        %v5724 = vadd.f32 %v5416, %v5646
        %v5725 = vadd.f32 %v5421, %v5651
        %v5726 = vadd.f32 %v5426, %v5656
        %v5727 = vadd.f32 %v5431, %v5661
        %v5728 = vadd.f32 %v5436, %v5666
        %v5729 = vadd.f32 %v5441, %v5671
        %v5730 = vadd.f32 %v5446, %v5676
        %v5731 = vadd.f32 %v5451, %v5681
        %v5732 = vadd.f32 %v5456, %v5686
        %v5733 = vadd.f32 %v5461, %v5691
        %v5734 = vadd.f32 %v5466, %v5696
        %v5735 = vadd.f32 %v5471, %v5701
        %v5736 = vld [vmem:[%s4105 + $0x2] sm:$0xff]
        %v5737 = vld [vmem:[%s4105 + $0xa] sm:$0xff]
        %v5738 = vld [vmem:[%s4105 + $0x1a] sm:$0xff]
        %v5739 = vld [vmem:[%s4105 + $0x22] sm:$0xff]
        %v5740 = vld [vmem:[%s4105 + $0x32] sm:$0xff]
        %v5741 = vld [vmem:[%s4105 + $0x3a] sm:$0xff]
        %v5742 = vld [vmem:[%s4105 + $0x4a] sm:$0xff]
        %v5743 = vld [vmem:[%s4105 + $0x52] sm:$0xff]
        %v5744 = vld [vmem:[%s4105 + $0x62] sm:$0xff]
        %v5745 = vld [vmem:[%s4105 + $0x6a] sm:$0xff]
        %v5746 = vld [vmem:[%s4105 + $0x7a] sm:$0xff]
        %v5747 = vld [vmem:[%s4105 + $0x82] sm:$0xff]
        %v5748 = vld [vmem:[%s4105 + $0x92] sm:$0xff]
        %v5749 = vld [vmem:[%s4105 + $0x9a] sm:$0xff]
        %v5750 = vld [vmem:[%s4105 + $0xaa] sm:$0xff]
        %v5751 = vld [vmem:[%s4105 + $0xb2] sm:$0xff]
        %v5752 = vld [vmem:[%s4105 + $0xc2] sm:$0xff]
        %v5753 = vld [vmem:[%s4105 + $0xca] sm:$0xff]
        %v5754 = vld [vmem:[%s4105 + $0xda] sm:$0xff]
        %v5755 = vld [vmem:[%s4105 + $0xe2] sm:$0xff]
        %v5756 = vld [vmem:[%s4105 + $0xf2] sm:$0xff]
        %v5757 = vld [vmem:[%s4105 + $0xfa] sm:$0xff]
        %v5758 = vld [vmem:[%s4105 + $0x10a] sm:$0xff]
        %v5759 = vld [vmem:[%s4105 + $0x112] sm:$0xff]
        %v5760 = vld [vmem:[%s4105 + $0x122] sm:$0xff]
        %v5761 = vld [vmem:[%s4105 + $0x12a] sm:$0xff]
        %v5762 = vld [vmem:[%s4105 + $0x13a] sm:$0xff]
        %v5763 = vld [vmem:[%s4105 + $0x142] sm:$0xff]
        %v5764 = vld [vmem:[%s4105 + $0x152] sm:$0xff]
        %v5765 = vld [vmem:[%s4105 + $0x15a] sm:$0xff]
        %v5766 = vld [vmem:[%s4105 + $0x16a] sm:$0xff]
        %v5767 = vld [vmem:[%s4105 + $0x172] sm:$0xff]
        %s5768 = scalar_lea.vmem [#allocation8], 60
        %v5769 = vld [vmem:[%s5768] sm:$0xf]
        %v5771 = vsel %vm347, %v5736, 0
        %v5774 = vsel %vm347, %v5737, 0
        %v5777 = vsel %vm347, %v5738, 0
        %v5780 = vsel %vm347, %v5739, 0
        %v5783 = vsel %vm347, %v5740, 0
        %v5786 = vsel %vm347, %v5741, 0
        %v5789 = vsel %vm347, %v5742, 0
        %v5792 = vsel %vm347, %v5743, 0
        %v5795 = vsel %vm347, %v5744, 0
        %v5798 = vsel %vm347, %v5745, 0
        %v5801 = vsel %vm347, %v5746, 0
        %v5804 = vsel %vm347, %v5747, 0
        %v5807 = vsel %vm347, %v5748, 0
        %v5810 = vsel %vm347, %v5749, 0
        %v5813 = vsel %vm347, %v5750, 0
        %v5816 = vsel %vm347, %v5751, 0
        %v5819 = vsel %vm347, %v5752, 0
        %v5822 = vsel %vm347, %v5753, 0
        %v5825 = vsel %vm347, %v5754, 0
        %v5828 = vsel %vm347, %v5755, 0
        %v5831 = vsel %vm347, %v5756, 0
        %v5834 = vsel %vm347, %v5757, 0
        %v5837 = vsel %vm347, %v5758, 0
        %v5840 = vsel %vm347, %v5759, 0
        %v5843 = vsel %vm347, %v5760, 0
        %v5846 = vsel %vm347, %v5761, 0
        %v5849 = vsel %vm347, %v5762, 0
        %v5852 = vsel %vm347, %v5763, 0
        %v5855 = vsel %vm347, %v5764, 0
        %v5858 = vsel %vm347, %v5765, 0
        %v5861 = vsel %vm347, %v5766, 0
        %v5864 = vsel %vm347, %v5767, 0
        %v5867 = vsel %vm585, %v5769, 0
        %5869 = vmatprep.subr.mxu0 0.0
        %5870 = vmatpush1.msra.mxu0 %v5867
        %5871 = vmatprep.subr.mxu0 0.0
        %5872 = vmatpush1.msra.mxu0 0.0
        %5873 = vmatprep.subr.mxu0 0.0
        %5874 = vmatpush1.msra.mxu0 0.0
        %5875 = vmatprep.subr.mxu0 0.0
        %5876 = vmatpush1.msra.mxu0 0.0
        %5877 = vmatprep.subr.mxu0 0.0
        %5878 = vmatpush1.msra.mxu0 0.0
        %5879 = vmatprep.subr.mxu0 0.0
        %5880 = vmatpush1.msra.mxu0 0.0
        %5881 = vmatprep.subr.mxu0 0.0
        %5882 = vmatpush1.msra.mxu0 0.0
        %5883 = vmatprep.subr.mxu0 0.0
        %5884 = vmatpush1.msra.mxu0 0.0
        %5885 = vmatprep.subr.mxu0 0.0
        %5886 = vmatpush1.msra.mxu0 0.0
        %5887 = vmatprep.subr.mxu0 0.0
        %5888 = vmatpush1.msra.mxu0 0.0
        %5889 = vmatprep.subr.mxu0 0.0
        %5890 = vmatpush1.msra.mxu0 0.0
        %5891 = vmatprep.subr.mxu0 0.0
        %5892 = vmatpush1.msra.mxu0 0.0
        %5893 = vmatprep.subr.mxu0 0.0
        %5894 = vmatpush1.msra.mxu0 0.0
        %5895 = vmatprep.subr.mxu0 0.0
        %5896 = vmatpush1.msra.mxu0 0.0
        %5897 = vmatprep.subr.mxu0 0.0
        %5898 = vmatpush1.msra.mxu0 0.0
        %5899 = vmatprep.subr.mxu0 0.0
        %5900 = vmatpush1.msra.mxu0 0.0
        %5901 = vmatprep.subr.mxu0 0.0
        %5902 = vmatpush1.msra.mxu0 0.0
        %5903 = vmatprep.subr.mxu0 0.0
        %5904 = vmatpush1.msra.mxu0 0.0
        %5905 = vmatprep.subr.mxu0 0.0
        %5906 = vmatpush1.msra.mxu0 0.0
        %5907 = vmatprep.subr.mxu0 0.0
        %5908 = vmatpush1.msra.mxu0 0.0
        %5909 = vmatprep.subr.mxu0 0.0
        %5910 = vmatpush1.msra.mxu0 0.0
        %5911 = vmatprep.subr.mxu0 0.0
        %5912 = vmatpush1.msra.mxu0 0.0
        %5913 = vmatprep.subr.mxu0 0.0
        %5914 = vmatpush1.msra.mxu0 0.0
        %5915 = vmatprep.subr.mxu0 0.0
        %5916 = vmatpush1.msra.mxu0 0.0
        %5917 = vmatprep.subr.mxu0 0.0
        %5918 = vmatpush1.msra.mxu0 0.0
        %5919 = vmatprep.subr.mxu0 0.0
        %5920 = vmatpush1.msra.mxu0 0.0
        %5921 = vmatprep.subr.mxu0 0.0
        %5922 = vmatpush1.msra.mxu0 0.0
        %5923 = vmatprep.subr.mxu0 0.0
        %5924 = vmatpush1.msra.mxu0 0.0
        %5925 = vmatprep.subr.mxu0 0.0
        %5926 = vmatpush1.msra.mxu0 0.0
        %5927 = vmatprep.subr.mxu0 0.0
        %5928 = vmatpush1.msra.mxu0 0.0
        %5929 = vmatprep.subr.mxu0 0.0
        %5930 = vmatpush1.msra.mxu0 0.0
        %5931 = vmatprep.subr.mxu0 0.0
        %5932 = vmatpush1.msra.mxu0 0.0
        %5933 = vmatprep.mubr.f32.mxu0 0.0
        %5934 = vmatmul.mubr.f32.gmra.mrb[0].mxu0 %v5771
        %v5935 = vpop.f32.mrb[0].mxu0
        %v5936 = vadd.f32 0.0, %v5935
        %v5937 = vpop.f32.mrb[0].mxu0
        %5938 = vmatprep.mubr.f32.mxu0 0.0
        %5939 = vmatmul.mubr.f32.gmra.mrb[0].mxu0 %v5774
        %v5940 = vpop.f32.mrb[0].mxu0
        %v5941 = vadd.f32 0.0, %v5940
        %v5942 = vpop.f32.mrb[0].mxu0
        %5943 = vmatprep.mubr.f32.mxu0 0.0
        %5944 = vmatmul.mubr.f32.gmra.mrb[0].mxu0 %v5777
        %v5945 = vpop.f32.mrb[0].mxu0
        %v5946 = vadd.f32 0.0, %v5945
        %v5947 = vpop.f32.mrb[0].mxu0
        %5948 = vmatprep.mubr.f32.mxu0 0.0
        %5949 = vmatmul.mubr.f32.gmra.mrb[0].mxu0 %v5780
        %v5950 = vpop.f32.mrb[0].mxu0
        %v5951 = vadd.f32 0.0, %v5950
        %v5952 = vpop.f32.mrb[0].mxu0
        %5953 = vmatprep.mubr.f32.mxu0 0.0
        %5954 = vmatmul.mubr.f32.gmra.mrb[0].mxu0 %v5783
        %v5955 = vpop.f32.mrb[0].mxu0
        %v5956 = vadd.f32 0.0, %v5955
        %v5957 = vpop.f32.mrb[0].mxu0
        %5958 = vmatprep.mubr.f32.mxu0 0.0
        %5959 = vmatmul.mubr.f32.gmra.mrb[0].mxu0 %v5786
        %v5960 = vpop.f32.mrb[0].mxu0
        %v5961 = vadd.f32 0.0, %v5960
        %v5962 = vpop.f32.mrb[0].mxu0
        %5963 = vmatprep.mubr.f32.mxu0 0.0
        %5964 = vmatmul.mubr.f32.gmra.mrb[0].mxu0 %v5789
        %v5965 = vpop.f32.mrb[0].mxu0
        %v5966 = vadd.f32 0.0, %v5965
        %v5967 = vpop.f32.mrb[0].mxu0
        %5968 = vmatprep.mubr.f32.mxu0 0.0
        %5969 = vmatmul.mubr.f32.gmra.mrb[0].mxu0 %v5792
        %v5970 = vpop.f32.mrb[0].mxu0
        %v5971 = vadd.f32 0.0, %v5970
        %v5972 = vpop.f32.mrb[0].mxu0
        %5973 = vmatprep.mubr.f32.mxu0 0.0
        %5974 = vmatmul.mubr.f32.gmra.mrb[0].mxu0 %v5795
        %v5975 = vpop.f32.mrb[0].mxu0
        %v5976 = vadd.f32 0.0, %v5975
        %v5977 = vpop.f32.mrb[0].mxu0
        %5978 = vmatprep.mubr.f32.mxu0 0.0
        %5979 = vmatmul.mubr.f32.gmra.mrb[0].mxu0 %v5798
        %v5980 = vpop.f32.mrb[0].mxu0
        %v5981 = vadd.f32 0.0, %v5980
        %v5982 = vpop.f32.mrb[0].mxu0
        %5983 = vmatprep.mubr.f32.mxu0 0.0
        %5984 = vmatmul.mubr.f32.gmra.mrb[0].mxu0 %v5801
        %v5985 = vpop.f32.mrb[0].mxu0
        %v5986 = vadd.f32 0.0, %v5985
        %v5987 = vpop.f32.mrb[0].mxu0
        %5988 = vmatprep.mubr.f32.mxu0 0.0
        %5989 = vmatmul.mubr.f32.gmra.mrb[0].mxu0 %v5804
        %v5990 = vpop.f32.mrb[0].mxu0
        %v5991 = vadd.f32 0.0, %v5990
        %v5992 = vpop.f32.mrb[0].mxu0
        %5993 = vmatprep.mubr.f32.mxu0 0.0
        %5994 = vmatmul.mubr.f32.gmra.mrb[0].mxu0 %v5807
        %v5995 = vpop.f32.mrb[0].mxu0
        %v5996 = vadd.f32 0.0, %v5995
        %v5997 = vpop.f32.mrb[0].mxu0
        %5998 = vmatprep.mubr.f32.mxu0 0.0
        %5999 = vmatmul.mubr.f32.gmra.mrb[0].mxu0 %v5810
        %v6000 = vpop.f32.mrb[0].mxu0
        %v6001 = vadd.f32 0.0, %v6000
        %v6002 = vpop.f32.mrb[0].mxu0
        %6003 = vmatprep.mubr.f32.mxu0 0.0
        %6004 = vmatmul.mubr.f32.gmra.mrb[0].mxu0 %v5813
        %v6005 = vpop.f32.mrb[0].mxu0
        %v6006 = vadd.f32 0.0, %v6005
        %v6007 = vpop.f32.mrb[0].mxu0
        %6008 = vmatprep.mubr.f32.mxu0 0.0
        %6009 = vmatmul.mubr.f32.gmra.mrb[0].mxu0 %v5816
        %v6010 = vpop.f32.mrb[0].mxu0
        %v6011 = vadd.f32 0.0, %v6010
        %v6012 = vpop.f32.mrb[0].mxu0
        %6013 = vmatprep.mubr.f32.mxu0 0.0
        %6014 = vmatmul.mubr.f32.gmra.mrb[0].mxu0 %v5819
        %v6015 = vpop.f32.mrb[0].mxu0
        %v6016 = vadd.f32 0.0, %v6015
        %v6017 = vpop.f32.mrb[0].mxu0
        %6018 = vmatprep.mubr.f32.mxu0 0.0
        %6019 = vmatmul.mubr.f32.gmra.mrb[0].mxu0 %v5822
        %v6020 = vpop.f32.mrb[0].mxu0
        %v6021 = vadd.f32 0.0, %v6020
        %v6022 = vpop.f32.mrb[0].mxu0
        %6023 = vmatprep.mubr.f32.mxu0 0.0
        %6024 = vmatmul.mubr.f32.gmra.mrb[0].mxu0 %v5825
        %v6025 = vpop.f32.mrb[0].mxu0
        %v6026 = vadd.f32 0.0, %v6025
        %v6027 = vpop.f32.mrb[0].mxu0
        %6028 = vmatprep.mubr.f32.mxu0 0.0
        %6029 = vmatmul.mubr.f32.gmra.mrb[0].mxu0 %v5828
        %v6030 = vpop.f32.mrb[0].mxu0
        %v6031 = vadd.f32 0.0, %v6030
        %v6032 = vpop.f32.mrb[0].mxu0
        %6033 = vmatprep.mubr.f32.mxu0 0.0
        %6034 = vmatmul.mubr.f32.gmra.mrb[0].mxu0 %v5831
        %v6035 = vpop.f32.mrb[0].mxu0
        %v6036 = vadd.f32 0.0, %v6035
        %v6037 = vpop.f32.mrb[0].mxu0
        %6038 = vmatprep.mubr.f32.mxu0 0.0
        %6039 = vmatmul.mubr.f32.gmra.mrb[0].mxu0 %v5834
        %v6040 = vpop.f32.mrb[0].mxu0
        %v6041 = vadd.f32 0.0, %v6040
        %v6042 = vpop.f32.mrb[0].mxu0
        %6043 = vmatprep.mubr.f32.mxu0 0.0
        %6044 = vmatmul.mubr.f32.gmra.mrb[0].mxu0 %v5837
        %v6045 = vpop.f32.mrb[0].mxu0
        %v6046 = vadd.f32 0.0, %v6045
        %v6047 = vpop.f32.mrb[0].mxu0
        %6048 = vmatprep.mubr.f32.mxu0 0.0
        %6049 = vmatmul.mubr.f32.gmra.mrb[0].mxu0 %v5840
        %v6050 = vpop.f32.mrb[0].mxu0
        %v6051 = vadd.f32 0.0, %v6050
        %v6052 = vpop.f32.mrb[0].mxu0
        %6053 = vmatprep.mubr.f32.mxu0 0.0
        %6054 = vmatmul.mubr.f32.gmra.mrb[0].mxu0 %v5843
        %v6055 = vpop.f32.mrb[0].mxu0
        %v6056 = vadd.f32 0.0, %v6055
        %v6057 = vpop.f32.mrb[0].mxu0
        %6058 = vmatprep.mubr.f32.mxu0 0.0
        %6059 = vmatmul.mubr.f32.gmra.mrb[0].mxu0 %v5846
        %v6060 = vpop.f32.mrb[0].mxu0
        %v6061 = vadd.f32 0.0, %v6060
        %v6062 = vpop.f32.mrb[0].mxu0
        %6063 = vmatprep.mubr.f32.mxu0 0.0
        %6064 = vmatmul.mubr.f32.gmra.mrb[0].mxu0 %v5849
        %v6065 = vpop.f32.mrb[0].mxu0
        %v6066 = vadd.f32 0.0, %v6065
        %v6067 = vpop.f32.mrb[0].mxu0
        %6068 = vmatprep.mubr.f32.mxu0 0.0
        %6069 = vmatmul.mubr.f32.gmra.mrb[0].mxu0 %v5852
        %v6070 = vpop.f32.mrb[0].mxu0
        %v6071 = vadd.f32 0.0, %v6070
        %v6072 = vpop.f32.mrb[0].mxu0
        %6073 = vmatprep.mubr.f32.mxu0 0.0
        %6074 = vmatmul.mubr.f32.gmra.mrb[0].mxu0 %v5855
        %v6075 = vpop.f32.mrb[0].mxu0
        %v6076 = vadd.f32 0.0, %v6075
        %v6077 = vpop.f32.mrb[0].mxu0
        %6078 = vmatprep.mubr.f32.mxu0 0.0
        %6079 = vmatmul.mubr.f32.gmra.mrb[0].mxu0 %v5858
        %v6080 = vpop.f32.mrb[0].mxu0
        %v6081 = vadd.f32 0.0, %v6080
        %v6082 = vpop.f32.mrb[0].mxu0
        %6083 = vmatprep.mubr.f32.mxu0 0.0
        %6084 = vmatmul.mubr.f32.gmra.mrb[0].mxu0 %v5861
        %v6085 = vpop.f32.mrb[0].mxu0
        %v6086 = vadd.f32 0.0, %v6085
        %v6087 = vpop.f32.mrb[0].mxu0
        %6088 = vmatprep.mubr.f32.mxu0 0.0
        %6089 = vmatmul.mubr.f32.gmra.mrb[0].mxu0 %v5864
        %v6090 = vpop.f32.mrb[0].mxu0
        %v6091 = vadd.f32 0.0, %v6090
        %v6092 = vpop.f32.mrb[0].mxu0
        %6093 = vdwg.mxu0
        %v6094 = vadd.f32 %v5704, %v5936
        %v6095 = vadd.f32 %v5705, %v5941
        %v6096 = vadd.f32 %v5706, %v5946
        %v6097 = vadd.f32 %v5707, %v5951
        %v6098 = vadd.f32 %v5708, %v5956
        %v6099 = vadd.f32 %v5709, %v5961
        %v6100 = vadd.f32 %v5710, %v5966
        %v6101 = vadd.f32 %v5711, %v5971
        %v6102 = vadd.f32 %v5712, %v5976
        %v6103 = vadd.f32 %v5713, %v5981
        %v6104 = vadd.f32 %v5714, %v5986
        %v6105 = vadd.f32 %v5715, %v5991
        %v6106 = vadd.f32 %v5716, %v5996
        %v6107 = vadd.f32 %v5717, %v6001
        %v6108 = vadd.f32 %v5718, %v6006
        %v6109 = vadd.f32 %v5719, %v6011
        %v6110 = vadd.f32 %v5720, %v6016
        %v6111 = vadd.f32 %v5721, %v6021
        %v6112 = vadd.f32 %v5722, %v6026
        %v6113 = vadd.f32 %v5723, %v6031
        %v6114 = vadd.f32 %v5724, %v6036
        %v6115 = vadd.f32 %v5725, %v6041
        %v6116 = vadd.f32 %v5726, %v6046
        %v6117 = vadd.f32 %v5727, %v6051
        %v6118 = vadd.f32 %v5728, %v6056
        %v6119 = vadd.f32 %v5729, %v6061
        %v6120 = vadd.f32 %v5730, %v6066
        %v6121 = vadd.f32 %v5731, %v6071
        %v6122 = vadd.f32 %v5732, %v6076
        %v6123 = vadd.f32 %v5733, %v6081
        %v6124 = vadd.f32 %v5734, %v6086
        %v6125 = vadd.f32 %v5735, %v6091
        %6158 = vrot.lane.b32.xlu0 %v6094, 4
        %v6159 = vpop.permute.xlu0 %6158
        %6160 = vrot.lane.b32.xlu0 %v6095, 4
        %v6161 = vpop.permute.xlu0 %6160
        %6162 = vrot.lane.b32.xlu0 %v6096, 4
        %v6163 = vpop.permute.xlu0 %6162
        %6164 = vrot.lane.b32.xlu0 %v6097, 4
        %v6165 = vpop.permute.xlu0 %6164
        %6166 = vrot.lane.b32.xlu0 %v6098, 4
        %v6167 = vpop.permute.xlu0 %6166
        %6168 = vrot.lane.b32.xlu0 %v6099, 4
        %v6169 = vpop.permute.xlu0 %6168
        %6170 = vrot.lane.b32.xlu0 %v6100, 4
        %v6171 = vpop.permute.xlu0 %6170
        %6172 = vrot.lane.b32.xlu0 %v6101, 4
        %v6173 = vpop.permute.xlu0 %6172
        %6174 = vrot.lane.b32.xlu0 %v6102, 4
        %v6175 = vpop.permute.xlu0 %6174
        %6176 = vrot.lane.b32.xlu0 %v6103, 4
        %v6177 = vpop.permute.xlu0 %6176
        %6178 = vrot.lane.b32.xlu0 %v6104, 4
        %v6179 = vpop.permute.xlu0 %6178
        %6180 = vrot.lane.b32.xlu0 %v6105, 4
        %v6181 = vpop.permute.xlu0 %6180
        %6182 = vrot.lane.b32.xlu0 %v6106, 4
        %v6183 = vpop.permute.xlu0 %6182
        %6184 = vrot.lane.b32.xlu0 %v6107, 4
        %v6185 = vpop.permute.xlu0 %6184
        %6186 = vrot.lane.b32.xlu0 %v6108, 4
        %v6187 = vpop.permute.xlu0 %6186
        %6188 = vrot.lane.b32.xlu0 %v6109, 4
        %v6189 = vpop.permute.xlu0 %6188
        %6190 = vrot.lane.b32.xlu0 %v6110, 4
        %v6191 = vpop.permute.xlu0 %6190
        %6192 = vrot.lane.b32.xlu0 %v6111, 4
        %v6193 = vpop.permute.xlu0 %6192
        %6194 = vrot.lane.b32.xlu0 %v6112, 4
        %v6195 = vpop.permute.xlu0 %6194
        %6196 = vrot.lane.b32.xlu0 %v6113, 4
        %v6197 = vpop.permute.xlu0 %6196
        %6198 = vrot.lane.b32.xlu0 %v6114, 4
        %v6199 = vpop.permute.xlu0 %6198
        %6200 = vrot.lane.b32.xlu0 %v6115, 4
        %v6201 = vpop.permute.xlu0 %6200
        %6202 = vrot.lane.b32.xlu0 %v6116, 4
        %v6203 = vpop.permute.xlu0 %6202
        %6204 = vrot.lane.b32.xlu0 %v6117, 4
        %v6205 = vpop.permute.xlu0 %6204
        %6206 = vrot.lane.b32.xlu0 %v6118, 4
        %v6207 = vpop.permute.xlu0 %6206
        %6208 = vrot.lane.b32.xlu0 %v6119, 4
        %v6209 = vpop.permute.xlu0 %6208
        %6210 = vrot.lane.b32.xlu0 %v6120, 4
        %v6211 = vpop.permute.xlu0 %6210
        %6212 = vrot.lane.b32.xlu0 %v6121, 4
        %v6213 = vpop.permute.xlu0 %6212
        %6214 = vrot.lane.b32.xlu0 %v6122, 4
        %v6215 = vpop.permute.xlu0 %6214
        %6216 = vrot.lane.b32.xlu0 %v6123, 4
        %v6217 = vpop.permute.xlu0 %6216
        %6218 = vrot.lane.b32.xlu0 %v6124, 4
        %v6219 = vpop.permute.xlu0 %6218
        %6220 = vrot.lane.b32.xlu0 %v6125, 4
        %v6221 = vpop.permute.xlu0 %6220
        %v6254 = vsel %vm347, %v4854, %v6159
        %v6255 = vsel %vm347, %v4855, %v6161
        %v6256 = vsel %vm347, %v4856, %v6163
        %v6257 = vsel %vm347, %v4857, %v6165
        %v6258 = vsel %vm347, %v4858, %v6167
        %v6259 = vsel %vm347, %v4859, %v6169
        %v6260 = vsel %vm347, %v4860, %v6171
        %v6261 = vsel %vm347, %v4861, %v6173
        %v6262 = vsel %vm347, %v4862, %v6175
        %v6263 = vsel %vm347, %v4863, %v6177
        %v6264 = vsel %vm347, %v4864, %v6179
        %v6265 = vsel %vm347, %v4865, %v6181
        %v6266 = vsel %vm347, %v4866, %v6183
        %v6267 = vsel %vm347, %v4867, %v6185
        %v6268 = vsel %vm347, %v4868, %v6187
        %v6269 = vsel %vm347, %v4869, %v6189
        %v6270 = vsel %vm347, %v4870, %v6191
        %v6271 = vsel %vm347, %v4871, %v6193
        %v6272 = vsel %vm347, %v4872, %v6195
        %v6273 = vsel %vm347, %v4873, %v6197
        %v6274 = vsel %vm347, %v4874, %v6199
        %v6275 = vsel %vm347, %v4875, %v6201
        %v6276 = vsel %vm347, %v4876, %v6203
        %v6277 = vsel %vm347, %v4877, %v6205
        %v6278 = vsel %vm347, %v4878, %v6207
        %v6279 = vsel %vm347, %v4879, %v6209
        %v6280 = vsel %vm347, %v4880, %v6211
        %v6281 = vsel %vm347, %v4881, %v6213
        %v6282 = vsel %vm347, %v4882, %v6215
        %v6283 = vsel %vm347, %v4883, %v6217
        %v6284 = vsel %vm347, %v4884, %v6219
        %v6285 = vsel %vm347, %v4885, %v6221
        %v6286 = vadd.f32 %v6254, %v3322
        %v6287 = vadd.f32 %v6255, %v3322
        %v6288 = vadd.f32 %v6256, %v3322
        %v6289 = vadd.f32 %v6257, %v3322
        %v6290 = vadd.f32 %v6258, %v3322
        %v6291 = vadd.f32 %v6259, %v3322
        %v6292 = vadd.f32 %v6260, %v3322
        %v6293 = vadd.f32 %v6261, %v3322
        %v6294 = vadd.f32 %v6262, %v3322
        %v6295 = vadd.f32 %v6263, %v3322
        %v6296 = vadd.f32 %v6264, %v3322
        %v6297 = vadd.f32 %v6265, %v3322
        %v6298 = vadd.f32 %v6266, %v3322
        %v6299 = vadd.f32 %v6267, %v3322
        %v6300 = vadd.f32 %v6268, %v3322
        %v6301 = vadd.f32 %v6269, %v3322
        %v6302 = vadd.f32 %v6270, %v3322
        %v6303 = vadd.f32 %v6271, %v3322
        %v6304 = vadd.f32 %v6272, %v3322
        %v6305 = vadd.f32 %v6273, %v3322
        %v6306 = vadd.f32 %v6274, %v3322
        %v6307 = vadd.f32 %v6275, %v3322
        %v6308 = vadd.f32 %v6276, %v3322
        %v6309 = vadd.f32 %v6277, %v3322
        %v6310 = vadd.f32 %v6278, %v3322
        %v6311 = vadd.f32 %v6279, %v3322
        %v6312 = vadd.f32 %v6280, %v3322
        %v6313 = vadd.f32 %v6281, %v3322
        %v6314 = vadd.f32 %v6282, %v3322
        %v6315 = vadd.f32 %v6283, %v3322
        %v6316 = vadd.f32 %v6284, %v3322
        %v6317 = vadd.f32 %v6285, %v3322
        %s6318 = scalar_lea.vmem %s305, 16 [#allocation11]
        %6319 = vst.msk [vmem:[%s6318] sm:$0xff] %vm3356, %v6286
        %6320 = vst.msk [vmem:[%s6318 + $0x8] sm:$0xff] %vm3356, %v6287
        %6321 = vst.msk [vmem:[%s6318 + $0x20] sm:$0xff] %vm3356, %v6288
        %6322 = vst.msk [vmem:[%s6318 + $0x28] sm:$0xff] %vm3356, %v6289
        %6323 = vst.msk [vmem:[%s6318 + $0x40] sm:$0xff] %vm3356, %v6290
        %6324 = vst.msk [vmem:[%s6318 + $0x48] sm:$0xff] %vm3356, %v6291
        %6325 = vst.msk [vmem:[%s6318 + $0x60] sm:$0xff] %vm3356, %v6292
        %6326 = vst.msk [vmem:[%s6318 + $0x68] sm:$0xff] %vm3356, %v6293
        %6327 = vst.msk [vmem:[%s6318 + $0x80] sm:$0xff] %vm3356, %v6294
        %6328 = vst.msk [vmem:[%s6318 + $0x88] sm:$0xff] %vm3356, %v6295
        %6329 = vst.msk [vmem:[%s6318 + $0xa0] sm:$0xff] %vm3356, %v6296
        %6330 = vst.msk [vmem:[%s6318 + $0xa8] sm:$0xff] %vm3356, %v6297
        %6331 = vst.msk [vmem:[%s6318 + $0xc0] sm:$0xff] %vm3356, %v6298
        %6332 = vst.msk [vmem:[%s6318 + $0xc8] sm:$0xff] %vm3356, %v6299
        %6333 = vst.msk [vmem:[%s6318 + $0xe0] sm:$0xff] %vm3356, %v6300
        %6334 = vst.msk [vmem:[%s6318 + $0xe8] sm:$0xff] %vm3356, %v6301
        %6335 = vst.msk [vmem:[%s6318 + $0x100] sm:$0xff] %vm3356, %v6302
        %6336 = vst.msk [vmem:[%s6318 + $0x108] sm:$0xff] %vm3356, %v6303
        %6337 = vst.msk [vmem:[%s6318 + $0x120] sm:$0xff] %vm3356, %v6304
        %6338 = vst.msk [vmem:[%s6318 + $0x128] sm:$0xff] %vm3356, %v6305
        %6339 = vst.msk [vmem:[%s6318 + $0x140] sm:$0xff] %vm3356, %v6306
        %6340 = vst.msk [vmem:[%s6318 + $0x148] sm:$0xff] %vm3356, %v6307
        %6341 = vst.msk [vmem:[%s6318 + $0x160] sm:$0xff] %vm3356, %v6308
        %6342 = vst.msk [vmem:[%s6318 + $0x168] sm:$0xff] %vm3356, %v6309
        %6343 = vst.msk [vmem:[%s6318 + $0x180] sm:$0xff] %vm3356, %v6310
        %6344 = vst.msk [vmem:[%s6318 + $0x188] sm:$0xff] %vm3356, %v6311
        %6345 = vst.msk [vmem:[%s6318 + $0x1a0] sm:$0xff] %vm3356, %v6312
        %6346 = vst.msk [vmem:[%s6318 + $0x1a8] sm:$0xff] %vm3356, %v6313
        %6347 = vst.msk [vmem:[%s6318 + $0x1c0] sm:$0xff] %vm3356, %v6314
        %6348 = vst.msk [vmem:[%s6318 + $0x1c8] sm:$0xff] %vm3356, %v6315
        %6349 = vst.msk [vmem:[%s6318 + $0x1e0] sm:$0xff] %vm3356, %v6316
        %6350 = vst.msk [vmem:[%s6318 + $0x1e8] sm:$0xff] %vm3356, %v6317
        %s6351 = sand.u32 %s145, 1
        %s6352 = scalar_lea.sflag [#allocation5], %s6351
        %s6353 = sand.u32 %s145, 1
        %s6354 = smul.addr %s6353, 512
        %s6355 = scalar_lea.vmem [#allocation11], %s6354
        // Predicated region
        $region53: #{tpu_custom_call.1} parent=35 // pred_check
          %p6356 = pneg %p155
        $region54: #{tpu_custom_call.1} parent=35 // pred_check_branch
          %6358 = sbr.rel (%p6356) target = $region56
        $region55: #{tpu_custom_call.1} parent=35 // pred_region
          %s6359 = smul.u32 16, %s30
          %s6361 = ssub.s32 8192, 8192
          %6362 = vsyncadd %s6352, %s6361
          %s6363 = smul.addr %s6359, 4
          %s6364 = smul.addr %s29, 64
          %s6365 = sadd.s32 %s6363, %s6364
          %s6366 = smul.addr %s6365, 128
          %s6367 = scalar_lea.hbm %s4, %s6366
          %s6368 = sshll.u32 %s6355, 4
          %s6369 = int_to_ptr.vmem [resolvable:$true] %s6368
          %6374 = dma.vmem_to_hbm [thread:$0]  %s6369, 8192, %s6367, %s6352, 128, 128, 8
        $region56: #{tpu_custom_call.1} parent=35 // pred_fallthru
          _
      $region36: #{tpu_custom_call.1} parent=5 // pred_fallthru
        _
      %p6375 = scmp.le.s32.totalorder 2, %s20
      // Predicated region
      $region57: #{tpu_custom_call.1} parent=5 // pred_check
        %p6376 = pneg %p6375
      $region58: #{tpu_custom_call.1} parent=5 // pred_check_branch
        %6378 = sbr.rel (%p6376) target = $region60
      $region59: #{tpu_custom_call.1} parent=5 // pred_region
        %s6379 = ssub.s32 %s20, 2
        // Predicated region
        $region61: #{tpu_custom_call.1} parent=59 // pred_check
          %p6380 = pneg %p161
        $region62: #{tpu_custom_call.1} parent=59 // pred_check_branch
          %6382 = sbr.rel (%p6380) target = $region64
        $region63: #{tpu_custom_call.1} parent=59 // pred_region
          %s6383 = sand.u32 %s146, 1
          %s6384 = scalar_lea.sflag [#allocation5], %s6383
          %s6385 = sand.u32 %s146, 1
          %s6386 = smul.addr %s6385, 512
          %s6387 = scalar_lea.vmem [#allocation11], %s6386
          %6388 = dma.done %s6384, 8192
        $region64: #{tpu_custom_call.1} parent=59 // pred_fallthru
          _
      $region60: #{tpu_custom_call.1} parent=5 // pred_fallthru
        _
    $region6: #{tpu_custom_call.1} parent=1 // loop_footer
      %s24 = sadd.s32 1, %s20
    $region7: #{tpu_custom_call.1} parent=1 // loop_footer_branch
      %19 = sbr.rel target = $region3
    $region8: #{tpu_custom_call.1} parent=1 // loop_exit
      _
    %6389 = vsyncpa [#allocation4], 1
    %s6390 = scalar_lea.sflag [#allocation4], 1
    %6391 = vsyncpa %s6390, 1
    %6392 = vsyncpa [#allocation7], 1
    %s6393 = scalar_lea.sflag [#allocation7], 1
    %6394 = vsyncpa %s6393, 1
    %6395 = vsyncpa [#allocation10], 1
    %6396 = vsyncpa [#allocation5], 1
    %s6397 = scalar_lea.sflag [#allocation5], 1
    %6398 = vsyncpa %s6397, 1

</llo_original>
